<compile_context>
chip_gen: v5e
topology: v5e:2x2
jax: 0.10.0
libtpu: 0.0.40
codegen_flags: <defaults>
</compile_context>

<pallas_src>
import numpy as np

import jax
import jax.numpy as jnp
from jax import lax
from jax.experimental import pallas as pl
from jax.experimental.pallas import tpu as pltpu

# ----------------------------- static geometry ------------------------------
IMG = 28            # MNIST input (fc1 hard-codes 4*4*50, which forces 28x28)
K = 5               # conv kernel size
C1_H = IMG - K + 1  # 24 : conv1 output spatial
P1_H = C1_H // 2    # 12 : pool1 output spatial
C2_H = P1_H - K + 1  # 8 : conv2 output spatial
P2_H = C2_H // 2    # 4  : pool2 output spatial
C1_OUT = 20
C2_OUT = 50
FC1_OUT = 500
FC1_PAD = 512       # lane-dense fc1 width
NCLS = 10
NCLS_PAD = 128      # lane-dense fc2 width
NEG_INF = -1e30


# ------------------------------ Pallas kernel --------------------------------

def _lenet_kernel(patch_ref, w1_ref, b1_ref, sel_ref, w2_ref, b2_ref,
                  w1r_ref, b1f_ref, w2f_ref, b2f_ref, out_ref):
    f32 = jnp.float32
    n_pool1 = P1_H * P1_H          # 144
    n_conv2 = C2_H * C2_H          # 64
    n_pool2 = P2_H * P2_H          # 16

    # ---- conv1 (GEMM on pre-gathered patches) + relu + fused 2x2 max-pool ---
    # Patch rows are grouped by pooling-window parity: 4 blocks of 144 rows,
    # each covering the 12x12 pooled positions, so pool1 is just an elementwise
    # max over four tile-aligned GEMM results.
    w1 = w1_ref[...]               # (25, 20)
    b1 = b1_ref[...]               # (1, 20)
    pool1 = None
    for g in range(4):
        pg = patch_ref[0, g * n_pool1:(g + 1) * n_pool1, :]          # (144, 25)
        yg = jnp.maximum(jnp.dot(pg, w1, preferred_element_type=f32) + b1, 0.0)
        pool1 = yg if pool1 is None else jnp.maximum(pool1, yg)       # (144, 20)

    # ---- conv2 + relu + fused 2x2 max-pool ----------------------------------
    # im2col of the VMEM-resident pool1 is done with constant 0/1 gather
    # matrices on the MXU (no HBM im2col); output rows come out in pool-parity
    # order so pool2 is again a max over four 16-row blocks.
    acc2 = jnp.zeros((n_conv2, C2_OUT), f32)                          # (64, 50)
    for k in range(K * K):
        gathered = jnp.dot(sel_ref[k], pool1,
                           preferred_element_type=f32)                # (64, 20)
        acc2 = acc2 + jnp.dot(gathered, w2_ref[k],
                              preferred_element_type=f32)             # (64, 50)
    y2 = jnp.maximum(acc2 + b2_ref[...], 0.0)
    pool2 = jnp.maximum(
        jnp.maximum(y2[0 * n_pool2:1 * n_pool2], y2[1 * n_pool2:2 * n_pool2]),
        jnp.maximum(y2[2 * n_pool2:3 * n_pool2], y2[3 * n_pool2:4 * n_pool2]))
    # pool2: (16, 50), rows = pooled spatial position (h*4 + w), cols = channel

    # ---- fc1 + relu ----------------------------------------------------------
    # PyTorch's channel-major flatten is folded into the fc1 weight layout
    # (w1r[s, c, :] = fc1_w[:, c*16 + s]), so the 800-way contraction becomes
    # 16 accumulated (1,50)x(50,512) matmuls: no in-kernel flatten/relayout.
    h1 = b1f_ref[...]                                                 # (1, 512)
    for s in range(n_pool2):
        h1 = h1 + jnp.dot(pool2[s:s + 1, :], w1r_ref[s],
                          preferred_element_type=f32)
    h1 = jnp.maximum(h1, 0.0)

    # ---- fc2 + softmax (lane-dense, padded classes carry a -inf bias) -------
    logits = b2f_ref[...]                                             # (1, 128)
    for c in range(FC1_PAD // 128):
        logits = logits + jnp.dot(h1[:, c * 128:(c + 1) * 128],
                                  w2f_ref[c * 128:(c + 1) * 128, :],
                                  preferred_element_type=f32)
    m = jnp.max(logits, axis=-1, keepdims=True)
    e = jnp.exp(logits - m)                 # padded lanes underflow to exactly 0
    denom = jnp.sum(e, axis=-1, keepdims=True)
    out_ref[0] = e * pl.reciprocal(denom, approx=True)


# ---------------------------- wrapper-side prep ------------------------------

def _conv2_selectors():
    """(25, 64, 144) constant 0/1 matrices: sel[k] @ pool1 gathers the pool1
    rows needed by conv2 kernel offset k = di*5+dj, with conv2 output rows
    ordered by 2x2-pooling parity group (a2, b2, p2, q2)."""
    rows = [(2 * p2 + a2, 2 * q2 + b2)
            for a2 in range(2) for b2 in range(2)
            for p2 in range(P2_H) for q2 in range(P2_H)]
    sel = np.zeros((K * K, C2_H * C2_H, P1_H * P1_H), np.float32)
    for k in range(K * K):
        di, dj = divmod(k, K)
        for m, (i2, j2) in enumerate(rows):
            sel[k, m, (i2 + di) * P1_H + (j2 + dj)] = 1.0
    return sel


_SEL = jnp.asarray(_conv2_selectors())


def _conv1_patches(x_img):
    """x_img: (N, 28, 28) -> (N, 576, 25) im2col patches; rows ordered by
    2x2-pool parity group (a, b) then pooled position (p, q)."""
    cols = jnp.stack([x_img[:, di:di + C1_H, dj:dj + C1_H]
                      for di in range(K) for dj in range(K)],
                     axis=-1)                                   # (N, 24, 24, 25)
    groups = [cols[:, a::2, b::2, :] for a in range(2) for b in range(2)]
    pat = jnp.stack(groups, axis=1)                             # (N, 4, 12, 12, 25)
    return pat.reshape(x_img.shape[0], 4 * P1_H * P1_H, K * K)


def _prep_params(params):
    """One-time reshape/pad of the PyTorch-layout parameters (constant-folded
    under jit)."""
    w1 = jnp.transpose(params["conv1_w"], (2, 3, 1, 0)).reshape(K * K, C1_OUT)
    b1 = params["conv1_b"].reshape(1, C1_OUT)
    w2 = jnp.transpose(params["conv2_w"], (2, 3, 1, 0)).reshape(K * K, C1_OUT, C2_OUT)
    b2 = params["conv2_b"].reshape(1, C2_OUT)
    # fc1: (500, 800) with input index c*16 + s  ->  w1r[s, c, o], o padded to 512.
    w1r = params["fc1_w"].T.reshape(C2_OUT, P2_H * P2_H, FC1_OUT).transpose(1, 0, 2)
    w1r = jnp.pad(w1r, ((0, 0), (0, 0), (0, FC1_PAD - FC1_OUT)))
    b1f = jnp.pad(params["fc1_b"], (0, FC1_PAD - FC1_OUT)).reshape(1, FC1_PAD)
    # fc2: pad to (512, 128); padded class lanes get a -inf bias so the
    # in-kernel 128-lane softmax is exact for the real 10 classes.
    w2f = jnp.pad(params["fc2_w"].T,
                  ((0, FC1_PAD - FC1_OUT), (0, NCLS_PAD - NCLS)))
    b2f = jnp.concatenate(
        [params["fc2_b"],
         jnp.full((NCLS_PAD - NCLS,), NEG_INF, jnp.float32)]).reshape(1, NCLS_PAD)
    return w1, b1, w2, b2, w1r, b1f, w2f, b2f


@jax.jit
def lenet_forward(params, x_nchw):
    n = x_nchw.shape[0]
    x_img = x_nchw[:, 0, :, :]                       # single input channel
    patches = _conv1_patches(x_img)                  # (N, 576, 25)
    w1, b1, w2, b2, w1r, b1f, w2f, b2f = _prep_params(params)

    def const(shape):
        return pl.BlockSpec(shape, lambda i: (0,) * len(shape))

    out = pl.pallas_call(
        _lenet_kernel,
        out_shape=jax.ShapeDtypeStruct((n, 1, NCLS_PAD), jnp.float32),
        grid=(n,),
        in_specs=[
            pl.BlockSpec((1, 4 * P1_H * P1_H, K * K), lambda i: (i, 0, 0)),
            const((K * K, C1_OUT)),
            const((1, C1_OUT)),
            const((K * K, C2_H * C2_H, P1_H * P1_H)),
            const((K * K, C1_OUT, C2_OUT)),
            const((1, C2_OUT)),
            const((P2_H * P2_H, C2_OUT, FC1_PAD)),
            const((1, FC1_PAD)),
            const((FC1_PAD, NCLS_PAD)),
            const((1, NCLS_PAD)),
        ],
        out_specs=pl.BlockSpec((1, 1, NCLS_PAD), lambda i: (i, 0, 0)),
        compiler_params=pltpu.CompilerParams(
            dimension_semantics=("parallel",),
            vmem_limit_bytes=32 * 1024 * 1024),
    )(patches, w1, b1, _SEL, w2, b2, w1r, b1f, w2f, b2f)
    return out.reshape(n, NCLS_PAD)[:, :NCLS]


# ------------------------- pure-JAX reference (check) ------------------------

def lenet_reference(params, x):
    dn1 = lax.conv_dimension_numbers(x.shape, params["conv1_w"].shape,
                                     ("NCHW", "OIHW", "NCHW"))
    y = lax.conv_general_dilated(x, params["conv1_w"], (1, 1), "VALID",
                                 dimension_numbers=dn1)
    y = jax.nn.relu(y + params["conv1_b"][None, :, None, None])
    y = lax.reduce_window(y, -jnp.inf, lax.max, (1, 1, 2, 2), (1, 1, 2, 2),
                          "VALID")
    dn2 = lax.conv_dimension_numbers(y.shape, params["conv2_w"].shape,
                                     ("NCHW", "OIHW", "NCHW"))
    y = lax.conv_general_dilated(y, params["conv2_w"], (1, 1), "VALID",
                                 dimension_numbers=dn2)
    y = jax.nn.relu(y + params["conv2_b"][None, :, None, None])
    y = lax.reduce_window(y, -jnp.inf, lax.max, (1, 1, 2, 2), (1, 1, 2, 2),
                          "VALID")
    y = y.reshape(y.shape[0], -1)
    y = jax.nn.relu(y @ params["fc1_w"].T + params["fc1_b"])
    y = y @ params["fc2_w"].T + params["fc2_b"]
    return jax.nn.softmax(y, axis=1)


# ------------------------------ params / main --------------------------------

def init_params(key):
    ks = jax.random.split(key, 8)

    def u(k, shape, scale):
        return scale * jax.random.uniform(k, shape, jnp.float32, -1.0, 1.0)

    return {
        "conv1_w": u(ks[0], (20, 1, 5, 5), 0.2),    # PyTorch OIHW layout
        "conv1_b": u(ks[1], (20,), 0.1),
        "conv2_w": u(ks[2], (50, 20, 5, 5), 0.05),
        "conv2_b": u(ks[3], (50,), 0.05),
        "fc1_w":   u(ks[4], (500, 800), 0.03),      # PyTorch (out, in) layout
        "fc1_b":   u(ks[5], (500,), 0.03),
        "fc2_w":   u(ks[6], (10, 500), 0.05),
        "fc2_b":   u(ks[7], (10,), 0.05),
    }


if __name__ == "__main__":
    key = jax.random.PRNGKey(0)
    pkey, xkey = jax.random.split(key)
    params = init_params(pkey)

    # MNIST-shaped input (the fc1 layer hard-codes 4*4*50, which forces 28x28).
    x = jax.random.normal(xkey, (2, 1, 28, 28), jnp.float32)

    out = jax.block_until_ready(lenet_forward(params, x))
    ref = jax.block_until_ready(lenet_reference(params, x))

    assert out.shape == (2, 10), out.shape
    # Softmax uses the approximate (EUP) reciprocal -> allow a little slack.
    assert jnp.allclose(jnp.sum(out, axis=1), 1.0, atol=5e-3)
    assert jnp.allclose(out, ref, rtol=5e-3, atol=1e-5), \
        float(jnp.max(jnp.abs(out - ref)))

    print("KERNEL_OK")
</pallas_src>

<mosaic_0001>
module attributes {stable_mosaic.version = 11 : i64} {
  func.func @_lenet_kernel(%arg0: i32, %arg1: memref<1x576x25xf32, #tpu.memory_space<vmem>>, %arg2: memref<25x20xf32, #tpu.memory_space<vmem>>, %arg3: memref<1x20xf32, #tpu.memory_space<vmem>>, %arg4: memref<25x64x144xf32, #tpu.memory_space<vmem>>, %arg5: memref<25x20x50xf32, #tpu.memory_space<vmem>>, %arg6: memref<1x50xf32, #tpu.memory_space<vmem>>, %arg7: memref<16x50x512xf32, #tpu.memory_space<vmem>>, %arg8: memref<1x512xf32, #tpu.memory_space<vmem>>, %arg9: memref<512x128xf32, #tpu.memory_space<vmem>>, %arg10: memref<1x128xf32, #tpu.memory_space<vmem>>, %arg11: memref<1x1x128xf32, #tpu.memory_space<vmem>>) attributes {dimension_semantics = [#tpu.dimension_semantics<parallel>], iteration_bounds = array<i64: 2>, scalar_prefetch = 0 : i64, scratch_operands = 0 : i64, tpu.core_type = #tpu.core_type<tc>, window_params = [{transform_indices = @transform_0, window_bounds = array<i64: 1, 576, 25>}, {pipeline_mode = #tpu.pipeline_mode<synchronous>, transform_indices = @transform_1, window_bounds = array<i64: 25, 20>}, {pipeline_mode = #tpu.pipeline_mode<synchronous>, transform_indices = @transform_2, window_bounds = array<i64: 1, 20>}, {pipeline_mode = #tpu.pipeline_mode<synchronous>, transform_indices = @transform_3, window_bounds = array<i64: 25, 64, 144>}, {pipeline_mode = #tpu.pipeline_mode<synchronous>, transform_indices = @transform_4, window_bounds = array<i64: 25, 20, 50>}, {pipeline_mode = #tpu.pipeline_mode<synchronous>, transform_indices = @transform_5, window_bounds = array<i64: 1, 50>}, {pipeline_mode = #tpu.pipeline_mode<synchronous>, transform_indices = @transform_6, window_bounds = array<i64: 16, 50, 512>}, {pipeline_mode = #tpu.pipeline_mode<synchronous>, transform_indices = @transform_7, window_bounds = array<i64: 1, 512>}, {pipeline_mode = #tpu.pipeline_mode<synchronous>, transform_indices = @transform_8, window_bounds = array<i64: 512, 128>}, {pipeline_mode = #tpu.pipeline_mode<synchronous>, transform_indices = @transform_9, window_bounds = array<i64: 1, 128>}, {transform_indices = @transform_10, window_bounds = array<i64: 1, 1, 128>}]} {
    %c0 = arith.constant 0 : index
    %c0_0 = arith.constant 0 : index
    %0 = vector.load %arg2[%c0, %c0_0] : memref<25x20xf32, #tpu.memory_space<vmem>>, vector<25x20xf32>
    %c0_1 = arith.constant 0 : index
    %c0_2 = arith.constant 0 : index
    %1 = vector.load %arg3[%c0_1, %c0_2] : memref<1x20xf32, #tpu.memory_space<vmem>>, vector<1x20xf32>
    %c0_3 = arith.constant 0 : index
    %c0_4 = arith.constant 0 : index
    %c0_5 = arith.constant 0 : index
    %2 = vector.load %arg1[%c0_3, %c0_4, %c0_5] : memref<1x576x25xf32, #tpu.memory_space<vmem>>, vector<1x144x25xf32>
    %3 = vector.shape_cast %2 : vector<1x144x25xf32> to vector<144x25xf32>
    %cst = arith.constant dense<0.000000e+00> : vector<144x20xf32>
    %4 = tpu.matmul %3, %0, %cst {dimension_numbers = #tpu.dot_dimension_numbers<[1], [0], [0], [1], [0, 0, 1, 1], [], []>} : vector<144x25xf32>, vector<25x20xf32>, vector<144x20xf32> -> vector<144x20xf32>
    %5 = vector.broadcast %1 : vector<1x20xf32> to vector<144x20xf32>
    %6 = arith.addf %4, %5 : vector<144x20xf32>
    %cst_6 = arith.constant 0.000000e+00 : f32
    %7 = vector.broadcast %cst_6 : f32 to vector<144x20xf32>
    %8 = arith.maximumf %6, %7 : vector<144x20xf32>
    %c0_7 = arith.constant 0 : index
    %c144 = arith.constant 144 : index
    %c0_8 = arith.constant 0 : index
    %9 = vector.load %arg1[%c0_7, %c144, %c0_8] : memref<1x576x25xf32, #tpu.memory_space<vmem>>, vector<1x144x25xf32>
    %10 = vector.shape_cast %9 : vector<1x144x25xf32> to vector<144x25xf32>
    %cst_9 = arith.constant dense<0.000000e+00> : vector<144x20xf32>
    %11 = tpu.matmul %10, %0, %cst_9 {dimension_numbers = #tpu.dot_dimension_numbers<[1], [0], [0], [1], [0, 0, 1, 1], [], []>} : vector<144x25xf32>, vector<25x20xf32>, vector<144x20xf32> -> vector<144x20xf32>
    %12 = vector.broadcast %1 : vector<1x20xf32> to vector<144x20xf32>
    %13 = arith.addf %11, %12 : vector<144x20xf32>
    %cst_10 = arith.constant 0.000000e+00 : f32
    %14 = vector.broadcast %cst_10 : f32 to vector<144x20xf32>
    %15 = arith.maximumf %13, %14 : vector<144x20xf32>
    %16 = arith.maximumf %8, %15 : vector<144x20xf32>
    %c0_11 = arith.constant 0 : index
    %c288 = arith.constant 288 : index
    %c0_12 = arith.constant 0 : index
    %17 = vector.load %arg1[%c0_11, %c288, %c0_12] : memref<1x576x25xf32, #tpu.memory_space<vmem>>, vector<1x144x25xf32>
    %18 = vector.shape_cast %17 : vector<1x144x25xf32> to vector<144x25xf32>
    %cst_13 = arith.constant dense<0.000000e+00> : vector<144x20xf32>
    %19 = tpu.matmul %18, %0, %cst_13 {dimension_numbers = #tpu.dot_dimension_numbers<[1], [0], [0], [1], [0, 0, 1, 1], [], []>} : vector<144x25xf32>, vector<25x20xf32>, vector<144x20xf32> -> vector<144x20xf32>
    %20 = vector.broadcast %1 : vector<1x20xf32> to vector<144x20xf32>
    %21 = arith.addf %19, %20 : vector<144x20xf32>
    %cst_14 = arith.constant 0.000000e+00 : f32
    %22 = vector.broadcast %cst_14 : f32 to vector<144x20xf32>
    %23 = arith.maximumf %21, %22 : vector<144x20xf32>
    %24 = arith.maximumf %16, %23 : vector<144x20xf32>
    %c0_15 = arith.constant 0 : index
    %c432 = arith.constant 432 : index
    %c0_16 = arith.constant 0 : index
    %25 = vector.load %arg1[%c0_15, %c432, %c0_16] : memref<1x576x25xf32, #tpu.memory_space<vmem>>, vector<1x144x25xf32>
    %26 = vector.shape_cast %25 : vector<1x144x25xf32> to vector<144x25xf32>
    %cst_17 = arith.constant dense<0.000000e+00> : vector<144x20xf32>
    %27 = tpu.matmul %26, %0, %cst_17 {dimension_numbers = #tpu.dot_dimension_numbers<[1], [0], [0], [1], [0, 0, 1, 1], [], []>} : vector<144x25xf32>, vector<25x20xf32>, vector<144x20xf32> -> vector<144x20xf32>
    %28 = vector.broadcast %1 : vector<1x20xf32> to vector<144x20xf32>
    %29 = arith.addf %27, %28 : vector<144x20xf32>
    %cst_18 = arith.constant 0.000000e+00 : f32
    %30 = vector.broadcast %cst_18 : f32 to vector<144x20xf32>
    %31 = arith.maximumf %29, %30 : vector<144x20xf32>
    %32 = arith.maximumf %24, %31 : vector<144x20xf32>
    %cst_19 = arith.constant 0.000000e+00 : f32
    %33 = vector.broadcast %cst_19 : f32 to vector<64x50xf32>
    %c0_20 = arith.constant 0 : index
    %c0_21 = arith.constant 0 : index
    %c0_22 = arith.constant 0 : index
    %34 = vector.load %arg4[%c0_20, %c0_21, %c0_22] : memref<25x64x144xf32, #tpu.memory_space<vmem>>, vector<1x64x144xf32>
    %35 = vector.shape_cast %34 : vector<1x64x144xf32> to vector<64x144xf32>
    %cst_23 = arith.constant dense<0.000000e+00> : vector<64x20xf32>
    %36 = tpu.matmul %35, %32, %cst_23 {dimension_numbers = #tpu.dot_dimension_numbers<[1], [0], [0], [1], [0, 0, 1, 1], [], []>} : vector<64x144xf32>, vector<144x20xf32>, vector<64x20xf32> -> vector<64x20xf32>
    %c0_24 = arith.constant 0 : index
    %c0_25 = arith.constant 0 : index
    %c0_26 = arith.constant 0 : index
    %37 = vector.load %arg5[%c0_24, %c0_25, %c0_26] : memref<25x20x50xf32, #tpu.memory_space<vmem>>, vector<1x20x50xf32>
    %38 = vector.shape_cast %37 : vector<1x20x50xf32> to vector<20x50xf32>
    %cst_27 = arith.constant dense<0.000000e+00> : vector<64x50xf32>
    %39 = tpu.matmul %36, %38, %cst_27 {dimension_numbers = #tpu.dot_dimension_numbers<[1], [0], [0], [1], [0, 0, 1, 1], [], []>} : vector<64x20xf32>, vector<20x50xf32>, vector<64x50xf32> -> vector<64x50xf32>
    %40 = arith.addf %33, %39 : vector<64x50xf32>
    %c1 = arith.constant 1 : index
    %c0_28 = arith.constant 0 : index
    %c0_29 = arith.constant 0 : index
    %41 = vector.load %arg4[%c1, %c0_28, %c0_29] : memref<25x64x144xf32, #tpu.memory_space<vmem>>, vector<1x64x144xf32>
    %42 = vector.shape_cast %41 : vector<1x64x144xf32> to vector<64x144xf32>
    %cst_30 = arith.constant dense<0.000000e+00> : vector<64x20xf32>
    %43 = tpu.matmul %42, %32, %cst_30 {dimension_numbers = #tpu.dot_dimension_numbers<[1], [0], [0], [1], [0, 0, 1, 1], [], []>} : vector<64x144xf32>, vector<144x20xf32>, vector<64x20xf32> -> vector<64x20xf32>
    %c1_31 = arith.constant 1 : index
    %c0_32 = arith.constant 0 : index
    %c0_33 = arith.constant 0 : index
    %44 = vector.load %arg5[%c1_31, %c0_32, %c0_33] : memref<25x20x50xf32, #tpu.memory_space<vmem>>, vector<1x20x50xf32>
    %45 = vector.shape_cast %44 : vector<1x20x50xf32> to vector<20x50xf32>
    %cst_34 = arith.constant dense<0.000000e+00> : vector<64x50xf32>
    %46 = tpu.matmul %43, %45, %cst_34 {dimension_numbers = #tpu.dot_dimension_numbers<[1], [0], [0], [1], [0, 0, 1, 1], [], []>} : vector<64x20xf32>, vector<20x50xf32>, vector<64x50xf32> -> vector<64x50xf32>
    %47 = arith.addf %40, %46 : vector<64x50xf32>
    %c2 = arith.constant 2 : index
    %c0_35 = arith.constant 0 : index
    %c0_36 = arith.constant 0 : index
    %48 = vector.load %arg4[%c2, %c0_35, %c0_36] : memref<25x64x144xf32, #tpu.memory_space<vmem>>, vector<1x64x144xf32>
    %49 = vector.shape_cast %48 : vector<1x64x144xf32> to vector<64x144xf32>
    %cst_37 = arith.constant dense<0.000000e+00> : vector<64x20xf32>
    %50 = tpu.matmul %49, %32, %cst_37 {dimension_numbers = #tpu.dot_dimension_numbers<[1], [0], [0], [1], [0, 0, 1, 1], [], []>} : vector<64x144xf32>, vector<144x20xf32>, vector<64x20xf32> -> vector<64x20xf32>
    %c2_38 = arith.constant 2 : index
    %c0_39 = arith.constant 0 : index
    %c0_40 = arith.constant 0 : index
    %51 = vector.load %arg5[%c2_38, %c0_39, %c0_40] : memref<25x20x50xf32, #tpu.memory_space<vmem>>, vector<1x20x50xf32>
    %52 = vector.shape_cast %51 : vector<1x20x50xf32> to vector<20x50xf32>
    %cst_41 = arith.constant dense<0.000000e+00> : vector<64x50xf32>
    %53 = tpu.matmul %50, %52, %cst_41 {dimension_numbers = #tpu.dot_dimension_numbers<[1], [0], [0], [1], [0, 0, 1, 1], [], []>} : vector<64x20xf32>, vector<20x50xf32>, vector<64x50xf32> -> vector<64x50xf32>
    %54 = arith.addf %47, %53 : vector<64x50xf32>
    %c3 = arith.constant 3 : index
    %c0_42 = arith.constant 0 : index
    %c0_43 = arith.constant 0 : index
    %55 = vector.load %arg4[%c3, %c0_42, %c0_43] : memref<25x64x144xf32, #tpu.memory_space<vmem>>, vector<1x64x144xf32>
    %56 = vector.shape_cast %55 : vector<1x64x144xf32> to vector<64x144xf32>
    %cst_44 = arith.constant dense<0.000000e+00> : vector<64x20xf32>
    %57 = tpu.matmul %56, %32, %cst_44 {dimension_numbers = #tpu.dot_dimension_numbers<[1], [0], [0], [1], [0, 0, 1, 1], [], []>} : vector<64x144xf32>, vector<144x20xf32>, vector<64x20xf32> -> vector<64x20xf32>
    %c3_45 = arith.constant 3 : index
    %c0_46 = arith.constant 0 : index
    %c0_47 = arith.constant 0 : index
    %58 = vector.load %arg5[%c3_45, %c0_46, %c0_47] : memref<25x20x50xf32, #tpu.memory_space<vmem>>, vector<1x20x50xf32>
    %59 = vector.shape_cast %58 : vector<1x20x50xf32> to vector<20x50xf32>
    %cst_48 = arith.constant dense<0.000000e+00> : vector<64x50xf32>
    %60 = tpu.matmul %57, %59, %cst_48 {dimension_numbers = #tpu.dot_dimension_numbers<[1], [0], [0], [1], [0, 0, 1, 1], [], []>} : vector<64x20xf32>, vector<20x50xf32>, vector<64x50xf32> -> vector<64x50xf32>
    %61 = arith.addf %54, %60 : vector<64x50xf32>
    %c4 = arith.constant 4 : index
    %c0_49 = arith.constant 0 : index
    %c0_50 = arith.constant 0 : index
    %62 = vector.load %arg4[%c4, %c0_49, %c0_50] : memref<25x64x144xf32, #tpu.memory_space<vmem>>, vector<1x64x144xf32>
    %63 = vector.shape_cast %62 : vector<1x64x144xf32> to vector<64x144xf32>
    %cst_51 = arith.constant dense<0.000000e+00> : vector<64x20xf32>
    %64 = tpu.matmul %63, %32, %cst_51 {dimension_numbers = #tpu.dot_dimension_numbers<[1], [0], [0], [1], [0, 0, 1, 1], [], []>} : vector<64x144xf32>, vector<144x20xf32>, vector<64x20xf32> -> vector<64x20xf32>
    %c4_52 = arith.constant 4 : index
    %c0_53 = arith.constant 0 : index
    %c0_54 = arith.constant 0 : index
    %65 = vector.load %arg5[%c4_52, %c0_53, %c0_54] : memref<25x20x50xf32, #tpu.memory_space<vmem>>, vector<1x20x50xf32>
    %66 = vector.shape_cast %65 : vector<1x20x50xf32> to vector<20x50xf32>
    %cst_55 = arith.constant dense<0.000000e+00> : vector<64x50xf32>
    %67 = tpu.matmul %64, %66, %cst_55 {dimension_numbers = #tpu.dot_dimension_numbers<[1], [0], [0], [1], [0, 0, 1, 1], [], []>} : vector<64x20xf32>, vector<20x50xf32>, vector<64x50xf32> -> vector<64x50xf32>
    %68 = arith.addf %61, %67 : vector<64x50xf32>
    %c5 = arith.constant 5 : index
    %c0_56 = arith.constant 0 : index
    %c0_57 = arith.constant 0 : index
    %69 = vector.load %arg4[%c5, %c0_56, %c0_57] : memref<25x64x144xf32, #tpu.memory_space<vmem>>, vector<1x64x144xf32>
    %70 = vector.shape_cast %69 : vector<1x64x144xf32> to vector<64x144xf32>
    %cst_58 = arith.constant dense<0.000000e+00> : vector<64x20xf32>
    %71 = tpu.matmul %70, %32, %cst_58 {dimension_numbers = #tpu.dot_dimension_numbers<[1], [0], [0], [1], [0, 0, 1, 1], [], []>} : vector<64x144xf32>, vector<144x20xf32>, vector<64x20xf32> -> vector<64x20xf32>
    %c5_59 = arith.constant 5 : index
    %c0_60 = arith.constant 0 : index
    %c0_61 = arith.constant 0 : index
    %72 = vector.load %arg5[%c5_59, %c0_60, %c0_61] : memref<25x20x50xf32, #tpu.memory_space<vmem>>, vector<1x20x50xf32>
    %73 = vector.shape_cast %72 : vector<1x20x50xf32> to vector<20x50xf32>
    %cst_62 = arith.constant dense<0.000000e+00> : vector<64x50xf32>
    %74 = tpu.matmul %71, %73, %cst_62 {dimension_numbers = #tpu.dot_dimension_numbers<[1], [0], [0], [1], [0, 0, 1, 1], [], []>} : vector<64x20xf32>, vector<20x50xf32>, vector<64x50xf32> -> vector<64x50xf32>
    %75 = arith.addf %68, %74 : vector<64x50xf32>
    %c6 = arith.constant 6 : index
    %c0_63 = arith.constant 0 : index
    %c0_64 = arith.constant 0 : index
    %76 = vector.load %arg4[%c6, %c0_63, %c0_64] : memref<25x64x144xf32, #tpu.memory_space<vmem>>, vector<1x64x144xf32>
    %77 = vector.shape_cast %76 : vector<1x64x144xf32> to vector<64x144xf32>
    %cst_65 = arith.constant dense<0.000000e+00> : vector<64x20xf32>
    %78 = tpu.matmul %77, %32, %cst_65 {dimension_numbers = #tpu.dot_dimension_numbers<[1], [0], [0], [1], [0, 0, 1, 1], [], []>} : vector<64x144xf32>, vector<144x20xf32>, vector<64x20xf32> -> vector<64x20xf32>
    %c6_66 = arith.constant 6 : index
    %c0_67 = arith.constant 0 : index
    %c0_68 = arith.constant 0 : index
    %79 = vector.load %arg5[%c6_66, %c0_67, %c0_68] : memref<25x20x50xf32, #tpu.memory_space<vmem>>, vector<1x20x50xf32>
    %80 = vector.shape_cast %79 : vector<1x20x50xf32> to vector<20x50xf32>
    %cst_69 = arith.constant dense<0.000000e+00> : vector<64x50xf32>
    %81 = tpu.matmul %78, %80, %cst_69 {dimension_numbers = #tpu.dot_dimension_numbers<[1], [0], [0], [1], [0, 0, 1, 1], [], []>} : vector<64x20xf32>, vector<20x50xf32>, vector<64x50xf32> -> vector<64x50xf32>
    %82 = arith.addf %75, %81 : vector<64x50xf32>
    %c7 = arith.constant 7 : index
    %c0_70 = arith.constant 0 : index
    %c0_71 = arith.constant 0 : index
    %83 = vector.load %arg4[%c7, %c0_70, %c0_71] : memref<25x64x144xf32, #tpu.memory_space<vmem>>, vector<1x64x144xf32>
    %84 = vector.shape_cast %83 : vector<1x64x144xf32> to vector<64x144xf32>
    %cst_72 = arith.constant dense<0.000000e+00> : vector<64x20xf32>
    %85 = tpu.matmul %84, %32, %cst_72 {dimension_numbers = #tpu.dot_dimension_numbers<[1], [0], [0], [1], [0, 0, 1, 1], [], []>} : vector<64x144xf32>, vector<144x20xf32>, vector<64x20xf32> -> vector<64x20xf32>
    %c7_73 = arith.constant 7 : index
    %c0_74 = arith.constant 0 : index
    %c0_75 = arith.constant 0 : index
    %86 = vector.load %arg5[%c7_73, %c0_74, %c0_75] : memref<25x20x50xf32, #tpu.memory_space<vmem>>, vector<1x20x50xf32>
    %87 = vector.shape_cast %86 : vector<1x20x50xf32> to vector<20x50xf32>
    %cst_76 = arith.constant dense<0.000000e+00> : vector<64x50xf32>
    %88 = tpu.matmul %85, %87, %cst_76 {dimension_numbers = #tpu.dot_dimension_numbers<[1], [0], [0], [1], [0, 0, 1, 1], [], []>} : vector<64x20xf32>, vector<20x50xf32>, vector<64x50xf32> -> vector<64x50xf32>
    %89 = arith.addf %82, %88 : vector<64x50xf32>
    %c8 = arith.constant 8 : index
    %c0_77 = arith.constant 0 : index
    %c0_78 = arith.constant 0 : index
    %90 = vector.load %arg4[%c8, %c0_77, %c0_78] : memref<25x64x144xf32, #tpu.memory_space<vmem>>, vector<1x64x144xf32>
    %91 = vector.shape_cast %90 : vector<1x64x144xf32> to vector<64x144xf32>
    %cst_79 = arith.constant dense<0.000000e+00> : vector<64x20xf32>
    %92 = tpu.matmul %91, %32, %cst_79 {dimension_numbers = #tpu.dot_dimension_numbers<[1], [0], [0], [1], [0, 0, 1, 1], [], []>} : vector<64x144xf32>, vector<144x20xf32>, vector<64x20xf32> -> vector<64x20xf32>
    %c8_80 = arith.constant 8 : index
    %c0_81 = arith.constant 0 : index
    %c0_82 = arith.constant 0 : index
    %93 = vector.load %arg5[%c8_80, %c0_81, %c0_82] : memref<25x20x50xf32, #tpu.memory_space<vmem>>, vector<1x20x50xf32>
    %94 = vector.shape_cast %93 : vector<1x20x50xf32> to vector<20x50xf32>
    %cst_83 = arith.constant dense<0.000000e+00> : vector<64x50xf32>
    %95 = tpu.matmul %92, %94, %cst_83 {dimension_numbers = #tpu.dot_dimension_numbers<[1], [0], [0], [1], [0, 0, 1, 1], [], []>} : vector<64x20xf32>, vector<20x50xf32>, vector<64x50xf32> -> vector<64x50xf32>
    %96 = arith.addf %89, %95 : vector<64x50xf32>
    %c9 = arith.constant 9 : index
    %c0_84 = arith.constant 0 : index
    %c0_85 = arith.constant 0 : index
    %97 = vector.load %arg4[%c9, %c0_84, %c0_85] : memref<25x64x144xf32, #tpu.memory_space<vmem>>, vector<1x64x144xf32>
    %98 = vector.shape_cast %97 : vector<1x64x144xf32> to vector<64x144xf32>
    %cst_86 = arith.constant dense<0.000000e+00> : vector<64x20xf32>
    %99 = tpu.matmul %98, %32, %cst_86 {dimension_numbers = #tpu.dot_dimension_numbers<[1], [0], [0], [1], [0, 0, 1, 1], [], []>} : vector<64x144xf32>, vector<144x20xf32>, vector<64x20xf32> -> vector<64x20xf32>
    %c9_87 = arith.constant 9 : index
    %c0_88 = arith.constant 0 : index
    %c0_89 = arith.constant 0 : index
    %100 = vector.load %arg5[%c9_87, %c0_88, %c0_89] : memref<25x20x50xf32, #tpu.memory_space<vmem>>, vector<1x20x50xf32>
    %101 = vector.shape_cast %100 : vector<1x20x50xf32> to vector<20x50xf32>
    %cst_90 = arith.constant dense<0.000000e+00> : vector<64x50xf32>
    %102 = tpu.matmul %99, %101, %cst_90 {dimension_numbers = #tpu.dot_dimension_numbers<[1], [0], [0], [1], [0, 0, 1, 1], [], []>} : vector<64x20xf32>, vector<20x50xf32>, vector<64x50xf32> -> vector<64x50xf32>
    %103 = arith.addf %96, %102 : vector<64x50xf32>
    %c10 = arith.constant 10 : index
    %c0_91 = arith.constant 0 : index
    %c0_92 = arith.constant 0 : index
    %104 = vector.load %arg4[%c10, %c0_91, %c0_92] : memref<25x64x144xf32, #tpu.memory_space<vmem>>, vector<1x64x144xf32>
    %105 = vector.shape_cast %104 : vector<1x64x144xf32> to vector<64x144xf32>
    %cst_93 = arith.constant dense<0.000000e+00> : vector<64x20xf32>
    %106 = tpu.matmul %105, %32, %cst_93 {dimension_numbers = #tpu.dot_dimension_numbers<[1], [0], [0], [1], [0, 0, 1, 1], [], []>} : vector<64x144xf32>, vector<144x20xf32>, vector<64x20xf32> -> vector<64x20xf32>
    %c10_94 = arith.constant 10 : index
    %c0_95 = arith.constant 0 : index
    %c0_96 = arith.constant 0 : index
    %107 = vector.load %arg5[%c10_94, %c0_95, %c0_96] : memref<25x20x50xf32, #tpu.memory_space<vmem>>, vector<1x20x50xf32>
    %108 = vector.shape_cast %107 : vector<1x20x50xf32> to vector<20x50xf32>
    %cst_97 = arith.constant dense<0.000000e+00> : vector<64x50xf32>
    %109 = tpu.matmul %106, %108, %cst_97 {dimension_numbers = #tpu.dot_dimension_numbers<[1], [0], [0], [1], [0, 0, 1, 1], [], []>} : vector<64x20xf32>, vector<20x50xf32>, vector<64x50xf32> -> vector<64x50xf32>
    %110 = arith.addf %103, %109 : vector<64x50xf32>
    %c11 = arith.constant 11 : index
    %c0_98 = arith.constant 0 : index
    %c0_99 = arith.constant 0 : index
    %111 = vector.load %arg4[%c11, %c0_98, %c0_99] : memref<25x64x144xf32, #tpu.memory_space<vmem>>, vector<1x64x144xf32>
    %112 = vector.shape_cast %111 : vector<1x64x144xf32> to vector<64x144xf32>
    %cst_100 = arith.constant dense<0.000000e+00> : vector<64x20xf32>
    %113 = tpu.matmul %112, %32, %cst_100 {dimension_numbers = #tpu.dot_dimension_numbers<[1], [0], [0], [1], [0, 0, 1, 1], [], []>} : vector<64x144xf32>, vector<144x20xf32>, vector<64x20xf32> -> vector<64x20xf32>
    %c11_101 = arith.constant 11 : index
    %c0_102 = arith.constant 0 : index
    %c0_103 = arith.constant 0 : index
    %114 = vector.load %arg5[%c11_101, %c0_102, %c0_103] : memref<25x20x50xf32, #tpu.memory_space<vmem>>, vector<1x20x50xf32>
    %115 = vector.shape_cast %114 : vector<1x20x50xf32> to vector<20x50xf32>
    %cst_104 = arith.constant dense<0.000000e+00> : vector<64x50xf32>
    %116 = tpu.matmul %113, %115, %cst_104 {dimension_numbers = #tpu.dot_dimension_numbers<[1], [0], [0], [1], [0, 0, 1, 1], [], []>} : vector<64x20xf32>, vector<20x50xf32>, vector<64x50xf32> -> vector<64x50xf32>
    %117 = arith.addf %110, %116 : vector<64x50xf32>
    %c12 = arith.constant 12 : index
    %c0_105 = arith.constant 0 : index
    %c0_106 = arith.constant 0 : index
    %118 = vector.load %arg4[%c12, %c0_105, %c0_106] : memref<25x64x144xf32, #tpu.memory_space<vmem>>, vector<1x64x144xf32>
    %119 = vector.shape_cast %118 : vector<1x64x144xf32> to vector<64x144xf32>
    %cst_107 = arith.constant dense<0.000000e+00> : vector<64x20xf32>
    %120 = tpu.matmul %119, %32, %cst_107 {dimension_numbers = #tpu.dot_dimension_numbers<[1], [0], [0], [1], [0, 0, 1, 1], [], []>} : vector<64x144xf32>, vector<144x20xf32>, vector<64x20xf32> -> vector<64x20xf32>
    %c12_108 = arith.constant 12 : index
    %c0_109 = arith.constant 0 : index
    %c0_110 = arith.constant 0 : index
    %121 = vector.load %arg5[%c12_108, %c0_109, %c0_110] : memref<25x20x50xf32, #tpu.memory_space<vmem>>, vector<1x20x50xf32>
    %122 = vector.shape_cast %121 : vector<1x20x50xf32> to vector<20x50xf32>
    %cst_111 = arith.constant dense<0.000000e+00> : vector<64x50xf32>
    %123 = tpu.matmul %120, %122, %cst_111 {dimension_numbers = #tpu.dot_dimension_numbers<[1], [0], [0], [1], [0, 0, 1, 1], [], []>} : vector<64x20xf32>, vector<20x50xf32>, vector<64x50xf32> -> vector<64x50xf32>
    %124 = arith.addf %117, %123 : vector<64x50xf32>
    %c13 = arith.constant 13 : index
    %c0_112 = arith.constant 0 : index
    %c0_113 = arith.constant 0 : index
    %125 = vector.load %arg4[%c13, %c0_112, %c0_113] : memref<25x64x144xf32, #tpu.memory_space<vmem>>, vector<1x64x144xf32>
    %126 = vector.shape_cast %125 : vector<1x64x144xf32> to vector<64x144xf32>
    %cst_114 = arith.constant dense<0.000000e+00> : vector<64x20xf32>
    %127 = tpu.matmul %126, %32, %cst_114 {dimension_numbers = #tpu.dot_dimension_numbers<[1], [0], [0], [1], [0, 0, 1, 1], [], []>} : vector<64x144xf32>, vector<144x20xf32>, vector<64x20xf32> -> vector<64x20xf32>
    %c13_115 = arith.constant 13 : index
    %c0_116 = arith.constant 0 : index
    %c0_117 = arith.constant 0 : index
    %128 = vector.load %arg5[%c13_115, %c0_116, %c0_117] : memref<25x20x50xf32, #tpu.memory_space<vmem>>, vector<1x20x50xf32>
    %129 = vector.shape_cast %128 : vector<1x20x50xf32> to vector<20x50xf32>
    %cst_118 = arith.constant dense<0.000000e+00> : vector<64x50xf32>
    %130 = tpu.matmul %127, %129, %cst_118 {dimension_numbers = #tpu.dot_dimension_numbers<[1], [0], [0], [1], [0, 0, 1, 1], [], []>} : vector<64x20xf32>, vector<20x50xf32>, vector<64x50xf32> -> vector<64x50xf32>
    %131 = arith.addf %124, %130 : vector<64x50xf32>
    %c14 = arith.constant 14 : index
    %c0_119 = arith.constant 0 : index
    %c0_120 = arith.constant 0 : index
    %132 = vector.load %arg4[%c14, %c0_119, %c0_120] : memref<25x64x144xf32, #tpu.memory_space<vmem>>, vector<1x64x144xf32>
    %133 = vector.shape_cast %132 : vector<1x64x144xf32> to vector<64x144xf32>
    %cst_121 = arith.constant dense<0.000000e+00> : vector<64x20xf32>
    %134 = tpu.matmul %133, %32, %cst_121 {dimension_numbers = #tpu.dot_dimension_numbers<[1], [0], [0], [1], [0, 0, 1, 1], [], []>} : vector<64x144xf32>, vector<144x20xf32>, vector<64x20xf32> -> vector<64x20xf32>
    %c14_122 = arith.constant 14 : index
    %c0_123 = arith.constant 0 : index
    %c0_124 = arith.constant 0 : index
    %135 = vector.load %arg5[%c14_122, %c0_123, %c0_124] : memref<25x20x50xf32, #tpu.memory_space<vmem>>, vector<1x20x50xf32>
    %136 = vector.shape_cast %135 : vector<1x20x50xf32> to vector<20x50xf32>
    %cst_125 = arith.constant dense<0.000000e+00> : vector<64x50xf32>
    %137 = tpu.matmul %134, %136, %cst_125 {dimension_numbers = #tpu.dot_dimension_numbers<[1], [0], [0], [1], [0, 0, 1, 1], [], []>} : vector<64x20xf32>, vector<20x50xf32>, vector<64x50xf32> -> vector<64x50xf32>
    %138 = arith.addf %131, %137 : vector<64x50xf32>
    %c15 = arith.constant 15 : index
    %c0_126 = arith.constant 0 : index
    %c0_127 = arith.constant 0 : index
    %139 = vector.load %arg4[%c15, %c0_126, %c0_127] : memref<25x64x144xf32, #tpu.memory_space<vmem>>, vector<1x64x144xf32>
    %140 = vector.shape_cast %139 : vector<1x64x144xf32> to vector<64x144xf32>
    %cst_128 = arith.constant dense<0.000000e+00> : vector<64x20xf32>
    %141 = tpu.matmul %140, %32, %cst_128 {dimension_numbers = #tpu.dot_dimension_numbers<[1], [0], [0], [1], [0, 0, 1, 1], [], []>} : vector<64x144xf32>, vector<144x20xf32>, vector<64x20xf32> -> vector<64x20xf32>
    %c15_129 = arith.constant 15 : index
    %c0_130 = arith.constant 0 : index
    %c0_131 = arith.constant 0 : index
    %142 = vector.load %arg5[%c15_129, %c0_130, %c0_131] : memref<25x20x50xf32, #tpu.memory_space<vmem>>, vector<1x20x50xf32>
    %143 = vector.shape_cast %142 : vector<1x20x50xf32> to vector<20x50xf32>
    %cst_132 = arith.constant dense<0.000000e+00> : vector<64x50xf32>
    %144 = tpu.matmul %141, %143, %cst_132 {dimension_numbers = #tpu.dot_dimension_numbers<[1], [0], [0], [1], [0, 0, 1, 1], [], []>} : vector<64x20xf32>, vector<20x50xf32>, vector<64x50xf32> -> vector<64x50xf32>
    %145 = arith.addf %138, %144 : vector<64x50xf32>
    %c16 = arith.constant 16 : index
    %c0_133 = arith.constant 0 : index
    %c0_134 = arith.constant 0 : index
    %146 = vector.load %arg4[%c16, %c0_133, %c0_134] : memref<25x64x144xf32, #tpu.memory_space<vmem>>, vector<1x64x144xf32>
    %147 = vector.shape_cast %146 : vector<1x64x144xf32> to vector<64x144xf32>
    %cst_135 = arith.constant dense<0.000000e+00> : vector<64x20xf32>
    %148 = tpu.matmul %147, %32, %cst_135 {dimension_numbers = #tpu.dot_dimension_numbers<[1], [0], [0], [1], [0, 0, 1, 1], [], []>} : vector<64x144xf32>, vector<144x20xf32>, vector<64x20xf32> -> vector<64x20xf32>
    %c16_136 = arith.constant 16 : index
    %c0_137 = arith.constant 0 : index
    %c0_138 = arith.constant 0 : index
    %149 = vector.load %arg5[%c16_136, %c0_137, %c0_138] : memref<25x20x50xf32, #tpu.memory_space<vmem>>, vector<1x20x50xf32>
    %150 = vector.shape_cast %149 : vector<1x20x50xf32> to vector<20x50xf32>
    %cst_139 = arith.constant dense<0.000000e+00> : vector<64x50xf32>
    %151 = tpu.matmul %148, %150, %cst_139 {dimension_numbers = #tpu.dot_dimension_numbers<[1], [0], [0], [1], [0, 0, 1, 1], [], []>} : vector<64x20xf32>, vector<20x50xf32>, vector<64x50xf32> -> vector<64x50xf32>
    %152 = arith.addf %145, %151 : vector<64x50xf32>
    %c17 = arith.constant 17 : index
    %c0_140 = arith.constant 0 : index
    %c0_141 = arith.constant 0 : index
    %153 = vector.load %arg4[%c17, %c0_140, %c0_141] : memref<25x64x144xf32, #tpu.memory_space<vmem>>, vector<1x64x144xf32>
    %154 = vector.shape_cast %153 : vector<1x64x144xf32> to vector<64x144xf32>
    %cst_142 = arith.constant dense<0.000000e+00> : vector<64x20xf32>
    %155 = tpu.matmul %154, %32, %cst_142 {dimension_numbers = #tpu.dot_dimension_numbers<[1], [0], [0], [1], [0, 0, 1, 1], [], []>} : vector<64x144xf32>, vector<144x20xf32>, vector<64x20xf32> -> vector<64x20xf32>
    %c17_143 = arith.constant 17 : index
    %c0_144 = arith.constant 0 : index
    %c0_145 = arith.constant 0 : index
    %156 = vector.load %arg5[%c17_143, %c0_144, %c0_145] : memref<25x20x50xf32, #tpu.memory_space<vmem>>, vector<1x20x50xf32>
    %157 = vector.shape_cast %156 : vector<1x20x50xf32> to vector<20x50xf32>
    %cst_146 = arith.constant dense<0.000000e+00> : vector<64x50xf32>
    %158 = tpu.matmul %155, %157, %cst_146 {dimension_numbers = #tpu.dot_dimension_numbers<[1], [0], [0], [1], [0, 0, 1, 1], [], []>} : vector<64x20xf32>, vector<20x50xf32>, vector<64x50xf32> -> vector<64x50xf32>
    %159 = arith.addf %152, %158 : vector<64x50xf32>
    %c18 = arith.constant 18 : index
    %c0_147 = arith.constant 0 : index
    %c0_148 = arith.constant 0 : index
    %160 = vector.load %arg4[%c18, %c0_147, %c0_148] : memref<25x64x144xf32, #tpu.memory_space<vmem>>, vector<1x64x144xf32>
    %161 = vector.shape_cast %160 : vector<1x64x144xf32> to vector<64x144xf32>
    %cst_149 = arith.constant dense<0.000000e+00> : vector<64x20xf32>
    %162 = tpu.matmul %161, %32, %cst_149 {dimension_numbers = #tpu.dot_dimension_numbers<[1], [0], [0], [1], [0, 0, 1, 1], [], []>} : vector<64x144xf32>, vector<144x20xf32>, vector<64x20xf32> -> vector<64x20xf32>
    %c18_150 = arith.constant 18 : index
    %c0_151 = arith.constant 0 : index
    %c0_152 = arith.constant 0 : index
    %163 = vector.load %arg5[%c18_150, %c0_151, %c0_152] : memref<25x20x50xf32, #tpu.memory_space<vmem>>, vector<1x20x50xf32>
    %164 = vector.shape_cast %163 : vector<1x20x50xf32> to vector<20x50xf32>
    %cst_153 = arith.constant dense<0.000000e+00> : vector<64x50xf32>
    %165 = tpu.matmul %162, %164, %cst_153 {dimension_numbers = #tpu.dot_dimension_numbers<[1], [0], [0], [1], [0, 0, 1, 1], [], []>} : vector<64x20xf32>, vector<20x50xf32>, vector<64x50xf32> -> vector<64x50xf32>
    %166 = arith.addf %159, %165 : vector<64x50xf32>
    %c19 = arith.constant 19 : index
    %c0_154 = arith.constant 0 : index
    %c0_155 = arith.constant 0 : index
    %167 = vector.load %arg4[%c19, %c0_154, %c0_155] : memref<25x64x144xf32, #tpu.memory_space<vmem>>, vector<1x64x144xf32>
    %168 = vector.shape_cast %167 : vector<1x64x144xf32> to vector<64x144xf32>
    %cst_156 = arith.constant dense<0.000000e+00> : vector<64x20xf32>
    %169 = tpu.matmul %168, %32, %cst_156 {dimension_numbers = #tpu.dot_dimension_numbers<[1], [0], [0], [1], [0, 0, 1, 1], [], []>} : vector<64x144xf32>, vector<144x20xf32>, vector<64x20xf32> -> vector<64x20xf32>
    %c19_157 = arith.constant 19 : index
    %c0_158 = arith.constant 0 : index
    %c0_159 = arith.constant 0 : index
    %170 = vector.load %arg5[%c19_157, %c0_158, %c0_159] : memref<25x20x50xf32, #tpu.memory_space<vmem>>, vector<1x20x50xf32>
    %171 = vector.shape_cast %170 : vector<1x20x50xf32> to vector<20x50xf32>
    %cst_160 = arith.constant dense<0.000000e+00> : vector<64x50xf32>
    %172 = tpu.matmul %169, %171, %cst_160 {dimension_numbers = #tpu.dot_dimension_numbers<[1], [0], [0], [1], [0, 0, 1, 1], [], []>} : vector<64x20xf32>, vector<20x50xf32>, vector<64x50xf32> -> vector<64x50xf32>
    %173 = arith.addf %166, %172 : vector<64x50xf32>
    %c20 = arith.constant 20 : index
    %c0_161 = arith.constant 0 : index
    %c0_162 = arith.constant 0 : index
    %174 = vector.load %arg4[%c20, %c0_161, %c0_162] : memref<25x64x144xf32, #tpu.memory_space<vmem>>, vector<1x64x144xf32>
    %175 = vector.shape_cast %174 : vector<1x64x144xf32> to vector<64x144xf32>
    %cst_163 = arith.constant dense<0.000000e+00> : vector<64x20xf32>
    %176 = tpu.matmul %175, %32, %cst_163 {dimension_numbers = #tpu.dot_dimension_numbers<[1], [0], [0], [1], [0, 0, 1, 1], [], []>} : vector<64x144xf32>, vector<144x20xf32>, vector<64x20xf32> -> vector<64x20xf32>
    %c20_164 = arith.constant 20 : index
    %c0_165 = arith.constant 0 : index
    %c0_166 = arith.constant 0 : index
    %177 = vector.load %arg5[%c20_164, %c0_165, %c0_166] : memref<25x20x50xf32, #tpu.memory_space<vmem>>, vector<1x20x50xf32>
    %178 = vector.shape_cast %177 : vector<1x20x50xf32> to vector<20x50xf32>
    %cst_167 = arith.constant dense<0.000000e+00> : vector<64x50xf32>
    %179 = tpu.matmul %176, %178, %cst_167 {dimension_numbers = #tpu.dot_dimension_numbers<[1], [0], [0], [1], [0, 0, 1, 1], [], []>} : vector<64x20xf32>, vector<20x50xf32>, vector<64x50xf32> -> vector<64x50xf32>
    %180 = arith.addf %173, %179 : vector<64x50xf32>
    %c21 = arith.constant 21 : index
    %c0_168 = arith.constant 0 : index
    %c0_169 = arith.constant 0 : index
    %181 = vector.load %arg4[%c21, %c0_168, %c0_169] : memref<25x64x144xf32, #tpu.memory_space<vmem>>, vector<1x64x144xf32>
    %182 = vector.shape_cast %181 : vector<1x64x144xf32> to vector<64x144xf32>
    %cst_170 = arith.constant dense<0.000000e+00> : vector<64x20xf32>
    %183 = tpu.matmul %182, %32, %cst_170 {dimension_numbers = #tpu.dot_dimension_numbers<[1], [0], [0], [1], [0, 0, 1, 1], [], []>} : vector<64x144xf32>, vector<144x20xf32>, vector<64x20xf32> -> vector<64x20xf32>
    %c21_171 = arith.constant 21 : index
    %c0_172 = arith.constant 0 : index
    %c0_173 = arith.constant 0 : index
    %184 = vector.load %arg5[%c21_171, %c0_172, %c0_173] : memref<25x20x50xf32, #tpu.memory_space<vmem>>, vector<1x20x50xf32>
    %185 = vector.shape_cast %184 : vector<1x20x50xf32> to vector<20x50xf32>
    %cst_174 = arith.constant dense<0.000000e+00> : vector<64x50xf32>
    %186 = tpu.matmul %183, %185, %cst_174 {dimension_numbers = #tpu.dot_dimension_numbers<[1], [0], [0], [1], [0, 0, 1, 1], [], []>} : vector<64x20xf32>, vector<20x50xf32>, vector<64x50xf32> -> vector<64x50xf32>
    %187 = arith.addf %180, %186 : vector<64x50xf32>
    %c22 = arith.constant 22 : index
    %c0_175 = arith.constant 0 : index
    %c0_176 = arith.constant 0 : index
    %188 = vector.load %arg4[%c22, %c0_175, %c0_176] : memref<25x64x144xf32, #tpu.memory_space<vmem>>, vector<1x64x144xf32>
    %189 = vector.shape_cast %188 : vector<1x64x144xf32> to vector<64x144xf32>
    %cst_177 = arith.constant dense<0.000000e+00> : vector<64x20xf32>
    %190 = tpu.matmul %189, %32, %cst_177 {dimension_numbers = #tpu.dot_dimension_numbers<[1], [0], [0], [1], [0, 0, 1, 1], [], []>} : vector<64x144xf32>, vector<144x20xf32>, vector<64x20xf32> -> vector<64x20xf32>
    %c22_178 = arith.constant 22 : index
    %c0_179 = arith.constant 0 : index
    %c0_180 = arith.constant 0 : index
    %191 = vector.load %arg5[%c22_178, %c0_179, %c0_180] : memref<25x20x50xf32, #tpu.memory_space<vmem>>, vector<1x20x50xf32>
    %192 = vector.shape_cast %191 : vector<1x20x50xf32> to vector<20x50xf32>
    %cst_181 = arith.constant dense<0.000000e+00> : vector<64x50xf32>
    %193 = tpu.matmul %190, %192, %cst_181 {dimension_numbers = #tpu.dot_dimension_numbers<[1], [0], [0], [1], [0, 0, 1, 1], [], []>} : vector<64x20xf32>, vector<20x50xf32>, vector<64x50xf32> -> vector<64x50xf32>
    %194 = arith.addf %187, %193 : vector<64x50xf32>
    %c23 = arith.constant 23 : index
    %c0_182 = arith.constant 0 : index
    %c0_183 = arith.constant 0 : index
    %195 = vector.load %arg4[%c23, %c0_182, %c0_183] : memref<25x64x144xf32, #tpu.memory_space<vmem>>, vector<1x64x144xf32>
    %196 = vector.shape_cast %195 : vector<1x64x144xf32> to vector<64x144xf32>
    %cst_184 = arith.constant dense<0.000000e+00> : vector<64x20xf32>
    %197 = tpu.matmul %196, %32, %cst_184 {dimension_numbers = #tpu.dot_dimension_numbers<[1], [0], [0], [1], [0, 0, 1, 1], [], []>} : vector<64x144xf32>, vector<144x20xf32>, vector<64x20xf32> -> vector<64x20xf32>
    %c23_185 = arith.constant 23 : index
    %c0_186 = arith.constant 0 : index
    %c0_187 = arith.constant 0 : index
    %198 = vector.load %arg5[%c23_185, %c0_186, %c0_187] : memref<25x20x50xf32, #tpu.memory_space<vmem>>, vector<1x20x50xf32>
    %199 = vector.shape_cast %198 : vector<1x20x50xf32> to vector<20x50xf32>
    %cst_188 = arith.constant dense<0.000000e+00> : vector<64x50xf32>
    %200 = tpu.matmul %197, %199, %cst_188 {dimension_numbers = #tpu.dot_dimension_numbers<[1], [0], [0], [1], [0, 0, 1, 1], [], []>} : vector<64x20xf32>, vector<20x50xf32>, vector<64x50xf32> -> vector<64x50xf32>
    %201 = arith.addf %194, %200 : vector<64x50xf32>
    %c24 = arith.constant 24 : index
    %c0_189 = arith.constant 0 : index
    %c0_190 = arith.constant 0 : index
    %202 = vector.load %arg4[%c24, %c0_189, %c0_190] : memref<25x64x144xf32, #tpu.memory_space<vmem>>, vector<1x64x144xf32>
    %203 = vector.shape_cast %202 : vector<1x64x144xf32> to vector<64x144xf32>
    %cst_191 = arith.constant dense<0.000000e+00> : vector<64x20xf32>
    %204 = tpu.matmul %203, %32, %cst_191 {dimension_numbers = #tpu.dot_dimension_numbers<[1], [0], [0], [1], [0, 0, 1, 1], [], []>} : vector<64x144xf32>, vector<144x20xf32>, vector<64x20xf32> -> vector<64x20xf32>
    %c24_192 = arith.constant 24 : index
    %c0_193 = arith.constant 0 : index
    %c0_194 = arith.constant 0 : index
    %205 = vector.load %arg5[%c24_192, %c0_193, %c0_194] : memref<25x20x50xf32, #tpu.memory_space<vmem>>, vector<1x20x50xf32>
    %206 = vector.shape_cast %205 : vector<1x20x50xf32> to vector<20x50xf32>
    %cst_195 = arith.constant dense<0.000000e+00> : vector<64x50xf32>
    %207 = tpu.matmul %204, %206, %cst_195 {dimension_numbers = #tpu.dot_dimension_numbers<[1], [0], [0], [1], [0, 0, 1, 1], [], []>} : vector<64x20xf32>, vector<20x50xf32>, vector<64x50xf32> -> vector<64x50xf32>
    %208 = arith.addf %201, %207 : vector<64x50xf32>
    %c0_196 = arith.constant 0 : index
    %c0_197 = arith.constant 0 : index
    %209 = vector.load %arg6[%c0_196, %c0_197] : memref<1x50xf32, #tpu.memory_space<vmem>>, vector<1x50xf32>
    %210 = vector.broadcast %209 : vector<1x50xf32> to vector<64x50xf32>
    %211 = arith.addf %208, %210 : vector<64x50xf32>
    %cst_198 = arith.constant 0.000000e+00 : f32
    %212 = vector.broadcast %cst_198 : f32 to vector<64x50xf32>
    %213 = arith.maximumf %211, %212 : vector<64x50xf32>
    %214 = vector.extract_strided_slice %213 {offsets = [0, 0], sizes = [16, 50], strides = [1, 1]} : vector<64x50xf32> to vector<16x50xf32>
    %215 = vector.extract_strided_slice %213 {offsets = [16, 0], sizes = [16, 50], strides = [1, 1]} : vector<64x50xf32> to vector<16x50xf32>
    %216 = arith.maximumf %214, %215 : vector<16x50xf32>
    %217 = vector.extract_strided_slice %213 {offsets = [32, 0], sizes = [16, 50], strides = [1, 1]} : vector<64x50xf32> to vector<16x50xf32>
    %218 = vector.extract_strided_slice %213 {offsets = [48, 0], sizes = [16, 50], strides = [1, 1]} : vector<64x50xf32> to vector<16x50xf32>
    %219 = arith.maximumf %217, %218 : vector<16x50xf32>
    %220 = arith.maximumf %216, %219 : vector<16x50xf32>
    %c0_199 = arith.constant 0 : index
    %c0_200 = arith.constant 0 : index
    %221 = vector.load %arg8[%c0_199, %c0_200] : memref<1x512xf32, #tpu.memory_space<vmem>>, vector<1x512xf32>
    %222 = vector.extract_strided_slice %220 {offsets = [0, 0], sizes = [1, 50], strides = [1, 1]} : vector<16x50xf32> to vector<1x50xf32>
    %c0_201 = arith.constant 0 : index
    %c0_202 = arith.constant 0 : index
    %c0_203 = arith.constant 0 : index
    %223 = vector.load %arg7[%c0_201, %c0_202, %c0_203] : memref<16x50x512xf32, #tpu.memory_space<vmem>>, vector<1x50x512xf32>
    %224 = vector.shape_cast %223 : vector<1x50x512xf32> to vector<50x512xf32>
    %cst_204 = arith.constant dense<0.000000e+00> : vector<1x512xf32>
    %225 = tpu.matmul %222, %224, %cst_204 {dimension_numbers = #tpu.dot_dimension_numbers<[1], [0], [0], [1], [0, 0, 1, 1], [], []>} : vector<1x50xf32>, vector<50x512xf32>, vector<1x512xf32> -> vector<1x512xf32>
    %226 = arith.addf %221, %225 : vector<1x512xf32>
    %227 = vector.extract_strided_slice %220 {offsets = [1, 0], sizes = [1, 50], strides = [1, 1]} : vector<16x50xf32> to vector<1x50xf32>
    %c1_205 = arith.constant 1 : index
    %c0_206 = arith.constant 0 : index
    %c0_207 = arith.constant 0 : index
    %228 = vector.load %arg7[%c1_205, %c0_206, %c0_207] : memref<16x50x512xf32, #tpu.memory_space<vmem>>, vector<1x50x512xf32>
    %229 = vector.shape_cast %228 : vector<1x50x512xf32> to vector<50x512xf32>
    %cst_208 = arith.constant dense<0.000000e+00> : vector<1x512xf32>
    %230 = tpu.matmul %227, %229, %cst_208 {dimension_numbers = #tpu.dot_dimension_numbers<[1], [0], [0], [1], [0, 0, 1, 1], [], []>} : vector<1x50xf32>, vector<50x512xf32>, vector<1x512xf32> -> vector<1x512xf32>
    %231 = arith.addf %226, %230 : vector<1x512xf32>
    %232 = vector.extract_strided_slice %220 {offsets = [2, 0], sizes = [1, 50], strides = [1, 1]} : vector<16x50xf32> to vector<1x50xf32>
    %c2_209 = arith.constant 2 : index
    %c0_210 = arith.constant 0 : index
    %c0_211 = arith.constant 0 : index
    %233 = vector.load %arg7[%c2_209, %c0_210, %c0_211] : memref<16x50x512xf32, #tpu.memory_space<vmem>>, vector<1x50x512xf32>
    %234 = vector.shape_cast %233 : vector<1x50x512xf32> to vector<50x512xf32>
    %cst_212 = arith.constant dense<0.000000e+00> : vector<1x512xf32>
    %235 = tpu.matmul %232, %234, %cst_212 {dimension_numbers = #tpu.dot_dimension_numbers<[1], [0], [0], [1], [0, 0, 1, 1], [], []>} : vector<1x50xf32>, vector<50x512xf32>, vector<1x512xf32> -> vector<1x512xf32>
    %236 = arith.addf %231, %235 : vector<1x512xf32>
    %237 = vector.extract_strided_slice %220 {offsets = [3, 0], sizes = [1, 50], strides = [1, 1]} : vector<16x50xf32> to vector<1x50xf32>
    %c3_213 = arith.constant 3 : index
    %c0_214 = arith.constant 0 : index
    %c0_215 = arith.constant 0 : index
    %238 = vector.load %arg7[%c3_213, %c0_214, %c0_215] : memref<16x50x512xf32, #tpu.memory_space<vmem>>, vector<1x50x512xf32>
    %239 = vector.shape_cast %238 : vector<1x50x512xf32> to vector<50x512xf32>
    %cst_216 = arith.constant dense<0.000000e+00> : vector<1x512xf32>
    %240 = tpu.matmul %237, %239, %cst_216 {dimension_numbers = #tpu.dot_dimension_numbers<[1], [0], [0], [1], [0, 0, 1, 1], [], []>} : vector<1x50xf32>, vector<50x512xf32>, vector<1x512xf32> -> vector<1x512xf32>
    %241 = arith.addf %236, %240 : vector<1x512xf32>
    %242 = vector.extract_strided_slice %220 {offsets = [4, 0], sizes = [1, 50], strides = [1, 1]} : vector<16x50xf32> to vector<1x50xf32>
    %c4_217 = arith.constant 4 : index
    %c0_218 = arith.constant 0 : index
    %c0_219 = arith.constant 0 : index
    %243 = vector.load %arg7[%c4_217, %c0_218, %c0_219] : memref<16x50x512xf32, #tpu.memory_space<vmem>>, vector<1x50x512xf32>
    %244 = vector.shape_cast %243 : vector<1x50x512xf32> to vector<50x512xf32>
    %cst_220 = arith.constant dense<0.000000e+00> : vector<1x512xf32>
    %245 = tpu.matmul %242, %244, %cst_220 {dimension_numbers = #tpu.dot_dimension_numbers<[1], [0], [0], [1], [0, 0, 1, 1], [], []>} : vector<1x50xf32>, vector<50x512xf32>, vector<1x512xf32> -> vector<1x512xf32>
    %246 = arith.addf %241, %245 : vector<1x512xf32>
    %247 = vector.extract_strided_slice %220 {offsets = [5, 0], sizes = [1, 50], strides = [1, 1]} : vector<16x50xf32> to vector<1x50xf32>
    %c5_221 = arith.constant 5 : index
    %c0_222 = arith.constant 0 : index
    %c0_223 = arith.constant 0 : index
    %248 = vector.load %arg7[%c5_221, %c0_222, %c0_223] : memref<16x50x512xf32, #tpu.memory_space<vmem>>, vector<1x50x512xf32>
    %249 = vector.shape_cast %248 : vector<1x50x512xf32> to vector<50x512xf32>
    %cst_224 = arith.constant dense<0.000000e+00> : vector<1x512xf32>
    %250 = tpu.matmul %247, %249, %cst_224 {dimension_numbers = #tpu.dot_dimension_numbers<[1], [0], [0], [1], [0, 0, 1, 1], [], []>} : vector<1x50xf32>, vector<50x512xf32>, vector<1x512xf32> -> vector<1x512xf32>
    %251 = arith.addf %246, %250 : vector<1x512xf32>
    %252 = vector.extract_strided_slice %220 {offsets = [6, 0], sizes = [1, 50], strides = [1, 1]} : vector<16x50xf32> to vector<1x50xf32>
    %c6_225 = arith.constant 6 : index
    %c0_226 = arith.constant 0 : index
    %c0_227 = arith.constant 0 : index
    %253 = vector.load %arg7[%c6_225, %c0_226, %c0_227] : memref<16x50x512xf32, #tpu.memory_space<vmem>>, vector<1x50x512xf32>
    %254 = vector.shape_cast %253 : vector<1x50x512xf32> to vector<50x512xf32>
    %cst_228 = arith.constant dense<0.000000e+00> : vector<1x512xf32>
    %255 = tpu.matmul %252, %254, %cst_228 {dimension_numbers = #tpu.dot_dimension_numbers<[1], [0], [0], [1], [0, 0, 1, 1], [], []>} : vector<1x50xf32>, vector<50x512xf32>, vector<1x512xf32> -> vector<1x512xf32>
    %256 = arith.addf %251, %255 : vector<1x512xf32>
    %257 = vector.extract_strided_slice %220 {offsets = [7, 0], sizes = [1, 50], strides = [1, 1]} : vector<16x50xf32> to vector<1x50xf32>
    %c7_229 = arith.constant 7 : index
    %c0_230 = arith.constant 0 : index
    %c0_231 = arith.constant 0 : index
    %258 = vector.load %arg7[%c7_229, %c0_230, %c0_231] : memref<16x50x512xf32, #tpu.memory_space<vmem>>, vector<1x50x512xf32>
    %259 = vector.shape_cast %258 : vector<1x50x512xf32> to vector<50x512xf32>
    %cst_232 = arith.constant dense<0.000000e+00> : vector<1x512xf32>
    %260 = tpu.matmul %257, %259, %cst_232 {dimension_numbers = #tpu.dot_dimension_numbers<[1], [0], [0], [1], [0, 0, 1, 1], [], []>} : vector<1x50xf32>, vector<50x512xf32>, vector<1x512xf32> -> vector<1x512xf32>
    %261 = arith.addf %256, %260 : vector<1x512xf32>
    %262 = vector.extract_strided_slice %220 {offsets = [8, 0], sizes = [1, 50], strides = [1, 1]} : vector<16x50xf32> to vector<1x50xf32>
    %c8_233 = arith.constant 8 : index
    %c0_234 = arith.constant 0 : index
    %c0_235 = arith.constant 0 : index
    %263 = vector.load %arg7[%c8_233, %c0_234, %c0_235] : memref<16x50x512xf32, #tpu.memory_space<vmem>>, vector<1x50x512xf32>
    %264 = vector.shape_cast %263 : vector<1x50x512xf32> to vector<50x512xf32>
    %cst_236 = arith.constant dense<0.000000e+00> : vector<1x512xf32>
    %265 = tpu.matmul %262, %264, %cst_236 {dimension_numbers = #tpu.dot_dimension_numbers<[1], [0], [0], [1], [0, 0, 1, 1], [], []>} : vector<1x50xf32>, vector<50x512xf32>, vector<1x512xf32> -> vector<1x512xf32>
    %266 = arith.addf %261, %265 : vector<1x512xf32>
    %267 = vector.extract_strided_slice %220 {offsets = [9, 0], sizes = [1, 50], strides = [1, 1]} : vector<16x50xf32> to vector<1x50xf32>
    %c9_237 = arith.constant 9 : index
    %c0_238 = arith.constant 0 : index
    %c0_239 = arith.constant 0 : index
    %268 = vector.load %arg7[%c9_237, %c0_238, %c0_239] : memref<16x50x512xf32, #tpu.memory_space<vmem>>, vector<1x50x512xf32>
    %269 = vector.shape_cast %268 : vector<1x50x512xf32> to vector<50x512xf32>
    %cst_240 = arith.constant dense<0.000000e+00> : vector<1x512xf32>
    %270 = tpu.matmul %267, %269, %cst_240 {dimension_numbers = #tpu.dot_dimension_numbers<[1], [0], [0], [1], [0, 0, 1, 1], [], []>} : vector<1x50xf32>, vector<50x512xf32>, vector<1x512xf32> -> vector<1x512xf32>
    %271 = arith.addf %266, %270 : vector<1x512xf32>
    %272 = vector.extract_strided_slice %220 {offsets = [10, 0], sizes = [1, 50], strides = [1, 1]} : vector<16x50xf32> to vector<1x50xf32>
    %c10_241 = arith.constant 10 : index
    %c0_242 = arith.constant 0 : index
    %c0_243 = arith.constant 0 : index
    %273 = vector.load %arg7[%c10_241, %c0_242, %c0_243] : memref<16x50x512xf32, #tpu.memory_space<vmem>>, vector<1x50x512xf32>
    %274 = vector.shape_cast %273 : vector<1x50x512xf32> to vector<50x512xf32>
    %cst_244 = arith.constant dense<0.000000e+00> : vector<1x512xf32>
    %275 = tpu.matmul %272, %274, %cst_244 {dimension_numbers = #tpu.dot_dimension_numbers<[1], [0], [0], [1], [0, 0, 1, 1], [], []>} : vector<1x50xf32>, vector<50x512xf32>, vector<1x512xf32> -> vector<1x512xf32>
    %276 = arith.addf %271, %275 : vector<1x512xf32>
    %277 = vector.extract_strided_slice %220 {offsets = [11, 0], sizes = [1, 50], strides = [1, 1]} : vector<16x50xf32> to vector<1x50xf32>
    %c11_245 = arith.constant 11 : index
    %c0_246 = arith.constant 0 : index
    %c0_247 = arith.constant 0 : index
    %278 = vector.load %arg7[%c11_245, %c0_246, %c0_247] : memref<16x50x512xf32, #tpu.memory_space<vmem>>, vector<1x50x512xf32>
    %279 = vector.shape_cast %278 : vector<1x50x512xf32> to vector<50x512xf32>
    %cst_248 = arith.constant dense<0.000000e+00> : vector<1x512xf32>
    %280 = tpu.matmul %277, %279, %cst_248 {dimension_numbers = #tpu.dot_dimension_numbers<[1], [0], [0], [1], [0, 0, 1, 1], [], []>} : vector<1x50xf32>, vector<50x512xf32>, vector<1x512xf32> -> vector<1x512xf32>
    %281 = arith.addf %276, %280 : vector<1x512xf32>
    %282 = vector.extract_strided_slice %220 {offsets = [12, 0], sizes = [1, 50], strides = [1, 1]} : vector<16x50xf32> to vector<1x50xf32>
    %c12_249 = arith.constant 12 : index
    %c0_250 = arith.constant 0 : index
    %c0_251 = arith.constant 0 : index
    %283 = vector.load %arg7[%c12_249, %c0_250, %c0_251] : memref<16x50x512xf32, #tpu.memory_space<vmem>>, vector<1x50x512xf32>
    %284 = vector.shape_cast %283 : vector<1x50x512xf32> to vector<50x512xf32>
    %cst_252 = arith.constant dense<0.000000e+00> : vector<1x512xf32>
    %285 = tpu.matmul %282, %284, %cst_252 {dimension_numbers = #tpu.dot_dimension_numbers<[1], [0], [0], [1], [0, 0, 1, 1], [], []>} : vector<1x50xf32>, vector<50x512xf32>, vector<1x512xf32> -> vector<1x512xf32>
    %286 = arith.addf %281, %285 : vector<1x512xf32>
    %287 = vector.extract_strided_slice %220 {offsets = [13, 0], sizes = [1, 50], strides = [1, 1]} : vector<16x50xf32> to vector<1x50xf32>
    %c13_253 = arith.constant 13 : index
    %c0_254 = arith.constant 0 : index
    %c0_255 = arith.constant 0 : index
    %288 = vector.load %arg7[%c13_253, %c0_254, %c0_255] : memref<16x50x512xf32, #tpu.memory_space<vmem>>, vector<1x50x512xf32>
    %289 = vector.shape_cast %288 : vector<1x50x512xf32> to vector<50x512xf32>
    %cst_256 = arith.constant dense<0.000000e+00> : vector<1x512xf32>
    %290 = tpu.matmul %287, %289, %cst_256 {dimension_numbers = #tpu.dot_dimension_numbers<[1], [0], [0], [1], [0, 0, 1, 1], [], []>} : vector<1x50xf32>, vector<50x512xf32>, vector<1x512xf32> -> vector<1x512xf32>
    %291 = arith.addf %286, %290 : vector<1x512xf32>
    %292 = vector.extract_strided_slice %220 {offsets = [14, 0], sizes = [1, 50], strides = [1, 1]} : vector<16x50xf32> to vector<1x50xf32>
    %c14_257 = arith.constant 14 : index
    %c0_258 = arith.constant 0 : index
    %c0_259 = arith.constant 0 : index
    %293 = vector.load %arg7[%c14_257, %c0_258, %c0_259] : memref<16x50x512xf32, #tpu.memory_space<vmem>>, vector<1x50x512xf32>
    %294 = vector.shape_cast %293 : vector<1x50x512xf32> to vector<50x512xf32>
    %cst_260 = arith.constant dense<0.000000e+00> : vector<1x512xf32>
    %295 = tpu.matmul %292, %294, %cst_260 {dimension_numbers = #tpu.dot_dimension_numbers<[1], [0], [0], [1], [0, 0, 1, 1], [], []>} : vector<1x50xf32>, vector<50x512xf32>, vector<1x512xf32> -> vector<1x512xf32>
    %296 = arith.addf %291, %295 : vector<1x512xf32>
    %297 = vector.extract_strided_slice %220 {offsets = [15, 0], sizes = [1, 50], strides = [1, 1]} : vector<16x50xf32> to vector<1x50xf32>
    %c15_261 = arith.constant 15 : index
    %c0_262 = arith.constant 0 : index
    %c0_263 = arith.constant 0 : index
    %298 = vector.load %arg7[%c15_261, %c0_262, %c0_263] : memref<16x50x512xf32, #tpu.memory_space<vmem>>, vector<1x50x512xf32>
    %299 = vector.shape_cast %298 : vector<1x50x512xf32> to vector<50x512xf32>
    %cst_264 = arith.constant dense<0.000000e+00> : vector<1x512xf32>
    %300 = tpu.matmul %297, %299, %cst_264 {dimension_numbers = #tpu.dot_dimension_numbers<[1], [0], [0], [1], [0, 0, 1, 1], [], []>} : vector<1x50xf32>, vector<50x512xf32>, vector<1x512xf32> -> vector<1x512xf32>
    %301 = arith.addf %296, %300 : vector<1x512xf32>
    %cst_265 = arith.constant 0.000000e+00 : f32
    %302 = vector.broadcast %cst_265 : f32 to vector<1x512xf32>
    %303 = arith.maximumf %301, %302 : vector<1x512xf32>
    %c0_266 = arith.constant 0 : index
    %c0_267 = arith.constant 0 : index
    %304 = vector.load %arg10[%c0_266, %c0_267] : memref<1x128xf32, #tpu.memory_space<vmem>>, vector<1x128xf32>
    %305 = vector.extract_strided_slice %303 {offsets = [0, 0], sizes = [1, 128], strides = [1, 1]} : vector<1x512xf32> to vector<1x128xf32>
    %c0_268 = arith.constant 0 : index
    %c0_269 = arith.constant 0 : index
    %306 = vector.load %arg9[%c0_268, %c0_269] : memref<512x128xf32, #tpu.memory_space<vmem>>, vector<128x128xf32>
    %cst_270 = arith.constant dense<0.000000e+00> : vector<1x128xf32>
    %307 = tpu.matmul %305, %306, %cst_270 {dimension_numbers = #tpu.dot_dimension_numbers<[1], [0], [0], [1], [0, 0, 1, 1], [], []>} : vector<1x128xf32>, vector<128x128xf32>, vector<1x128xf32> -> vector<1x128xf32>
    %308 = arith.addf %304, %307 : vector<1x128xf32>
    %309 = vector.extract_strided_slice %303 {offsets = [0, 128], sizes = [1, 128], strides = [1, 1]} : vector<1x512xf32> to vector<1x128xf32>
    %c128 = arith.constant 128 : index
    %c0_271 = arith.constant 0 : index
    %310 = vector.load %arg9[%c128, %c0_271] : memref<512x128xf32, #tpu.memory_space<vmem>>, vector<128x128xf32>
    %cst_272 = arith.constant dense<0.000000e+00> : vector<1x128xf32>
    %311 = tpu.matmul %309, %310, %cst_272 {dimension_numbers = #tpu.dot_dimension_numbers<[1], [0], [0], [1], [0, 0, 1, 1], [], []>} : vector<1x128xf32>, vector<128x128xf32>, vector<1x128xf32> -> vector<1x128xf32>
    %312 = arith.addf %308, %311 : vector<1x128xf32>
    %313 = vector.extract_strided_slice %303 {offsets = [0, 256], sizes = [1, 128], strides = [1, 1]} : vector<1x512xf32> to vector<1x128xf32>
    %c256 = arith.constant 256 : index
    %c0_273 = arith.constant 0 : index
    %314 = vector.load %arg9[%c256, %c0_273] : memref<512x128xf32, #tpu.memory_space<vmem>>, vector<128x128xf32>
    %cst_274 = arith.constant dense<0.000000e+00> : vector<1x128xf32>
    %315 = tpu.matmul %313, %314, %cst_274 {dimension_numbers = #tpu.dot_dimension_numbers<[1], [0], [0], [1], [0, 0, 1, 1], [], []>} : vector<1x128xf32>, vector<128x128xf32>, vector<1x128xf32> -> vector<1x128xf32>
    %316 = arith.addf %312, %315 : vector<1x128xf32>
    %317 = vector.extract_strided_slice %303 {offsets = [0, 384], sizes = [1, 128], strides = [1, 1]} : vector<1x512xf32> to vector<1x128xf32>
    %c384 = arith.constant 384 : index
    %c0_275 = arith.constant 0 : index
    %318 = vector.load %arg9[%c384, %c0_275] : memref<512x128xf32, #tpu.memory_space<vmem>>, vector<128x128xf32>
    %cst_276 = arith.constant dense<0.000000e+00> : vector<1x128xf32>
    %319 = tpu.matmul %317, %318, %cst_276 {dimension_numbers = #tpu.dot_dimension_numbers<[1], [0], [0], [1], [0, 0, 1, 1], [], []>} : vector<1x128xf32>, vector<128x128xf32>, vector<1x128xf32> -> vector<1x128xf32>
    %320 = arith.addf %316, %319 : vector<1x128xf32>
    %cst_277 = arith.constant dense<0xFF800000> : vector<1xf32>
    %321 = vector.multi_reduction <maximumf>, %320, %cst_277 [1] : vector<1x128xf32> to vector<1xf32>
    %322 = vector.shape_cast %321 : vector<1xf32> to vector<1x1xf32>
    %323 = vector.broadcast %322 : vector<1x1xf32> to vector<1x128xf32>
    %324 = arith.subf %320, %323 : vector<1x128xf32>
    %325 = math.exp %324 : vector<1x128xf32>
    %cst_278 = arith.constant dense<0.000000e+00> : vector<1xf32>
    %326 = vector.multi_reduction <add>, %325, %cst_278 [1] : vector<1x128xf32> to vector<1xf32>
    %327 = vector.shape_cast %326 : vector<1xf32> to vector<1x1xf32>
    %328 = tpu.reciprocal %327 {approx = true} : vector<1x1xf32> -> vector<1x1xf32>
    %329 = vector.broadcast %328 : vector<1x1xf32> to vector<1x128xf32>
    %330 = arith.mulf %325, %329 : vector<1x128xf32>
    %c0_279 = arith.constant 0 : index
    %c0_280 = arith.constant 0 : index
    %c0_281 = arith.constant 0 : index
    %331 = vector.load %arg11[%c0_279, %c0_280, %c0_281] : memref<1x1x128xf32, #tpu.memory_space<vmem>>, vector<1x1x128xf32>
    %332 = vector.shape_cast %331 : vector<1x1x128xf32> to vector<1x128xf32>
    %333 = vector.shape_cast %330 : vector<1x128xf32> to vector<1x1x128xf32>
    tpu.vector_store %arg11[%c0_279, %c0_280, %c0_281], %333 {strides = array<i32>} : memref<1x1x128xf32, #tpu.memory_space<vmem>>, vector<1x1x128xf32>,
    return
  }
  func.func @transform_0(%arg0: i32) -> (i32, i32, i32) {
    %c0_i32 = arith.constant 0 : i32
    %c0_i32_0 = arith.constant 0 : i32
    %c0_i32_1 = arith.constant 0 : i32
    return %arg0, %c0_i32, %c0_i32_0 : i32, i32, i32
  }
  func.func @transform_1(%arg0: i32) -> (i32, i32) {
    %c0_i32 = arith.constant 0 : i32
    %c0_i32_0 = arith.constant 0 : i32
    %c0_i32_1 = arith.constant 0 : i32
    return %c0_i32, %c0_i32_0 : i32, i32
  }
  func.func @transform_2(%arg0: i32) -> (i32, i32) {
    %c0_i32 = arith.constant 0 : i32
    %c0_i32_0 = arith.constant 0 : i32
    %c0_i32_1 = arith.constant 0 : i32
    return %c0_i32, %c0_i32_0 : i32, i32
  }
  func.func @transform_3(%arg0: i32) -> (i32, i32, i32) {
    %c0_i32 = arith.constant 0 : i32
    %c0_i32_0 = arith.constant 0 : i32
    %c0_i32_1 = arith.constant 0 : i32
    %c0_i32_2 = arith.constant 0 : i32
    return %c0_i32, %c0_i32_0, %c0_i32_1 : i32, i32, i32
  }
  func.func @transform_4(%arg0: i32) -> (i32, i32, i32) {
    %c0_i32 = arith.constant 0 : i32
    %c0_i32_0 = arith.constant 0 : i32
    %c0_i32_1 = arith.constant 0 : i32
    %c0_i32_2 = arith.constant 0 : i32
    return %c0_i32, %c0_i32_0, %c0_i32_1 : i32, i32, i32
  }
  func.func @transform_5(%arg0: i32) -> (i32, i32) {
    %c0_i32 = arith.constant 0 : i32
    %c0_i32_0 = arith.constant 0 : i32
    %c0_i32_1 = arith.constant 0 : i32
    return %c0_i32, %c0_i32_0 : i32, i32
  }
  func.func @transform_6(%arg0: i32) -> (i32, i32, i32) {
    %c0_i32 = arith.constant 0 : i32
    %c0_i32_0 = arith.constant 0 : i32
    %c0_i32_1 = arith.constant 0 : i32
    %c0_i32_2 = arith.constant 0 : i32
    return %c0_i32, %c0_i32_0, %c0_i32_1 : i32, i32, i32
  }
  func.func @transform_7(%arg0: i32) -> (i32, i32) {
    %c0_i32 = arith.constant 0 : i32
    %c0_i32_0 = arith.constant 0 : i32
    %c0_i32_1 = arith.constant 0 : i32
    return %c0_i32, %c0_i32_0 : i32, i32
  }
  func.func @transform_8(%arg0: i32) -> (i32, i32) {
    %c0_i32 = arith.constant 0 : i32
    %c0_i32_0 = arith.constant 0 : i32
    %c0_i32_1 = arith.constant 0 : i32
    return %c0_i32, %c0_i32_0 : i32, i32
  }
  func.func @transform_9(%arg0: i32) -> (i32, i32) {
    %c0_i32 = arith.constant 0 : i32
    %c0_i32_0 = arith.constant 0 : i32
    %c0_i32_1 = arith.constant 0 : i32
    return %c0_i32, %c0_i32_0 : i32, i32
  }
  func.func @transform_10(%arg0: i32) -> (i32, i32, i32) {
    %c0_i32 = arith.constant 0 : i32
    %c0_i32_0 = arith.constant 0 : i32
    %c0_i32_1 = arith.constant 0 : i32
    return %arg0, %c0_i32, %c0_i32_0 : i32, i32, i32
  }
}

</mosaic_0001>

<llo_original>
// kernel: lenet_forward.1
$region0: #{lenet_forward.1}
  #allocation0 [shape = 'u32[]', space=smem, size = 0x4, offset = 0x4, fixed_abs, tag = 'smem constant byte address 0x4 - core index']
  #allocation1 [shape = 'u32[72,128]{1,0:T(1,128)}', space=vmem, size = 0x9000, scoped, tag = 'internal scratch']
  %s0 = inlined_call_operand.vmem [shape: f32[2,576,25], index: 0, kind: input, shape index: {}]
  %s1 = inlined_call_operand.vmem [shape: f32[25,20], index: 1, kind: input, shape index: {}]
  %s2 = inlined_call_operand.vmem [shape: f32[1,20], index: 2, kind: input, shape index: {}]
  %s3 = inlined_call_operand.vmem [shape: f32[25,64,144], index: 3, kind: input, shape index: {}]
  %s4 = inlined_call_operand.vmem [shape: f32[25,20,50], index: 4, kind: input, shape index: {}]
  %s5 = inlined_call_operand.vmem [shape: f32[1,50], index: 5, kind: input, shape index: {}]
  %s6 = inlined_call_operand.vmem [shape: f32[16,50,512], index: 6, kind: input, shape index: {}]
  %s7 = inlined_call_operand.vmem [shape: f32[1,512], index: 7, kind: input, shape index: {}]
  %s8 = inlined_call_operand.vmem [shape: f32[512,128], index: 8, kind: input, shape index: {}]
  %s9 = inlined_call_operand.vmem [shape: f32[1,128], index: 9, kind: input, shape index: {}]
  %s10 = inlined_call_operand.hbm [shape: f32[2,1,128], index: 10, kind: output, shape index: {}]
  %s11 = sld [smem:[#allocation0]]
  $region73: #{lenet_forward.1} parent=0
    _
  %s13 = ssub.s32 1, %s11
  %s14 = scalar_select 0, %s13, %s11
  $region1: #{lenet_forward.1} parent=0
    #allocation2 [shape = 'u8[1024]{0}', space=vmem, size = 0x400, scoped, tag = 'output window, operand 0']
    #allocation3 [shape = 's32[2]{0}', space=sflag, size = 0x8, scoped, tag = 'scoped memory for lenet_forward.1']
    %15 = vsyncpa [#allocation3], 0
    %s16 = scalar_lea.sflag [#allocation3], 1
    %17 = vsyncpa %s16, 0
    loop: start=0, step=1, limit=4
    $region2: #{lenet_forward.1} parent=1 // loop_pre_header
      _
    $region3: #{lenet_forward.1} parent=1 // loop_header
      %s19 = sphi 0, %s23
      %p20 = scmp.ge.s32.totalorder %s19, 4
      %s29 = sphi 0, %s31
      %s32 = sphi 0, %s29
      %s33 = sphi 0, %s32
      %s49 = sphi 0, %s33
      %s53 = sphi 0, %s53
      %s55 = sphi 0, %s53
      %s56 = sphi 0, %s55
      %s70 = sphi 0, %s56
      %s74 = sphi 0, %s74
      %s76 = sphi 0, %s74
      %s77 = sphi 0, %s76
      %s91 = sphi 0, %s77
      %s95 = sphi 0, %s95
      %s97 = sphi 0, %s95
      %s98 = sphi 0, %s97
      %s112 = sphi 0, %s98
      %s116 = sphi 0, %s116
      %s118 = sphi 0, %s116
      %s119 = sphi 0, %s118
      %s133 = sphi 0, %s119
      %s137 = sphi 0, %s137
      %s139 = sphi 0, %s137
      %s140 = sphi 0, %s139
      %s154 = sphi 0, %s140
      %s158 = sphi 0, %s158
      %s160 = sphi 0, %s158
      %s161 = sphi 0, %s160
      %s175 = sphi 0, %s161
      %s179 = sphi 0, %s179
      %s181 = sphi 0, %s179
      %s182 = sphi 0, %s181
      %s196 = sphi 0, %s182
      %s200 = sphi 0, %s200
      %s202 = sphi 0, %s200
      %s203 = sphi 0, %s202
      %s217 = sphi 0, %s203
      %s221 = sphi 0, %s221
      %s223 = sphi 0, %s221
      %s224 = sphi 0, %s223
      %s238 = sphi 0, %s224
      %s244 = sphi 0, %s246
      %s247 = sphi 0, %s244
      %s248 = sphi 0, %s247
      %s264 = sphi 0, %s248
    $region4: #{lenet_forward.1} parent=1 // loop_header_branch
      %22 = sbr.rel (%p20) target = $region8
    $region5: #{lenet_forward.1} parent=1 // loop_body
      %s24 = ssub.s32 %s19, 1
      %s25 = ssub.s32 %s19, 2
      %s26 = sadd.s32 %s19, 1
      %s27 = ssub.s32 %s19, %s26
      %p28 = scmp.eq.s32.totalorder %s27, 0
      %s30 = sadd.s32 %s29, 1
      %s31 = scalar_select %p28, %s29, %s30
      %p34 = pneg %p28
      %p35 = scmp.eq.s32.totalorder %s19, 1
      %p36 = por %p34, %p35
      %p37 = scmp.ne.s32.totalorder %s29, %s32
      %p38 = scmp.eq.s32.totalorder %s19, 0
      %p39 = por %p37, %p38
      %p40 = scmp.ne.s32.totalorder %s29, %s32
      %p41 = scmp.eq.s32.totalorder %s24, 1
      %p42 = por %p40, %p41
      %p43 = scmp.ne.s32.totalorder %s32, %s33
      %p44 = scmp.eq.s32.totalorder %s24, 0
      %p45 = por %p43, %p44
      %p46 = scmp.ne.s32.totalorder %s32, %s33
      %p47 = scmp.eq.s32.totalorder %s25, 1
      %p48 = por %p46, %p47
      %p50 = scmp.ne.s32.totalorder %s33, %s49
      %p51 = scmp.eq.s32.totalorder %s25, 0
      %p52 = por %p50, %p51
      %s54 = sadd.s32 %s53, 1
      %p57 = scmp.eq.s32.totalorder %s19, 1
      %p58 = scmp.ne.s32.totalorder %s53, %s55
      %p59 = scmp.eq.s32.totalorder %s19, 0
      %p60 = por %p58, %p59
      %p61 = scmp.ne.s32.totalorder %s53, %s55
      %p62 = scmp.eq.s32.totalorder %s24, 1
      %p63 = por %p61, %p62
      %p64 = scmp.ne.s32.totalorder %s55, %s56
      %p65 = scmp.eq.s32.totalorder %s24, 0
      %p66 = por %p64, %p65
      %p67 = scmp.ne.s32.totalorder %s55, %s56
      %p68 = scmp.eq.s32.totalorder %s25, 1
      %p69 = por %p67, %p68
      %p71 = scmp.ne.s32.totalorder %s56, %s70
      %p72 = scmp.eq.s32.totalorder %s25, 0
      %p73 = por %p71, %p72
      %s75 = sadd.s32 %s74, 1
      %p78 = scmp.eq.s32.totalorder %s19, 1
      %p79 = scmp.ne.s32.totalorder %s74, %s76
      %p80 = scmp.eq.s32.totalorder %s19, 0
      %p81 = por %p79, %p80
      %p82 = scmp.ne.s32.totalorder %s74, %s76
      %p83 = scmp.eq.s32.totalorder %s24, 1
      %p84 = por %p82, %p83
      %p85 = scmp.ne.s32.totalorder %s76, %s77
      %p86 = scmp.eq.s32.totalorder %s24, 0
      %p87 = por %p85, %p86
      %p88 = scmp.ne.s32.totalorder %s76, %s77
      %p89 = scmp.eq.s32.totalorder %s25, 1
      %p90 = por %p88, %p89
      %p92 = scmp.ne.s32.totalorder %s77, %s91
      %p93 = scmp.eq.s32.totalorder %s25, 0
      %p94 = por %p92, %p93
      %s96 = sadd.s32 %s95, 1
      %p99 = scmp.eq.s32.totalorder %s19, 1
      %p100 = scmp.ne.s32.totalorder %s95, %s97
      %p101 = scmp.eq.s32.totalorder %s19, 0
      %p102 = por %p100, %p101
      %p103 = scmp.ne.s32.totalorder %s95, %s97
      %p104 = scmp.eq.s32.totalorder %s24, 1
      %p105 = por %p103, %p104
      %p106 = scmp.ne.s32.totalorder %s97, %s98
      %p107 = scmp.eq.s32.totalorder %s24, 0
      %p108 = por %p106, %p107
      %p109 = scmp.ne.s32.totalorder %s97, %s98
      %p110 = scmp.eq.s32.totalorder %s25, 1
      %p111 = por %p109, %p110
      %p113 = scmp.ne.s32.totalorder %s98, %s112
      %p114 = scmp.eq.s32.totalorder %s25, 0
      %p115 = por %p113, %p114
      %s117 = sadd.s32 %s116, 1
      %p120 = scmp.eq.s32.totalorder %s19, 1
      %p121 = scmp.ne.s32.totalorder %s116, %s118
      %p122 = scmp.eq.s32.totalorder %s19, 0
      %p123 = por %p121, %p122
      %p124 = scmp.ne.s32.totalorder %s116, %s118
      %p125 = scmp.eq.s32.totalorder %s24, 1
      %p126 = por %p124, %p125
      %p127 = scmp.ne.s32.totalorder %s118, %s119
      %p128 = scmp.eq.s32.totalorder %s24, 0
      %p129 = por %p127, %p128
      %p130 = scmp.ne.s32.totalorder %s118, %s119
      %p131 = scmp.eq.s32.totalorder %s25, 1
      %p132 = por %p130, %p131
      %p134 = scmp.ne.s32.totalorder %s119, %s133
      %p135 = scmp.eq.s32.totalorder %s25, 0
      %p136 = por %p134, %p135
      %s138 = sadd.s32 %s137, 1
      %p141 = scmp.eq.s32.totalorder %s19, 1
      %p142 = scmp.ne.s32.totalorder %s137, %s139
      %p143 = scmp.eq.s32.totalorder %s19, 0
      %p144 = por %p142, %p143
      %p145 = scmp.ne.s32.totalorder %s137, %s139
      %p146 = scmp.eq.s32.totalorder %s24, 1
      %p147 = por %p145, %p146
      %p148 = scmp.ne.s32.totalorder %s139, %s140
      %p149 = scmp.eq.s32.totalorder %s24, 0
      %p150 = por %p148, %p149
      %p151 = scmp.ne.s32.totalorder %s139, %s140
      %p152 = scmp.eq.s32.totalorder %s25, 1
      %p153 = por %p151, %p152
      %p155 = scmp.ne.s32.totalorder %s140, %s154
      %p156 = scmp.eq.s32.totalorder %s25, 0
      %p157 = por %p155, %p156
      %s159 = sadd.s32 %s158, 1
      %p162 = scmp.eq.s32.totalorder %s19, 1
      %p163 = scmp.ne.s32.totalorder %s158, %s160
      %p164 = scmp.eq.s32.totalorder %s19, 0
      %p165 = por %p163, %p164
      %p166 = scmp.ne.s32.totalorder %s158, %s160
      %p167 = scmp.eq.s32.totalorder %s24, 1
      %p168 = por %p166, %p167
      %p169 = scmp.ne.s32.totalorder %s160, %s161
      %p170 = scmp.eq.s32.totalorder %s24, 0
      %p171 = por %p169, %p170
      %p172 = scmp.ne.s32.totalorder %s160, %s161
      %p173 = scmp.eq.s32.totalorder %s25, 1
      %p174 = por %p172, %p173
      %p176 = scmp.ne.s32.totalorder %s161, %s175
      %p177 = scmp.eq.s32.totalorder %s25, 0
      %p178 = por %p176, %p177
      %s180 = sadd.s32 %s179, 1
      %p183 = scmp.eq.s32.totalorder %s19, 1
      %p184 = scmp.ne.s32.totalorder %s179, %s181
      %p185 = scmp.eq.s32.totalorder %s19, 0
      %p186 = por %p184, %p185
      %p187 = scmp.ne.s32.totalorder %s179, %s181
      %p188 = scmp.eq.s32.totalorder %s24, 1
      %p189 = por %p187, %p188
      %p190 = scmp.ne.s32.totalorder %s181, %s182
      %p191 = scmp.eq.s32.totalorder %s24, 0
      %p192 = por %p190, %p191
      %p193 = scmp.ne.s32.totalorder %s181, %s182
      %p194 = scmp.eq.s32.totalorder %s25, 1
      %p195 = por %p193, %p194
      %p197 = scmp.ne.s32.totalorder %s182, %s196
      %p198 = scmp.eq.s32.totalorder %s25, 0
      %p199 = por %p197, %p198
      %s201 = sadd.s32 %s200, 1
      %p204 = scmp.eq.s32.totalorder %s19, 1
      %p205 = scmp.ne.s32.totalorder %s200, %s202
      %p206 = scmp.eq.s32.totalorder %s19, 0
      %p207 = por %p205, %p206
      %p208 = scmp.ne.s32.totalorder %s200, %s202
      %p209 = scmp.eq.s32.totalorder %s24, 1
      %p210 = por %p208, %p209
      %p211 = scmp.ne.s32.totalorder %s202, %s203
      %p212 = scmp.eq.s32.totalorder %s24, 0
      %p213 = por %p211, %p212
      %p214 = scmp.ne.s32.totalorder %s202, %s203
      %p215 = scmp.eq.s32.totalorder %s25, 1
      %p216 = por %p214, %p215
      %p218 = scmp.ne.s32.totalorder %s203, %s217
      %p219 = scmp.eq.s32.totalorder %s25, 0
      %p220 = por %p218, %p219
      %s222 = sadd.s32 %s221, 1
      %p225 = scmp.eq.s32.totalorder %s19, 1
      %p226 = scmp.ne.s32.totalorder %s221, %s223
      %p227 = scmp.eq.s32.totalorder %s19, 0
      %p228 = por %p226, %p227
      %p229 = scmp.ne.s32.totalorder %s221, %s223
      %p230 = scmp.eq.s32.totalorder %s24, 1
      %p231 = por %p229, %p230
      %p232 = scmp.ne.s32.totalorder %s223, %s224
      %p233 = scmp.eq.s32.totalorder %s24, 0
      %p234 = por %p232, %p233
      %p235 = scmp.ne.s32.totalorder %s223, %s224
      %p236 = scmp.eq.s32.totalorder %s25, 1
      %p237 = por %p235, %p236
      %p239 = scmp.ne.s32.totalorder %s224, %s238
      %p240 = scmp.eq.s32.totalorder %s25, 0
      %p241 = por %p239, %p240
      %s242 = ssub.s32 %s19, %s26
      %p243 = scmp.eq.s32.totalorder %s242, 0
      %s245 = sadd.s32 %s244, 1
      %s246 = scalar_select %p243, %s244, %s245
      %p249 = pneg %p243
      %p250 = scmp.eq.s32.totalorder %s19, 1
      %p251 = por %p249, %p250
      %p252 = scmp.ne.s32.totalorder %s244, %s247
      %p253 = scmp.eq.s32.totalorder %s19, 0
      %p254 = por %p252, %p253
      %p255 = scmp.ne.s32.totalorder %s244, %s247
      %p256 = scmp.eq.s32.totalorder %s24, 1
      %p257 = por %p255, %p256
      %p258 = scmp.ne.s32.totalorder %s247, %s248
      %p259 = scmp.eq.s32.totalorder %s24, 0
      %p260 = por %p258, %p259
      %p261 = scmp.ne.s32.totalorder %s247, %s248
      %p262 = scmp.eq.s32.totalorder %s25, 1
      %p263 = por %p261, %p262
      %p265 = scmp.ne.s32.totalorder %s248, %s264
      %p266 = scmp.eq.s32.totalorder %s25, 0
      %p267 = por %p265, %p266
      %p268 = scmp.le.s32.totalorder 1, %s19
      %p269 = scmp.lt.s32.totalorder %s19, 3
      %p270 = pnand %p268, %p269
      %p271 = pneg %p270
      // Predicated region
      $region9: #{lenet_forward.1} parent=5 // pred_check
        _
      $region10: #{lenet_forward.1} parent=5 // pred_check_branch
        %273 = sbr.rel (%p270) target = $region12
      $region11: #{lenet_forward.1} parent=5 // pred_region
        %s274 = ssub.s32 %s19, 1
        // Predicated region
        $region13: #{lenet_forward.1} parent=11 // pred_check
          %p275 = pneg %p66
        $region14: #{lenet_forward.1} parent=11 // pred_check_branch
          %277 = sbr.rel (%p275) target = $region16
        $region15: #{lenet_forward.1} parent=11 // pred_region
          _
        $region16: #{lenet_forward.1} parent=11 // pred_fallthru
          _
        // Predicated region
        $region17: #{lenet_forward.1} parent=11 // pred_check
          %p278 = pneg %p87
        $region18: #{lenet_forward.1} parent=11 // pred_check_branch
          %280 = sbr.rel (%p278) target = $region20
        $region19: #{lenet_forward.1} parent=11 // pred_region
          _
        $region20: #{lenet_forward.1} parent=11 // pred_fallthru
          _
        // Predicated region
        $region21: #{lenet_forward.1} parent=11 // pred_check
          %p281 = pneg %p108
        $region22: #{lenet_forward.1} parent=11 // pred_check_branch
          %283 = sbr.rel (%p281) target = $region24
        $region23: #{lenet_forward.1} parent=11 // pred_region
          _
        $region24: #{lenet_forward.1} parent=11 // pred_fallthru
          _
        // Predicated region
        $region25: #{lenet_forward.1} parent=11 // pred_check
          %p284 = pneg %p129
        $region26: #{lenet_forward.1} parent=11 // pred_check_branch
          %286 = sbr.rel (%p284) target = $region28
        $region27: #{lenet_forward.1} parent=11 // pred_region
          _
        $region28: #{lenet_forward.1} parent=11 // pred_fallthru
          _
        // Predicated region
        $region29: #{lenet_forward.1} parent=11 // pred_check
          %p287 = pneg %p150
        $region30: #{lenet_forward.1} parent=11 // pred_check_branch
          %289 = sbr.rel (%p287) target = $region32
        $region31: #{lenet_forward.1} parent=11 // pred_region
          _
        $region32: #{lenet_forward.1} parent=11 // pred_fallthru
          _
        // Predicated region
        $region33: #{lenet_forward.1} parent=11 // pred_check
          %p290 = pneg %p171
        $region34: #{lenet_forward.1} parent=11 // pred_check_branch
          %292 = sbr.rel (%p290) target = $region36
        $region35: #{lenet_forward.1} parent=11 // pred_region
          _
        $region36: #{lenet_forward.1} parent=11 // pred_fallthru
          _
        // Predicated region
        $region37: #{lenet_forward.1} parent=11 // pred_check
          %p293 = pneg %p192
        $region38: #{lenet_forward.1} parent=11 // pred_check_branch
          %295 = sbr.rel (%p293) target = $region40
        $region39: #{lenet_forward.1} parent=11 // pred_region
          _
        $region40: #{lenet_forward.1} parent=11 // pred_fallthru
          _
        // Predicated region
        $region41: #{lenet_forward.1} parent=11 // pred_check
          %p296 = pneg %p213
        $region42: #{lenet_forward.1} parent=11 // pred_check_branch
          %298 = sbr.rel (%p296) target = $region44
        $region43: #{lenet_forward.1} parent=11 // pred_region
          _
        $region44: #{lenet_forward.1} parent=11 // pred_fallthru
          _
        // Predicated region
        $region45: #{lenet_forward.1} parent=11 // pred_check
          %p299 = pneg %p234
        $region46: #{lenet_forward.1} parent=11 // pred_check_branch
          %301 = sbr.rel (%p299) target = $region48
        $region47: #{lenet_forward.1} parent=11 // pred_region
          _
        $region48: #{lenet_forward.1} parent=11 // pred_fallthru
          _
      $region12: #{lenet_forward.1} parent=5 // pred_fallthru
        _
      %p302 = scmp.lt.s32.totalorder %s19, 2
      // Predicated region
      $region49: #{lenet_forward.1} parent=5 // pred_check
        %p303 = pneg %p302
      $region50: #{lenet_forward.1} parent=5 // pred_check_branch
        %305 = sbr.rel (%p303) target = $region52
      $region51: #{lenet_forward.1} parent=5 // pred_region
        // Predicated region
        $region53: #{lenet_forward.1} parent=51 // pred_check
          %p306 = pneg %p39
        $region54: #{lenet_forward.1} parent=51 // pred_check_branch
          %308 = sbr.rel (%p306) target = $region56
        $region55: #{lenet_forward.1} parent=51 // pred_region
          %p309 = scmp.lt.s32.totalorder %s19, 1
          %s310 = scalar_select %p309, %s19, 1
          %s311 = smul.addr %s310, 72
          %s312 = smul.addr %s311, 8
          %s313 = scalar_lea.vmem %s0, %s312
        $region56: #{lenet_forward.1} parent=51 // pred_fallthru
          _
      $region52: #{lenet_forward.1} parent=5 // pred_fallthru
        _
      %p314 = scmp.le.s32.totalorder 1, %s19
      %p315 = scmp.lt.s32.totalorder %s19, 3
      %p316 = pnand %p314, %p315
      %p317 = pneg %p316
      // Predicated region
      $region57: #{lenet_forward.1} parent=5 // pred_check
        _
      $region58: #{lenet_forward.1} parent=5 // pred_check_branch
        %319 = sbr.rel (%p316) target = $region60
      $region59: #{lenet_forward.1} parent=5 // pred_region
        %s320 = ssub.s32 %s19, 1
        %p321 = scmp.lt.s32.totalorder %s24, 1
        %s322 = scalar_select %p321, %s24, 1
        %s323 = smul.addr %s322, 72
        %s324 = smul.addr %s323, 8
        %s325 = scalar_lea.vmem %s0, %s324
        %p326 = pneg %p45
        %p327 = pneg %p42
        %p328 = pneg %p66
        %p329 = pneg %p63
        %p330 = pneg %p87
        %p331 = pneg %p84
        %p332 = pneg %p108
        %p333 = pneg %p105
        %p334 = pneg %p129
        %p335 = pneg %p126
        %p336 = pneg %p150
        %p337 = pneg %p147
        %p338 = pneg %p171
        %p339 = pneg %p168
        %p340 = pneg %p192
        %p341 = pneg %p189
        %p342 = pneg %p213
        %p343 = pneg %p210
        %p344 = pneg %p234
        %p345 = pneg %p231
        %p346 = pneg %p260
        %p347 = pneg %p257
        %s348 = sand.u32 %s247, 1
        %s349 = scalar_lea.sflag [#allocation3], %s348
        %s350 = sand.u32 %s247, 1
        %s351 = scalar_lea.vmem [#allocation2], %s350
        %p352 = scmp.lt.s32.totalorder %s24, 1
        %s353 = scalar_select %p352, %s24, 1
        %s354 = smul.addr %s353, 72
        %s355 = smul.addr %s354, 8
        %s356 = scalar_lea.vmem %s0, %s355
        %v357 = vld [vmem:[%s1] sm:$0xff]
        %v358 = vld [vmem:[%s1 + $0x8] sm:$0xff]
        %v359 = vld [vmem:[%s1 + $0x10] sm:$0xff]
        %v360 = vld [vmem:[%s1 + $0x18] sm:$0x1]
        %v361 = vld [vmem:[%s2] sm:$0x1]
        %v362 = vld [vmem:[%s356] sm:$0xff]
        %v363 = vld [vmem:[%s356 + $0x8] sm:$0xff]
        %v364 = vld [vmem:[%s356 + $0x10] sm:$0xff]
        %v365 = vld [vmem:[%s356 + $0x18] sm:$0xff]
        %v366 = vld [vmem:[%s356 + $0x20] sm:$0xff]
        %v367 = vld [vmem:[%s356 + $0x28] sm:$0xff]
        %v368 = vld [vmem:[%s356 + $0x30] sm:$0xff]
        %v369 = vld [vmem:[%s356 + $0x38] sm:$0xff]
        %v370 = vld [vmem:[%s356 + $0x40] sm:$0xff]
        %v371 = vld [vmem:[%s356 + $0x48] sm:$0xff]
        %v372 = vld [vmem:[%s356 + $0x50] sm:$0xff]
        %v373 = vld [vmem:[%s356 + $0x58] sm:$0xff]
        %v374 = vld [vmem:[%s356 + $0x60] sm:$0xff]
        %v375 = vld [vmem:[%s356 + $0x68] sm:$0xff]
        %v376 = vld [vmem:[%s356 + $0x70] sm:$0xff]
        %v377 = vld [vmem:[%s356 + $0x78] sm:$0xff]
        %v378 = vld [vmem:[%s356 + $0x80] sm:$0xff]
        %v379 = vld [vmem:[%s356 + $0x88] sm:$0xff]
        %v381 = vperm.slane %v361, 0
        %vm383 = vcmask 203776
        %v385 = vsel %vm383, %v362, 0
        %v388 = vsel %vm383, %v363, 0
        %v391 = vsel %vm383, %v364, 0
        %v394 = vsel %vm383, %v365, 0
        %v397 = vsel %vm383, %v366, 0
        %v400 = vsel %vm383, %v367, 0
        %v403 = vsel %vm383, %v368, 0
        %v406 = vsel %vm383, %v369, 0
        %v409 = vsel %vm383, %v370, 0
        %v412 = vsel %vm383, %v371, 0
        %v415 = vsel %vm383, %v372, 0
        %v418 = vsel %vm383, %v373, 0
        %v421 = vsel %vm383, %v374, 0
        %v424 = vsel %vm383, %v375, 0
        %v427 = vsel %vm383, %v376, 0
        %v430 = vsel %vm383, %v377, 0
        %v433 = vsel %vm383, %v378, 0
        %v436 = vsel %vm383, %v379, 0
        %vm438 = vcmask 1040384
        %v440 = vsel %vm438, %v360, 0
        %442 = vmatpush.msra.mxu0 0.0
        %443 = vmatpush.msra.mxu0 0.0
        %444 = vmatpush.msra.mxu0 0.0
        %445 = vmatpush.msra.mxu0 0.0
        %446 = vmatpush.msra.mxu0 0.0
        %447 = vmatpush.msra.mxu0 0.0
        %448 = vmatpush.msra.mxu0 0.0
        %449 = vmatpush.msra.mxu0 0.0
        %450 = vmatpush.msra.mxu0 0.0
        %451 = vmatpush.msra.mxu0 0.0
        %452 = vmatpush.msra.mxu0 0.0
        %453 = vmatpush.msra.mxu0 0.0
        %454 = vmatpush.msra.mxu0 %v440
        %455 = vmatpush.msra.mxu0 %v359
        %456 = vmatpush.msra.mxu0 %v358
        %457 = vmatpush.msra.mxu0 %v357
        %458 = vmatmul.f32.gmra.mxu0 %v385
        %v459 = vpop.f32.mrf.mxu0
        %v460 = vadd.f32 %v381, %v459
        %461 = vmatmul.f32.gmra.mxu0 %v388
        %v462 = vpop.f32.mrf.mxu0
        %v463 = vadd.f32 %v381, %v462
        %464 = vmatmul.f32.gmra.mxu0 %v391
        %v465 = vpop.f32.mrf.mxu0
        %v466 = vadd.f32 %v381, %v465
        %467 = vmatmul.f32.gmra.mxu0 %v394
        %v468 = vpop.f32.mrf.mxu0
        %v469 = vadd.f32 %v381, %v468
        %470 = vmatmul.f32.gmra.mxu0 %v397
        %v471 = vpop.f32.mrf.mxu0
        %v472 = vadd.f32 %v381, %v471
        %473 = vmatmul.f32.gmra.mxu0 %v400
        %v474 = vpop.f32.mrf.mxu0
        %v475 = vadd.f32 %v381, %v474
        %476 = vmatmul.f32.gmra.mxu0 %v403
        %v477 = vpop.f32.mrf.mxu0
        %v478 = vadd.f32 %v381, %v477
        %479 = vmatmul.f32.gmra.mxu0 %v406
        %v480 = vpop.f32.mrf.mxu0
        %v481 = vadd.f32 %v381, %v480
        %482 = vmatmul.f32.gmra.mxu0 %v409
        %v483 = vpop.f32.mrf.mxu0
        %v484 = vadd.f32 %v381, %v483
        %485 = vmatmul.f32.gmra.mxu0 %v412
        %v486 = vpop.f32.mrf.mxu0
        %v487 = vadd.f32 %v381, %v486
        %488 = vmatmul.f32.gmra.mxu0 %v415
        %v489 = vpop.f32.mrf.mxu0
        %v490 = vadd.f32 %v381, %v489
        %491 = vmatmul.f32.gmra.mxu0 %v418
        %v492 = vpop.f32.mrf.mxu0
        %v493 = vadd.f32 %v381, %v492
        %494 = vmatmul.f32.gmra.mxu0 %v421
        %v495 = vpop.f32.mrf.mxu0
        %v496 = vadd.f32 %v381, %v495
        %497 = vmatmul.f32.gmra.mxu0 %v424
        %v498 = vpop.f32.mrf.mxu0
        %v499 = vadd.f32 %v381, %v498
        %500 = vmatmul.f32.gmra.mxu0 %v427
        %v501 = vpop.f32.mrf.mxu0
        %v502 = vadd.f32 %v381, %v501
        %503 = vmatmul.f32.gmra.mxu0 %v430
        %v504 = vpop.f32.mrf.mxu0
        %v505 = vadd.f32 %v381, %v504
        %506 = vmatmul.f32.gmra.mxu0 %v433
        %v507 = vpop.f32.mrf.mxu0
        %v508 = vadd.f32 %v381, %v507
        %509 = vmatmul.f32.gmra.mxu0 %v436
        %v510 = vpop.f32.mrf.mxu0
        %v511 = vadd.f32 %v381, %v510
        %512 = vdwg.mxu0
        %v513 = vmax.f32 %v460, 0.0
        %v514 = vmax.f32 %v463, 0.0
        %v515 = vmax.f32 %v466, 0.0
        %v516 = vmax.f32 %v469, 0.0
        %v517 = vmax.f32 %v472, 0.0
        %v518 = vmax.f32 %v475, 0.0
        %v519 = vmax.f32 %v478, 0.0
        %v520 = vmax.f32 %v481, 0.0
        %v521 = vmax.f32 %v484, 0.0
        %v522 = vmax.f32 %v487, 0.0
        %v523 = vmax.f32 %v490, 0.0
        %v524 = vmax.f32 %v493, 0.0
        %v525 = vmax.f32 %v496, 0.0
        %v526 = vmax.f32 %v499, 0.0
        %v527 = vmax.f32 %v502, 0.0
        %v528 = vmax.f32 %v505, 0.0
        %v529 = vmax.f32 %v508, 0.0
        %v530 = vmax.f32 %v511, 0.0
        %v531 = vld [vmem:[%s356 + $0x90] sm:$0xff]
        %v532 = vld [vmem:[%s356 + $0x98] sm:$0xff]
        %v533 = vld [vmem:[%s356 + $0xa0] sm:$0xff]
        %v534 = vld [vmem:[%s356 + $0xa8] sm:$0xff]
        %v535 = vld [vmem:[%s356 + $0xb0] sm:$0xff]
        %v536 = vld [vmem:[%s356 + $0xb8] sm:$0xff]
        %v537 = vld [vmem:[%s356 + $0xc0] sm:$0xff]
        %v538 = vld [vmem:[%s356 + $0xc8] sm:$0xff]
        %v539 = vld [vmem:[%s356 + $0xd0] sm:$0xff]
        %v540 = vld [vmem:[%s356 + $0xd8] sm:$0xff]
        %v541 = vld [vmem:[%s356 + $0xe0] sm:$0xff]
        %v542 = vld [vmem:[%s356 + $0xe8] sm:$0xff]
        %v543 = vld [vmem:[%s356 + $0xf0] sm:$0xff]
        %v544 = vld [vmem:[%s356 + $0xf8] sm:$0xff]
        %v545 = vld [vmem:[%s356 + $0x100] sm:$0xff]
        %v546 = vld [vmem:[%s356 + $0x108] sm:$0xff]
        %v547 = vld [vmem:[%s356 + $0x110] sm:$0xff]
        %v548 = vld [vmem:[%s356 + $0x118] sm:$0xff]
        %v550 = vsel %vm383, %v531, 0
        %v553 = vsel %vm383, %v532, 0
        %v556 = vsel %vm383, %v533, 0
        %v559 = vsel %vm383, %v534, 0
        %v562 = vsel %vm383, %v535, 0
        %v565 = vsel %vm383, %v536, 0
        %v568 = vsel %vm383, %v537, 0
        %v571 = vsel %vm383, %v538, 0
        %v574 = vsel %vm383, %v539, 0
        %v577 = vsel %vm383, %v540, 0
        %v580 = vsel %vm383, %v541, 0
        %v583 = vsel %vm383, %v542, 0
        %v586 = vsel %vm383, %v543, 0
        %v589 = vsel %vm383, %v544, 0
        %v592 = vsel %vm383, %v545, 0
        %v595 = vsel %vm383, %v546, 0
        %v598 = vsel %vm383, %v547, 0
        %v601 = vsel %vm383, %v548, 0
        %603 = vmatpush.msra.mxu0 0.0
        %604 = vmatpush.msra.mxu0 0.0
        %605 = vmatpush.msra.mxu0 0.0
        %606 = vmatpush.msra.mxu0 0.0
        %607 = vmatpush.msra.mxu0 0.0
        %608 = vmatpush.msra.mxu0 0.0
        %609 = vmatpush.msra.mxu0 0.0
        %610 = vmatpush.msra.mxu0 0.0
        %611 = vmatpush.msra.mxu0 0.0
        %612 = vmatpush.msra.mxu0 0.0
        %613 = vmatpush.msra.mxu0 0.0
        %614 = vmatpush.msra.mxu0 0.0
        %615 = vmatpush.msra.mxu0 %v440
        %616 = vmatpush.msra.mxu0 %v359
        %617 = vmatpush.msra.mxu0 %v358
        %618 = vmatpush.msra.mxu0 %v357
        %619 = vmatmul.f32.gmra.mxu0 %v550
        %v620 = vpop.f32.mrf.mxu0
        %v621 = vadd.f32 %v381, %v620
        %622 = vmatmul.f32.gmra.mxu0 %v553
        %v623 = vpop.f32.mrf.mxu0
        %v624 = vadd.f32 %v381, %v623
        %625 = vmatmul.f32.gmra.mxu0 %v556
        %v626 = vpop.f32.mrf.mxu0
        %v627 = vadd.f32 %v381, %v626
        %628 = vmatmul.f32.gmra.mxu0 %v559
        %v629 = vpop.f32.mrf.mxu0
        %v630 = vadd.f32 %v381, %v629
        %631 = vmatmul.f32.gmra.mxu0 %v562
        %v632 = vpop.f32.mrf.mxu0
        %v633 = vadd.f32 %v381, %v632
        %634 = vmatmul.f32.gmra.mxu0 %v565
        %v635 = vpop.f32.mrf.mxu0
        %v636 = vadd.f32 %v381, %v635
        %637 = vmatmul.f32.gmra.mxu0 %v568
        %v638 = vpop.f32.mrf.mxu0
        %v639 = vadd.f32 %v381, %v638
        %640 = vmatmul.f32.gmra.mxu0 %v571
        %v641 = vpop.f32.mrf.mxu0
        %v642 = vadd.f32 %v381, %v641
        %643 = vmatmul.f32.gmra.mxu0 %v574
        %v644 = vpop.f32.mrf.mxu0
        %v645 = vadd.f32 %v381, %v644
        %646 = vmatmul.f32.gmra.mxu0 %v577
        %v647 = vpop.f32.mrf.mxu0
        %v648 = vadd.f32 %v381, %v647
        %649 = vmatmul.f32.gmra.mxu0 %v580
        %v650 = vpop.f32.mrf.mxu0
        %v651 = vadd.f32 %v381, %v650
        %652 = vmatmul.f32.gmra.mxu0 %v583
        %v653 = vpop.f32.mrf.mxu0
        %v654 = vadd.f32 %v381, %v653
        %655 = vmatmul.f32.gmra.mxu0 %v586
        %v656 = vpop.f32.mrf.mxu0
        %v657 = vadd.f32 %v381, %v656
        %658 = vmatmul.f32.gmra.mxu0 %v589
        %v659 = vpop.f32.mrf.mxu0
        %v660 = vadd.f32 %v381, %v659
        %661 = vmatmul.f32.gmra.mxu0 %v592
        %v662 = vpop.f32.mrf.mxu0
        %v663 = vadd.f32 %v381, %v662
        %664 = vmatmul.f32.gmra.mxu0 %v595
        %v665 = vpop.f32.mrf.mxu0
        %v666 = vadd.f32 %v381, %v665
        %667 = vmatmul.f32.gmra.mxu0 %v598
        %v668 = vpop.f32.mrf.mxu0
        %v669 = vadd.f32 %v381, %v668
        %670 = vmatmul.f32.gmra.mxu0 %v601
        %v671 = vpop.f32.mrf.mxu0
        %v672 = vadd.f32 %v381, %v671
        %673 = vdwg.mxu0
        %v674 = vmax.f32 %v621, 0.0
        %v675 = vmax.f32 %v624, 0.0
        %v676 = vmax.f32 %v627, 0.0
        %v677 = vmax.f32 %v630, 0.0
        %v678 = vmax.f32 %v633, 0.0
        %v679 = vmax.f32 %v636, 0.0
        %v680 = vmax.f32 %v639, 0.0
        %v681 = vmax.f32 %v642, 0.0
        %v682 = vmax.f32 %v645, 0.0
        %v683 = vmax.f32 %v648, 0.0
        %v684 = vmax.f32 %v651, 0.0
        %v685 = vmax.f32 %v654, 0.0
        %v686 = vmax.f32 %v657, 0.0
        %v687 = vmax.f32 %v660, 0.0
        %v688 = vmax.f32 %v663, 0.0
        %v689 = vmax.f32 %v666, 0.0
        %v690 = vmax.f32 %v669, 0.0
        %v691 = vmax.f32 %v672, 0.0
        %v692 = vmax.f32 %v513, %v674
        %v693 = vmax.f32 %v514, %v675
        %v694 = vmax.f32 %v515, %v676
        %v695 = vmax.f32 %v516, %v677
        %v696 = vmax.f32 %v517, %v678
        %v697 = vmax.f32 %v518, %v679
        %v698 = vmax.f32 %v519, %v680
        %v699 = vmax.f32 %v520, %v681
        %v700 = vmax.f32 %v521, %v682
        %v701 = vmax.f32 %v522, %v683
        %v702 = vmax.f32 %v523, %v684
        %v703 = vmax.f32 %v524, %v685
        %v704 = vmax.f32 %v525, %v686
        %v705 = vmax.f32 %v526, %v687
        %v706 = vmax.f32 %v527, %v688
        %v707 = vmax.f32 %v528, %v689
        %v708 = vmax.f32 %v529, %v690
        %v709 = vmax.f32 %v530, %v691
        %v710 = vld [vmem:[%s356 + $0x120] sm:$0xff]
        %v711 = vld [vmem:[%s356 + $0x128] sm:$0xff]
        %v712 = vld [vmem:[%s356 + $0x130] sm:$0xff]
        %v713 = vld [vmem:[%s356 + $0x138] sm:$0xff]
        %v714 = vld [vmem:[%s356 + $0x140] sm:$0xff]
        %v715 = vld [vmem:[%s356 + $0x148] sm:$0xff]
        %v716 = vld [vmem:[%s356 + $0x150] sm:$0xff]
        %v717 = vld [vmem:[%s356 + $0x158] sm:$0xff]
        %v718 = vld [vmem:[%s356 + $0x160] sm:$0xff]
        %v719 = vld [vmem:[%s356 + $0x168] sm:$0xff]
        %v720 = vld [vmem:[%s356 + $0x170] sm:$0xff]
        %v721 = vld [vmem:[%s356 + $0x178] sm:$0xff]
        %v722 = vld [vmem:[%s356 + $0x180] sm:$0xff]
        %v723 = vld [vmem:[%s356 + $0x188] sm:$0xff]
        %v724 = vld [vmem:[%s356 + $0x190] sm:$0xff]
        %v725 = vld [vmem:[%s356 + $0x198] sm:$0xff]
        %v726 = vld [vmem:[%s356 + $0x1a0] sm:$0xff]
        %v727 = vld [vmem:[%s356 + $0x1a8] sm:$0xff]
        %v729 = vsel %vm383, %v710, 0
        %v732 = vsel %vm383, %v711, 0
        %v735 = vsel %vm383, %v712, 0
        %v738 = vsel %vm383, %v713, 0
        %v741 = vsel %vm383, %v714, 0
        %v744 = vsel %vm383, %v715, 0
        %v747 = vsel %vm383, %v716, 0
        %v750 = vsel %vm383, %v717, 0
        %v753 = vsel %vm383, %v718, 0
        %v756 = vsel %vm383, %v719, 0
        %v759 = vsel %vm383, %v720, 0
        %v762 = vsel %vm383, %v721, 0
        %v765 = vsel %vm383, %v722, 0
        %v768 = vsel %vm383, %v723, 0
        %v771 = vsel %vm383, %v724, 0
        %v774 = vsel %vm383, %v725, 0
        %v777 = vsel %vm383, %v726, 0
        %v780 = vsel %vm383, %v727, 0
        %782 = vmatpush.msra.mxu0 0.0
        %783 = vmatpush.msra.mxu0 0.0
        %784 = vmatpush.msra.mxu0 0.0
        %785 = vmatpush.msra.mxu0 0.0
        %786 = vmatpush.msra.mxu0 0.0
        %787 = vmatpush.msra.mxu0 0.0
        %788 = vmatpush.msra.mxu0 0.0
        %789 = vmatpush.msra.mxu0 0.0
        %790 = vmatpush.msra.mxu0 0.0
        %791 = vmatpush.msra.mxu0 0.0
        %792 = vmatpush.msra.mxu0 0.0
        %793 = vmatpush.msra.mxu0 0.0
        %794 = vmatpush.msra.mxu0 %v440
        %795 = vmatpush.msra.mxu0 %v359
        %796 = vmatpush.msra.mxu0 %v358
        %797 = vmatpush.msra.mxu0 %v357
        %798 = vmatmul.f32.gmra.mxu0 %v729
        %v799 = vpop.f32.mrf.mxu0
        %v800 = vadd.f32 %v381, %v799
        %801 = vmatmul.f32.gmra.mxu0 %v732
        %v802 = vpop.f32.mrf.mxu0
        %v803 = vadd.f32 %v381, %v802
        %804 = vmatmul.f32.gmra.mxu0 %v735
        %v805 = vpop.f32.mrf.mxu0
        %v806 = vadd.f32 %v381, %v805
        %807 = vmatmul.f32.gmra.mxu0 %v738
        %v808 = vpop.f32.mrf.mxu0
        %v809 = vadd.f32 %v381, %v808
        %810 = vmatmul.f32.gmra.mxu0 %v741
        %v811 = vpop.f32.mrf.mxu0
        %v812 = vadd.f32 %v381, %v811
        %813 = vmatmul.f32.gmra.mxu0 %v744
        %v814 = vpop.f32.mrf.mxu0
        %v815 = vadd.f32 %v381, %v814
        %816 = vmatmul.f32.gmra.mxu0 %v747
        %v817 = vpop.f32.mrf.mxu0
        %v818 = vadd.f32 %v381, %v817
        %819 = vmatmul.f32.gmra.mxu0 %v750
        %v820 = vpop.f32.mrf.mxu0
        %v821 = vadd.f32 %v381, %v820
        %822 = vmatmul.f32.gmra.mxu0 %v753
        %v823 = vpop.f32.mrf.mxu0
        %v824 = vadd.f32 %v381, %v823
        %825 = vmatmul.f32.gmra.mxu0 %v756
        %v826 = vpop.f32.mrf.mxu0
        %v827 = vadd.f32 %v381, %v826
        %828 = vmatmul.f32.gmra.mxu0 %v759
        %v829 = vpop.f32.mrf.mxu0
        %v830 = vadd.f32 %v381, %v829
        %831 = vmatmul.f32.gmra.mxu0 %v762
        %v832 = vpop.f32.mrf.mxu0
        %v833 = vadd.f32 %v381, %v832
        %834 = vmatmul.f32.gmra.mxu0 %v765
        %v835 = vpop.f32.mrf.mxu0
        %v836 = vadd.f32 %v381, %v835
        %837 = vmatmul.f32.gmra.mxu0 %v768
        %v838 = vpop.f32.mrf.mxu0
        %v839 = vadd.f32 %v381, %v838
        %840 = vmatmul.f32.gmra.mxu0 %v771
        %v841 = vpop.f32.mrf.mxu0
        %v842 = vadd.f32 %v381, %v841
        %843 = vmatmul.f32.gmra.mxu0 %v774
        %v844 = vpop.f32.mrf.mxu0
        %v845 = vadd.f32 %v381, %v844
        %846 = vmatmul.f32.gmra.mxu0 %v777
        %v847 = vpop.f32.mrf.mxu0
        %v848 = vadd.f32 %v381, %v847
        %849 = vmatmul.f32.gmra.mxu0 %v780
        %v850 = vpop.f32.mrf.mxu0
        %v851 = vadd.f32 %v381, %v850
        %852 = vdwg.mxu0
        %v853 = vmax.f32 %v800, 0.0
        %v854 = vmax.f32 %v803, 0.0
        %v855 = vmax.f32 %v806, 0.0
        %v856 = vmax.f32 %v809, 0.0
        %v857 = vmax.f32 %v812, 0.0
        %v858 = vmax.f32 %v815, 0.0
        %v859 = vmax.f32 %v818, 0.0
        %v860 = vmax.f32 %v821, 0.0
        %v861 = vmax.f32 %v824, 0.0
        %v862 = vmax.f32 %v827, 0.0
        %v863 = vmax.f32 %v830, 0.0
        %v864 = vmax.f32 %v833, 0.0
        %v865 = vmax.f32 %v836, 0.0
        %v866 = vmax.f32 %v839, 0.0
        %v867 = vmax.f32 %v842, 0.0
        %v868 = vmax.f32 %v845, 0.0
        %v869 = vmax.f32 %v848, 0.0
        %v870 = vmax.f32 %v851, 0.0
        %v871 = vmax.f32 %v692, %v853
        %v872 = vmax.f32 %v693, %v854
        %v873 = vmax.f32 %v694, %v855
        %v874 = vmax.f32 %v695, %v856
        %v875 = vmax.f32 %v696, %v857
        %v876 = vmax.f32 %v697, %v858
        %v877 = vmax.f32 %v698, %v859
        %v878 = vmax.f32 %v699, %v860
        %v879 = vmax.f32 %v700, %v861
        %v880 = vmax.f32 %v701, %v862
        %v881 = vmax.f32 %v702, %v863
        %v882 = vmax.f32 %v703, %v864
        %v883 = vmax.f32 %v704, %v865
        %v884 = vmax.f32 %v705, %v866
        %v885 = vmax.f32 %v706, %v867
        %v886 = vmax.f32 %v707, %v868
        %v887 = vmax.f32 %v708, %v869
        %v888 = vmax.f32 %v709, %v870
        %v889 = vld [vmem:[%s356 + $0x1b0] sm:$0xff]
        %v890 = vld [vmem:[%s356 + $0x1b8] sm:$0xff]
        %v891 = vld [vmem:[%s356 + $0x1c0] sm:$0xff]
        %v892 = vld [vmem:[%s356 + $0x1c8] sm:$0xff]
        %v893 = vld [vmem:[%s356 + $0x1d0] sm:$0xff]
        %v894 = vld [vmem:[%s356 + $0x1d8] sm:$0xff]
        %v895 = vld [vmem:[%s356 + $0x1e0] sm:$0xff]
        %v896 = vld [vmem:[%s356 + $0x1e8] sm:$0xff]
        %v897 = vld [vmem:[%s356 + $0x1f0] sm:$0xff]
        %v898 = vld [vmem:[%s356 + $0x1f8] sm:$0xff]
        %v899 = vld [vmem:[%s356 + $0x200] sm:$0xff]
        %v900 = vld [vmem:[%s356 + $0x208] sm:$0xff]
        %v901 = vld [vmem:[%s356 + $0x210] sm:$0xff]
        %v902 = vld [vmem:[%s356 + $0x218] sm:$0xff]
        %v903 = vld [vmem:[%s356 + $0x220] sm:$0xff]
        %v904 = vld [vmem:[%s356 + $0x228] sm:$0xff]
        %v905 = vld [vmem:[%s356 + $0x230] sm:$0xff]
        %v906 = vld [vmem:[%s356 + $0x238] sm:$0xff]
        %v908 = vsel %vm383, %v889, 0
        %v911 = vsel %vm383, %v890, 0
        %v914 = vsel %vm383, %v891, 0
        %v917 = vsel %vm383, %v892, 0
        %v920 = vsel %vm383, %v893, 0
        %v923 = vsel %vm383, %v894, 0
        %v926 = vsel %vm383, %v895, 0
        %v929 = vsel %vm383, %v896, 0
        %v932 = vsel %vm383, %v897, 0
        %v935 = vsel %vm383, %v898, 0
        %v938 = vsel %vm383, %v899, 0
        %v941 = vsel %vm383, %v900, 0
        %v944 = vsel %vm383, %v901, 0
        %v947 = vsel %vm383, %v902, 0
        %v950 = vsel %vm383, %v903, 0
        %v953 = vsel %vm383, %v904, 0
        %v956 = vsel %vm383, %v905, 0
        %v959 = vsel %vm383, %v906, 0
        %961 = vmatpush.msra.mxu0 0.0
        %962 = vmatpush.msra.mxu0 0.0
        %963 = vmatpush.msra.mxu0 0.0
        %964 = vmatpush.msra.mxu0 0.0
        %965 = vmatpush.msra.mxu0 0.0
        %966 = vmatpush.msra.mxu0 0.0
        %967 = vmatpush.msra.mxu0 0.0
        %968 = vmatpush.msra.mxu0 0.0
        %969 = vmatpush.msra.mxu0 0.0
        %970 = vmatpush.msra.mxu0 0.0
        %971 = vmatpush.msra.mxu0 0.0
        %972 = vmatpush.msra.mxu0 0.0
        %973 = vmatpush.msra.mxu0 %v440
        %974 = vmatpush.msra.mxu0 %v359
        %975 = vmatpush.msra.mxu0 %v358
        %976 = vmatpush.msra.mxu0 %v357
        %977 = vmatmul.f32.gmra.mxu0 %v908
        %v978 = vpop.f32.mrf.mxu0
        %v979 = vadd.f32 %v381, %v978
        %980 = vmatmul.f32.gmra.mxu0 %v911
        %v981 = vpop.f32.mrf.mxu0
        %v982 = vadd.f32 %v381, %v981
        %983 = vmatmul.f32.gmra.mxu0 %v914
        %v984 = vpop.f32.mrf.mxu0
        %v985 = vadd.f32 %v381, %v984
        %986 = vmatmul.f32.gmra.mxu0 %v917
        %v987 = vpop.f32.mrf.mxu0
        %v988 = vadd.f32 %v381, %v987
        %989 = vmatmul.f32.gmra.mxu0 %v920
        %v990 = vpop.f32.mrf.mxu0
        %v991 = vadd.f32 %v381, %v990
        %992 = vmatmul.f32.gmra.mxu0 %v923
        %v993 = vpop.f32.mrf.mxu0
        %v994 = vadd.f32 %v381, %v993
        %995 = vmatmul.f32.gmra.mxu0 %v926
        %v996 = vpop.f32.mrf.mxu0
        %v997 = vadd.f32 %v381, %v996
        %998 = vmatmul.f32.gmra.mxu0 %v929
        %v999 = vpop.f32.mrf.mxu0
        %v1000 = vadd.f32 %v381, %v999
        %1001 = vmatmul.f32.gmra.mxu0 %v932
        %v1002 = vpop.f32.mrf.mxu0
        %v1003 = vadd.f32 %v381, %v1002
        %1004 = vmatmul.f32.gmra.mxu0 %v935
        %v1005 = vpop.f32.mrf.mxu0
        %v1006 = vadd.f32 %v381, %v1005
        %1007 = vmatmul.f32.gmra.mxu0 %v938
        %v1008 = vpop.f32.mrf.mxu0
        %v1009 = vadd.f32 %v381, %v1008
        %1010 = vmatmul.f32.gmra.mxu0 %v941
        %v1011 = vpop.f32.mrf.mxu0
        %v1012 = vadd.f32 %v381, %v1011
        %1013 = vmatmul.f32.gmra.mxu0 %v944
        %v1014 = vpop.f32.mrf.mxu0
        %v1015 = vadd.f32 %v381, %v1014
        %1016 = vmatmul.f32.gmra.mxu0 %v947
        %v1017 = vpop.f32.mrf.mxu0
        %v1018 = vadd.f32 %v381, %v1017
        %1019 = vmatmul.f32.gmra.mxu0 %v950
        %v1020 = vpop.f32.mrf.mxu0
        %v1021 = vadd.f32 %v381, %v1020
        %1022 = vmatmul.f32.gmra.mxu0 %v953
        %v1023 = vpop.f32.mrf.mxu0
        %v1024 = vadd.f32 %v381, %v1023
        %1025 = vmatmul.f32.gmra.mxu0 %v956
        %v1026 = vpop.f32.mrf.mxu0
        %v1027 = vadd.f32 %v381, %v1026
        %1028 = vmatmul.f32.gmra.mxu0 %v959
        %v1029 = vpop.f32.mrf.mxu0
        %v1030 = vadd.f32 %v381, %v1029
        %1031 = vdwg.mxu0
        %v1032 = vmax.f32 %v979, 0.0
        %v1033 = vmax.f32 %v982, 0.0
        %v1034 = vmax.f32 %v985, 0.0
        %v1035 = vmax.f32 %v988, 0.0
        %v1036 = vmax.f32 %v991, 0.0
        %v1037 = vmax.f32 %v994, 0.0
        %v1038 = vmax.f32 %v997, 0.0
        %v1039 = vmax.f32 %v1000, 0.0
        %v1040 = vmax.f32 %v1003, 0.0
        %v1041 = vmax.f32 %v1006, 0.0
        %v1042 = vmax.f32 %v1009, 0.0
        %v1043 = vmax.f32 %v1012, 0.0
        %v1044 = vmax.f32 %v1015, 0.0
        %v1045 = vmax.f32 %v1018, 0.0
        %v1046 = vmax.f32 %v1021, 0.0
        %v1047 = vmax.f32 %v1024, 0.0
        %v1048 = vmax.f32 %v1027, 0.0
        %v1049 = vmax.f32 %v1030, 0.0
        %v1050 = vmax.f32 %v871, %v1032
        %v1051 = vmax.f32 %v872, %v1033
        %v1052 = vmax.f32 %v873, %v1034
        %v1053 = vmax.f32 %v874, %v1035
        %v1054 = vmax.f32 %v875, %v1036
        %v1055 = vmax.f32 %v876, %v1037
        %v1056 = vmax.f32 %v877, %v1038
        %v1057 = vmax.f32 %v878, %v1039
        %v1058 = vmax.f32 %v879, %v1040
        %v1059 = vmax.f32 %v880, %v1041
        %v1060 = vmax.f32 %v881, %v1042
        %v1061 = vmax.f32 %v882, %v1043
        %v1062 = vmax.f32 %v883, %v1044
        %v1063 = vmax.f32 %v884, %v1045
        %v1064 = vmax.f32 %v885, %v1046
        %v1065 = vmax.f32 %v886, %v1047
        %v1066 = vmax.f32 %v887, %v1048
        %v1067 = vmax.f32 %v888, %v1049
        %v1068 = vld [vmem:[%s3] sm:$0xff]
        %v1069 = vld [vmem:[%s3 + $0x8] sm:$0xff]
        %v1070 = vld [vmem:[%s3 + $0x10] sm:$0xff]
        %v1071 = vld [vmem:[%s3 + $0x18] sm:$0xff]
        %v1072 = vld [vmem:[%s3 + $0x20] sm:$0xff]
        %v1073 = vld [vmem:[%s3 + $0x28] sm:$0xff]
        %v1074 = vld [vmem:[%s3 + $0x30] sm:$0xff]
        %v1075 = vld [vmem:[%s3 + $0x38] sm:$0xff]
        %v1076 = vld [vmem:[%s3 + $0x40] sm:$0xff]
        %v1077 = vld [vmem:[%s3 + $0x48] sm:$0xff]
        %v1078 = vld [vmem:[%s3 + $0x50] sm:$0xff]
        %v1079 = vld [vmem:[%s3 + $0x58] sm:$0xff]
        %v1080 = vld [vmem:[%s3 + $0x60] sm:$0xff]
        %v1081 = vld [vmem:[%s3 + $0x68] sm:$0xff]
        %v1082 = vld [vmem:[%s3 + $0x70] sm:$0xff]
        %v1083 = vld [vmem:[%s3 + $0x78] sm:$0xff]
        %vm1084 = vcmask 130048
        %v1086 = vsel %vm1084, %v1069, 0
        %v1089 = vsel %vm1084, %v1071, 0
        %v1092 = vsel %vm1084, %v1073, 0
        %v1095 = vsel %vm1084, %v1075, 0
        %v1098 = vsel %vm1084, %v1077, 0
        %v1101 = vsel %vm1084, %v1079, 0
        %v1104 = vsel %vm1084, %v1081, 0
        %v1107 = vsel %vm1084, %v1083, 0
        %1109 = vmatpush.msra.mxu0 %v1065
        %1110 = vmatpush.msra.mxu0 %v1064
        %1111 = vmatpush.msra.mxu0 %v1063
        %1112 = vmatpush.msra.mxu0 %v1062
        %1113 = vmatpush.msra.mxu0 %v1061
        %1114 = vmatpush.msra.mxu0 %v1060
        %1115 = vmatpush.msra.mxu0 %v1059
        %1116 = vmatpush.msra.mxu0 %v1058
        %1117 = vmatpush.msra.mxu0 %v1057
        %1118 = vmatpush.msra.mxu0 %v1056
        %1119 = vmatpush.msra.mxu0 %v1055
        %1120 = vmatpush.msra.mxu0 %v1054
        %1121 = vmatpush.msra.mxu0 %v1053
        %1122 = vmatpush.msra.mxu0 %v1052
        %1123 = vmatpush.msra.mxu0 %v1051
        %1124 = vmatpush.msra.mxu0 %v1050
        %1125 = vmatmul.f32.gmra.mxu0 %v1068
        %v1126 = vpop.f32.mrf.mxu0
        %v1127 = vadd.f32 0.0, %v1126
        %1128 = vmatmul.f32.gmra.mxu0 %v1070
        %v1129 = vpop.f32.mrf.mxu0
        %v1130 = vadd.f32 0.0, %v1129
        %1131 = vmatmul.f32.gmra.mxu0 %v1072
        %v1132 = vpop.f32.mrf.mxu0
        %v1133 = vadd.f32 0.0, %v1132
        %1134 = vmatmul.f32.gmra.mxu0 %v1074
        %v1135 = vpop.f32.mrf.mxu0
        %v1136 = vadd.f32 0.0, %v1135
        %1137 = vmatmul.f32.gmra.mxu0 %v1076
        %v1138 = vpop.f32.mrf.mxu0
        %v1139 = vadd.f32 0.0, %v1138
        %1140 = vmatmul.f32.gmra.mxu0 %v1078
        %v1141 = vpop.f32.mrf.mxu0
        %v1142 = vadd.f32 0.0, %v1141
        %1143 = vmatmul.f32.gmra.mxu0 %v1080
        %v1144 = vpop.f32.mrf.mxu0
        %v1145 = vadd.f32 0.0, %v1144
        %1146 = vmatmul.f32.gmra.mxu0 %v1082
        %v1147 = vpop.f32.mrf.mxu0
        %v1148 = vadd.f32 0.0, %v1147
        %1149 = vdwg.mxu0
        %1150 = vmatpush.msra.mxu0 0.0
        %1151 = vmatpush.msra.mxu0 0.0
        %1152 = vmatpush.msra.mxu0 0.0
        %1153 = vmatpush.msra.mxu0 0.0
        %1154 = vmatpush.msra.mxu0 0.0
        %1155 = vmatpush.msra.mxu0 0.0
        %1156 = vmatpush.msra.mxu0 0.0
        %1157 = vmatpush.msra.mxu0 0.0
        %1158 = vmatpush.msra.mxu0 0.0
        %1159 = vmatpush.msra.mxu0 0.0
        %1160 = vmatpush.msra.mxu0 0.0
        %1161 = vmatpush.msra.mxu0 0.0
        %1162 = vmatpush.msra.mxu0 0.0
        %1163 = vmatpush.msra.mxu0 0.0
        %1164 = vmatpush.msra.mxu0 %v1067
        %1165 = vmatpush.msra.mxu0 %v1066
        %1166 = vmatmul.f32.gmra.mxu0 %v1086
        %v1167 = vpop.f32.mrf.mxu0
        %v1168 = vadd.f32 %v1127, %v1167
        %1169 = vmatmul.f32.gmra.mxu0 %v1089
        %v1170 = vpop.f32.mrf.mxu0
        %v1171 = vadd.f32 %v1130, %v1170
        %1172 = vmatmul.f32.gmra.mxu0 %v1092
        %v1173 = vpop.f32.mrf.mxu0
        %v1174 = vadd.f32 %v1133, %v1173
        %1175 = vmatmul.f32.gmra.mxu0 %v1095
        %v1176 = vpop.f32.mrf.mxu0
        %v1177 = vadd.f32 %v1136, %v1176
        %1178 = vmatmul.f32.gmra.mxu0 %v1098
        %v1179 = vpop.f32.mrf.mxu0
        %v1180 = vadd.f32 %v1139, %v1179
        %1181 = vmatmul.f32.gmra.mxu0 %v1101
        %v1182 = vpop.f32.mrf.mxu0
        %v1183 = vadd.f32 %v1142, %v1182
        %1184 = vmatmul.f32.gmra.mxu0 %v1104
        %v1185 = vpop.f32.mrf.mxu0
        %v1186 = vadd.f32 %v1145, %v1185
        %1187 = vmatmul.f32.gmra.mxu0 %v1107
        %v1188 = vpop.f32.mrf.mxu0
        %v1189 = vadd.f32 %v1148, %v1188
        %1190 = vdwg.mxu0
        %v1191 = vld [vmem:[%s4] sm:$0xff]
        %v1192 = vld [vmem:[%s4 + $0x8] sm:$0xff]
        %v1193 = vld [vmem:[%s4 + $0x10] sm:$0xf]
        %s1194 = scalar_lea.vmem %s3, 128
        %v1195 = vld [vmem:[%s1194] sm:$0xff]
        %v1196 = vld [vmem:[%s1194 + $0x8] sm:$0xff]
        %v1197 = vld [vmem:[%s1194 + $0x10] sm:$0xff]
        %v1198 = vld [vmem:[%s1194 + $0x18] sm:$0xff]
        %v1199 = vld [vmem:[%s1194 + $0x20] sm:$0xff]
        %v1200 = vld [vmem:[%s1194 + $0x28] sm:$0xff]
        %v1201 = vld [vmem:[%s1194 + $0x30] sm:$0xff]
        %v1202 = vld [vmem:[%s1194 + $0x38] sm:$0xff]
        %v1203 = vld [vmem:[%s1194 + $0x40] sm:$0xff]
        %v1204 = vld [vmem:[%s1194 + $0x48] sm:$0xff]
        %v1205 = vld [vmem:[%s1194 + $0x50] sm:$0xff]
        %v1206 = vld [vmem:[%s1194 + $0x58] sm:$0xff]
        %v1207 = vld [vmem:[%s1194 + $0x60] sm:$0xff]
        %v1208 = vld [vmem:[%s1194 + $0x68] sm:$0xff]
        %v1209 = vld [vmem:[%s1194 + $0x70] sm:$0xff]
        %v1210 = vld [vmem:[%s1194 + $0x78] sm:$0xff]
        %v1212 = vsel %vm1084, %v1196, 0
        %v1215 = vsel %vm1084, %v1198, 0
        %v1218 = vsel %vm1084, %v1200, 0
        %v1221 = vsel %vm1084, %v1202, 0
        %v1224 = vsel %vm1084, %v1204, 0
        %v1227 = vsel %vm1084, %v1206, 0
        %v1230 = vsel %vm1084, %v1208, 0
        %v1233 = vsel %vm1084, %v1210, 0
        %1235 = vmatpush.msra.mxu0 %v1065
        %1236 = vmatpush.msra.mxu0 %v1064
        %1237 = vmatpush.msra.mxu0 %v1063
        %1238 = vmatpush.msra.mxu0 %v1062
        %1239 = vmatpush.msra.mxu0 %v1061
        %1240 = vmatpush.msra.mxu0 %v1060
        %1241 = vmatpush.msra.mxu0 %v1059
        %1242 = vmatpush.msra.mxu0 %v1058
        %1243 = vmatpush.msra.mxu0 %v1057
        %1244 = vmatpush.msra.mxu0 %v1056
        %1245 = vmatpush.msra.mxu0 %v1055
        %1246 = vmatpush.msra.mxu0 %v1054
        %1247 = vmatpush.msra.mxu0 %v1053
        %1248 = vmatpush.msra.mxu0 %v1052
        %1249 = vmatpush.msra.mxu0 %v1051
        %1250 = vmatpush.msra.mxu0 %v1050
        %1251 = vmatmul.f32.gmra.mxu0 %v1195
        %v1252 = vpop.f32.mrf.mxu0
        %v1253 = vadd.f32 0.0, %v1252
        %1254 = vmatmul.f32.gmra.mxu0 %v1197
        %v1255 = vpop.f32.mrf.mxu0
        %v1256 = vadd.f32 0.0, %v1255
        %1257 = vmatmul.f32.gmra.mxu0 %v1199
        %v1258 = vpop.f32.mrf.mxu0
        %v1259 = vadd.f32 0.0, %v1258
        %1260 = vmatmul.f32.gmra.mxu0 %v1201
        %v1261 = vpop.f32.mrf.mxu0
        %v1262 = vadd.f32 0.0, %v1261
        %1263 = vmatmul.f32.gmra.mxu0 %v1203
        %v1264 = vpop.f32.mrf.mxu0
        %v1265 = vadd.f32 0.0, %v1264
        %1266 = vmatmul.f32.gmra.mxu0 %v1205
        %v1267 = vpop.f32.mrf.mxu0
        %v1268 = vadd.f32 0.0, %v1267
        %1269 = vmatmul.f32.gmra.mxu0 %v1207
        %v1270 = vpop.f32.mrf.mxu0
        %v1271 = vadd.f32 0.0, %v1270
        %1272 = vmatmul.f32.gmra.mxu0 %v1209
        %v1273 = vpop.f32.mrf.mxu0
        %v1274 = vadd.f32 0.0, %v1273
        %1275 = vdwg.mxu0
        %1276 = vmatpush.msra.mxu0 0.0
        %1277 = vmatpush.msra.mxu0 0.0
        %1278 = vmatpush.msra.mxu0 0.0
        %1279 = vmatpush.msra.mxu0 0.0
        %1280 = vmatpush.msra.mxu0 0.0
        %1281 = vmatpush.msra.mxu0 0.0
        %1282 = vmatpush.msra.mxu0 0.0
        %1283 = vmatpush.msra.mxu0 0.0
        %1284 = vmatpush.msra.mxu0 0.0
        %1285 = vmatpush.msra.mxu0 0.0
        %1286 = vmatpush.msra.mxu0 0.0
        %1287 = vmatpush.msra.mxu0 0.0
        %1288 = vmatpush.msra.mxu0 0.0
        %1289 = vmatpush.msra.mxu0 0.0
        %1290 = vmatpush.msra.mxu0 %v1067
        %1291 = vmatpush.msra.mxu0 %v1066
        %1292 = vmatmul.f32.gmra.mxu0 %v1212
        %v1293 = vpop.f32.mrf.mxu0
        %v1294 = vadd.f32 %v1253, %v1293
        %1295 = vmatmul.f32.gmra.mxu0 %v1215
        %v1296 = vpop.f32.mrf.mxu0
        %v1297 = vadd.f32 %v1256, %v1296
        %1298 = vmatmul.f32.gmra.mxu0 %v1218
        %v1299 = vpop.f32.mrf.mxu0
        %v1300 = vadd.f32 %v1259, %v1299
        %1301 = vmatmul.f32.gmra.mxu0 %v1221
        %v1302 = vpop.f32.mrf.mxu0
        %v1303 = vadd.f32 %v1262, %v1302
        %1304 = vmatmul.f32.gmra.mxu0 %v1224
        %v1305 = vpop.f32.mrf.mxu0
        %v1306 = vadd.f32 %v1265, %v1305
        %1307 = vmatmul.f32.gmra.mxu0 %v1227
        %v1308 = vpop.f32.mrf.mxu0
        %v1309 = vadd.f32 %v1268, %v1308
        %1310 = vmatmul.f32.gmra.mxu0 %v1230
        %v1311 = vpop.f32.mrf.mxu0
        %v1312 = vadd.f32 %v1271, %v1311
        %1313 = vmatmul.f32.gmra.mxu0 %v1233
        %v1314 = vpop.f32.mrf.mxu0
        %v1315 = vadd.f32 %v1274, %v1314
        %1316 = vdwg.mxu0
        %s1317 = scalar_lea.vmem %s4, 24
        %v1318 = vld [vmem:[%s1317] sm:$0xff]
        %v1319 = vld [vmem:[%s1317 + $0x8] sm:$0xff]
        %v1320 = vld [vmem:[%s1317 + $0x10] sm:$0xf]
        %vm1321 = vcmask 162816
        %v1323 = vsel %vm1321, %v1294, 0
        %v1326 = vsel %vm1321, %v1297, 0
        %v1329 = vsel %vm1321, %v1300, 0
        %v1332 = vsel %vm1321, %v1303, 0
        %v1335 = vsel %vm1321, %v1306, 0
        %v1338 = vsel %vm1321, %v1309, 0
        %v1341 = vsel %vm1321, %v1312, 0
        %v1344 = vsel %vm1321, %v1315, 0
        %vm1346 = vcmask 1043456
        %v1348 = vsel %vm1346, %v1320, 0
        %1350 = vmatpush.msra.mxu0 0.0
        %1351 = vmatpush.msra.mxu0 0.0
        %1352 = vmatpush.msra.mxu0 0.0
        %1353 = vmatpush.msra.mxu0 0.0
        %1354 = vmatpush.msra.mxu0 0.0
        %1355 = vmatpush.msra.mxu0 0.0
        %1356 = vmatpush.msra.mxu0 0.0
        %1357 = vmatpush.msra.mxu0 0.0
        %1358 = vmatpush.msra.mxu0 0.0
        %1359 = vmatpush.msra.mxu0 0.0
        %1360 = vmatpush.msra.mxu0 0.0
        %1361 = vmatpush.msra.mxu0 0.0
        %1362 = vmatpush.msra.mxu0 0.0
        %1363 = vmatpush.msra.mxu0 %v1348
        %1364 = vmatpush.msra.mxu0 %v1319
        %1365 = vmatpush.msra.mxu0 %v1318
        %1366 = vmatmul.f32.gmra.mxu0 %v1323
        %v1367 = vpop.f32.mrf.mxu0
        %v1368 = vadd.f32 0.0, %v1367
        %1369 = vmatmul.f32.gmra.mxu0 %v1326
        %v1370 = vpop.f32.mrf.mxu0
        %v1371 = vadd.f32 0.0, %v1370
        %1372 = vmatmul.f32.gmra.mxu0 %v1329
        %v1373 = vpop.f32.mrf.mxu0
        %v1374 = vadd.f32 0.0, %v1373
        %1375 = vmatmul.f32.gmra.mxu0 %v1332
        %v1376 = vpop.f32.mrf.mxu0
        %v1377 = vadd.f32 0.0, %v1376
        %1378 = vmatmul.f32.gmra.mxu0 %v1335
        %v1379 = vpop.f32.mrf.mxu0
        %v1380 = vadd.f32 0.0, %v1379
        %1381 = vmatmul.f32.gmra.mxu0 %v1338
        %v1382 = vpop.f32.mrf.mxu0
        %v1383 = vadd.f32 0.0, %v1382
        %1384 = vmatmul.f32.gmra.mxu0 %v1341
        %v1385 = vpop.f32.mrf.mxu0
        %v1386 = vadd.f32 0.0, %v1385
        %1387 = vmatmul.f32.gmra.mxu0 %v1344
        %v1388 = vpop.f32.mrf.mxu0
        %v1389 = vadd.f32 0.0, %v1388
        %1390 = vdwg.mxu0
        %v1392 = vsel %vm1321, %v1168, 0
        %v1395 = vsel %vm1321, %v1171, 0
        %v1398 = vsel %vm1321, %v1174, 0
        %v1401 = vsel %vm1321, %v1177, 0
        %v1404 = vsel %vm1321, %v1180, 0
        %v1407 = vsel %vm1321, %v1183, 0
        %v1410 = vsel %vm1321, %v1186, 0
        %v1413 = vsel %vm1321, %v1189, 0
        %v1416 = vsel %vm1346, %v1193, 0
        %1418 = vmatpush.msra.mxu0 0.0
        %1419 = vmatpush.msra.mxu0 0.0
        %1420 = vmatpush.msra.mxu0 0.0
        %1421 = vmatpush.msra.mxu0 0.0
        %1422 = vmatpush.msra.mxu0 0.0
        %1423 = vmatpush.msra.mxu0 0.0
        %1424 = vmatpush.msra.mxu0 0.0
        %1425 = vmatpush.msra.mxu0 0.0
        %1426 = vmatpush.msra.mxu0 0.0
        %1427 = vmatpush.msra.mxu0 0.0
        %1428 = vmatpush.msra.mxu0 0.0
        %1429 = vmatpush.msra.mxu0 0.0
        %1430 = vmatpush.msra.mxu0 0.0
        %1431 = vmatpush.msra.mxu0 %v1416
        %1432 = vmatpush.msra.mxu0 %v1192
        %1433 = vmatpush.msra.mxu0 %v1191
        %1434 = vmatmul.f32.gmra.mxu0 %v1392
        %v1435 = vpop.f32.mrf.mxu0
        %v1436 = vadd.f32 %v1368, %v1435
        %1437 = vmatmul.f32.gmra.mxu0 %v1395
        %v1438 = vpop.f32.mrf.mxu0
        %v1439 = vadd.f32 %v1371, %v1438
        %1440 = vmatmul.f32.gmra.mxu0 %v1398
        %v1441 = vpop.f32.mrf.mxu0
        %v1442 = vadd.f32 %v1374, %v1441
        %1443 = vmatmul.f32.gmra.mxu0 %v1401
        %v1444 = vpop.f32.mrf.mxu0
        %v1445 = vadd.f32 %v1377, %v1444
        %1446 = vmatmul.f32.gmra.mxu0 %v1404
        %v1447 = vpop.f32.mrf.mxu0
        %v1448 = vadd.f32 %v1380, %v1447
        %1449 = vmatmul.f32.gmra.mxu0 %v1407
        %v1450 = vpop.f32.mrf.mxu0
        %v1451 = vadd.f32 %v1383, %v1450
        %1452 = vmatmul.f32.gmra.mxu0 %v1410
        %v1453 = vpop.f32.mrf.mxu0
        %v1454 = vadd.f32 %v1386, %v1453
        %1455 = vmatmul.f32.gmra.mxu0 %v1413
        %v1456 = vpop.f32.mrf.mxu0
        %v1457 = vadd.f32 %v1389, %v1456
        %1458 = vdwg.mxu0
        %s1459 = scalar_lea.vmem %s3, 256
        %v1460 = vld [vmem:[%s1459] sm:$0xff]
        %v1461 = vld [vmem:[%s1459 + $0x8] sm:$0xff]
        %v1462 = vld [vmem:[%s1459 + $0x10] sm:$0xff]
        %v1463 = vld [vmem:[%s1459 + $0x18] sm:$0xff]
        %v1464 = vld [vmem:[%s1459 + $0x20] sm:$0xff]
        %v1465 = vld [vmem:[%s1459 + $0x28] sm:$0xff]
        %v1466 = vld [vmem:[%s1459 + $0x30] sm:$0xff]
        %v1467 = vld [vmem:[%s1459 + $0x38] sm:$0xff]
        %v1468 = vld [vmem:[%s1459 + $0x40] sm:$0xff]
        %v1469 = vld [vmem:[%s1459 + $0x48] sm:$0xff]
        %v1470 = vld [vmem:[%s1459 + $0x50] sm:$0xff]
        %v1471 = vld [vmem:[%s1459 + $0x58] sm:$0xff]
        %v1472 = vld [vmem:[%s1459 + $0x60] sm:$0xff]
        %v1473 = vld [vmem:[%s1459 + $0x68] sm:$0xff]
        %v1474 = vld [vmem:[%s1459 + $0x70] sm:$0xff]
        %v1475 = vld [vmem:[%s1459 + $0x78] sm:$0xff]
        %v1477 = vsel %vm1084, %v1461, 0
        %v1480 = vsel %vm1084, %v1463, 0
        %v1483 = vsel %vm1084, %v1465, 0
        %v1486 = vsel %vm1084, %v1467, 0
        %v1489 = vsel %vm1084, %v1469, 0
        %v1492 = vsel %vm1084, %v1471, 0
        %v1495 = vsel %vm1084, %v1473, 0
        %v1498 = vsel %vm1084, %v1475, 0
        %1500 = vmatpush.msra.mxu0 %v1065
        %1501 = vmatpush.msra.mxu0 %v1064
        %1502 = vmatpush.msra.mxu0 %v1063
        %1503 = vmatpush.msra.mxu0 %v1062
        %1504 = vmatpush.msra.mxu0 %v1061
        %1505 = vmatpush.msra.mxu0 %v1060
        %1506 = vmatpush.msra.mxu0 %v1059
        %1507 = vmatpush.msra.mxu0 %v1058
        %1508 = vmatpush.msra.mxu0 %v1057
        %1509 = vmatpush.msra.mxu0 %v1056
        %1510 = vmatpush.msra.mxu0 %v1055
        %1511 = vmatpush.msra.mxu0 %v1054
        %1512 = vmatpush.msra.mxu0 %v1053
        %1513 = vmatpush.msra.mxu0 %v1052
        %1514 = vmatpush.msra.mxu0 %v1051
        %1515 = vmatpush.msra.mxu0 %v1050
        %1516 = vmatmul.f32.gmra.mxu0 %v1460
        %v1517 = vpop.f32.mrf.mxu0
        %v1518 = vadd.f32 0.0, %v1517
        %1519 = vmatmul.f32.gmra.mxu0 %v1462
        %v1520 = vpop.f32.mrf.mxu0
        %v1521 = vadd.f32 0.0, %v1520
        %1522 = vmatmul.f32.gmra.mxu0 %v1464
        %v1523 = vpop.f32.mrf.mxu0
        %v1524 = vadd.f32 0.0, %v1523
        %1525 = vmatmul.f32.gmra.mxu0 %v1466
        %v1526 = vpop.f32.mrf.mxu0
        %v1527 = vadd.f32 0.0, %v1526
        %1528 = vmatmul.f32.gmra.mxu0 %v1468
        %v1529 = vpop.f32.mrf.mxu0
        %v1530 = vadd.f32 0.0, %v1529
        %1531 = vmatmul.f32.gmra.mxu0 %v1470
        %v1532 = vpop.f32.mrf.mxu0
        %v1533 = vadd.f32 0.0, %v1532
        %1534 = vmatmul.f32.gmra.mxu0 %v1472
        %v1535 = vpop.f32.mrf.mxu0
        %v1536 = vadd.f32 0.0, %v1535
        %1537 = vmatmul.f32.gmra.mxu0 %v1474
        %v1538 = vpop.f32.mrf.mxu0
        %v1539 = vadd.f32 0.0, %v1538
        %1540 = vdwg.mxu0
        %1541 = vmatpush.msra.mxu0 0.0
        %1542 = vmatpush.msra.mxu0 0.0
        %1543 = vmatpush.msra.mxu0 0.0
        %1544 = vmatpush.msra.mxu0 0.0
        %1545 = vmatpush.msra.mxu0 0.0
        %1546 = vmatpush.msra.mxu0 0.0
        %1547 = vmatpush.msra.mxu0 0.0
        %1548 = vmatpush.msra.mxu0 0.0
        %1549 = vmatpush.msra.mxu0 0.0
        %1550 = vmatpush.msra.mxu0 0.0
        %1551 = vmatpush.msra.mxu0 0.0
        %1552 = vmatpush.msra.mxu0 0.0
        %1553 = vmatpush.msra.mxu0 0.0
        %1554 = vmatpush.msra.mxu0 0.0
        %1555 = vmatpush.msra.mxu0 %v1067
        %1556 = vmatpush.msra.mxu0 %v1066
        %1557 = vmatmul.f32.gmra.mxu0 %v1477
        %v1558 = vpop.f32.mrf.mxu0
        %v1559 = vadd.f32 %v1518, %v1558
        %1560 = vmatmul.f32.gmra.mxu0 %v1480
        %v1561 = vpop.f32.mrf.mxu0
        %v1562 = vadd.f32 %v1521, %v1561
        %1563 = vmatmul.f32.gmra.mxu0 %v1483
        %v1564 = vpop.f32.mrf.mxu0
        %v1565 = vadd.f32 %v1524, %v1564
        %1566 = vmatmul.f32.gmra.mxu0 %v1486
        %v1567 = vpop.f32.mrf.mxu0
        %v1568 = vadd.f32 %v1527, %v1567
        %1569 = vmatmul.f32.gmra.mxu0 %v1489
        %v1570 = vpop.f32.mrf.mxu0
        %v1571 = vadd.f32 %v1530, %v1570
        %1572 = vmatmul.f32.gmra.mxu0 %v1492
        %v1573 = vpop.f32.mrf.mxu0
        %v1574 = vadd.f32 %v1533, %v1573
        %1575 = vmatmul.f32.gmra.mxu0 %v1495
        %v1576 = vpop.f32.mrf.mxu0
        %v1577 = vadd.f32 %v1536, %v1576
        %1578 = vmatmul.f32.gmra.mxu0 %v1498
        %v1579 = vpop.f32.mrf.mxu0
        %v1580 = vadd.f32 %v1539, %v1579
        %1581 = vdwg.mxu0
        %s1582 = scalar_lea.vmem %s4, 48
        %v1583 = vld [vmem:[%s1582] sm:$0xff]
        %v1584 = vld [vmem:[%s1582 + $0x8] sm:$0xff]
        %v1585 = vld [vmem:[%s1582 + $0x10] sm:$0xf]
        %v1587 = vsel %vm1321, %v1559, 0
        %v1590 = vsel %vm1321, %v1562, 0
        %v1593 = vsel %vm1321, %v1565, 0
        %v1596 = vsel %vm1321, %v1568, 0
        %v1599 = vsel %vm1321, %v1571, 0
        %v1602 = vsel %vm1321, %v1574, 0
        %v1605 = vsel %vm1321, %v1577, 0
        %v1608 = vsel %vm1321, %v1580, 0
        %v1611 = vsel %vm1346, %v1585, 0
        %1613 = vmatpush.msra.mxu0 0.0
        %1614 = vmatpush.msra.mxu0 0.0
        %1615 = vmatpush.msra.mxu0 0.0
        %1616 = vmatpush.msra.mxu0 0.0
        %1617 = vmatpush.msra.mxu0 0.0
        %1618 = vmatpush.msra.mxu0 0.0
        %1619 = vmatpush.msra.mxu0 0.0
        %1620 = vmatpush.msra.mxu0 0.0
        %1621 = vmatpush.msra.mxu0 0.0
        %1622 = vmatpush.msra.mxu0 0.0
        %1623 = vmatpush.msra.mxu0 0.0
        %1624 = vmatpush.msra.mxu0 0.0
        %1625 = vmatpush.msra.mxu0 0.0
        %1626 = vmatpush.msra.mxu0 %v1611
        %1627 = vmatpush.msra.mxu0 %v1584
        %1628 = vmatpush.msra.mxu0 %v1583
        %1629 = vmatmul.f32.gmra.mxu0 %v1587
        %v1630 = vpop.f32.mrf.mxu0
        %v1631 = vadd.f32 0.0, %v1630
        %1632 = vmatmul.f32.gmra.mxu0 %v1590
        %v1633 = vpop.f32.mrf.mxu0
        %v1634 = vadd.f32 0.0, %v1633
        %1635 = vmatmul.f32.gmra.mxu0 %v1593
        %v1636 = vpop.f32.mrf.mxu0
        %v1637 = vadd.f32 0.0, %v1636
        %1638 = vmatmul.f32.gmra.mxu0 %v1596
        %v1639 = vpop.f32.mrf.mxu0
        %v1640 = vadd.f32 0.0, %v1639
        %1641 = vmatmul.f32.gmra.mxu0 %v1599
        %v1642 = vpop.f32.mrf.mxu0
        %v1643 = vadd.f32 0.0, %v1642
        %1644 = vmatmul.f32.gmra.mxu0 %v1602
        %v1645 = vpop.f32.mrf.mxu0
        %v1646 = vadd.f32 0.0, %v1645
        %1647 = vmatmul.f32.gmra.mxu0 %v1605
        %v1648 = vpop.f32.mrf.mxu0
        %v1649 = vadd.f32 0.0, %v1648
        %1650 = vmatmul.f32.gmra.mxu0 %v1608
        %v1651 = vpop.f32.mrf.mxu0
        %v1652 = vadd.f32 0.0, %v1651
        %1653 = vdwg.mxu0
        %v1654 = vadd.f32 %v1436, %v1631
        %v1655 = vadd.f32 %v1439, %v1634
        %v1656 = vadd.f32 %v1442, %v1637
        %v1657 = vadd.f32 %v1445, %v1640
        %v1658 = vadd.f32 %v1448, %v1643
        %v1659 = vadd.f32 %v1451, %v1646
        %v1660 = vadd.f32 %v1454, %v1649
        %v1661 = vadd.f32 %v1457, %v1652
        %s1662 = scalar_lea.vmem %s3, 384
        %v1663 = vld [vmem:[%s1662] sm:$0xff]
        %v1664 = vld [vmem:[%s1662 + $0x8] sm:$0xff]
        %v1665 = vld [vmem:[%s1662 + $0x10] sm:$0xff]
        %v1666 = vld [vmem:[%s1662 + $0x18] sm:$0xff]
        %v1667 = vld [vmem:[%s1662 + $0x20] sm:$0xff]
        %v1668 = vld [vmem:[%s1662 + $0x28] sm:$0xff]
        %v1669 = vld [vmem:[%s1662 + $0x30] sm:$0xff]
        %v1670 = vld [vmem:[%s1662 + $0x38] sm:$0xff]
        %v1671 = vld [vmem:[%s1662 + $0x40] sm:$0xff]
        %v1672 = vld [vmem:[%s1662 + $0x48] sm:$0xff]
        %v1673 = vld [vmem:[%s1662 + $0x50] sm:$0xff]
        %v1674 = vld [vmem:[%s1662 + $0x58] sm:$0xff]
        %v1675 = vld [vmem:[%s1662 + $0x60] sm:$0xff]
        %v1676 = vld [vmem:[%s1662 + $0x68] sm:$0xff]
        %v1677 = vld [vmem:[%s1662 + $0x70] sm:$0xff]
        %v1678 = vld [vmem:[%s1662 + $0x78] sm:$0xff]
        %v1680 = vsel %vm1084, %v1664, 0
        %v1683 = vsel %vm1084, %v1666, 0
        %v1686 = vsel %vm1084, %v1668, 0
        %v1689 = vsel %vm1084, %v1670, 0
        %v1692 = vsel %vm1084, %v1672, 0
        %v1695 = vsel %vm1084, %v1674, 0
        %v1698 = vsel %vm1084, %v1676, 0
        %v1701 = vsel %vm1084, %v1678, 0
        %1703 = vmatpush.msra.mxu0 %v1065
        %1704 = vmatpush.msra.mxu0 %v1064
        %1705 = vmatpush.msra.mxu0 %v1063
        %1706 = vmatpush.msra.mxu0 %v1062
        %1707 = vmatpush.msra.mxu0 %v1061
        %1708 = vmatpush.msra.mxu0 %v1060
        %1709 = vmatpush.msra.mxu0 %v1059
        %1710 = vmatpush.msra.mxu0 %v1058
        %1711 = vmatpush.msra.mxu0 %v1057
        %1712 = vmatpush.msra.mxu0 %v1056
        %1713 = vmatpush.msra.mxu0 %v1055
        %1714 = vmatpush.msra.mxu0 %v1054
        %1715 = vmatpush.msra.mxu0 %v1053
        %1716 = vmatpush.msra.mxu0 %v1052
        %1717 = vmatpush.msra.mxu0 %v1051
        %1718 = vmatpush.msra.mxu0 %v1050
        %1719 = vmatmul.f32.gmra.mxu0 %v1663
        %v1720 = vpop.f32.mrf.mxu0
        %v1721 = vadd.f32 0.0, %v1720
        %1722 = vmatmul.f32.gmra.mxu0 %v1665
        %v1723 = vpop.f32.mrf.mxu0
        %v1724 = vadd.f32 0.0, %v1723
        %1725 = vmatmul.f32.gmra.mxu0 %v1667
        %v1726 = vpop.f32.mrf.mxu0
        %v1727 = vadd.f32 0.0, %v1726
        %1728 = vmatmul.f32.gmra.mxu0 %v1669
        %v1729 = vpop.f32.mrf.mxu0
        %v1730 = vadd.f32 0.0, %v1729
        %1731 = vmatmul.f32.gmra.mxu0 %v1671
        %v1732 = vpop.f32.mrf.mxu0
        %v1733 = vadd.f32 0.0, %v1732
        %1734 = vmatmul.f32.gmra.mxu0 %v1673
        %v1735 = vpop.f32.mrf.mxu0
        %v1736 = vadd.f32 0.0, %v1735
        %1737 = vmatmul.f32.gmra.mxu0 %v1675
        %v1738 = vpop.f32.mrf.mxu0
        %v1739 = vadd.f32 0.0, %v1738
        %1740 = vmatmul.f32.gmra.mxu0 %v1677
        %v1741 = vpop.f32.mrf.mxu0
        %v1742 = vadd.f32 0.0, %v1741
        %1743 = vdwg.mxu0
        %1744 = vmatpush.msra.mxu0 0.0
        %1745 = vmatpush.msra.mxu0 0.0
        %1746 = vmatpush.msra.mxu0 0.0
        %1747 = vmatpush.msra.mxu0 0.0
        %1748 = vmatpush.msra.mxu0 0.0
        %1749 = vmatpush.msra.mxu0 0.0
        %1750 = vmatpush.msra.mxu0 0.0
        %1751 = vmatpush.msra.mxu0 0.0
        %1752 = vmatpush.msra.mxu0 0.0
        %1753 = vmatpush.msra.mxu0 0.0
        %1754 = vmatpush.msra.mxu0 0.0
        %1755 = vmatpush.msra.mxu0 0.0
        %1756 = vmatpush.msra.mxu0 0.0
        %1757 = vmatpush.msra.mxu0 0.0
        %1758 = vmatpush.msra.mxu0 %v1067
        %1759 = vmatpush.msra.mxu0 %v1066
        %1760 = vmatmul.f32.gmra.mxu0 %v1680
        %v1761 = vpop.f32.mrf.mxu0
        %v1762 = vadd.f32 %v1721, %v1761
        %1763 = vmatmul.f32.gmra.mxu0 %v1683
        %v1764 = vpop.f32.mrf.mxu0
        %v1765 = vadd.f32 %v1724, %v1764
        %1766 = vmatmul.f32.gmra.mxu0 %v1686
        %v1767 = vpop.f32.mrf.mxu0
        %v1768 = vadd.f32 %v1727, %v1767
        %1769 = vmatmul.f32.gmra.mxu0 %v1689
        %v1770 = vpop.f32.mrf.mxu0
        %v1771 = vadd.f32 %v1730, %v1770
        %1772 = vmatmul.f32.gmra.mxu0 %v1692
        %v1773 = vpop.f32.mrf.mxu0
        %v1774 = vadd.f32 %v1733, %v1773
        %1775 = vmatmul.f32.gmra.mxu0 %v1695
        %v1776 = vpop.f32.mrf.mxu0
        %v1777 = vadd.f32 %v1736, %v1776
        %1778 = vmatmul.f32.gmra.mxu0 %v1698
        %v1779 = vpop.f32.mrf.mxu0
        %v1780 = vadd.f32 %v1739, %v1779
        %1781 = vmatmul.f32.gmra.mxu0 %v1701
        %v1782 = vpop.f32.mrf.mxu0
        %v1783 = vadd.f32 %v1742, %v1782
        %1784 = vdwg.mxu0
        %s1785 = scalar_lea.vmem %s4, 72
        %v1786 = vld [vmem:[%s1785] sm:$0xff]
        %v1787 = vld [vmem:[%s1785 + $0x8] sm:$0xff]
        %v1788 = vld [vmem:[%s1785 + $0x10] sm:$0xf]
        %v1790 = vsel %vm1321, %v1762, 0
        %v1793 = vsel %vm1321, %v1765, 0
        %v1796 = vsel %vm1321, %v1768, 0
        %v1799 = vsel %vm1321, %v1771, 0
        %v1802 = vsel %vm1321, %v1774, 0
        %v1805 = vsel %vm1321, %v1777, 0
        %v1808 = vsel %vm1321, %v1780, 0
        %v1811 = vsel %vm1321, %v1783, 0
        %v1814 = vsel %vm1346, %v1788, 0
        %1816 = vmatpush.msra.mxu0 0.0
        %1817 = vmatpush.msra.mxu0 0.0
        %1818 = vmatpush.msra.mxu0 0.0
        %1819 = vmatpush.msra.mxu0 0.0
        %1820 = vmatpush.msra.mxu0 0.0
        %1821 = vmatpush.msra.mxu0 0.0
        %1822 = vmatpush.msra.mxu0 0.0
        %1823 = vmatpush.msra.mxu0 0.0
        %1824 = vmatpush.msra.mxu0 0.0
        %1825 = vmatpush.msra.mxu0 0.0
        %1826 = vmatpush.msra.mxu0 0.0
        %1827 = vmatpush.msra.mxu0 0.0
        %1828 = vmatpush.msra.mxu0 0.0
        %1829 = vmatpush.msra.mxu0 %v1814
        %1830 = vmatpush.msra.mxu0 %v1787
        %1831 = vmatpush.msra.mxu0 %v1786
        %1832 = vmatmul.f32.gmra.mxu0 %v1790
        %v1833 = vpop.f32.mrf.mxu0
        %v1834 = vadd.f32 0.0, %v1833
        %1835 = vmatmul.f32.gmra.mxu0 %v1793
        %v1836 = vpop.f32.mrf.mxu0
        %v1837 = vadd.f32 0.0, %v1836
        %1838 = vmatmul.f32.gmra.mxu0 %v1796
        %v1839 = vpop.f32.mrf.mxu0
        %v1840 = vadd.f32 0.0, %v1839
        %1841 = vmatmul.f32.gmra.mxu0 %v1799
        %v1842 = vpop.f32.mrf.mxu0
        %v1843 = vadd.f32 0.0, %v1842
        %1844 = vmatmul.f32.gmra.mxu0 %v1802
        %v1845 = vpop.f32.mrf.mxu0
        %v1846 = vadd.f32 0.0, %v1845
        %1847 = vmatmul.f32.gmra.mxu0 %v1805
        %v1848 = vpop.f32.mrf.mxu0
        %v1849 = vadd.f32 0.0, %v1848
        %1850 = vmatmul.f32.gmra.mxu0 %v1808
        %v1851 = vpop.f32.mrf.mxu0
        %v1852 = vadd.f32 0.0, %v1851
        %1853 = vmatmul.f32.gmra.mxu0 %v1811
        %v1854 = vpop.f32.mrf.mxu0
        %v1855 = vadd.f32 0.0, %v1854
        %1856 = vdwg.mxu0
        %v1857 = vadd.f32 %v1654, %v1834
        %v1858 = vadd.f32 %v1655, %v1837
        %v1859 = vadd.f32 %v1656, %v1840
        %v1860 = vadd.f32 %v1657, %v1843
        %v1861 = vadd.f32 %v1658, %v1846
        %v1862 = vadd.f32 %v1659, %v1849
        %v1863 = vadd.f32 %v1660, %v1852
        %v1864 = vadd.f32 %v1661, %v1855
        %s1865 = scalar_lea.vmem %s3, 512
        %v1866 = vld [vmem:[%s1865] sm:$0xff]
        %v1867 = vld [vmem:[%s1865 + $0x8] sm:$0xff]
        %v1868 = vld [vmem:[%s1865 + $0x10] sm:$0xff]
        %v1869 = vld [vmem:[%s1865 + $0x18] sm:$0xff]
        %v1870 = vld [vmem:[%s1865 + $0x20] sm:$0xff]
        %v1871 = vld [vmem:[%s1865 + $0x28] sm:$0xff]
        %v1872 = vld [vmem:[%s1865 + $0x30] sm:$0xff]
        %v1873 = vld [vmem:[%s1865 + $0x38] sm:$0xff]
        %v1874 = vld [vmem:[%s1865 + $0x40] sm:$0xff]
        %v1875 = vld [vmem:[%s1865 + $0x48] sm:$0xff]
        %v1876 = vld [vmem:[%s1865 + $0x50] sm:$0xff]
        %v1877 = vld [vmem:[%s1865 + $0x58] sm:$0xff]
        %v1878 = vld [vmem:[%s1865 + $0x60] sm:$0xff]
        %v1879 = vld [vmem:[%s1865 + $0x68] sm:$0xff]
        %v1880 = vld [vmem:[%s1865 + $0x70] sm:$0xff]
        %v1881 = vld [vmem:[%s1865 + $0x78] sm:$0xff]
        %v1883 = vsel %vm1084, %v1867, 0
        %v1886 = vsel %vm1084, %v1869, 0
        %v1889 = vsel %vm1084, %v1871, 0
        %v1892 = vsel %vm1084, %v1873, 0
        %v1895 = vsel %vm1084, %v1875, 0
        %v1898 = vsel %vm1084, %v1877, 0
        %v1901 = vsel %vm1084, %v1879, 0
        %v1904 = vsel %vm1084, %v1881, 0
        %1906 = vmatpush.msra.mxu0 %v1065
        %1907 = vmatpush.msra.mxu0 %v1064
        %1908 = vmatpush.msra.mxu0 %v1063
        %1909 = vmatpush.msra.mxu0 %v1062
        %1910 = vmatpush.msra.mxu0 %v1061
        %1911 = vmatpush.msra.mxu0 %v1060
        %1912 = vmatpush.msra.mxu0 %v1059
        %1913 = vmatpush.msra.mxu0 %v1058
        %1914 = vmatpush.msra.mxu0 %v1057
        %1915 = vmatpush.msra.mxu0 %v1056
        %1916 = vmatpush.msra.mxu0 %v1055
        %1917 = vmatpush.msra.mxu0 %v1054
        %1918 = vmatpush.msra.mxu0 %v1053
        %1919 = vmatpush.msra.mxu0 %v1052
        %1920 = vmatpush.msra.mxu0 %v1051
        %1921 = vmatpush.msra.mxu0 %v1050
        %1922 = vmatmul.f32.gmra.mxu0 %v1866
        %v1923 = vpop.f32.mrf.mxu0
        %v1924 = vadd.f32 0.0, %v1923
        %1925 = vmatmul.f32.gmra.mxu0 %v1868
        %v1926 = vpop.f32.mrf.mxu0
        %v1927 = vadd.f32 0.0, %v1926
        %1928 = vmatmul.f32.gmra.mxu0 %v1870
        %v1929 = vpop.f32.mrf.mxu0
        %v1930 = vadd.f32 0.0, %v1929
        %1931 = vmatmul.f32.gmra.mxu0 %v1872
        %v1932 = vpop.f32.mrf.mxu0
        %v1933 = vadd.f32 0.0, %v1932
        %1934 = vmatmul.f32.gmra.mxu0 %v1874
        %v1935 = vpop.f32.mrf.mxu0
        %v1936 = vadd.f32 0.0, %v1935
        %1937 = vmatmul.f32.gmra.mxu0 %v1876
        %v1938 = vpop.f32.mrf.mxu0
        %v1939 = vadd.f32 0.0, %v1938
        %1940 = vmatmul.f32.gmra.mxu0 %v1878
        %v1941 = vpop.f32.mrf.mxu0
        %v1942 = vadd.f32 0.0, %v1941
        %1943 = vmatmul.f32.gmra.mxu0 %v1880
        %v1944 = vpop.f32.mrf.mxu0
        %v1945 = vadd.f32 0.0, %v1944
        %1946 = vdwg.mxu0
        %1947 = vmatpush.msra.mxu0 0.0
        %1948 = vmatpush.msra.mxu0 0.0
        %1949 = vmatpush.msra.mxu0 0.0
        %1950 = vmatpush.msra.mxu0 0.0
        %1951 = vmatpush.msra.mxu0 0.0
        %1952 = vmatpush.msra.mxu0 0.0
        %1953 = vmatpush.msra.mxu0 0.0
        %1954 = vmatpush.msra.mxu0 0.0
        %1955 = vmatpush.msra.mxu0 0.0
        %1956 = vmatpush.msra.mxu0 0.0
        %1957 = vmatpush.msra.mxu0 0.0
        %1958 = vmatpush.msra.mxu0 0.0
        %1959 = vmatpush.msra.mxu0 0.0
        %1960 = vmatpush.msra.mxu0 0.0
        %1961 = vmatpush.msra.mxu0 %v1067
        %1962 = vmatpush.msra.mxu0 %v1066
        %1963 = vmatmul.f32.gmra.mxu0 %v1883
        %v1964 = vpop.f32.mrf.mxu0
        %v1965 = vadd.f32 %v1924, %v1964
        %1966 = vmatmul.f32.gmra.mxu0 %v1886
        %v1967 = vpop.f32.mrf.mxu0
        %v1968 = vadd.f32 %v1927, %v1967
        %1969 = vmatmul.f32.gmra.mxu0 %v1889
        %v1970 = vpop.f32.mrf.mxu0
        %v1971 = vadd.f32 %v1930, %v1970
        %1972 = vmatmul.f32.gmra.mxu0 %v1892
        %v1973 = vpop.f32.mrf.mxu0
        %v1974 = vadd.f32 %v1933, %v1973
        %1975 = vmatmul.f32.gmra.mxu0 %v1895
        %v1976 = vpop.f32.mrf.mxu0
        %v1977 = vadd.f32 %v1936, %v1976
        %1978 = vmatmul.f32.gmra.mxu0 %v1898
        %v1979 = vpop.f32.mrf.mxu0
        %v1980 = vadd.f32 %v1939, %v1979
        %1981 = vmatmul.f32.gmra.mxu0 %v1901
        %v1982 = vpop.f32.mrf.mxu0
        %v1983 = vadd.f32 %v1942, %v1982
        %1984 = vmatmul.f32.gmra.mxu0 %v1904
        %v1985 = vpop.f32.mrf.mxu0
        %v1986 = vadd.f32 %v1945, %v1985
        %1987 = vdwg.mxu0
        %s1988 = scalar_lea.vmem %s4, 96
        %v1989 = vld [vmem:[%s1988] sm:$0xff]
        %v1990 = vld [vmem:[%s1988 + $0x8] sm:$0xff]
        %v1991 = vld [vmem:[%s1988 + $0x10] sm:$0xf]
        %v1993 = vsel %vm1321, %v1965, 0
        %v1996 = vsel %vm1321, %v1968, 0
        %v1999 = vsel %vm1321, %v1971, 0
        %v2002 = vsel %vm1321, %v1974, 0
        %v2005 = vsel %vm1321, %v1977, 0
        %v2008 = vsel %vm1321, %v1980, 0
        %v2011 = vsel %vm1321, %v1983, 0
        %v2014 = vsel %vm1321, %v1986, 0
        %v2017 = vsel %vm1346, %v1991, 0
        %2019 = vmatpush.msra.mxu0 0.0
        %2020 = vmatpush.msra.mxu0 0.0
        %2021 = vmatpush.msra.mxu0 0.0
        %2022 = vmatpush.msra.mxu0 0.0
        %2023 = vmatpush.msra.mxu0 0.0
        %2024 = vmatpush.msra.mxu0 0.0
        %2025 = vmatpush.msra.mxu0 0.0
        %2026 = vmatpush.msra.mxu0 0.0
        %2027 = vmatpush.msra.mxu0 0.0
        %2028 = vmatpush.msra.mxu0 0.0
        %2029 = vmatpush.msra.mxu0 0.0
        %2030 = vmatpush.msra.mxu0 0.0
        %2031 = vmatpush.msra.mxu0 0.0
        %2032 = vmatpush.msra.mxu0 %v2017
        %2033 = vmatpush.msra.mxu0 %v1990
        %2034 = vmatpush.msra.mxu0 %v1989
        %2035 = vmatmul.f32.gmra.mxu0 %v1993
        %v2036 = vpop.f32.mrf.mxu0
        %v2037 = vadd.f32 0.0, %v2036
        %2038 = vmatmul.f32.gmra.mxu0 %v1996
        %v2039 = vpop.f32.mrf.mxu0
        %v2040 = vadd.f32 0.0, %v2039
        %2041 = vmatmul.f32.gmra.mxu0 %v1999
        %v2042 = vpop.f32.mrf.mxu0
        %v2043 = vadd.f32 0.0, %v2042
        %2044 = vmatmul.f32.gmra.mxu0 %v2002
        %v2045 = vpop.f32.mrf.mxu0
        %v2046 = vadd.f32 0.0, %v2045
        %2047 = vmatmul.f32.gmra.mxu0 %v2005
        %v2048 = vpop.f32.mrf.mxu0
        %v2049 = vadd.f32 0.0, %v2048
        %2050 = vmatmul.f32.gmra.mxu0 %v2008
        %v2051 = vpop.f32.mrf.mxu0
        %v2052 = vadd.f32 0.0, %v2051
        %2053 = vmatmul.f32.gmra.mxu0 %v2011
        %v2054 = vpop.f32.mrf.mxu0
        %v2055 = vadd.f32 0.0, %v2054
        %2056 = vmatmul.f32.gmra.mxu0 %v2014
        %v2057 = vpop.f32.mrf.mxu0
        %v2058 = vadd.f32 0.0, %v2057
        %2059 = vdwg.mxu0
        %v2060 = vadd.f32 %v1857, %v2037
        %v2061 = vadd.f32 %v1858, %v2040
        %v2062 = vadd.f32 %v1859, %v2043
        %v2063 = vadd.f32 %v1860, %v2046
        %v2064 = vadd.f32 %v1861, %v2049
        %v2065 = vadd.f32 %v1862, %v2052
        %v2066 = vadd.f32 %v1863, %v2055
        %v2067 = vadd.f32 %v1864, %v2058
        %s2068 = scalar_lea.vmem %s3, 640
        %v2069 = vld [vmem:[%s2068] sm:$0xff]
        %v2070 = vld [vmem:[%s2068 + $0x8] sm:$0xff]
        %v2071 = vld [vmem:[%s2068 + $0x10] sm:$0xff]
        %v2072 = vld [vmem:[%s2068 + $0x18] sm:$0xff]
        %v2073 = vld [vmem:[%s2068 + $0x20] sm:$0xff]
        %v2074 = vld [vmem:[%s2068 + $0x28] sm:$0xff]
        %v2075 = vld [vmem:[%s2068 + $0x30] sm:$0xff]
        %v2076 = vld [vmem:[%s2068 + $0x38] sm:$0xff]
        %v2077 = vld [vmem:[%s2068 + $0x40] sm:$0xff]
        %v2078 = vld [vmem:[%s2068 + $0x48] sm:$0xff]
        %v2079 = vld [vmem:[%s2068 + $0x50] sm:$0xff]
        %v2080 = vld [vmem:[%s2068 + $0x58] sm:$0xff]
        %v2081 = vld [vmem:[%s2068 + $0x60] sm:$0xff]
        %v2082 = vld [vmem:[%s2068 + $0x68] sm:$0xff]
        %v2083 = vld [vmem:[%s2068 + $0x70] sm:$0xff]
        %v2084 = vld [vmem:[%s2068 + $0x78] sm:$0xff]
        %v2086 = vsel %vm1084, %v2070, 0
        %v2089 = vsel %vm1084, %v2072, 0
        %v2092 = vsel %vm1084, %v2074, 0
        %v2095 = vsel %vm1084, %v2076, 0
        %v2098 = vsel %vm1084, %v2078, 0
        %v2101 = vsel %vm1084, %v2080, 0
        %v2104 = vsel %vm1084, %v2082, 0
        %v2107 = vsel %vm1084, %v2084, 0
        %2109 = vmatpush.msra.mxu0 %v1065
        %2110 = vmatpush.msra.mxu0 %v1064
        %2111 = vmatpush.msra.mxu0 %v1063
        %2112 = vmatpush.msra.mxu0 %v1062
        %2113 = vmatpush.msra.mxu0 %v1061
        %2114 = vmatpush.msra.mxu0 %v1060
        %2115 = vmatpush.msra.mxu0 %v1059
        %2116 = vmatpush.msra.mxu0 %v1058
        %2117 = vmatpush.msra.mxu0 %v1057
        %2118 = vmatpush.msra.mxu0 %v1056
        %2119 = vmatpush.msra.mxu0 %v1055
        %2120 = vmatpush.msra.mxu0 %v1054
        %2121 = vmatpush.msra.mxu0 %v1053
        %2122 = vmatpush.msra.mxu0 %v1052
        %2123 = vmatpush.msra.mxu0 %v1051
        %2124 = vmatpush.msra.mxu0 %v1050
        %2125 = vmatmul.f32.gmra.mxu0 %v2069
        %v2126 = vpop.f32.mrf.mxu0
        %v2127 = vadd.f32 0.0, %v2126
        %2128 = vmatmul.f32.gmra.mxu0 %v2071
        %v2129 = vpop.f32.mrf.mxu0
        %v2130 = vadd.f32 0.0, %v2129
        %2131 = vmatmul.f32.gmra.mxu0 %v2073
        %v2132 = vpop.f32.mrf.mxu0
        %v2133 = vadd.f32 0.0, %v2132
        %2134 = vmatmul.f32.gmra.mxu0 %v2075
        %v2135 = vpop.f32.mrf.mxu0
        %v2136 = vadd.f32 0.0, %v2135
        %2137 = vmatmul.f32.gmra.mxu0 %v2077
        %v2138 = vpop.f32.mrf.mxu0
        %v2139 = vadd.f32 0.0, %v2138
        %2140 = vmatmul.f32.gmra.mxu0 %v2079
        %v2141 = vpop.f32.mrf.mxu0
        %v2142 = vadd.f32 0.0, %v2141
        %2143 = vmatmul.f32.gmra.mxu0 %v2081
        %v2144 = vpop.f32.mrf.mxu0
        %v2145 = vadd.f32 0.0, %v2144
        %2146 = vmatmul.f32.gmra.mxu0 %v2083
        %v2147 = vpop.f32.mrf.mxu0
        %v2148 = vadd.f32 0.0, %v2147
        %2149 = vdwg.mxu0
        %2150 = vmatpush.msra.mxu0 0.0
        %2151 = vmatpush.msra.mxu0 0.0
        %2152 = vmatpush.msra.mxu0 0.0
        %2153 = vmatpush.msra.mxu0 0.0
        %2154 = vmatpush.msra.mxu0 0.0
        %2155 = vmatpush.msra.mxu0 0.0
        %2156 = vmatpush.msra.mxu0 0.0
        %2157 = vmatpush.msra.mxu0 0.0
        %2158 = vmatpush.msra.mxu0 0.0
        %2159 = vmatpush.msra.mxu0 0.0
        %2160 = vmatpush.msra.mxu0 0.0
        %2161 = vmatpush.msra.mxu0 0.0
        %2162 = vmatpush.msra.mxu0 0.0
        %2163 = vmatpush.msra.mxu0 0.0
        %2164 = vmatpush.msra.mxu0 %v1067
        %2165 = vmatpush.msra.mxu0 %v1066
        %2166 = vmatmul.f32.gmra.mxu0 %v2086
        %v2167 = vpop.f32.mrf.mxu0
        %v2168 = vadd.f32 %v2127, %v2167
        %2169 = vmatmul.f32.gmra.mxu0 %v2089
        %v2170 = vpop.f32.mrf.mxu0
        %v2171 = vadd.f32 %v2130, %v2170
        %2172 = vmatmul.f32.gmra.mxu0 %v2092
        %v2173 = vpop.f32.mrf.mxu0
        %v2174 = vadd.f32 %v2133, %v2173
        %2175 = vmatmul.f32.gmra.mxu0 %v2095
        %v2176 = vpop.f32.mrf.mxu0
        %v2177 = vadd.f32 %v2136, %v2176
        %2178 = vmatmul.f32.gmra.mxu0 %v2098
        %v2179 = vpop.f32.mrf.mxu0
        %v2180 = vadd.f32 %v2139, %v2179
        %2181 = vmatmul.f32.gmra.mxu0 %v2101
        %v2182 = vpop.f32.mrf.mxu0
        %v2183 = vadd.f32 %v2142, %v2182
        %2184 = vmatmul.f32.gmra.mxu0 %v2104
        %v2185 = vpop.f32.mrf.mxu0
        %v2186 = vadd.f32 %v2145, %v2185
        %2187 = vmatmul.f32.gmra.mxu0 %v2107
        %v2188 = vpop.f32.mrf.mxu0
        %v2189 = vadd.f32 %v2148, %v2188
        %2190 = vdwg.mxu0
        %s2191 = scalar_lea.vmem %s4, 120
        %v2192 = vld [vmem:[%s2191] sm:$0xff]
        %v2193 = vld [vmem:[%s2191 + $0x8] sm:$0xff]
        %v2194 = vld [vmem:[%s2191 + $0x10] sm:$0xf]
        %v2196 = vsel %vm1321, %v2168, 0
        %v2199 = vsel %vm1321, %v2171, 0
        %v2202 = vsel %vm1321, %v2174, 0
        %v2205 = vsel %vm1321, %v2177, 0
        %v2208 = vsel %vm1321, %v2180, 0
        %v2211 = vsel %vm1321, %v2183, 0
        %v2214 = vsel %vm1321, %v2186, 0
        %v2217 = vsel %vm1321, %v2189, 0
        %v2220 = vsel %vm1346, %v2194, 0
        %2222 = vmatpush.msra.mxu0 0.0
        %2223 = vmatpush.msra.mxu0 0.0
        %2224 = vmatpush.msra.mxu0 0.0
        %2225 = vmatpush.msra.mxu0 0.0
        %2226 = vmatpush.msra.mxu0 0.0
        %2227 = vmatpush.msra.mxu0 0.0
        %2228 = vmatpush.msra.mxu0 0.0
        %2229 = vmatpush.msra.mxu0 0.0
        %2230 = vmatpush.msra.mxu0 0.0
        %2231 = vmatpush.msra.mxu0 0.0
        %2232 = vmatpush.msra.mxu0 0.0
        %2233 = vmatpush.msra.mxu0 0.0
        %2234 = vmatpush.msra.mxu0 0.0
        %2235 = vmatpush.msra.mxu0 %v2220
        %2236 = vmatpush.msra.mxu0 %v2193
        %2237 = vmatpush.msra.mxu0 %v2192
        %2238 = vmatmul.f32.gmra.mxu0 %v2196
        %v2239 = vpop.f32.mrf.mxu0
        %v2240 = vadd.f32 0.0, %v2239
        %2241 = vmatmul.f32.gmra.mxu0 %v2199
        %v2242 = vpop.f32.mrf.mxu0
        %v2243 = vadd.f32 0.0, %v2242
        %2244 = vmatmul.f32.gmra.mxu0 %v2202
        %v2245 = vpop.f32.mrf.mxu0
        %v2246 = vadd.f32 0.0, %v2245
        %2247 = vmatmul.f32.gmra.mxu0 %v2205
        %v2248 = vpop.f32.mrf.mxu0
        %v2249 = vadd.f32 0.0, %v2248
        %2250 = vmatmul.f32.gmra.mxu0 %v2208
        %v2251 = vpop.f32.mrf.mxu0
        %v2252 = vadd.f32 0.0, %v2251
        %2253 = vmatmul.f32.gmra.mxu0 %v2211
        %v2254 = vpop.f32.mrf.mxu0
        %v2255 = vadd.f32 0.0, %v2254
        %2256 = vmatmul.f32.gmra.mxu0 %v2214
        %v2257 = vpop.f32.mrf.mxu0
        %v2258 = vadd.f32 0.0, %v2257
        %2259 = vmatmul.f32.gmra.mxu0 %v2217
        %v2260 = vpop.f32.mrf.mxu0
        %v2261 = vadd.f32 0.0, %v2260
        %2262 = vdwg.mxu0
        %v2263 = vadd.f32 %v2060, %v2240
        %v2264 = vadd.f32 %v2061, %v2243
        %v2265 = vadd.f32 %v2062, %v2246
        %v2266 = vadd.f32 %v2063, %v2249
        %v2267 = vadd.f32 %v2064, %v2252
        %v2268 = vadd.f32 %v2065, %v2255
        %v2269 = vadd.f32 %v2066, %v2258
        %v2270 = vadd.f32 %v2067, %v2261
        %s2271 = scalar_lea.vmem %s3, 768
        %v2272 = vld [vmem:[%s2271] sm:$0xff]
        %v2273 = vld [vmem:[%s2271 + $0x8] sm:$0xff]
        %v2274 = vld [vmem:[%s2271 + $0x10] sm:$0xff]
        %v2275 = vld [vmem:[%s2271 + $0x18] sm:$0xff]
        %v2276 = vld [vmem:[%s2271 + $0x20] sm:$0xff]
        %v2277 = vld [vmem:[%s2271 + $0x28] sm:$0xff]
        %v2278 = vld [vmem:[%s2271 + $0x30] sm:$0xff]
        %v2279 = vld [vmem:[%s2271 + $0x38] sm:$0xff]
        %v2280 = vld [vmem:[%s2271 + $0x40] sm:$0xff]
        %v2281 = vld [vmem:[%s2271 + $0x48] sm:$0xff]
        %v2282 = vld [vmem:[%s2271 + $0x50] sm:$0xff]
        %v2283 = vld [vmem:[%s2271 + $0x58] sm:$0xff]
        %v2284 = vld [vmem:[%s2271 + $0x60] sm:$0xff]
        %v2285 = vld [vmem:[%s2271 + $0x68] sm:$0xff]
        %v2286 = vld [vmem:[%s2271 + $0x70] sm:$0xff]
        %v2287 = vld [vmem:[%s2271 + $0x78] sm:$0xff]
        %v2289 = vsel %vm1084, %v2273, 0
        %v2292 = vsel %vm1084, %v2275, 0
        %v2295 = vsel %vm1084, %v2277, 0
        %v2298 = vsel %vm1084, %v2279, 0
        %v2301 = vsel %vm1084, %v2281, 0
        %v2304 = vsel %vm1084, %v2283, 0
        %v2307 = vsel %vm1084, %v2285, 0
        %v2310 = vsel %vm1084, %v2287, 0
        %2312 = vmatpush.msra.mxu0 %v1065
        %2313 = vmatpush.msra.mxu0 %v1064
        %2314 = vmatpush.msra.mxu0 %v1063
        %2315 = vmatpush.msra.mxu0 %v1062
        %2316 = vmatpush.msra.mxu0 %v1061
        %2317 = vmatpush.msra.mxu0 %v1060
        %2318 = vmatpush.msra.mxu0 %v1059
        %2319 = vmatpush.msra.mxu0 %v1058
        %2320 = vmatpush.msra.mxu0 %v1057
        %2321 = vmatpush.msra.mxu0 %v1056
        %2322 = vmatpush.msra.mxu0 %v1055
        %2323 = vmatpush.msra.mxu0 %v1054
        %2324 = vmatpush.msra.mxu0 %v1053
        %2325 = vmatpush.msra.mxu0 %v1052
        %2326 = vmatpush.msra.mxu0 %v1051
        %2327 = vmatpush.msra.mxu0 %v1050
        %2328 = vmatmul.f32.gmra.mxu0 %v2272
        %v2329 = vpop.f32.mrf.mxu0
        %v2330 = vadd.f32 0.0, %v2329
        %2331 = vmatmul.f32.gmra.mxu0 %v2274
        %v2332 = vpop.f32.mrf.mxu0
        %v2333 = vadd.f32 0.0, %v2332
        %2334 = vmatmul.f32.gmra.mxu0 %v2276
        %v2335 = vpop.f32.mrf.mxu0
        %v2336 = vadd.f32 0.0, %v2335
        %2337 = vmatmul.f32.gmra.mxu0 %v2278
        %v2338 = vpop.f32.mrf.mxu0
        %v2339 = vadd.f32 0.0, %v2338
        %2340 = vmatmul.f32.gmra.mxu0 %v2280
        %v2341 = vpop.f32.mrf.mxu0
        %v2342 = vadd.f32 0.0, %v2341
        %2343 = vmatmul.f32.gmra.mxu0 %v2282
        %v2344 = vpop.f32.mrf.mxu0
        %v2345 = vadd.f32 0.0, %v2344
        %2346 = vmatmul.f32.gmra.mxu0 %v2284
        %v2347 = vpop.f32.mrf.mxu0
        %v2348 = vadd.f32 0.0, %v2347
        %2349 = vmatmul.f32.gmra.mxu0 %v2286
        %v2350 = vpop.f32.mrf.mxu0
        %v2351 = vadd.f32 0.0, %v2350
        %2352 = vdwg.mxu0
        %2353 = vmatpush.msra.mxu0 0.0
        %2354 = vmatpush.msra.mxu0 0.0
        %2355 = vmatpush.msra.mxu0 0.0
        %2356 = vmatpush.msra.mxu0 0.0
        %2357 = vmatpush.msra.mxu0 0.0
        %2358 = vmatpush.msra.mxu0 0.0
        %2359 = vmatpush.msra.mxu0 0.0
        %2360 = vmatpush.msra.mxu0 0.0
        %2361 = vmatpush.msra.mxu0 0.0
        %2362 = vmatpush.msra.mxu0 0.0
        %2363 = vmatpush.msra.mxu0 0.0
        %2364 = vmatpush.msra.mxu0 0.0
        %2365 = vmatpush.msra.mxu0 0.0
        %2366 = vmatpush.msra.mxu0 0.0
        %2367 = vmatpush.msra.mxu0 %v1067
        %2368 = vmatpush.msra.mxu0 %v1066
        %2369 = vmatmul.f32.gmra.mxu0 %v2289
        %v2370 = vpop.f32.mrf.mxu0
        %v2371 = vadd.f32 %v2330, %v2370
        %2372 = vmatmul.f32.gmra.mxu0 %v2292
        %v2373 = vpop.f32.mrf.mxu0
        %v2374 = vadd.f32 %v2333, %v2373
        %2375 = vmatmul.f32.gmra.mxu0 %v2295
        %v2376 = vpop.f32.mrf.mxu0
        %v2377 = vadd.f32 %v2336, %v2376
        %2378 = vmatmul.f32.gmra.mxu0 %v2298
        %v2379 = vpop.f32.mrf.mxu0
        %v2380 = vadd.f32 %v2339, %v2379
        %2381 = vmatmul.f32.gmra.mxu0 %v2301
        %v2382 = vpop.f32.mrf.mxu0
        %v2383 = vadd.f32 %v2342, %v2382
        %2384 = vmatmul.f32.gmra.mxu0 %v2304
        %v2385 = vpop.f32.mrf.mxu0
        %v2386 = vadd.f32 %v2345, %v2385
        %2387 = vmatmul.f32.gmra.mxu0 %v2307
        %v2388 = vpop.f32.mrf.mxu0
        %v2389 = vadd.f32 %v2348, %v2388
        %2390 = vmatmul.f32.gmra.mxu0 %v2310
        %v2391 = vpop.f32.mrf.mxu0
        %v2392 = vadd.f32 %v2351, %v2391
        %2393 = vdwg.mxu0
        %s2394 = scalar_lea.vmem %s4, 144
        %v2395 = vld [vmem:[%s2394] sm:$0xff]
        %v2396 = vld [vmem:[%s2394 + $0x8] sm:$0xff]
        %v2397 = vld [vmem:[%s2394 + $0x10] sm:$0xf]
        %v2399 = vsel %vm1321, %v2371, 0
        %v2402 = vsel %vm1321, %v2374, 0
        %v2405 = vsel %vm1321, %v2377, 0
        %v2408 = vsel %vm1321, %v2380, 0
        %v2411 = vsel %vm1321, %v2383, 0
        %v2414 = vsel %vm1321, %v2386, 0
        %v2417 = vsel %vm1321, %v2389, 0
        %v2420 = vsel %vm1321, %v2392, 0
        %v2423 = vsel %vm1346, %v2397, 0
        %2425 = vmatpush.msra.mxu0 0.0
        %2426 = vmatpush.msra.mxu0 0.0
        %2427 = vmatpush.msra.mxu0 0.0
        %2428 = vmatpush.msra.mxu0 0.0
        %2429 = vmatpush.msra.mxu0 0.0
        %2430 = vmatpush.msra.mxu0 0.0
        %2431 = vmatpush.msra.mxu0 0.0
        %2432 = vmatpush.msra.mxu0 0.0
        %2433 = vmatpush.msra.mxu0 0.0
        %2434 = vmatpush.msra.mxu0 0.0
        %2435 = vmatpush.msra.mxu0 0.0
        %2436 = vmatpush.msra.mxu0 0.0
        %2437 = vmatpush.msra.mxu0 0.0
        %2438 = vmatpush.msra.mxu0 %v2423
        %2439 = vmatpush.msra.mxu0 %v2396
        %2440 = vmatpush.msra.mxu0 %v2395
        %2441 = vmatmul.f32.gmra.mxu0 %v2399
        %v2442 = vpop.f32.mrf.mxu0
        %v2443 = vadd.f32 0.0, %v2442
        %2444 = vmatmul.f32.gmra.mxu0 %v2402
        %v2445 = vpop.f32.mrf.mxu0
        %v2446 = vadd.f32 0.0, %v2445
        %2447 = vmatmul.f32.gmra.mxu0 %v2405
        %v2448 = vpop.f32.mrf.mxu0
        %v2449 = vadd.f32 0.0, %v2448
        %2450 = vmatmul.f32.gmra.mxu0 %v2408
        %v2451 = vpop.f32.mrf.mxu0
        %v2452 = vadd.f32 0.0, %v2451
        %2453 = vmatmul.f32.gmra.mxu0 %v2411
        %v2454 = vpop.f32.mrf.mxu0
        %v2455 = vadd.f32 0.0, %v2454
        %2456 = vmatmul.f32.gmra.mxu0 %v2414
        %v2457 = vpop.f32.mrf.mxu0
        %v2458 = vadd.f32 0.0, %v2457
        %2459 = vmatmul.f32.gmra.mxu0 %v2417
        %v2460 = vpop.f32.mrf.mxu0
        %v2461 = vadd.f32 0.0, %v2460
        %2462 = vmatmul.f32.gmra.mxu0 %v2420
        %v2463 = vpop.f32.mrf.mxu0
        %v2464 = vadd.f32 0.0, %v2463
        %2465 = vdwg.mxu0
        %v2466 = vadd.f32 %v2263, %v2443
        %v2467 = vadd.f32 %v2264, %v2446
        %v2468 = vadd.f32 %v2265, %v2449
        %v2469 = vadd.f32 %v2266, %v2452
        %v2470 = vadd.f32 %v2267, %v2455
        %v2471 = vadd.f32 %v2268, %v2458
        %v2472 = vadd.f32 %v2269, %v2461
        %v2473 = vadd.f32 %v2270, %v2464
        %s2474 = scalar_lea.vmem %s3, 896
        %v2475 = vld [vmem:[%s2474] sm:$0xff]
        %v2476 = vld [vmem:[%s2474 + $0x8] sm:$0xff]
        %v2477 = vld [vmem:[%s2474 + $0x10] sm:$0xff]
        %v2478 = vld [vmem:[%s2474 + $0x18] sm:$0xff]
        %v2479 = vld [vmem:[%s2474 + $0x20] sm:$0xff]
        %v2480 = vld [vmem:[%s2474 + $0x28] sm:$0xff]
        %v2481 = vld [vmem:[%s2474 + $0x30] sm:$0xff]
        %v2482 = vld [vmem:[%s2474 + $0x38] sm:$0xff]
        %v2483 = vld [vmem:[%s2474 + $0x40] sm:$0xff]
        %v2484 = vld [vmem:[%s2474 + $0x48] sm:$0xff]
        %v2485 = vld [vmem:[%s2474 + $0x50] sm:$0xff]
        %v2486 = vld [vmem:[%s2474 + $0x58] sm:$0xff]
        %v2487 = vld [vmem:[%s2474 + $0x60] sm:$0xff]
        %v2488 = vld [vmem:[%s2474 + $0x68] sm:$0xff]
        %v2489 = vld [vmem:[%s2474 + $0x70] sm:$0xff]
        %v2490 = vld [vmem:[%s2474 + $0x78] sm:$0xff]
        %v2492 = vsel %vm1084, %v2476, 0
        %v2495 = vsel %vm1084, %v2478, 0
        %v2498 = vsel %vm1084, %v2480, 0
        %v2501 = vsel %vm1084, %v2482, 0
        %v2504 = vsel %vm1084, %v2484, 0
        %v2507 = vsel %vm1084, %v2486, 0
        %v2510 = vsel %vm1084, %v2488, 0
        %v2513 = vsel %vm1084, %v2490, 0
        %2515 = vmatpush.msra.mxu0 %v1065
        %2516 = vmatpush.msra.mxu0 %v1064
        %2517 = vmatpush.msra.mxu0 %v1063
        %2518 = vmatpush.msra.mxu0 %v1062
        %2519 = vmatpush.msra.mxu0 %v1061
        %2520 = vmatpush.msra.mxu0 %v1060
        %2521 = vmatpush.msra.mxu0 %v1059
        %2522 = vmatpush.msra.mxu0 %v1058
        %2523 = vmatpush.msra.mxu0 %v1057
        %2524 = vmatpush.msra.mxu0 %v1056
        %2525 = vmatpush.msra.mxu0 %v1055
        %2526 = vmatpush.msra.mxu0 %v1054
        %2527 = vmatpush.msra.mxu0 %v1053
        %2528 = vmatpush.msra.mxu0 %v1052
        %2529 = vmatpush.msra.mxu0 %v1051
        %2530 = vmatpush.msra.mxu0 %v1050
        %2531 = vmatmul.f32.gmra.mxu0 %v2475
        %v2532 = vpop.f32.mrf.mxu0
        %v2533 = vadd.f32 0.0, %v2532
        %2534 = vmatmul.f32.gmra.mxu0 %v2477
        %v2535 = vpop.f32.mrf.mxu0
        %v2536 = vadd.f32 0.0, %v2535
        %2537 = vmatmul.f32.gmra.mxu0 %v2479
        %v2538 = vpop.f32.mrf.mxu0
        %v2539 = vadd.f32 0.0, %v2538
        %2540 = vmatmul.f32.gmra.mxu0 %v2481
        %v2541 = vpop.f32.mrf.mxu0
        %v2542 = vadd.f32 0.0, %v2541
        %2543 = vmatmul.f32.gmra.mxu0 %v2483
        %v2544 = vpop.f32.mrf.mxu0
        %v2545 = vadd.f32 0.0, %v2544
        %2546 = vmatmul.f32.gmra.mxu0 %v2485
        %v2547 = vpop.f32.mrf.mxu0
        %v2548 = vadd.f32 0.0, %v2547
        %2549 = vmatmul.f32.gmra.mxu0 %v2487
        %v2550 = vpop.f32.mrf.mxu0
        %v2551 = vadd.f32 0.0, %v2550
        %2552 = vmatmul.f32.gmra.mxu0 %v2489
        %v2553 = vpop.f32.mrf.mxu0
        %v2554 = vadd.f32 0.0, %v2553
        %2555 = vdwg.mxu0
        %2556 = vmatpush.msra.mxu0 0.0
        %2557 = vmatpush.msra.mxu0 0.0
        %2558 = vmatpush.msra.mxu0 0.0
        %2559 = vmatpush.msra.mxu0 0.0
        %2560 = vmatpush.msra.mxu0 0.0
        %2561 = vmatpush.msra.mxu0 0.0
        %2562 = vmatpush.msra.mxu0 0.0
        %2563 = vmatpush.msra.mxu0 0.0
        %2564 = vmatpush.msra.mxu0 0.0
        %2565 = vmatpush.msra.mxu0 0.0
        %2566 = vmatpush.msra.mxu0 0.0
        %2567 = vmatpush.msra.mxu0 0.0
        %2568 = vmatpush.msra.mxu0 0.0
        %2569 = vmatpush.msra.mxu0 0.0
        %2570 = vmatpush.msra.mxu0 %v1067
        %2571 = vmatpush.msra.mxu0 %v1066
        %2572 = vmatmul.f32.gmra.mxu0 %v2492
        %v2573 = vpop.f32.mrf.mxu0
        %v2574 = vadd.f32 %v2533, %v2573
        %2575 = vmatmul.f32.gmra.mxu0 %v2495
        %v2576 = vpop.f32.mrf.mxu0
        %v2577 = vadd.f32 %v2536, %v2576
        %2578 = vmatmul.f32.gmra.mxu0 %v2498
        %v2579 = vpop.f32.mrf.mxu0
        %v2580 = vadd.f32 %v2539, %v2579
        %2581 = vmatmul.f32.gmra.mxu0 %v2501
        %v2582 = vpop.f32.mrf.mxu0
        %v2583 = vadd.f32 %v2542, %v2582
        %2584 = vmatmul.f32.gmra.mxu0 %v2504
        %v2585 = vpop.f32.mrf.mxu0
        %v2586 = vadd.f32 %v2545, %v2585
        %2587 = vmatmul.f32.gmra.mxu0 %v2507
        %v2588 = vpop.f32.mrf.mxu0
        %v2589 = vadd.f32 %v2548, %v2588
        %2590 = vmatmul.f32.gmra.mxu0 %v2510
        %v2591 = vpop.f32.mrf.mxu0
        %v2592 = vadd.f32 %v2551, %v2591
        %2593 = vmatmul.f32.gmra.mxu0 %v2513
        %v2594 = vpop.f32.mrf.mxu0
        %v2595 = vadd.f32 %v2554, %v2594
        %2596 = vdwg.mxu0
        %s2597 = scalar_lea.vmem %s4, 168
        %v2598 = vld [vmem:[%s2597] sm:$0xff]
        %v2599 = vld [vmem:[%s2597 + $0x8] sm:$0xff]
        %v2600 = vld [vmem:[%s2597 + $0x10] sm:$0xf]
        %v2602 = vsel %vm1321, %v2574, 0
        %v2605 = vsel %vm1321, %v2577, 0
        %v2608 = vsel %vm1321, %v2580, 0
        %v2611 = vsel %vm1321, %v2583, 0
        %v2614 = vsel %vm1321, %v2586, 0
        %v2617 = vsel %vm1321, %v2589, 0
        %v2620 = vsel %vm1321, %v2592, 0
        %v2623 = vsel %vm1321, %v2595, 0
        %v2626 = vsel %vm1346, %v2600, 0
        %2628 = vmatpush.msra.mxu0 0.0
        %2629 = vmatpush.msra.mxu0 0.0
        %2630 = vmatpush.msra.mxu0 0.0
        %2631 = vmatpush.msra.mxu0 0.0
        %2632 = vmatpush.msra.mxu0 0.0
        %2633 = vmatpush.msra.mxu0 0.0
        %2634 = vmatpush.msra.mxu0 0.0
        %2635 = vmatpush.msra.mxu0 0.0
        %2636 = vmatpush.msra.mxu0 0.0
        %2637 = vmatpush.msra.mxu0 0.0
        %2638 = vmatpush.msra.mxu0 0.0
        %2639 = vmatpush.msra.mxu0 0.0
        %2640 = vmatpush.msra.mxu0 0.0
        %2641 = vmatpush.msra.mxu0 %v2626
        %2642 = vmatpush.msra.mxu0 %v2599
        %2643 = vmatpush.msra.mxu0 %v2598
        %2644 = vmatmul.f32.gmra.mxu0 %v2602
        %v2645 = vpop.f32.mrf.mxu0
        %v2646 = vadd.f32 0.0, %v2645
        %2647 = vmatmul.f32.gmra.mxu0 %v2605
        %v2648 = vpop.f32.mrf.mxu0
        %v2649 = vadd.f32 0.0, %v2648
        %2650 = vmatmul.f32.gmra.mxu0 %v2608
        %v2651 = vpop.f32.mrf.mxu0
        %v2652 = vadd.f32 0.0, %v2651
        %2653 = vmatmul.f32.gmra.mxu0 %v2611
        %v2654 = vpop.f32.mrf.mxu0
        %v2655 = vadd.f32 0.0, %v2654
        %2656 = vmatmul.f32.gmra.mxu0 %v2614
        %v2657 = vpop.f32.mrf.mxu0
        %v2658 = vadd.f32 0.0, %v2657
        %2659 = vmatmul.f32.gmra.mxu0 %v2617
        %v2660 = vpop.f32.mrf.mxu0
        %v2661 = vadd.f32 0.0, %v2660
        %2662 = vmatmul.f32.gmra.mxu0 %v2620
        %v2663 = vpop.f32.mrf.mxu0
        %v2664 = vadd.f32 0.0, %v2663
        %2665 = vmatmul.f32.gmra.mxu0 %v2623
        %v2666 = vpop.f32.mrf.mxu0
        %v2667 = vadd.f32 0.0, %v2666
        %2668 = vdwg.mxu0
        %v2669 = vadd.f32 %v2466, %v2646
        %v2670 = vadd.f32 %v2467, %v2649
        %v2671 = vadd.f32 %v2468, %v2652
        %v2672 = vadd.f32 %v2469, %v2655
        %v2673 = vadd.f32 %v2470, %v2658
        %v2674 = vadd.f32 %v2471, %v2661
        %v2675 = vadd.f32 %v2472, %v2664
        %v2676 = vadd.f32 %v2473, %v2667
        %s2677 = scalar_lea.vmem %s3, 1024
        %v2678 = vld [vmem:[%s2677] sm:$0xff]
        %v2679 = vld [vmem:[%s2677 + $0x8] sm:$0xff]
        %v2680 = vld [vmem:[%s2677 + $0x10] sm:$0xff]
        %v2681 = vld [vmem:[%s2677 + $0x18] sm:$0xff]
        %v2682 = vld [vmem:[%s2677 + $0x20] sm:$0xff]
        %v2683 = vld [vmem:[%s2677 + $0x28] sm:$0xff]
        %v2684 = vld [vmem:[%s2677 + $0x30] sm:$0xff]
        %v2685 = vld [vmem:[%s2677 + $0x38] sm:$0xff]
        %v2686 = vld [vmem:[%s2677 + $0x40] sm:$0xff]
        %v2687 = vld [vmem:[%s2677 + $0x48] sm:$0xff]
        %v2688 = vld [vmem:[%s2677 + $0x50] sm:$0xff]
        %v2689 = vld [vmem:[%s2677 + $0x58] sm:$0xff]
        %v2690 = vld [vmem:[%s2677 + $0x60] sm:$0xff]
        %v2691 = vld [vmem:[%s2677 + $0x68] sm:$0xff]
        %v2692 = vld [vmem:[%s2677 + $0x70] sm:$0xff]
        %v2693 = vld [vmem:[%s2677 + $0x78] sm:$0xff]
        %v2695 = vsel %vm1084, %v2679, 0
        %v2698 = vsel %vm1084, %v2681, 0
        %v2701 = vsel %vm1084, %v2683, 0
        %v2704 = vsel %vm1084, %v2685, 0
        %v2707 = vsel %vm1084, %v2687, 0
        %v2710 = vsel %vm1084, %v2689, 0
        %v2713 = vsel %vm1084, %v2691, 0
        %v2716 = vsel %vm1084, %v2693, 0
        %2718 = vmatpush.msra.mxu0 %v1065
        %2719 = vmatpush.msra.mxu0 %v1064
        %2720 = vmatpush.msra.mxu0 %v1063
        %2721 = vmatpush.msra.mxu0 %v1062
        %2722 = vmatpush.msra.mxu0 %v1061
        %2723 = vmatpush.msra.mxu0 %v1060
        %2724 = vmatpush.msra.mxu0 %v1059
        %2725 = vmatpush.msra.mxu0 %v1058
        %2726 = vmatpush.msra.mxu0 %v1057
        %2727 = vmatpush.msra.mxu0 %v1056
        %2728 = vmatpush.msra.mxu0 %v1055
        %2729 = vmatpush.msra.mxu0 %v1054
        %2730 = vmatpush.msra.mxu0 %v1053
        %2731 = vmatpush.msra.mxu0 %v1052
        %2732 = vmatpush.msra.mxu0 %v1051
        %2733 = vmatpush.msra.mxu0 %v1050
        %2734 = vmatmul.f32.gmra.mxu0 %v2678
        %v2735 = vpop.f32.mrf.mxu0
        %v2736 = vadd.f32 0.0, %v2735
        %2737 = vmatmul.f32.gmra.mxu0 %v2680
        %v2738 = vpop.f32.mrf.mxu0
        %v2739 = vadd.f32 0.0, %v2738
        %2740 = vmatmul.f32.gmra.mxu0 %v2682
        %v2741 = vpop.f32.mrf.mxu0
        %v2742 = vadd.f32 0.0, %v2741
        %2743 = vmatmul.f32.gmra.mxu0 %v2684
        %v2744 = vpop.f32.mrf.mxu0
        %v2745 = vadd.f32 0.0, %v2744
        %2746 = vmatmul.f32.gmra.mxu0 %v2686
        %v2747 = vpop.f32.mrf.mxu0
        %v2748 = vadd.f32 0.0, %v2747
        %2749 = vmatmul.f32.gmra.mxu0 %v2688
        %v2750 = vpop.f32.mrf.mxu0
        %v2751 = vadd.f32 0.0, %v2750
        %2752 = vmatmul.f32.gmra.mxu0 %v2690
        %v2753 = vpop.f32.mrf.mxu0
        %v2754 = vadd.f32 0.0, %v2753
        %2755 = vmatmul.f32.gmra.mxu0 %v2692
        %v2756 = vpop.f32.mrf.mxu0
        %v2757 = vadd.f32 0.0, %v2756
        %2758 = vdwg.mxu0
        %2759 = vmatpush.msra.mxu0 0.0
        %2760 = vmatpush.msra.mxu0 0.0
        %2761 = vmatpush.msra.mxu0 0.0
        %2762 = vmatpush.msra.mxu0 0.0
        %2763 = vmatpush.msra.mxu0 0.0
        %2764 = vmatpush.msra.mxu0 0.0
        %2765 = vmatpush.msra.mxu0 0.0
        %2766 = vmatpush.msra.mxu0 0.0
        %2767 = vmatpush.msra.mxu0 0.0
        %2768 = vmatpush.msra.mxu0 0.0
        %2769 = vmatpush.msra.mxu0 0.0
        %2770 = vmatpush.msra.mxu0 0.0
        %2771 = vmatpush.msra.mxu0 0.0
        %2772 = vmatpush.msra.mxu0 0.0
        %2773 = vmatpush.msra.mxu0 %v1067
        %2774 = vmatpush.msra.mxu0 %v1066
        %2775 = vmatmul.f32.gmra.mxu0 %v2695
        %v2776 = vpop.f32.mrf.mxu0
        %v2777 = vadd.f32 %v2736, %v2776
        %2778 = vmatmul.f32.gmra.mxu0 %v2698
        %v2779 = vpop.f32.mrf.mxu0
        %v2780 = vadd.f32 %v2739, %v2779
        %2781 = vmatmul.f32.gmra.mxu0 %v2701
        %v2782 = vpop.f32.mrf.mxu0
        %v2783 = vadd.f32 %v2742, %v2782
        %2784 = vmatmul.f32.gmra.mxu0 %v2704
        %v2785 = vpop.f32.mrf.mxu0
        %v2786 = vadd.f32 %v2745, %v2785
        %2787 = vmatmul.f32.gmra.mxu0 %v2707
        %v2788 = vpop.f32.mrf.mxu0
        %v2789 = vadd.f32 %v2748, %v2788
        %2790 = vmatmul.f32.gmra.mxu0 %v2710
        %v2791 = vpop.f32.mrf.mxu0
        %v2792 = vadd.f32 %v2751, %v2791
        %2793 = vmatmul.f32.gmra.mxu0 %v2713
        %v2794 = vpop.f32.mrf.mxu0
        %v2795 = vadd.f32 %v2754, %v2794
        %2796 = vmatmul.f32.gmra.mxu0 %v2716
        %v2797 = vpop.f32.mrf.mxu0
        %v2798 = vadd.f32 %v2757, %v2797
        %2799 = vdwg.mxu0
        %s2800 = scalar_lea.vmem %s4, 192
        %v2801 = vld [vmem:[%s2800] sm:$0xff]
        %v2802 = vld [vmem:[%s2800 + $0x8] sm:$0xff]
        %v2803 = vld [vmem:[%s2800 + $0x10] sm:$0xf]
        %v2805 = vsel %vm1321, %v2777, 0
        %v2808 = vsel %vm1321, %v2780, 0
        %v2811 = vsel %vm1321, %v2783, 0
        %v2814 = vsel %vm1321, %v2786, 0
        %v2817 = vsel %vm1321, %v2789, 0
        %v2820 = vsel %vm1321, %v2792, 0
        %v2823 = vsel %vm1321, %v2795, 0
        %v2826 = vsel %vm1321, %v2798, 0
        %v2829 = vsel %vm1346, %v2803, 0
        %2831 = vmatpush.msra.mxu0 0.0
        %2832 = vmatpush.msra.mxu0 0.0
        %2833 = vmatpush.msra.mxu0 0.0
        %2834 = vmatpush.msra.mxu0 0.0
        %2835 = vmatpush.msra.mxu0 0.0
        %2836 = vmatpush.msra.mxu0 0.0
        %2837 = vmatpush.msra.mxu0 0.0
        %2838 = vmatpush.msra.mxu0 0.0
        %2839 = vmatpush.msra.mxu0 0.0
        %2840 = vmatpush.msra.mxu0 0.0
        %2841 = vmatpush.msra.mxu0 0.0
        %2842 = vmatpush.msra.mxu0 0.0
        %2843 = vmatpush.msra.mxu0 0.0
        %2844 = vmatpush.msra.mxu0 %v2829
        %2845 = vmatpush.msra.mxu0 %v2802
        %2846 = vmatpush.msra.mxu0 %v2801
        %2847 = vmatmul.f32.gmra.mxu0 %v2805
        %v2848 = vpop.f32.mrf.mxu0
        %v2849 = vadd.f32 0.0, %v2848
        %2850 = vmatmul.f32.gmra.mxu0 %v2808
        %v2851 = vpop.f32.mrf.mxu0
        %v2852 = vadd.f32 0.0, %v2851
        %2853 = vmatmul.f32.gmra.mxu0 %v2811
        %v2854 = vpop.f32.mrf.mxu0
        %v2855 = vadd.f32 0.0, %v2854
        %2856 = vmatmul.f32.gmra.mxu0 %v2814
        %v2857 = vpop.f32.mrf.mxu0
        %v2858 = vadd.f32 0.0, %v2857
        %2859 = vmatmul.f32.gmra.mxu0 %v2817
        %v2860 = vpop.f32.mrf.mxu0
        %v2861 = vadd.f32 0.0, %v2860
        %2862 = vmatmul.f32.gmra.mxu0 %v2820
        %v2863 = vpop.f32.mrf.mxu0
        %v2864 = vadd.f32 0.0, %v2863
        %2865 = vmatmul.f32.gmra.mxu0 %v2823
        %v2866 = vpop.f32.mrf.mxu0
        %v2867 = vadd.f32 0.0, %v2866
        %2868 = vmatmul.f32.gmra.mxu0 %v2826
        %v2869 = vpop.f32.mrf.mxu0
        %v2870 = vadd.f32 0.0, %v2869
        %2871 = vdwg.mxu0
        %v2872 = vadd.f32 %v2669, %v2849
        %v2873 = vadd.f32 %v2670, %v2852
        %v2874 = vadd.f32 %v2671, %v2855
        %v2875 = vadd.f32 %v2672, %v2858
        %v2876 = vadd.f32 %v2673, %v2861
        %v2877 = vadd.f32 %v2674, %v2864
        %v2878 = vadd.f32 %v2675, %v2867
        %v2879 = vadd.f32 %v2676, %v2870
        %s2880 = scalar_lea.vmem %s3, 1152
        %v2881 = vld [vmem:[%s2880] sm:$0xff]
        %v2882 = vld [vmem:[%s2880 + $0x8] sm:$0xff]
        %v2883 = vld [vmem:[%s2880 + $0x10] sm:$0xff]
        %v2884 = vld [vmem:[%s2880 + $0x18] sm:$0xff]
        %v2885 = vld [vmem:[%s2880 + $0x20] sm:$0xff]
        %v2886 = vld [vmem:[%s2880 + $0x28] sm:$0xff]
        %v2887 = vld [vmem:[%s2880 + $0x30] sm:$0xff]
        %v2888 = vld [vmem:[%s2880 + $0x38] sm:$0xff]
        %v2889 = vld [vmem:[%s2880 + $0x40] sm:$0xff]
        %v2890 = vld [vmem:[%s2880 + $0x48] sm:$0xff]
        %v2891 = vld [vmem:[%s2880 + $0x50] sm:$0xff]
        %v2892 = vld [vmem:[%s2880 + $0x58] sm:$0xff]
        %v2893 = vld [vmem:[%s2880 + $0x60] sm:$0xff]
        %v2894 = vld [vmem:[%s2880 + $0x68] sm:$0xff]
        %v2895 = vld [vmem:[%s2880 + $0x70] sm:$0xff]
        %v2896 = vld [vmem:[%s2880 + $0x78] sm:$0xff]
        %v2898 = vsel %vm1084, %v2882, 0
        %v2901 = vsel %vm1084, %v2884, 0
        %v2904 = vsel %vm1084, %v2886, 0
        %v2907 = vsel %vm1084, %v2888, 0
        %v2910 = vsel %vm1084, %v2890, 0
        %v2913 = vsel %vm1084, %v2892, 0
        %v2916 = vsel %vm1084, %v2894, 0
        %v2919 = vsel %vm1084, %v2896, 0
        %2921 = vmatpush.msra.mxu0 %v1065
        %2922 = vmatpush.msra.mxu0 %v1064
        %2923 = vmatpush.msra.mxu0 %v1063
        %2924 = vmatpush.msra.mxu0 %v1062
        %2925 = vmatpush.msra.mxu0 %v1061
        %2926 = vmatpush.msra.mxu0 %v1060
        %2927 = vmatpush.msra.mxu0 %v1059
        %2928 = vmatpush.msra.mxu0 %v1058
        %2929 = vmatpush.msra.mxu0 %v1057
        %2930 = vmatpush.msra.mxu0 %v1056
        %2931 = vmatpush.msra.mxu0 %v1055
        %2932 = vmatpush.msra.mxu0 %v1054
        %2933 = vmatpush.msra.mxu0 %v1053
        %2934 = vmatpush.msra.mxu0 %v1052
        %2935 = vmatpush.msra.mxu0 %v1051
        %2936 = vmatpush.msra.mxu0 %v1050
        %2937 = vmatmul.f32.gmra.mxu0 %v2881
        %v2938 = vpop.f32.mrf.mxu0
        %v2939 = vadd.f32 0.0, %v2938
        %2940 = vmatmul.f32.gmra.mxu0 %v2883
        %v2941 = vpop.f32.mrf.mxu0
        %v2942 = vadd.f32 0.0, %v2941
        %2943 = vmatmul.f32.gmra.mxu0 %v2885
        %v2944 = vpop.f32.mrf.mxu0
        %v2945 = vadd.f32 0.0, %v2944
        %2946 = vmatmul.f32.gmra.mxu0 %v2887
        %v2947 = vpop.f32.mrf.mxu0
        %v2948 = vadd.f32 0.0, %v2947
        %2949 = vmatmul.f32.gmra.mxu0 %v2889
        %v2950 = vpop.f32.mrf.mxu0
        %v2951 = vadd.f32 0.0, %v2950
        %2952 = vmatmul.f32.gmra.mxu0 %v2891
        %v2953 = vpop.f32.mrf.mxu0
        %v2954 = vadd.f32 0.0, %v2953
        %2955 = vmatmul.f32.gmra.mxu0 %v2893
        %v2956 = vpop.f32.mrf.mxu0
        %v2957 = vadd.f32 0.0, %v2956
        %2958 = vmatmul.f32.gmra.mxu0 %v2895
        %v2959 = vpop.f32.mrf.mxu0
        %v2960 = vadd.f32 0.0, %v2959
        %2961 = vdwg.mxu0
        %2962 = vmatpush.msra.mxu0 0.0
        %2963 = vmatpush.msra.mxu0 0.0
        %2964 = vmatpush.msra.mxu0 0.0
        %2965 = vmatpush.msra.mxu0 0.0
        %2966 = vmatpush.msra.mxu0 0.0
        %2967 = vmatpush.msra.mxu0 0.0
        %2968 = vmatpush.msra.mxu0 0.0
        %2969 = vmatpush.msra.mxu0 0.0
        %2970 = vmatpush.msra.mxu0 0.0
        %2971 = vmatpush.msra.mxu0 0.0
        %2972 = vmatpush.msra.mxu0 0.0
        %2973 = vmatpush.msra.mxu0 0.0
        %2974 = vmatpush.msra.mxu0 0.0
        %2975 = vmatpush.msra.mxu0 0.0
        %2976 = vmatpush.msra.mxu0 %v1067
        %2977 = vmatpush.msra.mxu0 %v1066
        %2978 = vmatmul.f32.gmra.mxu0 %v2898
        %v2979 = vpop.f32.mrf.mxu0
        %v2980 = vadd.f32 %v2939, %v2979
        %2981 = vmatmul.f32.gmra.mxu0 %v2901
        %v2982 = vpop.f32.mrf.mxu0
        %v2983 = vadd.f32 %v2942, %v2982
        %2984 = vmatmul.f32.gmra.mxu0 %v2904
        %v2985 = vpop.f32.mrf.mxu0
        %v2986 = vadd.f32 %v2945, %v2985
        %2987 = vmatmul.f32.gmra.mxu0 %v2907
        %v2988 = vpop.f32.mrf.mxu0
        %v2989 = vadd.f32 %v2948, %v2988
        %2990 = vmatmul.f32.gmra.mxu0 %v2910
        %v2991 = vpop.f32.mrf.mxu0
        %v2992 = vadd.f32 %v2951, %v2991
        %2993 = vmatmul.f32.gmra.mxu0 %v2913
        %v2994 = vpop.f32.mrf.mxu0
        %v2995 = vadd.f32 %v2954, %v2994
        %2996 = vmatmul.f32.gmra.mxu0 %v2916
        %v2997 = vpop.f32.mrf.mxu0
        %v2998 = vadd.f32 %v2957, %v2997
        %2999 = vmatmul.f32.gmra.mxu0 %v2919
        %v3000 = vpop.f32.mrf.mxu0
        %v3001 = vadd.f32 %v2960, %v3000
        %3002 = vdwg.mxu0
        %s3003 = scalar_lea.vmem %s4, 216
        %v3004 = vld [vmem:[%s3003] sm:$0xff]
        %v3005 = vld [vmem:[%s3003 + $0x8] sm:$0xff]
        %v3006 = vld [vmem:[%s3003 + $0x10] sm:$0xf]
        %v3008 = vsel %vm1321, %v2980, 0
        %v3011 = vsel %vm1321, %v2983, 0
        %v3014 = vsel %vm1321, %v2986, 0
        %v3017 = vsel %vm1321, %v2989, 0
        %v3020 = vsel %vm1321, %v2992, 0
        %v3023 = vsel %vm1321, %v2995, 0
        %v3026 = vsel %vm1321, %v2998, 0
        %v3029 = vsel %vm1321, %v3001, 0
        %v3032 = vsel %vm1346, %v3006, 0
        %3034 = vmatpush.msra.mxu0 0.0
        %3035 = vmatpush.msra.mxu0 0.0
        %3036 = vmatpush.msra.mxu0 0.0
        %3037 = vmatpush.msra.mxu0 0.0
        %3038 = vmatpush.msra.mxu0 0.0
        %3039 = vmatpush.msra.mxu0 0.0
        %3040 = vmatpush.msra.mxu0 0.0
        %3041 = vmatpush.msra.mxu0 0.0
        %3042 = vmatpush.msra.mxu0 0.0
        %3043 = vmatpush.msra.mxu0 0.0
        %3044 = vmatpush.msra.mxu0 0.0
        %3045 = vmatpush.msra.mxu0 0.0
        %3046 = vmatpush.msra.mxu0 0.0
        %3047 = vmatpush.msra.mxu0 %v3032
        %3048 = vmatpush.msra.mxu0 %v3005
        %3049 = vmatpush.msra.mxu0 %v3004
        %3050 = vmatmul.f32.gmra.mxu0 %v3008
        %v3051 = vpop.f32.mrf.mxu0
        %v3052 = vadd.f32 0.0, %v3051
        %3053 = vmatmul.f32.gmra.mxu0 %v3011
        %v3054 = vpop.f32.mrf.mxu0
        %v3055 = vadd.f32 0.0, %v3054
        %3056 = vmatmul.f32.gmra.mxu0 %v3014
        %v3057 = vpop.f32.mrf.mxu0
        %v3058 = vadd.f32 0.0, %v3057
        %3059 = vmatmul.f32.gmra.mxu0 %v3017
        %v3060 = vpop.f32.mrf.mxu0
        %v3061 = vadd.f32 0.0, %v3060
        %3062 = vmatmul.f32.gmra.mxu0 %v3020
        %v3063 = vpop.f32.mrf.mxu0
        %v3064 = vadd.f32 0.0, %v3063
        %3065 = vmatmul.f32.gmra.mxu0 %v3023
        %v3066 = vpop.f32.mrf.mxu0
        %v3067 = vadd.f32 0.0, %v3066
        %3068 = vmatmul.f32.gmra.mxu0 %v3026
        %v3069 = vpop.f32.mrf.mxu0
        %v3070 = vadd.f32 0.0, %v3069
        %3071 = vmatmul.f32.gmra.mxu0 %v3029
        %v3072 = vpop.f32.mrf.mxu0
        %v3073 = vadd.f32 0.0, %v3072
        %3074 = vdwg.mxu0
        %v3075 = vadd.f32 %v2872, %v3052
        %v3076 = vadd.f32 %v2873, %v3055
        %v3077 = vadd.f32 %v2874, %v3058
        %v3078 = vadd.f32 %v2875, %v3061
        %v3079 = vadd.f32 %v2876, %v3064
        %v3080 = vadd.f32 %v2877, %v3067
        %v3081 = vadd.f32 %v2878, %v3070
        %v3082 = vadd.f32 %v2879, %v3073
        %s3083 = scalar_lea.vmem %s3, 1280
        %v3084 = vld [vmem:[%s3083] sm:$0xff]
        %v3085 = vld [vmem:[%s3083 + $0x8] sm:$0xff]
        %v3086 = vld [vmem:[%s3083 + $0x10] sm:$0xff]
        %v3087 = vld [vmem:[%s3083 + $0x18] sm:$0xff]
        %v3088 = vld [vmem:[%s3083 + $0x20] sm:$0xff]
        %v3089 = vld [vmem:[%s3083 + $0x28] sm:$0xff]
        %v3090 = vld [vmem:[%s3083 + $0x30] sm:$0xff]
        %v3091 = vld [vmem:[%s3083 + $0x38] sm:$0xff]
        %v3092 = vld [vmem:[%s3083 + $0x40] sm:$0xff]
        %v3093 = vld [vmem:[%s3083 + $0x48] sm:$0xff]
        %v3094 = vld [vmem:[%s3083 + $0x50] sm:$0xff]
        %v3095 = vld [vmem:[%s3083 + $0x58] sm:$0xff]
        %v3096 = vld [vmem:[%s3083 + $0x60] sm:$0xff]
        %v3097 = vld [vmem:[%s3083 + $0x68] sm:$0xff]
        %v3098 = vld [vmem:[%s3083 + $0x70] sm:$0xff]
        %v3099 = vld [vmem:[%s3083 + $0x78] sm:$0xff]
        %v3101 = vsel %vm1084, %v3085, 0
        %v3104 = vsel %vm1084, %v3087, 0
        %v3107 = vsel %vm1084, %v3089, 0
        %v3110 = vsel %vm1084, %v3091, 0
        %v3113 = vsel %vm1084, %v3093, 0
        %v3116 = vsel %vm1084, %v3095, 0
        %v3119 = vsel %vm1084, %v3097, 0
        %v3122 = vsel %vm1084, %v3099, 0
        %3124 = vmatpush.msra.mxu0 %v1065
        %3125 = vmatpush.msra.mxu0 %v1064
        %3126 = vmatpush.msra.mxu0 %v1063
        %3127 = vmatpush.msra.mxu0 %v1062
        %3128 = vmatpush.msra.mxu0 %v1061
        %3129 = vmatpush.msra.mxu0 %v1060
        %3130 = vmatpush.msra.mxu0 %v1059
        %3131 = vmatpush.msra.mxu0 %v1058
        %3132 = vmatpush.msra.mxu0 %v1057
        %3133 = vmatpush.msra.mxu0 %v1056
        %3134 = vmatpush.msra.mxu0 %v1055
        %3135 = vmatpush.msra.mxu0 %v1054
        %3136 = vmatpush.msra.mxu0 %v1053
        %3137 = vmatpush.msra.mxu0 %v1052
        %3138 = vmatpush.msra.mxu0 %v1051
        %3139 = vmatpush.msra.mxu0 %v1050
        %3140 = vmatmul.f32.gmra.mxu0 %v3084
        %v3141 = vpop.f32.mrf.mxu0
        %v3142 = vadd.f32 0.0, %v3141
        %3143 = vmatmul.f32.gmra.mxu0 %v3086
        %v3144 = vpop.f32.mrf.mxu0
        %v3145 = vadd.f32 0.0, %v3144
        %3146 = vmatmul.f32.gmra.mxu0 %v3088
        %v3147 = vpop.f32.mrf.mxu0
        %v3148 = vadd.f32 0.0, %v3147
        %3149 = vmatmul.f32.gmra.mxu0 %v3090
        %v3150 = vpop.f32.mrf.mxu0
        %v3151 = vadd.f32 0.0, %v3150
        %3152 = vmatmul.f32.gmra.mxu0 %v3092
        %v3153 = vpop.f32.mrf.mxu0
        %v3154 = vadd.f32 0.0, %v3153
        %3155 = vmatmul.f32.gmra.mxu0 %v3094
        %v3156 = vpop.f32.mrf.mxu0
        %v3157 = vadd.f32 0.0, %v3156
        %3158 = vmatmul.f32.gmra.mxu0 %v3096
        %v3159 = vpop.f32.mrf.mxu0
        %v3160 = vadd.f32 0.0, %v3159
        %3161 = vmatmul.f32.gmra.mxu0 %v3098
        %v3162 = vpop.f32.mrf.mxu0
        %v3163 = vadd.f32 0.0, %v3162
        %3164 = vdwg.mxu0
        %3165 = vmatpush.msra.mxu0 0.0
        %3166 = vmatpush.msra.mxu0 0.0
        %3167 = vmatpush.msra.mxu0 0.0
        %3168 = vmatpush.msra.mxu0 0.0
        %3169 = vmatpush.msra.mxu0 0.0
        %3170 = vmatpush.msra.mxu0 0.0
        %3171 = vmatpush.msra.mxu0 0.0
        %3172 = vmatpush.msra.mxu0 0.0
        %3173 = vmatpush.msra.mxu0 0.0
        %3174 = vmatpush.msra.mxu0 0.0
        %3175 = vmatpush.msra.mxu0 0.0
        %3176 = vmatpush.msra.mxu0 0.0
        %3177 = vmatpush.msra.mxu0 0.0
        %3178 = vmatpush.msra.mxu0 0.0
        %3179 = vmatpush.msra.mxu0 %v1067
        %3180 = vmatpush.msra.mxu0 %v1066
        %3181 = vmatmul.f32.gmra.mxu0 %v3101
        %v3182 = vpop.f32.mrf.mxu0
        %v3183 = vadd.f32 %v3142, %v3182
        %3184 = vmatmul.f32.gmra.mxu0 %v3104
        %v3185 = vpop.f32.mrf.mxu0
        %v3186 = vadd.f32 %v3145, %v3185
        %3187 = vmatmul.f32.gmra.mxu0 %v3107
        %v3188 = vpop.f32.mrf.mxu0
        %v3189 = vadd.f32 %v3148, %v3188
        %3190 = vmatmul.f32.gmra.mxu0 %v3110
        %v3191 = vpop.f32.mrf.mxu0
        %v3192 = vadd.f32 %v3151, %v3191
        %3193 = vmatmul.f32.gmra.mxu0 %v3113
        %v3194 = vpop.f32.mrf.mxu0
        %v3195 = vadd.f32 %v3154, %v3194
        %3196 = vmatmul.f32.gmra.mxu0 %v3116
        %v3197 = vpop.f32.mrf.mxu0
        %v3198 = vadd.f32 %v3157, %v3197
        %3199 = vmatmul.f32.gmra.mxu0 %v3119
        %v3200 = vpop.f32.mrf.mxu0
        %v3201 = vadd.f32 %v3160, %v3200
        %3202 = vmatmul.f32.gmra.mxu0 %v3122
        %v3203 = vpop.f32.mrf.mxu0
        %v3204 = vadd.f32 %v3163, %v3203
        %3205 = vdwg.mxu0
        %s3206 = scalar_lea.vmem %s4, 240
        %v3207 = vld [vmem:[%s3206] sm:$0xff]
        %v3208 = vld [vmem:[%s3206 + $0x8] sm:$0xff]
        %v3209 = vld [vmem:[%s3206 + $0x10] sm:$0xf]
        %v3211 = vsel %vm1321, %v3183, 0
        %v3214 = vsel %vm1321, %v3186, 0
        %v3217 = vsel %vm1321, %v3189, 0
        %v3220 = vsel %vm1321, %v3192, 0
        %v3223 = vsel %vm1321, %v3195, 0
        %v3226 = vsel %vm1321, %v3198, 0
        %v3229 = vsel %vm1321, %v3201, 0
        %v3232 = vsel %vm1321, %v3204, 0
        %v3235 = vsel %vm1346, %v3209, 0
        %3237 = vmatpush.msra.mxu0 0.0
        %3238 = vmatpush.msra.mxu0 0.0
        %3239 = vmatpush.msra.mxu0 0.0
        %3240 = vmatpush.msra.mxu0 0.0
        %3241 = vmatpush.msra.mxu0 0.0
        %3242 = vmatpush.msra.mxu0 0.0
        %3243 = vmatpush.msra.mxu0 0.0
        %3244 = vmatpush.msra.mxu0 0.0
        %3245 = vmatpush.msra.mxu0 0.0
        %3246 = vmatpush.msra.mxu0 0.0
        %3247 = vmatpush.msra.mxu0 0.0
        %3248 = vmatpush.msra.mxu0 0.0
        %3249 = vmatpush.msra.mxu0 0.0
        %3250 = vmatpush.msra.mxu0 %v3235
        %3251 = vmatpush.msra.mxu0 %v3208
        %3252 = vmatpush.msra.mxu0 %v3207
        %3253 = vmatmul.f32.gmra.mxu0 %v3211
        %v3254 = vpop.f32.mrf.mxu0
        %v3255 = vadd.f32 0.0, %v3254
        %3256 = vmatmul.f32.gmra.mxu0 %v3214
        %v3257 = vpop.f32.mrf.mxu0
        %v3258 = vadd.f32 0.0, %v3257
        %3259 = vmatmul.f32.gmra.mxu0 %v3217
        %v3260 = vpop.f32.mrf.mxu0
        %v3261 = vadd.f32 0.0, %v3260
        %3262 = vmatmul.f32.gmra.mxu0 %v3220
        %v3263 = vpop.f32.mrf.mxu0
        %v3264 = vadd.f32 0.0, %v3263
        %3265 = vmatmul.f32.gmra.mxu0 %v3223
        %v3266 = vpop.f32.mrf.mxu0
        %v3267 = vadd.f32 0.0, %v3266
        %3268 = vmatmul.f32.gmra.mxu0 %v3226
        %v3269 = vpop.f32.mrf.mxu0
        %v3270 = vadd.f32 0.0, %v3269
        %3271 = vmatmul.f32.gmra.mxu0 %v3229
        %v3272 = vpop.f32.mrf.mxu0
        %v3273 = vadd.f32 0.0, %v3272
        %3274 = vmatmul.f32.gmra.mxu0 %v3232
        %v3275 = vpop.f32.mrf.mxu0
        %v3276 = vadd.f32 0.0, %v3275
        %3277 = vdwg.mxu0
        %v3278 = vadd.f32 %v3075, %v3255
        %v3279 = vadd.f32 %v3076, %v3258
        %v3280 = vadd.f32 %v3077, %v3261
        %v3281 = vadd.f32 %v3078, %v3264
        %v3282 = vadd.f32 %v3079, %v3267
        %v3283 = vadd.f32 %v3080, %v3270
        %v3284 = vadd.f32 %v3081, %v3273
        %v3285 = vadd.f32 %v3082, %v3276
        %s3286 = scalar_lea.vmem %s3, 1408
        %v3287 = vld [vmem:[%s3286] sm:$0xff]
        %v3288 = vld [vmem:[%s3286 + $0x8] sm:$0xff]
        %v3289 = vld [vmem:[%s3286 + $0x10] sm:$0xff]
        %v3290 = vld [vmem:[%s3286 + $0x18] sm:$0xff]
        %v3291 = vld [vmem:[%s3286 + $0x20] sm:$0xff]
        %v3292 = vld [vmem:[%s3286 + $0x28] sm:$0xff]
        %v3293 = vld [vmem:[%s3286 + $0x30] sm:$0xff]
        %v3294 = vld [vmem:[%s3286 + $0x38] sm:$0xff]
        %v3295 = vld [vmem:[%s3286 + $0x40] sm:$0xff]
        %v3296 = vld [vmem:[%s3286 + $0x48] sm:$0xff]
        %v3297 = vld [vmem:[%s3286 + $0x50] sm:$0xff]
        %v3298 = vld [vmem:[%s3286 + $0x58] sm:$0xff]
        %v3299 = vld [vmem:[%s3286 + $0x60] sm:$0xff]
        %v3300 = vld [vmem:[%s3286 + $0x68] sm:$0xff]
        %v3301 = vld [vmem:[%s3286 + $0x70] sm:$0xff]
        %v3302 = vld [vmem:[%s3286 + $0x78] sm:$0xff]
        %v3304 = vsel %vm1084, %v3288, 0
        %v3307 = vsel %vm1084, %v3290, 0
        %v3310 = vsel %vm1084, %v3292, 0
        %v3313 = vsel %vm1084, %v3294, 0
        %v3316 = vsel %vm1084, %v3296, 0
        %v3319 = vsel %vm1084, %v3298, 0
        %v3322 = vsel %vm1084, %v3300, 0
        %v3325 = vsel %vm1084, %v3302, 0
        %3327 = vmatpush.msra.mxu0 %v1065
        %3328 = vmatpush.msra.mxu0 %v1064
        %3329 = vmatpush.msra.mxu0 %v1063
        %3330 = vmatpush.msra.mxu0 %v1062
        %3331 = vmatpush.msra.mxu0 %v1061
        %3332 = vmatpush.msra.mxu0 %v1060
        %3333 = vmatpush.msra.mxu0 %v1059
        %3334 = vmatpush.msra.mxu0 %v1058
        %3335 = vmatpush.msra.mxu0 %v1057
        %3336 = vmatpush.msra.mxu0 %v1056
        %3337 = vmatpush.msra.mxu0 %v1055
        %3338 = vmatpush.msra.mxu0 %v1054
        %3339 = vmatpush.msra.mxu0 %v1053
        %3340 = vmatpush.msra.mxu0 %v1052
        %3341 = vmatpush.msra.mxu0 %v1051
        %3342 = vmatpush.msra.mxu0 %v1050
        %3343 = vmatmul.f32.gmra.mxu0 %v3287
        %v3344 = vpop.f32.mrf.mxu0
        %v3345 = vadd.f32 0.0, %v3344
        %3346 = vmatmul.f32.gmra.mxu0 %v3289
        %v3347 = vpop.f32.mrf.mxu0
        %v3348 = vadd.f32 0.0, %v3347
        %3349 = vmatmul.f32.gmra.mxu0 %v3291
        %v3350 = vpop.f32.mrf.mxu0
        %v3351 = vadd.f32 0.0, %v3350
        %3352 = vmatmul.f32.gmra.mxu0 %v3293
        %v3353 = vpop.f32.mrf.mxu0
        %v3354 = vadd.f32 0.0, %v3353
        %3355 = vmatmul.f32.gmra.mxu0 %v3295
        %v3356 = vpop.f32.mrf.mxu0
        %v3357 = vadd.f32 0.0, %v3356
        %3358 = vmatmul.f32.gmra.mxu0 %v3297
        %v3359 = vpop.f32.mrf.mxu0
        %v3360 = vadd.f32 0.0, %v3359
        %3361 = vmatmul.f32.gmra.mxu0 %v3299
        %v3362 = vpop.f32.mrf.mxu0
        %v3363 = vadd.f32 0.0, %v3362
        %3364 = vmatmul.f32.gmra.mxu0 %v3301
        %v3365 = vpop.f32.mrf.mxu0
        %v3366 = vadd.f32 0.0, %v3365
        %3367 = vdwg.mxu0
        %3368 = vmatpush.msra.mxu0 0.0
        %3369 = vmatpush.msra.mxu0 0.0
        %3370 = vmatpush.msra.mxu0 0.0
        %3371 = vmatpush.msra.mxu0 0.0
        %3372 = vmatpush.msra.mxu0 0.0
        %3373 = vmatpush.msra.mxu0 0.0
        %3374 = vmatpush.msra.mxu0 0.0
        %3375 = vmatpush.msra.mxu0 0.0
        %3376 = vmatpush.msra.mxu0 0.0
        %3377 = vmatpush.msra.mxu0 0.0
        %3378 = vmatpush.msra.mxu0 0.0
        %3379 = vmatpush.msra.mxu0 0.0
        %3380 = vmatpush.msra.mxu0 0.0
        %3381 = vmatpush.msra.mxu0 0.0
        %3382 = vmatpush.msra.mxu0 %v1067
        %3383 = vmatpush.msra.mxu0 %v1066
        %3384 = vmatmul.f32.gmra.mxu0 %v3304
        %v3385 = vpop.f32.mrf.mxu0
        %v3386 = vadd.f32 %v3345, %v3385
        %3387 = vmatmul.f32.gmra.mxu0 %v3307
        %v3388 = vpop.f32.mrf.mxu0
        %v3389 = vadd.f32 %v3348, %v3388
        %3390 = vmatmul.f32.gmra.mxu0 %v3310
        %v3391 = vpop.f32.mrf.mxu0
        %v3392 = vadd.f32 %v3351, %v3391
        %3393 = vmatmul.f32.gmra.mxu0 %v3313
        %v3394 = vpop.f32.mrf.mxu0
        %v3395 = vadd.f32 %v3354, %v3394
        %3396 = vmatmul.f32.gmra.mxu0 %v3316
        %v3397 = vpop.f32.mrf.mxu0
        %v3398 = vadd.f32 %v3357, %v3397
        %3399 = vmatmul.f32.gmra.mxu0 %v3319
        %v3400 = vpop.f32.mrf.mxu0
        %v3401 = vadd.f32 %v3360, %v3400
        %3402 = vmatmul.f32.gmra.mxu0 %v3322
        %v3403 = vpop.f32.mrf.mxu0
        %v3404 = vadd.f32 %v3363, %v3403
        %3405 = vmatmul.f32.gmra.mxu0 %v3325
        %v3406 = vpop.f32.mrf.mxu0
        %v3407 = vadd.f32 %v3366, %v3406
        %3408 = vdwg.mxu0
        %s3409 = scalar_lea.vmem %s4, 264
        %v3410 = vld [vmem:[%s3409] sm:$0xff]
        %v3411 = vld [vmem:[%s3409 + $0x8] sm:$0xff]
        %v3412 = vld [vmem:[%s3409 + $0x10] sm:$0xf]
        %v3414 = vsel %vm1321, %v3386, 0
        %v3417 = vsel %vm1321, %v3389, 0
        %v3420 = vsel %vm1321, %v3392, 0
        %v3423 = vsel %vm1321, %v3395, 0
        %v3426 = vsel %vm1321, %v3398, 0
        %v3429 = vsel %vm1321, %v3401, 0
        %v3432 = vsel %vm1321, %v3404, 0
        %v3435 = vsel %vm1321, %v3407, 0
        %v3438 = vsel %vm1346, %v3412, 0
        %3440 = vmatpush.msra.mxu0 0.0
        %3441 = vmatpush.msra.mxu0 0.0
        %3442 = vmatpush.msra.mxu0 0.0
        %3443 = vmatpush.msra.mxu0 0.0
        %3444 = vmatpush.msra.mxu0 0.0
        %3445 = vmatpush.msra.mxu0 0.0
        %3446 = vmatpush.msra.mxu0 0.0
        %3447 = vmatpush.msra.mxu0 0.0
        %3448 = vmatpush.msra.mxu0 0.0
        %3449 = vmatpush.msra.mxu0 0.0
        %3450 = vmatpush.msra.mxu0 0.0
        %3451 = vmatpush.msra.mxu0 0.0
        %3452 = vmatpush.msra.mxu0 0.0
        %3453 = vmatpush.msra.mxu0 %v3438
        %3454 = vmatpush.msra.mxu0 %v3411
        %3455 = vmatpush.msra.mxu0 %v3410
        %3456 = vmatmul.f32.gmra.mxu0 %v3414
        %v3457 = vpop.f32.mrf.mxu0
        %v3458 = vadd.f32 0.0, %v3457
        %3459 = vmatmul.f32.gmra.mxu0 %v3417
        %v3460 = vpop.f32.mrf.mxu0
        %v3461 = vadd.f32 0.0, %v3460
        %3462 = vmatmul.f32.gmra.mxu0 %v3420
        %v3463 = vpop.f32.mrf.mxu0
        %v3464 = vadd.f32 0.0, %v3463
        %3465 = vmatmul.f32.gmra.mxu0 %v3423
        %v3466 = vpop.f32.mrf.mxu0
        %v3467 = vadd.f32 0.0, %v3466
        %3468 = vmatmul.f32.gmra.mxu0 %v3426
        %v3469 = vpop.f32.mrf.mxu0
        %v3470 = vadd.f32 0.0, %v3469
        %3471 = vmatmul.f32.gmra.mxu0 %v3429
        %v3472 = vpop.f32.mrf.mxu0
        %v3473 = vadd.f32 0.0, %v3472
        %3474 = vmatmul.f32.gmra.mxu0 %v3432
        %v3475 = vpop.f32.mrf.mxu0
        %v3476 = vadd.f32 0.0, %v3475
        %3477 = vmatmul.f32.gmra.mxu0 %v3435
        %v3478 = vpop.f32.mrf.mxu0
        %v3479 = vadd.f32 0.0, %v3478
        %3480 = vdwg.mxu0
        %v3481 = vadd.f32 %v3278, %v3458
        %v3482 = vadd.f32 %v3279, %v3461
        %v3483 = vadd.f32 %v3280, %v3464
        %v3484 = vadd.f32 %v3281, %v3467
        %v3485 = vadd.f32 %v3282, %v3470
        %v3486 = vadd.f32 %v3283, %v3473
        %v3487 = vadd.f32 %v3284, %v3476
        %v3488 = vadd.f32 %v3285, %v3479
        %s3489 = scalar_lea.vmem %s3, 1536
        %v3490 = vld [vmem:[%s3489] sm:$0xff]
        %v3491 = vld [vmem:[%s3489 + $0x8] sm:$0xff]
        %v3492 = vld [vmem:[%s3489 + $0x10] sm:$0xff]
        %v3493 = vld [vmem:[%s3489 + $0x18] sm:$0xff]
        %v3494 = vld [vmem:[%s3489 + $0x20] sm:$0xff]
        %v3495 = vld [vmem:[%s3489 + $0x28] sm:$0xff]
        %v3496 = vld [vmem:[%s3489 + $0x30] sm:$0xff]
        %v3497 = vld [vmem:[%s3489 + $0x38] sm:$0xff]
        %v3498 = vld [vmem:[%s3489 + $0x40] sm:$0xff]
        %v3499 = vld [vmem:[%s3489 + $0x48] sm:$0xff]
        %v3500 = vld [vmem:[%s3489 + $0x50] sm:$0xff]
        %v3501 = vld [vmem:[%s3489 + $0x58] sm:$0xff]
        %v3502 = vld [vmem:[%s3489 + $0x60] sm:$0xff]
        %v3503 = vld [vmem:[%s3489 + $0x68] sm:$0xff]
        %v3504 = vld [vmem:[%s3489 + $0x70] sm:$0xff]
        %v3505 = vld [vmem:[%s3489 + $0x78] sm:$0xff]
        %v3507 = vsel %vm1084, %v3491, 0
        %v3510 = vsel %vm1084, %v3493, 0
        %v3513 = vsel %vm1084, %v3495, 0
        %v3516 = vsel %vm1084, %v3497, 0
        %v3519 = vsel %vm1084, %v3499, 0
        %v3522 = vsel %vm1084, %v3501, 0
        %v3525 = vsel %vm1084, %v3503, 0
        %v3528 = vsel %vm1084, %v3505, 0
        %3530 = vmatpush.msra.mxu0 %v1065
        %3531 = vmatpush.msra.mxu0 %v1064
        %3532 = vmatpush.msra.mxu0 %v1063
        %3533 = vmatpush.msra.mxu0 %v1062
        %3534 = vmatpush.msra.mxu0 %v1061
        %3535 = vmatpush.msra.mxu0 %v1060
        %3536 = vmatpush.msra.mxu0 %v1059
        %3537 = vmatpush.msra.mxu0 %v1058
        %3538 = vmatpush.msra.mxu0 %v1057
        %3539 = vmatpush.msra.mxu0 %v1056
        %3540 = vmatpush.msra.mxu0 %v1055
        %3541 = vmatpush.msra.mxu0 %v1054
        %3542 = vmatpush.msra.mxu0 %v1053
        %3543 = vmatpush.msra.mxu0 %v1052
        %3544 = vmatpush.msra.mxu0 %v1051
        %3545 = vmatpush.msra.mxu0 %v1050
        %3546 = vmatmul.f32.gmra.mxu0 %v3490
        %v3547 = vpop.f32.mrf.mxu0
        %v3548 = vadd.f32 0.0, %v3547
        %3549 = vmatmul.f32.gmra.mxu0 %v3492
        %v3550 = vpop.f32.mrf.mxu0
        %v3551 = vadd.f32 0.0, %v3550
        %3552 = vmatmul.f32.gmra.mxu0 %v3494
        %v3553 = vpop.f32.mrf.mxu0
        %v3554 = vadd.f32 0.0, %v3553
        %3555 = vmatmul.f32.gmra.mxu0 %v3496
        %v3556 = vpop.f32.mrf.mxu0
        %v3557 = vadd.f32 0.0, %v3556
        %3558 = vmatmul.f32.gmra.mxu0 %v3498
        %v3559 = vpop.f32.mrf.mxu0
        %v3560 = vadd.f32 0.0, %v3559
        %3561 = vmatmul.f32.gmra.mxu0 %v3500
        %v3562 = vpop.f32.mrf.mxu0
        %v3563 = vadd.f32 0.0, %v3562
        %3564 = vmatmul.f32.gmra.mxu0 %v3502
        %v3565 = vpop.f32.mrf.mxu0
        %v3566 = vadd.f32 0.0, %v3565
        %3567 = vmatmul.f32.gmra.mxu0 %v3504
        %v3568 = vpop.f32.mrf.mxu0
        %v3569 = vadd.f32 0.0, %v3568
        %3570 = vdwg.mxu0
        %3571 = vmatpush.msra.mxu0 0.0
        %3572 = vmatpush.msra.mxu0 0.0
        %3573 = vmatpush.msra.mxu0 0.0
        %3574 = vmatpush.msra.mxu0 0.0
        %3575 = vmatpush.msra.mxu0 0.0
        %3576 = vmatpush.msra.mxu0 0.0
        %3577 = vmatpush.msra.mxu0 0.0
        %3578 = vmatpush.msra.mxu0 0.0
        %3579 = vmatpush.msra.mxu0 0.0
        %3580 = vmatpush.msra.mxu0 0.0
        %3581 = vmatpush.msra.mxu0 0.0
        %3582 = vmatpush.msra.mxu0 0.0
        %3583 = vmatpush.msra.mxu0 0.0
        %3584 = vmatpush.msra.mxu0 0.0
        %3585 = vmatpush.msra.mxu0 %v1067
        %3586 = vmatpush.msra.mxu0 %v1066
        %3587 = vmatmul.f32.gmra.mxu0 %v3507
        %v3588 = vpop.f32.mrf.mxu0
        %v3589 = vadd.f32 %v3548, %v3588
        %3590 = vmatmul.f32.gmra.mxu0 %v3510
        %v3591 = vpop.f32.mrf.mxu0
        %v3592 = vadd.f32 %v3551, %v3591
        %3593 = vmatmul.f32.gmra.mxu0 %v3513
        %v3594 = vpop.f32.mrf.mxu0
        %v3595 = vadd.f32 %v3554, %v3594
        %3596 = vmatmul.f32.gmra.mxu0 %v3516
        %v3597 = vpop.f32.mrf.mxu0
        %v3598 = vadd.f32 %v3557, %v3597
        %3599 = vmatmul.f32.gmra.mxu0 %v3519
        %v3600 = vpop.f32.mrf.mxu0
        %v3601 = vadd.f32 %v3560, %v3600
        %3602 = vmatmul.f32.gmra.mxu0 %v3522
        %v3603 = vpop.f32.mrf.mxu0
        %v3604 = vadd.f32 %v3563, %v3603
        %3605 = vmatmul.f32.gmra.mxu0 %v3525
        %v3606 = vpop.f32.mrf.mxu0
        %v3607 = vadd.f32 %v3566, %v3606
        %3608 = vmatmul.f32.gmra.mxu0 %v3528
        %v3609 = vpop.f32.mrf.mxu0
        %v3610 = vadd.f32 %v3569, %v3609
        %3611 = vdwg.mxu0
        %s3612 = scalar_lea.vmem %s4, 288
        %v3613 = vld [vmem:[%s3612] sm:$0xff]
        %v3614 = vld [vmem:[%s3612 + $0x8] sm:$0xff]
        %v3615 = vld [vmem:[%s3612 + $0x10] sm:$0xf]
        %v3617 = vsel %vm1321, %v3589, 0
        %v3620 = vsel %vm1321, %v3592, 0
        %v3623 = vsel %vm1321, %v3595, 0
        %v3626 = vsel %vm1321, %v3598, 0
        %v3629 = vsel %vm1321, %v3601, 0
        %v3632 = vsel %vm1321, %v3604, 0
        %v3635 = vsel %vm1321, %v3607, 0
        %v3638 = vsel %vm1321, %v3610, 0
        %v3641 = vsel %vm1346, %v3615, 0
        %3643 = vmatpush.msra.mxu0 0.0
        %3644 = vmatpush.msra.mxu0 0.0
        %3645 = vmatpush.msra.mxu0 0.0
        %3646 = vmatpush.msra.mxu0 0.0
        %3647 = vmatpush.msra.mxu0 0.0
        %3648 = vmatpush.msra.mxu0 0.0
        %3649 = vmatpush.msra.mxu0 0.0
        %3650 = vmatpush.msra.mxu0 0.0
        %3651 = vmatpush.msra.mxu0 0.0
        %3652 = vmatpush.msra.mxu0 0.0
        %3653 = vmatpush.msra.mxu0 0.0
        %3654 = vmatpush.msra.mxu0 0.0
        %3655 = vmatpush.msra.mxu0 0.0
        %3656 = vmatpush.msra.mxu0 %v3641
        %3657 = vmatpush.msra.mxu0 %v3614
        %3658 = vmatpush.msra.mxu0 %v3613
        %3659 = vmatmul.f32.gmra.mxu0 %v3617
        %v3660 = vpop.f32.mrf.mxu0
        %v3661 = vadd.f32 0.0, %v3660
        %3662 = vmatmul.f32.gmra.mxu0 %v3620
        %v3663 = vpop.f32.mrf.mxu0
        %v3664 = vadd.f32 0.0, %v3663
        %3665 = vmatmul.f32.gmra.mxu0 %v3623
        %v3666 = vpop.f32.mrf.mxu0
        %v3667 = vadd.f32 0.0, %v3666
        %3668 = vmatmul.f32.gmra.mxu0 %v3626
        %v3669 = vpop.f32.mrf.mxu0
        %v3670 = vadd.f32 0.0, %v3669
        %3671 = vmatmul.f32.gmra.mxu0 %v3629
        %v3672 = vpop.f32.mrf.mxu0
        %v3673 = vadd.f32 0.0, %v3672
        %3674 = vmatmul.f32.gmra.mxu0 %v3632
        %v3675 = vpop.f32.mrf.mxu0
        %v3676 = vadd.f32 0.0, %v3675
        %3677 = vmatmul.f32.gmra.mxu0 %v3635
        %v3678 = vpop.f32.mrf.mxu0
        %v3679 = vadd.f32 0.0, %v3678
        %3680 = vmatmul.f32.gmra.mxu0 %v3638
        %v3681 = vpop.f32.mrf.mxu0
        %v3682 = vadd.f32 0.0, %v3681
        %3683 = vdwg.mxu0
        %v3684 = vadd.f32 %v3481, %v3661
        %v3685 = vadd.f32 %v3482, %v3664
        %v3686 = vadd.f32 %v3483, %v3667
        %v3687 = vadd.f32 %v3484, %v3670
        %v3688 = vadd.f32 %v3485, %v3673
        %v3689 = vadd.f32 %v3486, %v3676
        %v3690 = vadd.f32 %v3487, %v3679
        %v3691 = vadd.f32 %v3488, %v3682
        %s3692 = scalar_lea.vmem %s3, 1664
        %v3693 = vld [vmem:[%s3692] sm:$0xff]
        %v3694 = vld [vmem:[%s3692 + $0x8] sm:$0xff]
        %v3695 = vld [vmem:[%s3692 + $0x10] sm:$0xff]
        %v3696 = vld [vmem:[%s3692 + $0x18] sm:$0xff]
        %v3697 = vld [vmem:[%s3692 + $0x20] sm:$0xff]
        %v3698 = vld [vmem:[%s3692 + $0x28] sm:$0xff]
        %v3699 = vld [vmem:[%s3692 + $0x30] sm:$0xff]
        %v3700 = vld [vmem:[%s3692 + $0x38] sm:$0xff]
        %v3701 = vld [vmem:[%s3692 + $0x40] sm:$0xff]
        %v3702 = vld [vmem:[%s3692 + $0x48] sm:$0xff]
        %v3703 = vld [vmem:[%s3692 + $0x50] sm:$0xff]
        %v3704 = vld [vmem:[%s3692 + $0x58] sm:$0xff]
        %v3705 = vld [vmem:[%s3692 + $0x60] sm:$0xff]
        %v3706 = vld [vmem:[%s3692 + $0x68] sm:$0xff]
        %v3707 = vld [vmem:[%s3692 + $0x70] sm:$0xff]
        %v3708 = vld [vmem:[%s3692 + $0x78] sm:$0xff]
        %v3710 = vsel %vm1084, %v3694, 0
        %v3713 = vsel %vm1084, %v3696, 0
        %v3716 = vsel %vm1084, %v3698, 0
        %v3719 = vsel %vm1084, %v3700, 0
        %v3722 = vsel %vm1084, %v3702, 0
        %v3725 = vsel %vm1084, %v3704, 0
        %v3728 = vsel %vm1084, %v3706, 0
        %v3731 = vsel %vm1084, %v3708, 0
        %3733 = vmatpush.msra.mxu0 %v1065
        %3734 = vmatpush.msra.mxu0 %v1064
        %3735 = vmatpush.msra.mxu0 %v1063
        %3736 = vmatpush.msra.mxu0 %v1062
        %3737 = vmatpush.msra.mxu0 %v1061
        %3738 = vmatpush.msra.mxu0 %v1060
        %3739 = vmatpush.msra.mxu0 %v1059
        %3740 = vmatpush.msra.mxu0 %v1058
        %3741 = vmatpush.msra.mxu0 %v1057
        %3742 = vmatpush.msra.mxu0 %v1056
        %3743 = vmatpush.msra.mxu0 %v1055
        %3744 = vmatpush.msra.mxu0 %v1054
        %3745 = vmatpush.msra.mxu0 %v1053
        %3746 = vmatpush.msra.mxu0 %v1052
        %3747 = vmatpush.msra.mxu0 %v1051
        %3748 = vmatpush.msra.mxu0 %v1050
        %3749 = vmatmul.f32.gmra.mxu0 %v3693
        %v3750 = vpop.f32.mrf.mxu0
        %v3751 = vadd.f32 0.0, %v3750
        %3752 = vmatmul.f32.gmra.mxu0 %v3695
        %v3753 = vpop.f32.mrf.mxu0
        %v3754 = vadd.f32 0.0, %v3753
        %3755 = vmatmul.f32.gmra.mxu0 %v3697
        %v3756 = vpop.f32.mrf.mxu0
        %v3757 = vadd.f32 0.0, %v3756
        %3758 = vmatmul.f32.gmra.mxu0 %v3699
        %v3759 = vpop.f32.mrf.mxu0
        %v3760 = vadd.f32 0.0, %v3759
        %3761 = vmatmul.f32.gmra.mxu0 %v3701
        %v3762 = vpop.f32.mrf.mxu0
        %v3763 = vadd.f32 0.0, %v3762
        %3764 = vmatmul.f32.gmra.mxu0 %v3703
        %v3765 = vpop.f32.mrf.mxu0
        %v3766 = vadd.f32 0.0, %v3765
        %3767 = vmatmul.f32.gmra.mxu0 %v3705
        %v3768 = vpop.f32.mrf.mxu0
        %v3769 = vadd.f32 0.0, %v3768
        %3770 = vmatmul.f32.gmra.mxu0 %v3707
        %v3771 = vpop.f32.mrf.mxu0
        %v3772 = vadd.f32 0.0, %v3771
        %3773 = vdwg.mxu0
        %3774 = vmatpush.msra.mxu0 0.0
        %3775 = vmatpush.msra.mxu0 0.0
        %3776 = vmatpush.msra.mxu0 0.0
        %3777 = vmatpush.msra.mxu0 0.0
        %3778 = vmatpush.msra.mxu0 0.0
        %3779 = vmatpush.msra.mxu0 0.0
        %3780 = vmatpush.msra.mxu0 0.0
        %3781 = vmatpush.msra.mxu0 0.0
        %3782 = vmatpush.msra.mxu0 0.0
        %3783 = vmatpush.msra.mxu0 0.0
        %3784 = vmatpush.msra.mxu0 0.0
        %3785 = vmatpush.msra.mxu0 0.0
        %3786 = vmatpush.msra.mxu0 0.0
        %3787 = vmatpush.msra.mxu0 0.0
        %3788 = vmatpush.msra.mxu0 %v1067
        %3789 = vmatpush.msra.mxu0 %v1066
        %3790 = vmatmul.f32.gmra.mxu0 %v3710
        %v3791 = vpop.f32.mrf.mxu0
        %v3792 = vadd.f32 %v3751, %v3791
        %3793 = vmatmul.f32.gmra.mxu0 %v3713
        %v3794 = vpop.f32.mrf.mxu0
        %v3795 = vadd.f32 %v3754, %v3794
        %3796 = vmatmul.f32.gmra.mxu0 %v3716
        %v3797 = vpop.f32.mrf.mxu0
        %v3798 = vadd.f32 %v3757, %v3797
        %3799 = vmatmul.f32.gmra.mxu0 %v3719
        %v3800 = vpop.f32.mrf.mxu0
        %v3801 = vadd.f32 %v3760, %v3800
        %3802 = vmatmul.f32.gmra.mxu0 %v3722
        %v3803 = vpop.f32.mrf.mxu0
        %v3804 = vadd.f32 %v3763, %v3803
        %3805 = vmatmul.f32.gmra.mxu0 %v3725
        %v3806 = vpop.f32.mrf.mxu0
        %v3807 = vadd.f32 %v3766, %v3806
        %3808 = vmatmul.f32.gmra.mxu0 %v3728
        %v3809 = vpop.f32.mrf.mxu0
        %v3810 = vadd.f32 %v3769, %v3809
        %3811 = vmatmul.f32.gmra.mxu0 %v3731
        %v3812 = vpop.f32.mrf.mxu0
        %v3813 = vadd.f32 %v3772, %v3812
        %3814 = vdwg.mxu0
        %s3815 = scalar_lea.vmem %s4, 312
        %v3816 = vld [vmem:[%s3815] sm:$0xff]
        %v3817 = vld [vmem:[%s3815 + $0x8] sm:$0xff]
        %v3818 = vld [vmem:[%s3815 + $0x10] sm:$0xf]
        %v3820 = vsel %vm1321, %v3792, 0
        %v3823 = vsel %vm1321, %v3795, 0
        %v3826 = vsel %vm1321, %v3798, 0
        %v3829 = vsel %vm1321, %v3801, 0
        %v3832 = vsel %vm1321, %v3804, 0
        %v3835 = vsel %vm1321, %v3807, 0
        %v3838 = vsel %vm1321, %v3810, 0
        %v3841 = vsel %vm1321, %v3813, 0
        %v3844 = vsel %vm1346, %v3818, 0
        %3846 = vmatpush.msra.mxu0 0.0
        %3847 = vmatpush.msra.mxu0 0.0
        %3848 = vmatpush.msra.mxu0 0.0
        %3849 = vmatpush.msra.mxu0 0.0
        %3850 = vmatpush.msra.mxu0 0.0
        %3851 = vmatpush.msra.mxu0 0.0
        %3852 = vmatpush.msra.mxu0 0.0
        %3853 = vmatpush.msra.mxu0 0.0
        %3854 = vmatpush.msra.mxu0 0.0
        %3855 = vmatpush.msra.mxu0 0.0
        %3856 = vmatpush.msra.mxu0 0.0
        %3857 = vmatpush.msra.mxu0 0.0
        %3858 = vmatpush.msra.mxu0 0.0
        %3859 = vmatpush.msra.mxu0 %v3844
        %3860 = vmatpush.msra.mxu0 %v3817
        %3861 = vmatpush.msra.mxu0 %v3816
        %3862 = vmatmul.f32.gmra.mxu0 %v3820
        %v3863 = vpop.f32.mrf.mxu0
        %v3864 = vadd.f32 0.0, %v3863
        %3865 = vmatmul.f32.gmra.mxu0 %v3823
        %v3866 = vpop.f32.mrf.mxu0
        %v3867 = vadd.f32 0.0, %v3866
        %3868 = vmatmul.f32.gmra.mxu0 %v3826
        %v3869 = vpop.f32.mrf.mxu0
        %v3870 = vadd.f32 0.0, %v3869
        %3871 = vmatmul.f32.gmra.mxu0 %v3829
        %v3872 = vpop.f32.mrf.mxu0
        %v3873 = vadd.f32 0.0, %v3872
        %3874 = vmatmul.f32.gmra.mxu0 %v3832
        %v3875 = vpop.f32.mrf.mxu0
        %v3876 = vadd.f32 0.0, %v3875
        %3877 = vmatmul.f32.gmra.mxu0 %v3835
        %v3878 = vpop.f32.mrf.mxu0
        %v3879 = vadd.f32 0.0, %v3878
        %3880 = vmatmul.f32.gmra.mxu0 %v3838
        %v3881 = vpop.f32.mrf.mxu0
        %v3882 = vadd.f32 0.0, %v3881
        %3883 = vmatmul.f32.gmra.mxu0 %v3841
        %v3884 = vpop.f32.mrf.mxu0
        %v3885 = vadd.f32 0.0, %v3884
        %3886 = vdwg.mxu0
        %v3887 = vadd.f32 %v3684, %v3864
        %v3888 = vadd.f32 %v3685, %v3867
        %v3889 = vadd.f32 %v3686, %v3870
        %v3890 = vadd.f32 %v3687, %v3873
        %v3891 = vadd.f32 %v3688, %v3876
        %v3892 = vadd.f32 %v3689, %v3879
        %v3893 = vadd.f32 %v3690, %v3882
        %v3894 = vadd.f32 %v3691, %v3885
        %s3895 = scalar_lea.vmem %s3, 1792
        %v3896 = vld [vmem:[%s3895] sm:$0xff]
        %v3897 = vld [vmem:[%s3895 + $0x8] sm:$0xff]
        %v3898 = vld [vmem:[%s3895 + $0x10] sm:$0xff]
        %v3899 = vld [vmem:[%s3895 + $0x18] sm:$0xff]
        %v3900 = vld [vmem:[%s3895 + $0x20] sm:$0xff]
        %v3901 = vld [vmem:[%s3895 + $0x28] sm:$0xff]
        %v3902 = vld [vmem:[%s3895 + $0x30] sm:$0xff]
        %v3903 = vld [vmem:[%s3895 + $0x38] sm:$0xff]
        %v3904 = vld [vmem:[%s3895 + $0x40] sm:$0xff]
        %v3905 = vld [vmem:[%s3895 + $0x48] sm:$0xff]
        %v3906 = vld [vmem:[%s3895 + $0x50] sm:$0xff]
        %v3907 = vld [vmem:[%s3895 + $0x58] sm:$0xff]
        %v3908 = vld [vmem:[%s3895 + $0x60] sm:$0xff]
        %v3909 = vld [vmem:[%s3895 + $0x68] sm:$0xff]
        %v3910 = vld [vmem:[%s3895 + $0x70] sm:$0xff]
        %v3911 = vld [vmem:[%s3895 + $0x78] sm:$0xff]
        %v3913 = vsel %vm1084, %v3897, 0
        %v3916 = vsel %vm1084, %v3899, 0
        %v3919 = vsel %vm1084, %v3901, 0
        %v3922 = vsel %vm1084, %v3903, 0
        %v3925 = vsel %vm1084, %v3905, 0
        %v3928 = vsel %vm1084, %v3907, 0
        %v3931 = vsel %vm1084, %v3909, 0
        %v3934 = vsel %vm1084, %v3911, 0
        %3936 = vmatpush.msra.mxu0 %v1065
        %3937 = vmatpush.msra.mxu0 %v1064
        %3938 = vmatpush.msra.mxu0 %v1063
        %3939 = vmatpush.msra.mxu0 %v1062
        %3940 = vmatpush.msra.mxu0 %v1061
        %3941 = vmatpush.msra.mxu0 %v1060
        %3942 = vmatpush.msra.mxu0 %v1059
        %3943 = vmatpush.msra.mxu0 %v1058
        %3944 = vmatpush.msra.mxu0 %v1057
        %3945 = vmatpush.msra.mxu0 %v1056
        %3946 = vmatpush.msra.mxu0 %v1055
        %3947 = vmatpush.msra.mxu0 %v1054
        %3948 = vmatpush.msra.mxu0 %v1053
        %3949 = vmatpush.msra.mxu0 %v1052
        %3950 = vmatpush.msra.mxu0 %v1051
        %3951 = vmatpush.msra.mxu0 %v1050
        %3952 = vmatmul.f32.gmra.mxu0 %v3896
        %v3953 = vpop.f32.mrf.mxu0
        %v3954 = vadd.f32 0.0, %v3953
        %3955 = vmatmul.f32.gmra.mxu0 %v3898
        %v3956 = vpop.f32.mrf.mxu0
        %v3957 = vadd.f32 0.0, %v3956
        %3958 = vmatmul.f32.gmra.mxu0 %v3900
        %v3959 = vpop.f32.mrf.mxu0
        %v3960 = vadd.f32 0.0, %v3959
        %3961 = vmatmul.f32.gmra.mxu0 %v3902
        %v3962 = vpop.f32.mrf.mxu0
        %v3963 = vadd.f32 0.0, %v3962
        %3964 = vmatmul.f32.gmra.mxu0 %v3904
        %v3965 = vpop.f32.mrf.mxu0
        %v3966 = vadd.f32 0.0, %v3965
        %3967 = vmatmul.f32.gmra.mxu0 %v3906
        %v3968 = vpop.f32.mrf.mxu0
        %v3969 = vadd.f32 0.0, %v3968
        %3970 = vmatmul.f32.gmra.mxu0 %v3908
        %v3971 = vpop.f32.mrf.mxu0
        %v3972 = vadd.f32 0.0, %v3971
        %3973 = vmatmul.f32.gmra.mxu0 %v3910
        %v3974 = vpop.f32.mrf.mxu0
        %v3975 = vadd.f32 0.0, %v3974
        %3976 = vdwg.mxu0
        %3977 = vmatpush.msra.mxu0 0.0
        %3978 = vmatpush.msra.mxu0 0.0
        %3979 = vmatpush.msra.mxu0 0.0
        %3980 = vmatpush.msra.mxu0 0.0
        %3981 = vmatpush.msra.mxu0 0.0
        %3982 = vmatpush.msra.mxu0 0.0
        %3983 = vmatpush.msra.mxu0 0.0
        %3984 = vmatpush.msra.mxu0 0.0
        %3985 = vmatpush.msra.mxu0 0.0
        %3986 = vmatpush.msra.mxu0 0.0
        %3987 = vmatpush.msra.mxu0 0.0
        %3988 = vmatpush.msra.mxu0 0.0
        %3989 = vmatpush.msra.mxu0 0.0
        %3990 = vmatpush.msra.mxu0 0.0
        %3991 = vmatpush.msra.mxu0 %v1067
        %3992 = vmatpush.msra.mxu0 %v1066
        %3993 = vmatmul.f32.gmra.mxu0 %v3913
        %v3994 = vpop.f32.mrf.mxu0
        %v3995 = vadd.f32 %v3954, %v3994
        %3996 = vmatmul.f32.gmra.mxu0 %v3916
        %v3997 = vpop.f32.mrf.mxu0
        %v3998 = vadd.f32 %v3957, %v3997
        %3999 = vmatmul.f32.gmra.mxu0 %v3919
        %v4000 = vpop.f32.mrf.mxu0
        %v4001 = vadd.f32 %v3960, %v4000
        %4002 = vmatmul.f32.gmra.mxu0 %v3922
        %v4003 = vpop.f32.mrf.mxu0
        %v4004 = vadd.f32 %v3963, %v4003
        %4005 = vmatmul.f32.gmra.mxu0 %v3925
        %v4006 = vpop.f32.mrf.mxu0
        %v4007 = vadd.f32 %v3966, %v4006
        %4008 = vmatmul.f32.gmra.mxu0 %v3928
        %v4009 = vpop.f32.mrf.mxu0
        %v4010 = vadd.f32 %v3969, %v4009
        %4011 = vmatmul.f32.gmra.mxu0 %v3931
        %v4012 = vpop.f32.mrf.mxu0
        %v4013 = vadd.f32 %v3972, %v4012
        %4014 = vmatmul.f32.gmra.mxu0 %v3934
        %v4015 = vpop.f32.mrf.mxu0
        %v4016 = vadd.f32 %v3975, %v4015
        %4017 = vdwg.mxu0
        %s4018 = scalar_lea.vmem %s4, 336
        %v4019 = vld [vmem:[%s4018] sm:$0xff]
        %v4020 = vld [vmem:[%s4018 + $0x8] sm:$0xff]
        %v4021 = vld [vmem:[%s4018 + $0x10] sm:$0xf]
        %v4023 = vsel %vm1321, %v3995, 0
        %v4026 = vsel %vm1321, %v3998, 0
        %v4029 = vsel %vm1321, %v4001, 0
        %v4032 = vsel %vm1321, %v4004, 0
        %v4035 = vsel %vm1321, %v4007, 0
        %v4038 = vsel %vm1321, %v4010, 0
        %v4041 = vsel %vm1321, %v4013, 0
        %v4044 = vsel %vm1321, %v4016, 0
        %v4047 = vsel %vm1346, %v4021, 0
        %4049 = vmatpush.msra.mxu0 0.0
        %4050 = vmatpush.msra.mxu0 0.0
        %4051 = vmatpush.msra.mxu0 0.0
        %4052 = vmatpush.msra.mxu0 0.0
        %4053 = vmatpush.msra.mxu0 0.0
        %4054 = vmatpush.msra.mxu0 0.0
        %4055 = vmatpush.msra.mxu0 0.0
        %4056 = vmatpush.msra.mxu0 0.0
        %4057 = vmatpush.msra.mxu0 0.0
        %4058 = vmatpush.msra.mxu0 0.0
        %4059 = vmatpush.msra.mxu0 0.0
        %4060 = vmatpush.msra.mxu0 0.0
        %4061 = vmatpush.msra.mxu0 0.0
        %4062 = vmatpush.msra.mxu0 %v4047
        %4063 = vmatpush.msra.mxu0 %v4020
        %4064 = vmatpush.msra.mxu0 %v4019
        %4065 = vmatmul.f32.gmra.mxu0 %v4023
        %v4066 = vpop.f32.mrf.mxu0
        %v4067 = vadd.f32 0.0, %v4066
        %4068 = vmatmul.f32.gmra.mxu0 %v4026
        %v4069 = vpop.f32.mrf.mxu0
        %v4070 = vadd.f32 0.0, %v4069
        %4071 = vmatmul.f32.gmra.mxu0 %v4029
        %v4072 = vpop.f32.mrf.mxu0
        %v4073 = vadd.f32 0.0, %v4072
        %4074 = vmatmul.f32.gmra.mxu0 %v4032
        %v4075 = vpop.f32.mrf.mxu0
        %v4076 = vadd.f32 0.0, %v4075
        %4077 = vmatmul.f32.gmra.mxu0 %v4035
        %v4078 = vpop.f32.mrf.mxu0
        %v4079 = vadd.f32 0.0, %v4078
        %4080 = vmatmul.f32.gmra.mxu0 %v4038
        %v4081 = vpop.f32.mrf.mxu0
        %v4082 = vadd.f32 0.0, %v4081
        %4083 = vmatmul.f32.gmra.mxu0 %v4041
        %v4084 = vpop.f32.mrf.mxu0
        %v4085 = vadd.f32 0.0, %v4084
        %4086 = vmatmul.f32.gmra.mxu0 %v4044
        %v4087 = vpop.f32.mrf.mxu0
        %v4088 = vadd.f32 0.0, %v4087
        %4089 = vdwg.mxu0
        %v4090 = vadd.f32 %v3887, %v4067
        %v4091 = vadd.f32 %v3888, %v4070
        %v4092 = vadd.f32 %v3889, %v4073
        %v4093 = vadd.f32 %v3890, %v4076
        %v4094 = vadd.f32 %v3891, %v4079
        %v4095 = vadd.f32 %v3892, %v4082
        %v4096 = vadd.f32 %v3893, %v4085
        %v4097 = vadd.f32 %v3894, %v4088
        %s4098 = scalar_lea.vmem %s3, 1920
        %v4099 = vld [vmem:[%s4098] sm:$0xff]
        %v4100 = vld [vmem:[%s4098 + $0x8] sm:$0xff]
        %v4101 = vld [vmem:[%s4098 + $0x10] sm:$0xff]
        %v4102 = vld [vmem:[%s4098 + $0x18] sm:$0xff]
        %v4103 = vld [vmem:[%s4098 + $0x20] sm:$0xff]
        %v4104 = vld [vmem:[%s4098 + $0x28] sm:$0xff]
        %v4105 = vld [vmem:[%s4098 + $0x30] sm:$0xff]
        %v4106 = vld [vmem:[%s4098 + $0x38] sm:$0xff]
        %v4107 = vld [vmem:[%s4098 + $0x40] sm:$0xff]
        %v4108 = vld [vmem:[%s4098 + $0x48] sm:$0xff]
        %v4109 = vld [vmem:[%s4098 + $0x50] sm:$0xff]
        %v4110 = vld [vmem:[%s4098 + $0x58] sm:$0xff]
        %v4111 = vld [vmem:[%s4098 + $0x60] sm:$0xff]
        %v4112 = vld [vmem:[%s4098 + $0x68] sm:$0xff]
        %v4113 = vld [vmem:[%s4098 + $0x70] sm:$0xff]
        %v4114 = vld [vmem:[%s4098 + $0x78] sm:$0xff]
        %v4116 = vsel %vm1084, %v4100, 0
        %v4119 = vsel %vm1084, %v4102, 0
        %v4122 = vsel %vm1084, %v4104, 0
        %v4125 = vsel %vm1084, %v4106, 0
        %v4128 = vsel %vm1084, %v4108, 0
        %v4131 = vsel %vm1084, %v4110, 0
        %v4134 = vsel %vm1084, %v4112, 0
        %v4137 = vsel %vm1084, %v4114, 0
        %4139 = vmatpush.msra.mxu0 %v1065
        %4140 = vmatpush.msra.mxu0 %v1064
        %4141 = vmatpush.msra.mxu0 %v1063
        %4142 = vmatpush.msra.mxu0 %v1062
        %4143 = vmatpush.msra.mxu0 %v1061
        %4144 = vmatpush.msra.mxu0 %v1060
        %4145 = vmatpush.msra.mxu0 %v1059
        %4146 = vmatpush.msra.mxu0 %v1058
        %4147 = vmatpush.msra.mxu0 %v1057
        %4148 = vmatpush.msra.mxu0 %v1056
        %4149 = vmatpush.msra.mxu0 %v1055
        %4150 = vmatpush.msra.mxu0 %v1054
        %4151 = vmatpush.msra.mxu0 %v1053
        %4152 = vmatpush.msra.mxu0 %v1052
        %4153 = vmatpush.msra.mxu0 %v1051
        %4154 = vmatpush.msra.mxu0 %v1050
        %4155 = vmatmul.f32.gmra.mxu0 %v4099
        %v4156 = vpop.f32.mrf.mxu0
        %v4157 = vadd.f32 0.0, %v4156
        %4158 = vmatmul.f32.gmra.mxu0 %v4101
        %v4159 = vpop.f32.mrf.mxu0
        %v4160 = vadd.f32 0.0, %v4159
        %4161 = vmatmul.f32.gmra.mxu0 %v4103
        %v4162 = vpop.f32.mrf.mxu0
        %v4163 = vadd.f32 0.0, %v4162
        %4164 = vmatmul.f32.gmra.mxu0 %v4105
        %v4165 = vpop.f32.mrf.mxu0
        %v4166 = vadd.f32 0.0, %v4165
        %4167 = vmatmul.f32.gmra.mxu0 %v4107
        %v4168 = vpop.f32.mrf.mxu0
        %v4169 = vadd.f32 0.0, %v4168
        %4170 = vmatmul.f32.gmra.mxu0 %v4109
        %v4171 = vpop.f32.mrf.mxu0
        %v4172 = vadd.f32 0.0, %v4171
        %4173 = vmatmul.f32.gmra.mxu0 %v4111
        %v4174 = vpop.f32.mrf.mxu0
        %v4175 = vadd.f32 0.0, %v4174
        %4176 = vmatmul.f32.gmra.mxu0 %v4113
        %v4177 = vpop.f32.mrf.mxu0
        %v4178 = vadd.f32 0.0, %v4177
        %4179 = vdwg.mxu0
        %4180 = vmatpush.msra.mxu0 0.0
        %4181 = vmatpush.msra.mxu0 0.0
        %4182 = vmatpush.msra.mxu0 0.0
        %4183 = vmatpush.msra.mxu0 0.0
        %4184 = vmatpush.msra.mxu0 0.0
        %4185 = vmatpush.msra.mxu0 0.0
        %4186 = vmatpush.msra.mxu0 0.0
        %4187 = vmatpush.msra.mxu0 0.0
        %4188 = vmatpush.msra.mxu0 0.0
        %4189 = vmatpush.msra.mxu0 0.0
        %4190 = vmatpush.msra.mxu0 0.0
        %4191 = vmatpush.msra.mxu0 0.0
        %4192 = vmatpush.msra.mxu0 0.0
        %4193 = vmatpush.msra.mxu0 0.0
        %4194 = vmatpush.msra.mxu0 %v1067
        %4195 = vmatpush.msra.mxu0 %v1066
        %4196 = vmatmul.f32.gmra.mxu0 %v4116
        %v4197 = vpop.f32.mrf.mxu0
        %v4198 = vadd.f32 %v4157, %v4197
        %4199 = vmatmul.f32.gmra.mxu0 %v4119
        %v4200 = vpop.f32.mrf.mxu0
        %v4201 = vadd.f32 %v4160, %v4200
        %4202 = vmatmul.f32.gmra.mxu0 %v4122
        %v4203 = vpop.f32.mrf.mxu0
        %v4204 = vadd.f32 %v4163, %v4203
        %4205 = vmatmul.f32.gmra.mxu0 %v4125
        %v4206 = vpop.f32.mrf.mxu0
        %v4207 = vadd.f32 %v4166, %v4206
        %4208 = vmatmul.f32.gmra.mxu0 %v4128
        %v4209 = vpop.f32.mrf.mxu0
        %v4210 = vadd.f32 %v4169, %v4209
        %4211 = vmatmul.f32.gmra.mxu0 %v4131
        %v4212 = vpop.f32.mrf.mxu0
        %v4213 = vadd.f32 %v4172, %v4212
        %4214 = vmatmul.f32.gmra.mxu0 %v4134
        %v4215 = vpop.f32.mrf.mxu0
        %v4216 = vadd.f32 %v4175, %v4215
        %4217 = vmatmul.f32.gmra.mxu0 %v4137
        %v4218 = vpop.f32.mrf.mxu0
        %v4219 = vadd.f32 %v4178, %v4218
        %4220 = vdwg.mxu0
        %s4221 = scalar_lea.vmem %s4, 360
        %v4222 = vld [vmem:[%s4221] sm:$0xff]
        %v4223 = vld [vmem:[%s4221 + $0x8] sm:$0xff]
        %v4224 = vld [vmem:[%s4221 + $0x10] sm:$0xf]
        %v4226 = vsel %vm1321, %v4198, 0
        %v4229 = vsel %vm1321, %v4201, 0
        %v4232 = vsel %vm1321, %v4204, 0
        %v4235 = vsel %vm1321, %v4207, 0
        %v4238 = vsel %vm1321, %v4210, 0
        %v4241 = vsel %vm1321, %v4213, 0
        %v4244 = vsel %vm1321, %v4216, 0
        %v4247 = vsel %vm1321, %v4219, 0
        %v4250 = vsel %vm1346, %v4224, 0
        %4252 = vmatpush.msra.mxu0 0.0
        %4253 = vmatpush.msra.mxu0 0.0
        %4254 = vmatpush.msra.mxu0 0.0
        %4255 = vmatpush.msra.mxu0 0.0
        %4256 = vmatpush.msra.mxu0 0.0
        %4257 = vmatpush.msra.mxu0 0.0
        %4258 = vmatpush.msra.mxu0 0.0
        %4259 = vmatpush.msra.mxu0 0.0
        %4260 = vmatpush.msra.mxu0 0.0
        %4261 = vmatpush.msra.mxu0 0.0
        %4262 = vmatpush.msra.mxu0 0.0
        %4263 = vmatpush.msra.mxu0 0.0
        %4264 = vmatpush.msra.mxu0 0.0
        %4265 = vmatpush.msra.mxu0 %v4250
        %4266 = vmatpush.msra.mxu0 %v4223
        %4267 = vmatpush.msra.mxu0 %v4222
        %4268 = vmatmul.f32.gmra.mxu0 %v4226
        %v4269 = vpop.f32.mrf.mxu0
        %v4270 = vadd.f32 0.0, %v4269
        %4271 = vmatmul.f32.gmra.mxu0 %v4229
        %v4272 = vpop.f32.mrf.mxu0
        %v4273 = vadd.f32 0.0, %v4272
        %4274 = vmatmul.f32.gmra.mxu0 %v4232
        %v4275 = vpop.f32.mrf.mxu0
        %v4276 = vadd.f32 0.0, %v4275
        %4277 = vmatmul.f32.gmra.mxu0 %v4235
        %v4278 = vpop.f32.mrf.mxu0
        %v4279 = vadd.f32 0.0, %v4278
        %4280 = vmatmul.f32.gmra.mxu0 %v4238
        %v4281 = vpop.f32.mrf.mxu0
        %v4282 = vadd.f32 0.0, %v4281
        %4283 = vmatmul.f32.gmra.mxu0 %v4241
        %v4284 = vpop.f32.mrf.mxu0
        %v4285 = vadd.f32 0.0, %v4284
        %4286 = vmatmul.f32.gmra.mxu0 %v4244
        %v4287 = vpop.f32.mrf.mxu0
        %v4288 = vadd.f32 0.0, %v4287
        %4289 = vmatmul.f32.gmra.mxu0 %v4247
        %v4290 = vpop.f32.mrf.mxu0
        %v4291 = vadd.f32 0.0, %v4290
        %4292 = vdwg.mxu0
        %v4293 = vadd.f32 %v4090, %v4270
        %v4294 = vadd.f32 %v4091, %v4273
        %v4295 = vadd.f32 %v4092, %v4276
        %v4296 = vadd.f32 %v4093, %v4279
        %v4297 = vadd.f32 %v4094, %v4282
        %v4298 = vadd.f32 %v4095, %v4285
        %v4299 = vadd.f32 %v4096, %v4288
        %v4300 = vadd.f32 %v4097, %v4291
        %s4301 = scalar_lea.vmem %s3, 2048
        %v4302 = vld [vmem:[%s4301] sm:$0xff]
        %v4303 = vld [vmem:[%s4301 + $0x8] sm:$0xff]
        %v4304 = vld [vmem:[%s4301 + $0x10] sm:$0xff]
        %v4305 = vld [vmem:[%s4301 + $0x18] sm:$0xff]
        %v4306 = vld [vmem:[%s4301 + $0x20] sm:$0xff]
        %v4307 = vld [vmem:[%s4301 + $0x28] sm:$0xff]
        %v4308 = vld [vmem:[%s4301 + $0x30] sm:$0xff]
        %v4309 = vld [vmem:[%s4301 + $0x38] sm:$0xff]
        %v4310 = vld [vmem:[%s4301 + $0x40] sm:$0xff]
        %v4311 = vld [vmem:[%s4301 + $0x48] sm:$0xff]
        %v4312 = vld [vmem:[%s4301 + $0x50] sm:$0xff]
        %v4313 = vld [vmem:[%s4301 + $0x58] sm:$0xff]
        %v4314 = vld [vmem:[%s4301 + $0x60] sm:$0xff]
        %v4315 = vld [vmem:[%s4301 + $0x68] sm:$0xff]
        %v4316 = vld [vmem:[%s4301 + $0x70] sm:$0xff]
        %v4317 = vld [vmem:[%s4301 + $0x78] sm:$0xff]
        %v4319 = vsel %vm1084, %v4303, 0
        %v4322 = vsel %vm1084, %v4305, 0
        %v4325 = vsel %vm1084, %v4307, 0
        %v4328 = vsel %vm1084, %v4309, 0
        %v4331 = vsel %vm1084, %v4311, 0
        %v4334 = vsel %vm1084, %v4313, 0
        %v4337 = vsel %vm1084, %v4315, 0
        %v4340 = vsel %vm1084, %v4317, 0
        %4342 = vmatpush.msra.mxu0 %v1065
        %4343 = vmatpush.msra.mxu0 %v1064
        %4344 = vmatpush.msra.mxu0 %v1063
        %4345 = vmatpush.msra.mxu0 %v1062
        %4346 = vmatpush.msra.mxu0 %v1061
        %4347 = vmatpush.msra.mxu0 %v1060
        %4348 = vmatpush.msra.mxu0 %v1059
        %4349 = vmatpush.msra.mxu0 %v1058
        %4350 = vmatpush.msra.mxu0 %v1057
        %4351 = vmatpush.msra.mxu0 %v1056
        %4352 = vmatpush.msra.mxu0 %v1055
        %4353 = vmatpush.msra.mxu0 %v1054
        %4354 = vmatpush.msra.mxu0 %v1053
        %4355 = vmatpush.msra.mxu0 %v1052
        %4356 = vmatpush.msra.mxu0 %v1051
        %4357 = vmatpush.msra.mxu0 %v1050
        %4358 = vmatmul.f32.gmra.mxu0 %v4302
        %v4359 = vpop.f32.mrf.mxu0
        %v4360 = vadd.f32 0.0, %v4359
        %4361 = vmatmul.f32.gmra.mxu0 %v4304
        %v4362 = vpop.f32.mrf.mxu0
        %v4363 = vadd.f32 0.0, %v4362
        %4364 = vmatmul.f32.gmra.mxu0 %v4306
        %v4365 = vpop.f32.mrf.mxu0
        %v4366 = vadd.f32 0.0, %v4365
        %4367 = vmatmul.f32.gmra.mxu0 %v4308
        %v4368 = vpop.f32.mrf.mxu0
        %v4369 = vadd.f32 0.0, %v4368
        %4370 = vmatmul.f32.gmra.mxu0 %v4310
        %v4371 = vpop.f32.mrf.mxu0
        %v4372 = vadd.f32 0.0, %v4371
        %4373 = vmatmul.f32.gmra.mxu0 %v4312
        %v4374 = vpop.f32.mrf.mxu0
        %v4375 = vadd.f32 0.0, %v4374
        %4376 = vmatmul.f32.gmra.mxu0 %v4314
        %v4377 = vpop.f32.mrf.mxu0
        %v4378 = vadd.f32 0.0, %v4377
        %4379 = vmatmul.f32.gmra.mxu0 %v4316
        %v4380 = vpop.f32.mrf.mxu0
        %v4381 = vadd.f32 0.0, %v4380
        %4382 = vdwg.mxu0
        %4383 = vmatpush.msra.mxu0 0.0
        %4384 = vmatpush.msra.mxu0 0.0
        %4385 = vmatpush.msra.mxu0 0.0
        %4386 = vmatpush.msra.mxu0 0.0
        %4387 = vmatpush.msra.mxu0 0.0
        %4388 = vmatpush.msra.mxu0 0.0
        %4389 = vmatpush.msra.mxu0 0.0
        %4390 = vmatpush.msra.mxu0 0.0
        %4391 = vmatpush.msra.mxu0 0.0
        %4392 = vmatpush.msra.mxu0 0.0
        %4393 = vmatpush.msra.mxu0 0.0
        %4394 = vmatpush.msra.mxu0 0.0
        %4395 = vmatpush.msra.mxu0 0.0
        %4396 = vmatpush.msra.mxu0 0.0
        %4397 = vmatpush.msra.mxu0 %v1067
        %4398 = vmatpush.msra.mxu0 %v1066
        %4399 = vmatmul.f32.gmra.mxu0 %v4319
        %v4400 = vpop.f32.mrf.mxu0
        %v4401 = vadd.f32 %v4360, %v4400
        %4402 = vmatmul.f32.gmra.mxu0 %v4322
        %v4403 = vpop.f32.mrf.mxu0
        %v4404 = vadd.f32 %v4363, %v4403
        %4405 = vmatmul.f32.gmra.mxu0 %v4325
        %v4406 = vpop.f32.mrf.mxu0
        %v4407 = vadd.f32 %v4366, %v4406
        %4408 = vmatmul.f32.gmra.mxu0 %v4328
        %v4409 = vpop.f32.mrf.mxu0
        %v4410 = vadd.f32 %v4369, %v4409
        %4411 = vmatmul.f32.gmra.mxu0 %v4331
        %v4412 = vpop.f32.mrf.mxu0
        %v4413 = vadd.f32 %v4372, %v4412
        %4414 = vmatmul.f32.gmra.mxu0 %v4334
        %v4415 = vpop.f32.mrf.mxu0
        %v4416 = vadd.f32 %v4375, %v4415
        %4417 = vmatmul.f32.gmra.mxu0 %v4337
        %v4418 = vpop.f32.mrf.mxu0
        %v4419 = vadd.f32 %v4378, %v4418
        %4420 = vmatmul.f32.gmra.mxu0 %v4340
        %v4421 = vpop.f32.mrf.mxu0
        %v4422 = vadd.f32 %v4381, %v4421
        %4423 = vdwg.mxu0
        %s4424 = scalar_lea.vmem %s4, 384
        %v4425 = vld [vmem:[%s4424] sm:$0xff]
        %v4426 = vld [vmem:[%s4424 + $0x8] sm:$0xff]
        %v4427 = vld [vmem:[%s4424 + $0x10] sm:$0xf]
        %v4429 = vsel %vm1321, %v4401, 0
        %v4432 = vsel %vm1321, %v4404, 0
        %v4435 = vsel %vm1321, %v4407, 0
        %v4438 = vsel %vm1321, %v4410, 0
        %v4441 = vsel %vm1321, %v4413, 0
        %v4444 = vsel %vm1321, %v4416, 0
        %v4447 = vsel %vm1321, %v4419, 0
        %v4450 = vsel %vm1321, %v4422, 0
        %v4453 = vsel %vm1346, %v4427, 0
        %4455 = vmatpush.msra.mxu0 0.0
        %4456 = vmatpush.msra.mxu0 0.0
        %4457 = vmatpush.msra.mxu0 0.0
        %4458 = vmatpush.msra.mxu0 0.0
        %4459 = vmatpush.msra.mxu0 0.0
        %4460 = vmatpush.msra.mxu0 0.0
        %4461 = vmatpush.msra.mxu0 0.0
        %4462 = vmatpush.msra.mxu0 0.0
        %4463 = vmatpush.msra.mxu0 0.0
        %4464 = vmatpush.msra.mxu0 0.0
        %4465 = vmatpush.msra.mxu0 0.0
        %4466 = vmatpush.msra.mxu0 0.0
        %4467 = vmatpush.msra.mxu0 0.0
        %4468 = vmatpush.msra.mxu0 %v4453
        %4469 = vmatpush.msra.mxu0 %v4426
        %4470 = vmatpush.msra.mxu0 %v4425
        %4471 = vmatmul.f32.gmra.mxu0 %v4429
        %v4472 = vpop.f32.mrf.mxu0
        %v4473 = vadd.f32 0.0, %v4472
        %4474 = vmatmul.f32.gmra.mxu0 %v4432
        %v4475 = vpop.f32.mrf.mxu0
        %v4476 = vadd.f32 0.0, %v4475
        %4477 = vmatmul.f32.gmra.mxu0 %v4435
        %v4478 = vpop.f32.mrf.mxu0
        %v4479 = vadd.f32 0.0, %v4478
        %4480 = vmatmul.f32.gmra.mxu0 %v4438
        %v4481 = vpop.f32.mrf.mxu0
        %v4482 = vadd.f32 0.0, %v4481
        %4483 = vmatmul.f32.gmra.mxu0 %v4441
        %v4484 = vpop.f32.mrf.mxu0
        %v4485 = vadd.f32 0.0, %v4484
        %4486 = vmatmul.f32.gmra.mxu0 %v4444
        %v4487 = vpop.f32.mrf.mxu0
        %v4488 = vadd.f32 0.0, %v4487
        %4489 = vmatmul.f32.gmra.mxu0 %v4447
        %v4490 = vpop.f32.mrf.mxu0
        %v4491 = vadd.f32 0.0, %v4490
        %4492 = vmatmul.f32.gmra.mxu0 %v4450
        %v4493 = vpop.f32.mrf.mxu0
        %v4494 = vadd.f32 0.0, %v4493
        %4495 = vdwg.mxu0
        %v4496 = vadd.f32 %v4293, %v4473
        %v4497 = vadd.f32 %v4294, %v4476
        %v4498 = vadd.f32 %v4295, %v4479
        %v4499 = vadd.f32 %v4296, %v4482
        %v4500 = vadd.f32 %v4297, %v4485
        %v4501 = vadd.f32 %v4298, %v4488
        %v4502 = vadd.f32 %v4299, %v4491
        %v4503 = vadd.f32 %v4300, %v4494
        %s4504 = scalar_lea.vmem %s3, 2176
        %v4505 = vld [vmem:[%s4504] sm:$0xff]
        %v4506 = vld [vmem:[%s4504 + $0x8] sm:$0xff]
        %v4507 = vld [vmem:[%s4504 + $0x10] sm:$0xff]
        %v4508 = vld [vmem:[%s4504 + $0x18] sm:$0xff]
        %v4509 = vld [vmem:[%s4504 + $0x20] sm:$0xff]
        %v4510 = vld [vmem:[%s4504 + $0x28] sm:$0xff]
        %v4511 = vld [vmem:[%s4504 + $0x30] sm:$0xff]
        %v4512 = vld [vmem:[%s4504 + $0x38] sm:$0xff]
        %v4513 = vld [vmem:[%s4504 + $0x40] sm:$0xff]
        %v4514 = vld [vmem:[%s4504 + $0x48] sm:$0xff]
        %v4515 = vld [vmem:[%s4504 + $0x50] sm:$0xff]
        %v4516 = vld [vmem:[%s4504 + $0x58] sm:$0xff]
        %v4517 = vld [vmem:[%s4504 + $0x60] sm:$0xff]
        %v4518 = vld [vmem:[%s4504 + $0x68] sm:$0xff]
        %v4519 = vld [vmem:[%s4504 + $0x70] sm:$0xff]
        %v4520 = vld [vmem:[%s4504 + $0x78] sm:$0xff]
        %v4522 = vsel %vm1084, %v4506, 0
        %v4525 = vsel %vm1084, %v4508, 0
        %v4528 = vsel %vm1084, %v4510, 0
        %v4531 = vsel %vm1084, %v4512, 0
        %v4534 = vsel %vm1084, %v4514, 0
        %v4537 = vsel %vm1084, %v4516, 0
        %v4540 = vsel %vm1084, %v4518, 0
        %v4543 = vsel %vm1084, %v4520, 0
        %4545 = vmatpush.msra.mxu0 %v1065
        %4546 = vmatpush.msra.mxu0 %v1064
        %4547 = vmatpush.msra.mxu0 %v1063
        %4548 = vmatpush.msra.mxu0 %v1062
        %4549 = vmatpush.msra.mxu0 %v1061
        %4550 = vmatpush.msra.mxu0 %v1060
        %4551 = vmatpush.msra.mxu0 %v1059
        %4552 = vmatpush.msra.mxu0 %v1058
        %4553 = vmatpush.msra.mxu0 %v1057
        %4554 = vmatpush.msra.mxu0 %v1056
        %4555 = vmatpush.msra.mxu0 %v1055
        %4556 = vmatpush.msra.mxu0 %v1054
        %4557 = vmatpush.msra.mxu0 %v1053
        %4558 = vmatpush.msra.mxu0 %v1052
        %4559 = vmatpush.msra.mxu0 %v1051
        %4560 = vmatpush.msra.mxu0 %v1050
        %4561 = vmatmul.f32.gmra.mxu0 %v4505
        %v4562 = vpop.f32.mrf.mxu0
        %v4563 = vadd.f32 0.0, %v4562
        %4564 = vmatmul.f32.gmra.mxu0 %v4507
        %v4565 = vpop.f32.mrf.mxu0
        %v4566 = vadd.f32 0.0, %v4565
        %4567 = vmatmul.f32.gmra.mxu0 %v4509
        %v4568 = vpop.f32.mrf.mxu0
        %v4569 = vadd.f32 0.0, %v4568
        %4570 = vmatmul.f32.gmra.mxu0 %v4511
        %v4571 = vpop.f32.mrf.mxu0
        %v4572 = vadd.f32 0.0, %v4571
        %4573 = vmatmul.f32.gmra.mxu0 %v4513
        %v4574 = vpop.f32.mrf.mxu0
        %v4575 = vadd.f32 0.0, %v4574
        %4576 = vmatmul.f32.gmra.mxu0 %v4515
        %v4577 = vpop.f32.mrf.mxu0
        %v4578 = vadd.f32 0.0, %v4577
        %4579 = vmatmul.f32.gmra.mxu0 %v4517
        %v4580 = vpop.f32.mrf.mxu0
        %v4581 = vadd.f32 0.0, %v4580
        %4582 = vmatmul.f32.gmra.mxu0 %v4519
        %v4583 = vpop.f32.mrf.mxu0
        %v4584 = vadd.f32 0.0, %v4583
        %4585 = vdwg.mxu0
        %4586 = vmatpush.msra.mxu0 0.0
        %4587 = vmatpush.msra.mxu0 0.0
        %4588 = vmatpush.msra.mxu0 0.0
        %4589 = vmatpush.msra.mxu0 0.0
        %4590 = vmatpush.msra.mxu0 0.0
        %4591 = vmatpush.msra.mxu0 0.0
        %4592 = vmatpush.msra.mxu0 0.0
        %4593 = vmatpush.msra.mxu0 0.0
        %4594 = vmatpush.msra.mxu0 0.0
        %4595 = vmatpush.msra.mxu0 0.0
        %4596 = vmatpush.msra.mxu0 0.0
        %4597 = vmatpush.msra.mxu0 0.0
        %4598 = vmatpush.msra.mxu0 0.0
        %4599 = vmatpush.msra.mxu0 0.0
        %4600 = vmatpush.msra.mxu0 %v1067
        %4601 = vmatpush.msra.mxu0 %v1066
        %4602 = vmatmul.f32.gmra.mxu0 %v4522
        %v4603 = vpop.f32.mrf.mxu0
        %v4604 = vadd.f32 %v4563, %v4603
        %4605 = vmatmul.f32.gmra.mxu0 %v4525
        %v4606 = vpop.f32.mrf.mxu0
        %v4607 = vadd.f32 %v4566, %v4606
        %4608 = vmatmul.f32.gmra.mxu0 %v4528
        %v4609 = vpop.f32.mrf.mxu0
        %v4610 = vadd.f32 %v4569, %v4609
        %4611 = vmatmul.f32.gmra.mxu0 %v4531
        %v4612 = vpop.f32.mrf.mxu0
        %v4613 = vadd.f32 %v4572, %v4612
        %4614 = vmatmul.f32.gmra.mxu0 %v4534
        %v4615 = vpop.f32.mrf.mxu0
        %v4616 = vadd.f32 %v4575, %v4615
        %4617 = vmatmul.f32.gmra.mxu0 %v4537
        %v4618 = vpop.f32.mrf.mxu0
        %v4619 = vadd.f32 %v4578, %v4618
        %4620 = vmatmul.f32.gmra.mxu0 %v4540
        %v4621 = vpop.f32.mrf.mxu0
        %v4622 = vadd.f32 %v4581, %v4621
        %4623 = vmatmul.f32.gmra.mxu0 %v4543
        %v4624 = vpop.f32.mrf.mxu0
        %v4625 = vadd.f32 %v4584, %v4624
        %4626 = vdwg.mxu0
        %s4627 = scalar_lea.vmem %s4, 408
        %v4628 = vld [vmem:[%s4627] sm:$0xff]
        %v4629 = vld [vmem:[%s4627 + $0x8] sm:$0xff]
        %v4630 = vld [vmem:[%s4627 + $0x10] sm:$0xf]
        %v4632 = vsel %vm1321, %v4604, 0
        %v4635 = vsel %vm1321, %v4607, 0
        %v4638 = vsel %vm1321, %v4610, 0
        %v4641 = vsel %vm1321, %v4613, 0
        %v4644 = vsel %vm1321, %v4616, 0
        %v4647 = vsel %vm1321, %v4619, 0
        %v4650 = vsel %vm1321, %v4622, 0
        %v4653 = vsel %vm1321, %v4625, 0
        %v4656 = vsel %vm1346, %v4630, 0
        %4658 = vmatpush.msra.mxu0 0.0
        %4659 = vmatpush.msra.mxu0 0.0
        %4660 = vmatpush.msra.mxu0 0.0
        %4661 = vmatpush.msra.mxu0 0.0
        %4662 = vmatpush.msra.mxu0 0.0
        %4663 = vmatpush.msra.mxu0 0.0
        %4664 = vmatpush.msra.mxu0 0.0
        %4665 = vmatpush.msra.mxu0 0.0
        %4666 = vmatpush.msra.mxu0 0.0
        %4667 = vmatpush.msra.mxu0 0.0
        %4668 = vmatpush.msra.mxu0 0.0
        %4669 = vmatpush.msra.mxu0 0.0
        %4670 = vmatpush.msra.mxu0 0.0
        %4671 = vmatpush.msra.mxu0 %v4656
        %4672 = vmatpush.msra.mxu0 %v4629
        %4673 = vmatpush.msra.mxu0 %v4628
        %4674 = vmatmul.f32.gmra.mxu0 %v4632
        %v4675 = vpop.f32.mrf.mxu0
        %v4676 = vadd.f32 0.0, %v4675
        %4677 = vmatmul.f32.gmra.mxu0 %v4635
        %v4678 = vpop.f32.mrf.mxu0
        %v4679 = vadd.f32 0.0, %v4678
        %4680 = vmatmul.f32.gmra.mxu0 %v4638
        %v4681 = vpop.f32.mrf.mxu0
        %v4682 = vadd.f32 0.0, %v4681
        %4683 = vmatmul.f32.gmra.mxu0 %v4641
        %v4684 = vpop.f32.mrf.mxu0
        %v4685 = vadd.f32 0.0, %v4684
        %4686 = vmatmul.f32.gmra.mxu0 %v4644
        %v4687 = vpop.f32.mrf.mxu0
        %v4688 = vadd.f32 0.0, %v4687
        %4689 = vmatmul.f32.gmra.mxu0 %v4647
        %v4690 = vpop.f32.mrf.mxu0
        %v4691 = vadd.f32 0.0, %v4690
        %4692 = vmatmul.f32.gmra.mxu0 %v4650
        %v4693 = vpop.f32.mrf.mxu0
        %v4694 = vadd.f32 0.0, %v4693
        %4695 = vmatmul.f32.gmra.mxu0 %v4653
        %v4696 = vpop.f32.mrf.mxu0
        %v4697 = vadd.f32 0.0, %v4696
        %4698 = vdwg.mxu0
        %v4699 = vadd.f32 %v4496, %v4676
        %v4700 = vadd.f32 %v4497, %v4679
        %v4701 = vadd.f32 %v4498, %v4682
        %v4702 = vadd.f32 %v4499, %v4685
        %v4703 = vadd.f32 %v4500, %v4688
        %v4704 = vadd.f32 %v4501, %v4691
        %v4705 = vadd.f32 %v4502, %v4694
        %v4706 = vadd.f32 %v4503, %v4697
        %s4707 = scalar_lea.vmem %s3, 2304
        %v4708 = vld [vmem:[%s4707] sm:$0xff]
        %v4709 = vld [vmem:[%s4707 + $0x8] sm:$0xff]
        %v4710 = vld [vmem:[%s4707 + $0x10] sm:$0xff]
        %v4711 = vld [vmem:[%s4707 + $0x18] sm:$0xff]
        %v4712 = vld [vmem:[%s4707 + $0x20] sm:$0xff]
        %v4713 = vld [vmem:[%s4707 + $0x28] sm:$0xff]
        %v4714 = vld [vmem:[%s4707 + $0x30] sm:$0xff]
        %v4715 = vld [vmem:[%s4707 + $0x38] sm:$0xff]
        %v4716 = vld [vmem:[%s4707 + $0x40] sm:$0xff]
        %v4717 = vld [vmem:[%s4707 + $0x48] sm:$0xff]
        %v4718 = vld [vmem:[%s4707 + $0x50] sm:$0xff]
        %v4719 = vld [vmem:[%s4707 + $0x58] sm:$0xff]
        %v4720 = vld [vmem:[%s4707 + $0x60] sm:$0xff]
        %v4721 = vld [vmem:[%s4707 + $0x68] sm:$0xff]
        %v4722 = vld [vmem:[%s4707 + $0x70] sm:$0xff]
        %v4723 = vld [vmem:[%s4707 + $0x78] sm:$0xff]
        %v4725 = vsel %vm1084, %v4709, 0
        %v4728 = vsel %vm1084, %v4711, 0
        %v4731 = vsel %vm1084, %v4713, 0
        %v4734 = vsel %vm1084, %v4715, 0
        %v4737 = vsel %vm1084, %v4717, 0
        %v4740 = vsel %vm1084, %v4719, 0
        %v4743 = vsel %vm1084, %v4721, 0
        %v4746 = vsel %vm1084, %v4723, 0
        %4748 = vmatpush.msra.mxu0 %v1065
        %4749 = vmatpush.msra.mxu0 %v1064
        %4750 = vmatpush.msra.mxu0 %v1063
        %4751 = vmatpush.msra.mxu0 %v1062
        %4752 = vmatpush.msra.mxu0 %v1061
        %4753 = vmatpush.msra.mxu0 %v1060
        %4754 = vmatpush.msra.mxu0 %v1059
        %4755 = vmatpush.msra.mxu0 %v1058
        %4756 = vmatpush.msra.mxu0 %v1057
        %4757 = vmatpush.msra.mxu0 %v1056
        %4758 = vmatpush.msra.mxu0 %v1055
        %4759 = vmatpush.msra.mxu0 %v1054
        %4760 = vmatpush.msra.mxu0 %v1053
        %4761 = vmatpush.msra.mxu0 %v1052
        %4762 = vmatpush.msra.mxu0 %v1051
        %4763 = vmatpush.msra.mxu0 %v1050
        %4764 = vmatmul.f32.gmra.mxu0 %v4708
        %v4765 = vpop.f32.mrf.mxu0
        %v4766 = vadd.f32 0.0, %v4765
        %4767 = vmatmul.f32.gmra.mxu0 %v4710
        %v4768 = vpop.f32.mrf.mxu0
        %v4769 = vadd.f32 0.0, %v4768
        %4770 = vmatmul.f32.gmra.mxu0 %v4712
        %v4771 = vpop.f32.mrf.mxu0
        %v4772 = vadd.f32 0.0, %v4771
        %4773 = vmatmul.f32.gmra.mxu0 %v4714
        %v4774 = vpop.f32.mrf.mxu0
        %v4775 = vadd.f32 0.0, %v4774
        %4776 = vmatmul.f32.gmra.mxu0 %v4716
        %v4777 = vpop.f32.mrf.mxu0
        %v4778 = vadd.f32 0.0, %v4777
        %4779 = vmatmul.f32.gmra.mxu0 %v4718
        %v4780 = vpop.f32.mrf.mxu0
        %v4781 = vadd.f32 0.0, %v4780
        %4782 = vmatmul.f32.gmra.mxu0 %v4720
        %v4783 = vpop.f32.mrf.mxu0
        %v4784 = vadd.f32 0.0, %v4783
        %4785 = vmatmul.f32.gmra.mxu0 %v4722
        %v4786 = vpop.f32.mrf.mxu0
        %v4787 = vadd.f32 0.0, %v4786
        %4788 = vdwg.mxu0
        %4789 = vmatpush.msra.mxu0 0.0
        %4790 = vmatpush.msra.mxu0 0.0
        %4791 = vmatpush.msra.mxu0 0.0
        %4792 = vmatpush.msra.mxu0 0.0
        %4793 = vmatpush.msra.mxu0 0.0
        %4794 = vmatpush.msra.mxu0 0.0
        %4795 = vmatpush.msra.mxu0 0.0
        %4796 = vmatpush.msra.mxu0 0.0
        %4797 = vmatpush.msra.mxu0 0.0
        %4798 = vmatpush.msra.mxu0 0.0
        %4799 = vmatpush.msra.mxu0 0.0
        %4800 = vmatpush.msra.mxu0 0.0
        %4801 = vmatpush.msra.mxu0 0.0
        %4802 = vmatpush.msra.mxu0 0.0
        %4803 = vmatpush.msra.mxu0 %v1067
        %4804 = vmatpush.msra.mxu0 %v1066
        %4805 = vmatmul.f32.gmra.mxu0 %v4725
        %v4806 = vpop.f32.mrf.mxu0
        %v4807 = vadd.f32 %v4766, %v4806
        %4808 = vmatmul.f32.gmra.mxu0 %v4728
        %v4809 = vpop.f32.mrf.mxu0
        %v4810 = vadd.f32 %v4769, %v4809
        %4811 = vmatmul.f32.gmra.mxu0 %v4731
        %v4812 = vpop.f32.mrf.mxu0
        %v4813 = vadd.f32 %v4772, %v4812
        %4814 = vmatmul.f32.gmra.mxu0 %v4734
        %v4815 = vpop.f32.mrf.mxu0
        %v4816 = vadd.f32 %v4775, %v4815
        %4817 = vmatmul.f32.gmra.mxu0 %v4737
        %v4818 = vpop.f32.mrf.mxu0
        %v4819 = vadd.f32 %v4778, %v4818
        %4820 = vmatmul.f32.gmra.mxu0 %v4740
        %v4821 = vpop.f32.mrf.mxu0
        %v4822 = vadd.f32 %v4781, %v4821
        %4823 = vmatmul.f32.gmra.mxu0 %v4743
        %v4824 = vpop.f32.mrf.mxu0
        %v4825 = vadd.f32 %v4784, %v4824
        %4826 = vmatmul.f32.gmra.mxu0 %v4746
        %v4827 = vpop.f32.mrf.mxu0
        %v4828 = vadd.f32 %v4787, %v4827
        %4829 = vdwg.mxu0
        %s4830 = scalar_lea.vmem %s4, 432
        %v4831 = vld [vmem:[%s4830] sm:$0xff]
        %v4832 = vld [vmem:[%s4830 + $0x8] sm:$0xff]
        %v4833 = vld [vmem:[%s4830 + $0x10] sm:$0xf]
        %v4835 = vsel %vm1321, %v4807, 0
        %v4838 = vsel %vm1321, %v4810, 0
        %v4841 = vsel %vm1321, %v4813, 0
        %v4844 = vsel %vm1321, %v4816, 0
        %v4847 = vsel %vm1321, %v4819, 0
        %v4850 = vsel %vm1321, %v4822, 0
        %v4853 = vsel %vm1321, %v4825, 0
        %v4856 = vsel %vm1321, %v4828, 0
        %v4859 = vsel %vm1346, %v4833, 0
        %4861 = vmatpush.msra.mxu0 0.0
        %4862 = vmatpush.msra.mxu0 0.0
        %4863 = vmatpush.msra.mxu0 0.0
        %4864 = vmatpush.msra.mxu0 0.0
        %4865 = vmatpush.msra.mxu0 0.0
        %4866 = vmatpush.msra.mxu0 0.0
        %4867 = vmatpush.msra.mxu0 0.0
        %4868 = vmatpush.msra.mxu0 0.0
        %4869 = vmatpush.msra.mxu0 0.0
        %4870 = vmatpush.msra.mxu0 0.0
        %4871 = vmatpush.msra.mxu0 0.0
        %4872 = vmatpush.msra.mxu0 0.0
        %4873 = vmatpush.msra.mxu0 0.0
        %4874 = vmatpush.msra.mxu0 %v4859
        %4875 = vmatpush.msra.mxu0 %v4832
        %4876 = vmatpush.msra.mxu0 %v4831
        %4877 = vmatmul.f32.gmra.mxu0 %v4835
        %v4878 = vpop.f32.mrf.mxu0
        %v4879 = vadd.f32 0.0, %v4878
        %4880 = vmatmul.f32.gmra.mxu0 %v4838
        %v4881 = vpop.f32.mrf.mxu0
        %v4882 = vadd.f32 0.0, %v4881
        %4883 = vmatmul.f32.gmra.mxu0 %v4841
        %v4884 = vpop.f32.mrf.mxu0
        %v4885 = vadd.f32 0.0, %v4884
        %4886 = vmatmul.f32.gmra.mxu0 %v4844
        %v4887 = vpop.f32.mrf.mxu0
        %v4888 = vadd.f32 0.0, %v4887
        %4889 = vmatmul.f32.gmra.mxu0 %v4847
        %v4890 = vpop.f32.mrf.mxu0
        %v4891 = vadd.f32 0.0, %v4890
        %4892 = vmatmul.f32.gmra.mxu0 %v4850
        %v4893 = vpop.f32.mrf.mxu0
        %v4894 = vadd.f32 0.0, %v4893
        %4895 = vmatmul.f32.gmra.mxu0 %v4853
        %v4896 = vpop.f32.mrf.mxu0
        %v4897 = vadd.f32 0.0, %v4896
        %4898 = vmatmul.f32.gmra.mxu0 %v4856
        %v4899 = vpop.f32.mrf.mxu0
        %v4900 = vadd.f32 0.0, %v4899
        %4901 = vdwg.mxu0
        %v4902 = vadd.f32 %v4699, %v4879
        %v4903 = vadd.f32 %v4700, %v4882
        %v4904 = vadd.f32 %v4701, %v4885
        %v4905 = vadd.f32 %v4702, %v4888
        %v4906 = vadd.f32 %v4703, %v4891
        %v4907 = vadd.f32 %v4704, %v4894
        %v4908 = vadd.f32 %v4705, %v4897
        %v4909 = vadd.f32 %v4706, %v4900
        %s4910 = scalar_lea.vmem %s3, 2432
        %v4911 = vld [vmem:[%s4910] sm:$0xff]
        %v4912 = vld [vmem:[%s4910 + $0x8] sm:$0xff]
        %v4913 = vld [vmem:[%s4910 + $0x10] sm:$0xff]
        %v4914 = vld [vmem:[%s4910 + $0x18] sm:$0xff]
        %v4915 = vld [vmem:[%s4910 + $0x20] sm:$0xff]
        %v4916 = vld [vmem:[%s4910 + $0x28] sm:$0xff]
        %v4917 = vld [vmem:[%s4910 + $0x30] sm:$0xff]
        %v4918 = vld [vmem:[%s4910 + $0x38] sm:$0xff]
        %v4919 = vld [vmem:[%s4910 + $0x40] sm:$0xff]
        %v4920 = vld [vmem:[%s4910 + $0x48] sm:$0xff]
        %v4921 = vld [vmem:[%s4910 + $0x50] sm:$0xff]
        %v4922 = vld [vmem:[%s4910 + $0x58] sm:$0xff]
        %v4923 = vld [vmem:[%s4910 + $0x60] sm:$0xff]
        %v4924 = vld [vmem:[%s4910 + $0x68] sm:$0xff]
        %v4925 = vld [vmem:[%s4910 + $0x70] sm:$0xff]
        %v4926 = vld [vmem:[%s4910 + $0x78] sm:$0xff]
        %v4928 = vsel %vm1084, %v4912, 0
        %v4931 = vsel %vm1084, %v4914, 0
        %v4934 = vsel %vm1084, %v4916, 0
        %v4937 = vsel %vm1084, %v4918, 0
        %v4940 = vsel %vm1084, %v4920, 0
        %v4943 = vsel %vm1084, %v4922, 0
        %v4946 = vsel %vm1084, %v4924, 0
        %v4949 = vsel %vm1084, %v4926, 0
        %4951 = vmatpush.msra.mxu0 %v1065
        %4952 = vmatpush.msra.mxu0 %v1064
        %4953 = vmatpush.msra.mxu0 %v1063
        %4954 = vmatpush.msra.mxu0 %v1062
        %4955 = vmatpush.msra.mxu0 %v1061
        %4956 = vmatpush.msra.mxu0 %v1060
        %4957 = vmatpush.msra.mxu0 %v1059
        %4958 = vmatpush.msra.mxu0 %v1058
        %4959 = vmatpush.msra.mxu0 %v1057
        %4960 = vmatpush.msra.mxu0 %v1056
        %4961 = vmatpush.msra.mxu0 %v1055
        %4962 = vmatpush.msra.mxu0 %v1054
        %4963 = vmatpush.msra.mxu0 %v1053
        %4964 = vmatpush.msra.mxu0 %v1052
        %4965 = vmatpush.msra.mxu0 %v1051
        %4966 = vmatpush.msra.mxu0 %v1050
        %4967 = vmatmul.f32.gmra.mxu0 %v4911
        %v4968 = vpop.f32.mrf.mxu0
        %v4969 = vadd.f32 0.0, %v4968
        %4970 = vmatmul.f32.gmra.mxu0 %v4913
        %v4971 = vpop.f32.mrf.mxu0
        %v4972 = vadd.f32 0.0, %v4971
        %4973 = vmatmul.f32.gmra.mxu0 %v4915
        %v4974 = vpop.f32.mrf.mxu0
        %v4975 = vadd.f32 0.0, %v4974
        %4976 = vmatmul.f32.gmra.mxu0 %v4917
        %v4977 = vpop.f32.mrf.mxu0
        %v4978 = vadd.f32 0.0, %v4977
        %4979 = vmatmul.f32.gmra.mxu0 %v4919
        %v4980 = vpop.f32.mrf.mxu0
        %v4981 = vadd.f32 0.0, %v4980
        %4982 = vmatmul.f32.gmra.mxu0 %v4921
        %v4983 = vpop.f32.mrf.mxu0
        %v4984 = vadd.f32 0.0, %v4983
        %4985 = vmatmul.f32.gmra.mxu0 %v4923
        %v4986 = vpop.f32.mrf.mxu0
        %v4987 = vadd.f32 0.0, %v4986
        %4988 = vmatmul.f32.gmra.mxu0 %v4925
        %v4989 = vpop.f32.mrf.mxu0
        %v4990 = vadd.f32 0.0, %v4989
        %4991 = vdwg.mxu0
        %4992 = vmatpush.msra.mxu0 0.0
        %4993 = vmatpush.msra.mxu0 0.0
        %4994 = vmatpush.msra.mxu0 0.0
        %4995 = vmatpush.msra.mxu0 0.0
        %4996 = vmatpush.msra.mxu0 0.0
        %4997 = vmatpush.msra.mxu0 0.0
        %4998 = vmatpush.msra.mxu0 0.0
        %4999 = vmatpush.msra.mxu0 0.0
        %5000 = vmatpush.msra.mxu0 0.0
        %5001 = vmatpush.msra.mxu0 0.0
        %5002 = vmatpush.msra.mxu0 0.0
        %5003 = vmatpush.msra.mxu0 0.0
        %5004 = vmatpush.msra.mxu0 0.0
        %5005 = vmatpush.msra.mxu0 0.0
        %5006 = vmatpush.msra.mxu0 %v1067
        %5007 = vmatpush.msra.mxu0 %v1066
        %5008 = vmatmul.f32.gmra.mxu0 %v4928
        %v5009 = vpop.f32.mrf.mxu0
        %v5010 = vadd.f32 %v4969, %v5009
        %5011 = vmatmul.f32.gmra.mxu0 %v4931
        %v5012 = vpop.f32.mrf.mxu0
        %v5013 = vadd.f32 %v4972, %v5012
        %5014 = vmatmul.f32.gmra.mxu0 %v4934
        %v5015 = vpop.f32.mrf.mxu0
        %v5016 = vadd.f32 %v4975, %v5015
        %5017 = vmatmul.f32.gmra.mxu0 %v4937
        %v5018 = vpop.f32.mrf.mxu0
        %v5019 = vadd.f32 %v4978, %v5018
        %5020 = vmatmul.f32.gmra.mxu0 %v4940
        %v5021 = vpop.f32.mrf.mxu0
        %v5022 = vadd.f32 %v4981, %v5021
        %5023 = vmatmul.f32.gmra.mxu0 %v4943
        %v5024 = vpop.f32.mrf.mxu0
        %v5025 = vadd.f32 %v4984, %v5024
        %5026 = vmatmul.f32.gmra.mxu0 %v4946
        %v5027 = vpop.f32.mrf.mxu0
        %v5028 = vadd.f32 %v4987, %v5027
        %5029 = vmatmul.f32.gmra.mxu0 %v4949
        %v5030 = vpop.f32.mrf.mxu0
        %v5031 = vadd.f32 %v4990, %v5030
        %5032 = vdwg.mxu0
        %s5033 = scalar_lea.vmem %s4, 456
        %v5034 = vld [vmem:[%s5033] sm:$0xff]
        %v5035 = vld [vmem:[%s5033 + $0x8] sm:$0xff]
        %v5036 = vld [vmem:[%s5033 + $0x10] sm:$0xf]
        %v5038 = vsel %vm1321, %v5010, 0
        %v5041 = vsel %vm1321, %v5013, 0
        %v5044 = vsel %vm1321, %v5016, 0
        %v5047 = vsel %vm1321, %v5019, 0
        %v5050 = vsel %vm1321, %v5022, 0
        %v5053 = vsel %vm1321, %v5025, 0
        %v5056 = vsel %vm1321, %v5028, 0
        %v5059 = vsel %vm1321, %v5031, 0
        %v5062 = vsel %vm1346, %v5036, 0
        %5064 = vmatpush.msra.mxu0 0.0
        %5065 = vmatpush.msra.mxu0 0.0
        %5066 = vmatpush.msra.mxu0 0.0
        %5067 = vmatpush.msra.mxu0 0.0
        %5068 = vmatpush.msra.mxu0 0.0
        %5069 = vmatpush.msra.mxu0 0.0
        %5070 = vmatpush.msra.mxu0 0.0
        %5071 = vmatpush.msra.mxu0 0.0
        %5072 = vmatpush.msra.mxu0 0.0
        %5073 = vmatpush.msra.mxu0 0.0
        %5074 = vmatpush.msra.mxu0 0.0
        %5075 = vmatpush.msra.mxu0 0.0
        %5076 = vmatpush.msra.mxu0 0.0
        %5077 = vmatpush.msra.mxu0 %v5062
        %5078 = vmatpush.msra.mxu0 %v5035
        %5079 = vmatpush.msra.mxu0 %v5034
        %5080 = vmatmul.f32.gmra.mxu0 %v5038
        %v5081 = vpop.f32.mrf.mxu0
        %v5082 = vadd.f32 0.0, %v5081
        %5083 = vmatmul.f32.gmra.mxu0 %v5041
        %v5084 = vpop.f32.mrf.mxu0
        %v5085 = vadd.f32 0.0, %v5084
        %5086 = vmatmul.f32.gmra.mxu0 %v5044
        %v5087 = vpop.f32.mrf.mxu0
        %v5088 = vadd.f32 0.0, %v5087
        %5089 = vmatmul.f32.gmra.mxu0 %v5047
        %v5090 = vpop.f32.mrf.mxu0
        %v5091 = vadd.f32 0.0, %v5090
        %5092 = vmatmul.f32.gmra.mxu0 %v5050
        %v5093 = vpop.f32.mrf.mxu0
        %v5094 = vadd.f32 0.0, %v5093
        %5095 = vmatmul.f32.gmra.mxu0 %v5053
        %v5096 = vpop.f32.mrf.mxu0
        %v5097 = vadd.f32 0.0, %v5096
        %5098 = vmatmul.f32.gmra.mxu0 %v5056
        %v5099 = vpop.f32.mrf.mxu0
        %v5100 = vadd.f32 0.0, %v5099
        %5101 = vmatmul.f32.gmra.mxu0 %v5059
        %v5102 = vpop.f32.mrf.mxu0
        %v5103 = vadd.f32 0.0, %v5102
        %5104 = vdwg.mxu0
        %v5105 = vadd.f32 %v4902, %v5082
        %v5106 = vadd.f32 %v4903, %v5085
        %v5107 = vadd.f32 %v4904, %v5088
        %v5108 = vadd.f32 %v4905, %v5091
        %v5109 = vadd.f32 %v4906, %v5094
        %v5110 = vadd.f32 %v4907, %v5097
        %v5111 = vadd.f32 %v4908, %v5100
        %v5112 = vadd.f32 %v4909, %v5103
        %s5113 = scalar_lea.vmem %s3, 2560
        %v5114 = vld [vmem:[%s5113] sm:$0xff]
        %v5115 = vld [vmem:[%s5113 + $0x8] sm:$0xff]
        %v5116 = vld [vmem:[%s5113 + $0x10] sm:$0xff]
        %v5117 = vld [vmem:[%s5113 + $0x18] sm:$0xff]
        %v5118 = vld [vmem:[%s5113 + $0x20] sm:$0xff]
        %v5119 = vld [vmem:[%s5113 + $0x28] sm:$0xff]
        %v5120 = vld [vmem:[%s5113 + $0x30] sm:$0xff]
        %v5121 = vld [vmem:[%s5113 + $0x38] sm:$0xff]
        %v5122 = vld [vmem:[%s5113 + $0x40] sm:$0xff]
        %v5123 = vld [vmem:[%s5113 + $0x48] sm:$0xff]
        %v5124 = vld [vmem:[%s5113 + $0x50] sm:$0xff]
        %v5125 = vld [vmem:[%s5113 + $0x58] sm:$0xff]
        %v5126 = vld [vmem:[%s5113 + $0x60] sm:$0xff]
        %v5127 = vld [vmem:[%s5113 + $0x68] sm:$0xff]
        %v5128 = vld [vmem:[%s5113 + $0x70] sm:$0xff]
        %v5129 = vld [vmem:[%s5113 + $0x78] sm:$0xff]
        %v5131 = vsel %vm1084, %v5115, 0
        %v5134 = vsel %vm1084, %v5117, 0
        %v5137 = vsel %vm1084, %v5119, 0
        %v5140 = vsel %vm1084, %v5121, 0
        %v5143 = vsel %vm1084, %v5123, 0
        %v5146 = vsel %vm1084, %v5125, 0
        %v5149 = vsel %vm1084, %v5127, 0
        %v5152 = vsel %vm1084, %v5129, 0
        %5154 = vmatpush.msra.mxu0 %v1065
        %5155 = vmatpush.msra.mxu0 %v1064
        %5156 = vmatpush.msra.mxu0 %v1063
        %5157 = vmatpush.msra.mxu0 %v1062
        %5158 = vmatpush.msra.mxu0 %v1061
        %5159 = vmatpush.msra.mxu0 %v1060
        %5160 = vmatpush.msra.mxu0 %v1059
        %5161 = vmatpush.msra.mxu0 %v1058
        %5162 = vmatpush.msra.mxu0 %v1057
        %5163 = vmatpush.msra.mxu0 %v1056
        %5164 = vmatpush.msra.mxu0 %v1055
        %5165 = vmatpush.msra.mxu0 %v1054
        %5166 = vmatpush.msra.mxu0 %v1053
        %5167 = vmatpush.msra.mxu0 %v1052
        %5168 = vmatpush.msra.mxu0 %v1051
        %5169 = vmatpush.msra.mxu0 %v1050
        %5170 = vmatmul.f32.gmra.mxu0 %v5114
        %v5171 = vpop.f32.mrf.mxu0
        %v5172 = vadd.f32 0.0, %v5171
        %5173 = vmatmul.f32.gmra.mxu0 %v5116
        %v5174 = vpop.f32.mrf.mxu0
        %v5175 = vadd.f32 0.0, %v5174
        %5176 = vmatmul.f32.gmra.mxu0 %v5118
        %v5177 = vpop.f32.mrf.mxu0
        %v5178 = vadd.f32 0.0, %v5177
        %5179 = vmatmul.f32.gmra.mxu0 %v5120
        %v5180 = vpop.f32.mrf.mxu0
        %v5181 = vadd.f32 0.0, %v5180
        %5182 = vmatmul.f32.gmra.mxu0 %v5122
        %v5183 = vpop.f32.mrf.mxu0
        %v5184 = vadd.f32 0.0, %v5183
        %5185 = vmatmul.f32.gmra.mxu0 %v5124
        %v5186 = vpop.f32.mrf.mxu0
        %v5187 = vadd.f32 0.0, %v5186
        %5188 = vmatmul.f32.gmra.mxu0 %v5126
        %v5189 = vpop.f32.mrf.mxu0
        %v5190 = vadd.f32 0.0, %v5189
        %5191 = vmatmul.f32.gmra.mxu0 %v5128
        %v5192 = vpop.f32.mrf.mxu0
        %v5193 = vadd.f32 0.0, %v5192
        %5194 = vdwg.mxu0
        %5195 = vmatpush.msra.mxu0 0.0
        %5196 = vmatpush.msra.mxu0 0.0
        %5197 = vmatpush.msra.mxu0 0.0
        %5198 = vmatpush.msra.mxu0 0.0
        %5199 = vmatpush.msra.mxu0 0.0
        %5200 = vmatpush.msra.mxu0 0.0
        %5201 = vmatpush.msra.mxu0 0.0
        %5202 = vmatpush.msra.mxu0 0.0
        %5203 = vmatpush.msra.mxu0 0.0
        %5204 = vmatpush.msra.mxu0 0.0
        %5205 = vmatpush.msra.mxu0 0.0
        %5206 = vmatpush.msra.mxu0 0.0
        %5207 = vmatpush.msra.mxu0 0.0
        %5208 = vmatpush.msra.mxu0 0.0
        %5209 = vmatpush.msra.mxu0 %v1067
        %5210 = vmatpush.msra.mxu0 %v1066
        %5211 = vmatmul.f32.gmra.mxu0 %v5131
        %v5212 = vpop.f32.mrf.mxu0
        %v5213 = vadd.f32 %v5172, %v5212
        %5214 = vmatmul.f32.gmra.mxu0 %v5134
        %v5215 = vpop.f32.mrf.mxu0
        %v5216 = vadd.f32 %v5175, %v5215
        %5217 = vmatmul.f32.gmra.mxu0 %v5137
        %v5218 = vpop.f32.mrf.mxu0
        %v5219 = vadd.f32 %v5178, %v5218
        %5220 = vmatmul.f32.gmra.mxu0 %v5140
        %v5221 = vpop.f32.mrf.mxu0
        %v5222 = vadd.f32 %v5181, %v5221
        %5223 = vmatmul.f32.gmra.mxu0 %v5143
        %v5224 = vpop.f32.mrf.mxu0
        %v5225 = vadd.f32 %v5184, %v5224
        %5226 = vmatmul.f32.gmra.mxu0 %v5146
        %v5227 = vpop.f32.mrf.mxu0
        %v5228 = vadd.f32 %v5187, %v5227
        %5229 = vmatmul.f32.gmra.mxu0 %v5149
        %v5230 = vpop.f32.mrf.mxu0
        %v5231 = vadd.f32 %v5190, %v5230
        %5232 = vmatmul.f32.gmra.mxu0 %v5152
        %v5233 = vpop.f32.mrf.mxu0
        %v5234 = vadd.f32 %v5193, %v5233
        %5235 = vdwg.mxu0
        %s5236 = scalar_lea.vmem %s4, 480
        %v5237 = vld [vmem:[%s5236] sm:$0xff]
        %v5238 = vld [vmem:[%s5236 + $0x8] sm:$0xff]
        %v5239 = vld [vmem:[%s5236 + $0x10] sm:$0xf]
        %v5241 = vsel %vm1321, %v5213, 0
        %v5244 = vsel %vm1321, %v5216, 0
        %v5247 = vsel %vm1321, %v5219, 0
        %v5250 = vsel %vm1321, %v5222, 0
        %v5253 = vsel %vm1321, %v5225, 0
        %v5256 = vsel %vm1321, %v5228, 0
        %v5259 = vsel %vm1321, %v5231, 0
        %v5262 = vsel %vm1321, %v5234, 0
        %v5265 = vsel %vm1346, %v5239, 0
        %5267 = vmatpush.msra.mxu0 0.0
        %5268 = vmatpush.msra.mxu0 0.0
        %5269 = vmatpush.msra.mxu0 0.0
        %5270 = vmatpush.msra.mxu0 0.0
        %5271 = vmatpush.msra.mxu0 0.0
        %5272 = vmatpush.msra.mxu0 0.0
        %5273 = vmatpush.msra.mxu0 0.0
        %5274 = vmatpush.msra.mxu0 0.0
        %5275 = vmatpush.msra.mxu0 0.0
        %5276 = vmatpush.msra.mxu0 0.0
        %5277 = vmatpush.msra.mxu0 0.0
        %5278 = vmatpush.msra.mxu0 0.0
        %5279 = vmatpush.msra.mxu0 0.0
        %5280 = vmatpush.msra.mxu0 %v5265
        %5281 = vmatpush.msra.mxu0 %v5238
        %5282 = vmatpush.msra.mxu0 %v5237
        %5283 = vmatmul.f32.gmra.mxu0 %v5241
        %v5284 = vpop.f32.mrf.mxu0
        %v5285 = vadd.f32 0.0, %v5284
        %5286 = vmatmul.f32.gmra.mxu0 %v5244
        %v5287 = vpop.f32.mrf.mxu0
        %v5288 = vadd.f32 0.0, %v5287
        %5289 = vmatmul.f32.gmra.mxu0 %v5247
        %v5290 = vpop.f32.mrf.mxu0
        %v5291 = vadd.f32 0.0, %v5290
        %5292 = vmatmul.f32.gmra.mxu0 %v5250
        %v5293 = vpop.f32.mrf.mxu0
        %v5294 = vadd.f32 0.0, %v5293
        %5295 = vmatmul.f32.gmra.mxu0 %v5253
        %v5296 = vpop.f32.mrf.mxu0
        %v5297 = vadd.f32 0.0, %v5296
        %5298 = vmatmul.f32.gmra.mxu0 %v5256
        %v5299 = vpop.f32.mrf.mxu0
        %v5300 = vadd.f32 0.0, %v5299
        %5301 = vmatmul.f32.gmra.mxu0 %v5259
        %v5302 = vpop.f32.mrf.mxu0
        %v5303 = vadd.f32 0.0, %v5302
        %5304 = vmatmul.f32.gmra.mxu0 %v5262
        %v5305 = vpop.f32.mrf.mxu0
        %v5306 = vadd.f32 0.0, %v5305
        %5307 = vdwg.mxu0
        %v5308 = vadd.f32 %v5105, %v5285
        %v5309 = vadd.f32 %v5106, %v5288
        %v5310 = vadd.f32 %v5107, %v5291
        %v5311 = vadd.f32 %v5108, %v5294
        %v5312 = vadd.f32 %v5109, %v5297
        %v5313 = vadd.f32 %v5110, %v5300
        %v5314 = vadd.f32 %v5111, %v5303
        %v5315 = vadd.f32 %v5112, %v5306
        %s5316 = scalar_lea.vmem %s3, 2688
        %v5317 = vld [vmem:[%s5316] sm:$0xff]
        %v5318 = vld [vmem:[%s5316 + $0x8] sm:$0xff]
        %v5319 = vld [vmem:[%s5316 + $0x10] sm:$0xff]
        %v5320 = vld [vmem:[%s5316 + $0x18] sm:$0xff]
        %v5321 = vld [vmem:[%s5316 + $0x20] sm:$0xff]
        %v5322 = vld [vmem:[%s5316 + $0x28] sm:$0xff]
        %v5323 = vld [vmem:[%s5316 + $0x30] sm:$0xff]
        %v5324 = vld [vmem:[%s5316 + $0x38] sm:$0xff]
        %v5325 = vld [vmem:[%s5316 + $0x40] sm:$0xff]
        %v5326 = vld [vmem:[%s5316 + $0x48] sm:$0xff]
        %v5327 = vld [vmem:[%s5316 + $0x50] sm:$0xff]
        %v5328 = vld [vmem:[%s5316 + $0x58] sm:$0xff]
        %v5329 = vld [vmem:[%s5316 + $0x60] sm:$0xff]
        %v5330 = vld [vmem:[%s5316 + $0x68] sm:$0xff]
        %v5331 = vld [vmem:[%s5316 + $0x70] sm:$0xff]
        %v5332 = vld [vmem:[%s5316 + $0x78] sm:$0xff]
        %v5334 = vsel %vm1084, %v5318, 0
        %v5337 = vsel %vm1084, %v5320, 0
        %v5340 = vsel %vm1084, %v5322, 0
        %v5343 = vsel %vm1084, %v5324, 0
        %v5346 = vsel %vm1084, %v5326, 0
        %v5349 = vsel %vm1084, %v5328, 0
        %v5352 = vsel %vm1084, %v5330, 0
        %v5355 = vsel %vm1084, %v5332, 0
        %5357 = vmatpush.msra.mxu0 %v1065
        %5358 = vmatpush.msra.mxu0 %v1064
        %5359 = vmatpush.msra.mxu0 %v1063
        %5360 = vmatpush.msra.mxu0 %v1062
        %5361 = vmatpush.msra.mxu0 %v1061
        %5362 = vmatpush.msra.mxu0 %v1060
        %5363 = vmatpush.msra.mxu0 %v1059
        %5364 = vmatpush.msra.mxu0 %v1058
        %5365 = vmatpush.msra.mxu0 %v1057
        %5366 = vmatpush.msra.mxu0 %v1056
        %5367 = vmatpush.msra.mxu0 %v1055
        %5368 = vmatpush.msra.mxu0 %v1054
        %5369 = vmatpush.msra.mxu0 %v1053
        %5370 = vmatpush.msra.mxu0 %v1052
        %5371 = vmatpush.msra.mxu0 %v1051
        %5372 = vmatpush.msra.mxu0 %v1050
        %5373 = vmatmul.f32.gmra.mxu0 %v5317
        %v5374 = vpop.f32.mrf.mxu0
        %v5375 = vadd.f32 0.0, %v5374
        %5376 = vmatmul.f32.gmra.mxu0 %v5319
        %v5377 = vpop.f32.mrf.mxu0
        %v5378 = vadd.f32 0.0, %v5377
        %5379 = vmatmul.f32.gmra.mxu0 %v5321
        %v5380 = vpop.f32.mrf.mxu0
        %v5381 = vadd.f32 0.0, %v5380
        %5382 = vmatmul.f32.gmra.mxu0 %v5323
        %v5383 = vpop.f32.mrf.mxu0
        %v5384 = vadd.f32 0.0, %v5383
        %5385 = vmatmul.f32.gmra.mxu0 %v5325
        %v5386 = vpop.f32.mrf.mxu0
        %v5387 = vadd.f32 0.0, %v5386
        %5388 = vmatmul.f32.gmra.mxu0 %v5327
        %v5389 = vpop.f32.mrf.mxu0
        %v5390 = vadd.f32 0.0, %v5389
        %5391 = vmatmul.f32.gmra.mxu0 %v5329
        %v5392 = vpop.f32.mrf.mxu0
        %v5393 = vadd.f32 0.0, %v5392
        %5394 = vmatmul.f32.gmra.mxu0 %v5331
        %v5395 = vpop.f32.mrf.mxu0
        %v5396 = vadd.f32 0.0, %v5395
        %5397 = vdwg.mxu0
        %5398 = vmatpush.msra.mxu0 0.0
        %5399 = vmatpush.msra.mxu0 0.0
        %5400 = vmatpush.msra.mxu0 0.0
        %5401 = vmatpush.msra.mxu0 0.0
        %5402 = vmatpush.msra.mxu0 0.0
        %5403 = vmatpush.msra.mxu0 0.0
        %5404 = vmatpush.msra.mxu0 0.0
        %5405 = vmatpush.msra.mxu0 0.0
        %5406 = vmatpush.msra.mxu0 0.0
        %5407 = vmatpush.msra.mxu0 0.0
        %5408 = vmatpush.msra.mxu0 0.0
        %5409 = vmatpush.msra.mxu0 0.0
        %5410 = vmatpush.msra.mxu0 0.0
        %5411 = vmatpush.msra.mxu0 0.0
        %5412 = vmatpush.msra.mxu0 %v1067
        %5413 = vmatpush.msra.mxu0 %v1066
        %5414 = vmatmul.f32.gmra.mxu0 %v5334
        %v5415 = vpop.f32.mrf.mxu0
        %v5416 = vadd.f32 %v5375, %v5415
        %5417 = vmatmul.f32.gmra.mxu0 %v5337
        %v5418 = vpop.f32.mrf.mxu0
        %v5419 = vadd.f32 %v5378, %v5418
        %5420 = vmatmul.f32.gmra.mxu0 %v5340
        %v5421 = vpop.f32.mrf.mxu0
        %v5422 = vadd.f32 %v5381, %v5421
        %5423 = vmatmul.f32.gmra.mxu0 %v5343
        %v5424 = vpop.f32.mrf.mxu0
        %v5425 = vadd.f32 %v5384, %v5424
        %5426 = vmatmul.f32.gmra.mxu0 %v5346
        %v5427 = vpop.f32.mrf.mxu0
        %v5428 = vadd.f32 %v5387, %v5427
        %5429 = vmatmul.f32.gmra.mxu0 %v5349
        %v5430 = vpop.f32.mrf.mxu0
        %v5431 = vadd.f32 %v5390, %v5430
        %5432 = vmatmul.f32.gmra.mxu0 %v5352
        %v5433 = vpop.f32.mrf.mxu0
        %v5434 = vadd.f32 %v5393, %v5433
        %5435 = vmatmul.f32.gmra.mxu0 %v5355
        %v5436 = vpop.f32.mrf.mxu0
        %v5437 = vadd.f32 %v5396, %v5436
        %5438 = vdwg.mxu0
        %s5439 = scalar_lea.vmem %s4, 504
        %v5440 = vld [vmem:[%s5439] sm:$0xff]
        %v5441 = vld [vmem:[%s5439 + $0x8] sm:$0xff]
        %v5442 = vld [vmem:[%s5439 + $0x10] sm:$0xf]
        %v5444 = vsel %vm1321, %v5416, 0
        %v5447 = vsel %vm1321, %v5419, 0
        %v5450 = vsel %vm1321, %v5422, 0
        %v5453 = vsel %vm1321, %v5425, 0
        %v5456 = vsel %vm1321, %v5428, 0
        %v5459 = vsel %vm1321, %v5431, 0
        %v5462 = vsel %vm1321, %v5434, 0
        %v5465 = vsel %vm1321, %v5437, 0
        %v5468 = vsel %vm1346, %v5442, 0
        %5470 = vmatpush.msra.mxu0 0.0
        %5471 = vmatpush.msra.mxu0 0.0
        %5472 = vmatpush.msra.mxu0 0.0
        %5473 = vmatpush.msra.mxu0 0.0
        %5474 = vmatpush.msra.mxu0 0.0
        %5475 = vmatpush.msra.mxu0 0.0
        %5476 = vmatpush.msra.mxu0 0.0
        %5477 = vmatpush.msra.mxu0 0.0
        %5478 = vmatpush.msra.mxu0 0.0
        %5479 = vmatpush.msra.mxu0 0.0
        %5480 = vmatpush.msra.mxu0 0.0
        %5481 = vmatpush.msra.mxu0 0.0
        %5482 = vmatpush.msra.mxu0 0.0
        %5483 = vmatpush.msra.mxu0 %v5468
        %5484 = vmatpush.msra.mxu0 %v5441
        %5485 = vmatpush.msra.mxu0 %v5440
        %5486 = vmatmul.f32.gmra.mxu0 %v5444
        %v5487 = vpop.f32.mrf.mxu0
        %v5488 = vadd.f32 0.0, %v5487
        %5489 = vmatmul.f32.gmra.mxu0 %v5447
        %v5490 = vpop.f32.mrf.mxu0
        %v5491 = vadd.f32 0.0, %v5490
        %5492 = vmatmul.f32.gmra.mxu0 %v5450
        %v5493 = vpop.f32.mrf.mxu0
        %v5494 = vadd.f32 0.0, %v5493
        %5495 = vmatmul.f32.gmra.mxu0 %v5453
        %v5496 = vpop.f32.mrf.mxu0
        %v5497 = vadd.f32 0.0, %v5496
        %5498 = vmatmul.f32.gmra.mxu0 %v5456
        %v5499 = vpop.f32.mrf.mxu0
        %v5500 = vadd.f32 0.0, %v5499
        %5501 = vmatmul.f32.gmra.mxu0 %v5459
        %v5502 = vpop.f32.mrf.mxu0
        %v5503 = vadd.f32 0.0, %v5502
        %5504 = vmatmul.f32.gmra.mxu0 %v5462
        %v5505 = vpop.f32.mrf.mxu0
        %v5506 = vadd.f32 0.0, %v5505
        %5507 = vmatmul.f32.gmra.mxu0 %v5465
        %v5508 = vpop.f32.mrf.mxu0
        %v5509 = vadd.f32 0.0, %v5508
        %5510 = vdwg.mxu0
        %v5511 = vadd.f32 %v5308, %v5488
        %v5512 = vadd.f32 %v5309, %v5491
        %v5513 = vadd.f32 %v5310, %v5494
        %v5514 = vadd.f32 %v5311, %v5497
        %v5515 = vadd.f32 %v5312, %v5500
        %v5516 = vadd.f32 %v5313, %v5503
        %v5517 = vadd.f32 %v5314, %v5506
        %v5518 = vadd.f32 %v5315, %v5509
        %s5519 = scalar_lea.vmem %s3, 2816
        %v5520 = vld [vmem:[%s5519] sm:$0xff]
        %v5521 = vld [vmem:[%s5519 + $0x8] sm:$0xff]
        %v5522 = vld [vmem:[%s5519 + $0x10] sm:$0xff]
        %v5523 = vld [vmem:[%s5519 + $0x18] sm:$0xff]
        %v5524 = vld [vmem:[%s5519 + $0x20] sm:$0xff]
        %v5525 = vld [vmem:[%s5519 + $0x28] sm:$0xff]
        %v5526 = vld [vmem:[%s5519 + $0x30] sm:$0xff]
        %v5527 = vld [vmem:[%s5519 + $0x38] sm:$0xff]
        %v5528 = vld [vmem:[%s5519 + $0x40] sm:$0xff]
        %v5529 = vld [vmem:[%s5519 + $0x48] sm:$0xff]
        %v5530 = vld [vmem:[%s5519 + $0x50] sm:$0xff]
        %v5531 = vld [vmem:[%s5519 + $0x58] sm:$0xff]
        %v5532 = vld [vmem:[%s5519 + $0x60] sm:$0xff]
        %v5533 = vld [vmem:[%s5519 + $0x68] sm:$0xff]
        %v5534 = vld [vmem:[%s5519 + $0x70] sm:$0xff]
        %v5535 = vld [vmem:[%s5519 + $0x78] sm:$0xff]
        %v5537 = vsel %vm1084, %v5521, 0
        %v5540 = vsel %vm1084, %v5523, 0
        %v5543 = vsel %vm1084, %v5525, 0
        %v5546 = vsel %vm1084, %v5527, 0
        %v5549 = vsel %vm1084, %v5529, 0
        %v5552 = vsel %vm1084, %v5531, 0
        %v5555 = vsel %vm1084, %v5533, 0
        %v5558 = vsel %vm1084, %v5535, 0
        %5560 = vmatpush.msra.mxu0 %v1065
        %5561 = vmatpush.msra.mxu0 %v1064
        %5562 = vmatpush.msra.mxu0 %v1063
        %5563 = vmatpush.msra.mxu0 %v1062
        %5564 = vmatpush.msra.mxu0 %v1061
        %5565 = vmatpush.msra.mxu0 %v1060
        %5566 = vmatpush.msra.mxu0 %v1059
        %5567 = vmatpush.msra.mxu0 %v1058
        %5568 = vmatpush.msra.mxu0 %v1057
        %5569 = vmatpush.msra.mxu0 %v1056
        %5570 = vmatpush.msra.mxu0 %v1055
        %5571 = vmatpush.msra.mxu0 %v1054
        %5572 = vmatpush.msra.mxu0 %v1053
        %5573 = vmatpush.msra.mxu0 %v1052
        %5574 = vmatpush.msra.mxu0 %v1051
        %5575 = vmatpush.msra.mxu0 %v1050
        %5576 = vmatmul.f32.gmra.mxu0 %v5520
        %v5577 = vpop.f32.mrf.mxu0
        %v5578 = vadd.f32 0.0, %v5577
        %5579 = vmatmul.f32.gmra.mxu0 %v5522
        %v5580 = vpop.f32.mrf.mxu0
        %v5581 = vadd.f32 0.0, %v5580
        %5582 = vmatmul.f32.gmra.mxu0 %v5524
        %v5583 = vpop.f32.mrf.mxu0
        %v5584 = vadd.f32 0.0, %v5583
        %5585 = vmatmul.f32.gmra.mxu0 %v5526
        %v5586 = vpop.f32.mrf.mxu0
        %v5587 = vadd.f32 0.0, %v5586
        %5588 = vmatmul.f32.gmra.mxu0 %v5528
        %v5589 = vpop.f32.mrf.mxu0
        %v5590 = vadd.f32 0.0, %v5589
        %5591 = vmatmul.f32.gmra.mxu0 %v5530
        %v5592 = vpop.f32.mrf.mxu0
        %v5593 = vadd.f32 0.0, %v5592
        %5594 = vmatmul.f32.gmra.mxu0 %v5532
        %v5595 = vpop.f32.mrf.mxu0
        %v5596 = vadd.f32 0.0, %v5595
        %5597 = vmatmul.f32.gmra.mxu0 %v5534
        %v5598 = vpop.f32.mrf.mxu0
        %v5599 = vadd.f32 0.0, %v5598
        %5600 = vdwg.mxu0
        %5601 = vmatpush.msra.mxu0 0.0
        %5602 = vmatpush.msra.mxu0 0.0
        %5603 = vmatpush.msra.mxu0 0.0
        %5604 = vmatpush.msra.mxu0 0.0
        %5605 = vmatpush.msra.mxu0 0.0
        %5606 = vmatpush.msra.mxu0 0.0
        %5607 = vmatpush.msra.mxu0 0.0
        %5608 = vmatpush.msra.mxu0 0.0
        %5609 = vmatpush.msra.mxu0 0.0
        %5610 = vmatpush.msra.mxu0 0.0
        %5611 = vmatpush.msra.mxu0 0.0
        %5612 = vmatpush.msra.mxu0 0.0
        %5613 = vmatpush.msra.mxu0 0.0
        %5614 = vmatpush.msra.mxu0 0.0
        %5615 = vmatpush.msra.mxu0 %v1067
        %5616 = vmatpush.msra.mxu0 %v1066
        %5617 = vmatmul.f32.gmra.mxu0 %v5537
        %v5618 = vpop.f32.mrf.mxu0
        %v5619 = vadd.f32 %v5578, %v5618
        %5620 = vmatmul.f32.gmra.mxu0 %v5540
        %v5621 = vpop.f32.mrf.mxu0
        %v5622 = vadd.f32 %v5581, %v5621
        %5623 = vmatmul.f32.gmra.mxu0 %v5543
        %v5624 = vpop.f32.mrf.mxu0
        %v5625 = vadd.f32 %v5584, %v5624
        %5626 = vmatmul.f32.gmra.mxu0 %v5546
        %v5627 = vpop.f32.mrf.mxu0
        %v5628 = vadd.f32 %v5587, %v5627
        %5629 = vmatmul.f32.gmra.mxu0 %v5549
        %v5630 = vpop.f32.mrf.mxu0
        %v5631 = vadd.f32 %v5590, %v5630
        %5632 = vmatmul.f32.gmra.mxu0 %v5552
        %v5633 = vpop.f32.mrf.mxu0
        %v5634 = vadd.f32 %v5593, %v5633
        %5635 = vmatmul.f32.gmra.mxu0 %v5555
        %v5636 = vpop.f32.mrf.mxu0
        %v5637 = vadd.f32 %v5596, %v5636
        %5638 = vmatmul.f32.gmra.mxu0 %v5558
        %v5639 = vpop.f32.mrf.mxu0
        %v5640 = vadd.f32 %v5599, %v5639
        %5641 = vdwg.mxu0
        %s5642 = scalar_lea.vmem %s4, 528
        %v5643 = vld [vmem:[%s5642] sm:$0xff]
        %v5644 = vld [vmem:[%s5642 + $0x8] sm:$0xff]
        %v5645 = vld [vmem:[%s5642 + $0x10] sm:$0xf]
        %v5647 = vsel %vm1321, %v5619, 0
        %v5650 = vsel %vm1321, %v5622, 0
        %v5653 = vsel %vm1321, %v5625, 0
        %v5656 = vsel %vm1321, %v5628, 0
        %v5659 = vsel %vm1321, %v5631, 0
        %v5662 = vsel %vm1321, %v5634, 0
        %v5665 = vsel %vm1321, %v5637, 0
        %v5668 = vsel %vm1321, %v5640, 0
        %v5671 = vsel %vm1346, %v5645, 0
        %5673 = vmatpush.msra.mxu0 0.0
        %5674 = vmatpush.msra.mxu0 0.0
        %5675 = vmatpush.msra.mxu0 0.0
        %5676 = vmatpush.msra.mxu0 0.0
        %5677 = vmatpush.msra.mxu0 0.0
        %5678 = vmatpush.msra.mxu0 0.0
        %5679 = vmatpush.msra.mxu0 0.0
        %5680 = vmatpush.msra.mxu0 0.0
        %5681 = vmatpush.msra.mxu0 0.0
        %5682 = vmatpush.msra.mxu0 0.0
        %5683 = vmatpush.msra.mxu0 0.0
        %5684 = vmatpush.msra.mxu0 0.0
        %5685 = vmatpush.msra.mxu0 0.0
        %5686 = vmatpush.msra.mxu0 %v5671
        %5687 = vmatpush.msra.mxu0 %v5644
        %5688 = vmatpush.msra.mxu0 %v5643
        %5689 = vmatmul.f32.gmra.mxu0 %v5647
        %v5690 = vpop.f32.mrf.mxu0
        %v5691 = vadd.f32 0.0, %v5690
        %5692 = vmatmul.f32.gmra.mxu0 %v5650
        %v5693 = vpop.f32.mrf.mxu0
        %v5694 = vadd.f32 0.0, %v5693
        %5695 = vmatmul.f32.gmra.mxu0 %v5653
        %v5696 = vpop.f32.mrf.mxu0
        %v5697 = vadd.f32 0.0, %v5696
        %5698 = vmatmul.f32.gmra.mxu0 %v5656
        %v5699 = vpop.f32.mrf.mxu0
        %v5700 = vadd.f32 0.0, %v5699
        %5701 = vmatmul.f32.gmra.mxu0 %v5659
        %v5702 = vpop.f32.mrf.mxu0
        %v5703 = vadd.f32 0.0, %v5702
        %5704 = vmatmul.f32.gmra.mxu0 %v5662
        %v5705 = vpop.f32.mrf.mxu0
        %v5706 = vadd.f32 0.0, %v5705
        %5707 = vmatmul.f32.gmra.mxu0 %v5665
        %v5708 = vpop.f32.mrf.mxu0
        %v5709 = vadd.f32 0.0, %v5708
        %5710 = vmatmul.f32.gmra.mxu0 %v5668
        %v5711 = vpop.f32.mrf.mxu0
        %v5712 = vadd.f32 0.0, %v5711
        %5713 = vdwg.mxu0
        %v5714 = vadd.f32 %v5511, %v5691
        %v5715 = vadd.f32 %v5512, %v5694
        %v5716 = vadd.f32 %v5513, %v5697
        %v5717 = vadd.f32 %v5514, %v5700
        %v5718 = vadd.f32 %v5515, %v5703
        %v5719 = vadd.f32 %v5516, %v5706
        %v5720 = vadd.f32 %v5517, %v5709
        %v5721 = vadd.f32 %v5518, %v5712
        %s5722 = scalar_lea.vmem %s3, 2944
        %v5723 = vld [vmem:[%s5722] sm:$0xff]
        %v5724 = vld [vmem:[%s5722 + $0x8] sm:$0xff]
        %v5725 = vld [vmem:[%s5722 + $0x10] sm:$0xff]
        %v5726 = vld [vmem:[%s5722 + $0x18] sm:$0xff]
        %v5727 = vld [vmem:[%s5722 + $0x20] sm:$0xff]
        %v5728 = vld [vmem:[%s5722 + $0x28] sm:$0xff]
        %v5729 = vld [vmem:[%s5722 + $0x30] sm:$0xff]
        %v5730 = vld [vmem:[%s5722 + $0x38] sm:$0xff]
        %v5731 = vld [vmem:[%s5722 + $0x40] sm:$0xff]
        %v5732 = vld [vmem:[%s5722 + $0x48] sm:$0xff]
        %v5733 = vld [vmem:[%s5722 + $0x50] sm:$0xff]
        %v5734 = vld [vmem:[%s5722 + $0x58] sm:$0xff]
        %v5735 = vld [vmem:[%s5722 + $0x60] sm:$0xff]
        %v5736 = vld [vmem:[%s5722 + $0x68] sm:$0xff]
        %v5737 = vld [vmem:[%s5722 + $0x70] sm:$0xff]
        %v5738 = vld [vmem:[%s5722 + $0x78] sm:$0xff]
        %v5740 = vsel %vm1084, %v5724, 0
        %v5743 = vsel %vm1084, %v5726, 0
        %v5746 = vsel %vm1084, %v5728, 0
        %v5749 = vsel %vm1084, %v5730, 0
        %v5752 = vsel %vm1084, %v5732, 0
        %v5755 = vsel %vm1084, %v5734, 0
        %v5758 = vsel %vm1084, %v5736, 0
        %v5761 = vsel %vm1084, %v5738, 0
        %5763 = vmatpush.msra.mxu0 %v1065
        %5764 = vmatpush.msra.mxu0 %v1064
        %5765 = vmatpush.msra.mxu0 %v1063
        %5766 = vmatpush.msra.mxu0 %v1062
        %5767 = vmatpush.msra.mxu0 %v1061
        %5768 = vmatpush.msra.mxu0 %v1060
        %5769 = vmatpush.msra.mxu0 %v1059
        %5770 = vmatpush.msra.mxu0 %v1058
        %5771 = vmatpush.msra.mxu0 %v1057
        %5772 = vmatpush.msra.mxu0 %v1056
        %5773 = vmatpush.msra.mxu0 %v1055
        %5774 = vmatpush.msra.mxu0 %v1054
        %5775 = vmatpush.msra.mxu0 %v1053
        %5776 = vmatpush.msra.mxu0 %v1052
        %5777 = vmatpush.msra.mxu0 %v1051
        %5778 = vmatpush.msra.mxu0 %v1050
        %5779 = vmatmul.f32.gmra.mxu0 %v5723
        %v5780 = vpop.f32.mrf.mxu0
        %v5781 = vadd.f32 0.0, %v5780
        %5782 = vmatmul.f32.gmra.mxu0 %v5725
        %v5783 = vpop.f32.mrf.mxu0
        %v5784 = vadd.f32 0.0, %v5783
        %5785 = vmatmul.f32.gmra.mxu0 %v5727
        %v5786 = vpop.f32.mrf.mxu0
        %v5787 = vadd.f32 0.0, %v5786
        %5788 = vmatmul.f32.gmra.mxu0 %v5729
        %v5789 = vpop.f32.mrf.mxu0
        %v5790 = vadd.f32 0.0, %v5789
        %5791 = vmatmul.f32.gmra.mxu0 %v5731
        %v5792 = vpop.f32.mrf.mxu0
        %v5793 = vadd.f32 0.0, %v5792
        %5794 = vmatmul.f32.gmra.mxu0 %v5733
        %v5795 = vpop.f32.mrf.mxu0
        %v5796 = vadd.f32 0.0, %v5795
        %5797 = vmatmul.f32.gmra.mxu0 %v5735
        %v5798 = vpop.f32.mrf.mxu0
        %v5799 = vadd.f32 0.0, %v5798
        %5800 = vmatmul.f32.gmra.mxu0 %v5737
        %v5801 = vpop.f32.mrf.mxu0
        %v5802 = vadd.f32 0.0, %v5801
        %5803 = vdwg.mxu0
        %5804 = vmatpush.msra.mxu0 0.0
        %5805 = vmatpush.msra.mxu0 0.0
        %5806 = vmatpush.msra.mxu0 0.0
        %5807 = vmatpush.msra.mxu0 0.0
        %5808 = vmatpush.msra.mxu0 0.0
        %5809 = vmatpush.msra.mxu0 0.0
        %5810 = vmatpush.msra.mxu0 0.0
        %5811 = vmatpush.msra.mxu0 0.0
        %5812 = vmatpush.msra.mxu0 0.0
        %5813 = vmatpush.msra.mxu0 0.0
        %5814 = vmatpush.msra.mxu0 0.0
        %5815 = vmatpush.msra.mxu0 0.0
        %5816 = vmatpush.msra.mxu0 0.0
        %5817 = vmatpush.msra.mxu0 0.0
        %5818 = vmatpush.msra.mxu0 %v1067
        %5819 = vmatpush.msra.mxu0 %v1066
        %5820 = vmatmul.f32.gmra.mxu0 %v5740
        %v5821 = vpop.f32.mrf.mxu0
        %v5822 = vadd.f32 %v5781, %v5821
        %5823 = vmatmul.f32.gmra.mxu0 %v5743
        %v5824 = vpop.f32.mrf.mxu0
        %v5825 = vadd.f32 %v5784, %v5824
        %5826 = vmatmul.f32.gmra.mxu0 %v5746
        %v5827 = vpop.f32.mrf.mxu0
        %v5828 = vadd.f32 %v5787, %v5827
        %5829 = vmatmul.f32.gmra.mxu0 %v5749
        %v5830 = vpop.f32.mrf.mxu0
        %v5831 = vadd.f32 %v5790, %v5830
        %5832 = vmatmul.f32.gmra.mxu0 %v5752
        %v5833 = vpop.f32.mrf.mxu0
        %v5834 = vadd.f32 %v5793, %v5833
        %5835 = vmatmul.f32.gmra.mxu0 %v5755
        %v5836 = vpop.f32.mrf.mxu0
        %v5837 = vadd.f32 %v5796, %v5836
        %5838 = vmatmul.f32.gmra.mxu0 %v5758
        %v5839 = vpop.f32.mrf.mxu0
        %v5840 = vadd.f32 %v5799, %v5839
        %5841 = vmatmul.f32.gmra.mxu0 %v5761
        %v5842 = vpop.f32.mrf.mxu0
        %v5843 = vadd.f32 %v5802, %v5842
        %5844 = vdwg.mxu0
        %s5845 = scalar_lea.vmem %s4, 552
        %v5846 = vld [vmem:[%s5845] sm:$0xff]
        %v5847 = vld [vmem:[%s5845 + $0x8] sm:$0xff]
        %v5848 = vld [vmem:[%s5845 + $0x10] sm:$0xf]
        %v5850 = vsel %vm1321, %v5822, 0
        %v5853 = vsel %vm1321, %v5825, 0
        %v5856 = vsel %vm1321, %v5828, 0
        %v5859 = vsel %vm1321, %v5831, 0
        %v5862 = vsel %vm1321, %v5834, 0
        %v5865 = vsel %vm1321, %v5837, 0
        %v5868 = vsel %vm1321, %v5840, 0
        %v5871 = vsel %vm1321, %v5843, 0
        %v5874 = vsel %vm1346, %v5848, 0
        %5876 = vmatpush.msra.mxu0 0.0
        %5877 = vmatpush.msra.mxu0 0.0
        %5878 = vmatpush.msra.mxu0 0.0
        %5879 = vmatpush.msra.mxu0 0.0
        %5880 = vmatpush.msra.mxu0 0.0
        %5881 = vmatpush.msra.mxu0 0.0
        %5882 = vmatpush.msra.mxu0 0.0
        %5883 = vmatpush.msra.mxu0 0.0
        %5884 = vmatpush.msra.mxu0 0.0
        %5885 = vmatpush.msra.mxu0 0.0
        %5886 = vmatpush.msra.mxu0 0.0
        %5887 = vmatpush.msra.mxu0 0.0
        %5888 = vmatpush.msra.mxu0 0.0
        %5889 = vmatpush.msra.mxu0 %v5874
        %5890 = vmatpush.msra.mxu0 %v5847
        %5891 = vmatpush.msra.mxu0 %v5846
        %5892 = vmatmul.f32.gmra.mxu0 %v5850
        %v5893 = vpop.f32.mrf.mxu0
        %v5894 = vadd.f32 0.0, %v5893
        %5895 = vmatmul.f32.gmra.mxu0 %v5853
        %v5896 = vpop.f32.mrf.mxu0
        %v5897 = vadd.f32 0.0, %v5896
        %5898 = vmatmul.f32.gmra.mxu0 %v5856
        %v5899 = vpop.f32.mrf.mxu0
        %v5900 = vadd.f32 0.0, %v5899
        %5901 = vmatmul.f32.gmra.mxu0 %v5859
        %v5902 = vpop.f32.mrf.mxu0
        %v5903 = vadd.f32 0.0, %v5902
        %5904 = vmatmul.f32.gmra.mxu0 %v5862
        %v5905 = vpop.f32.mrf.mxu0
        %v5906 = vadd.f32 0.0, %v5905
        %5907 = vmatmul.f32.gmra.mxu0 %v5865
        %v5908 = vpop.f32.mrf.mxu0
        %v5909 = vadd.f32 0.0, %v5908
        %5910 = vmatmul.f32.gmra.mxu0 %v5868
        %v5911 = vpop.f32.mrf.mxu0
        %v5912 = vadd.f32 0.0, %v5911
        %5913 = vmatmul.f32.gmra.mxu0 %v5871
        %v5914 = vpop.f32.mrf.mxu0
        %v5915 = vadd.f32 0.0, %v5914
        %5916 = vdwg.mxu0
        %v5917 = vadd.f32 %v5714, %v5894
        %v5918 = vadd.f32 %v5715, %v5897
        %v5919 = vadd.f32 %v5716, %v5900
        %v5920 = vadd.f32 %v5717, %v5903
        %v5921 = vadd.f32 %v5718, %v5906
        %v5922 = vadd.f32 %v5719, %v5909
        %v5923 = vadd.f32 %v5720, %v5912
        %v5924 = vadd.f32 %v5721, %v5915
        %s5925 = scalar_lea.vmem %s3, 3072
        %v5926 = vld [vmem:[%s5925] sm:$0xff]
        %v5927 = vld [vmem:[%s5925 + $0x8] sm:$0xff]
        %v5928 = vld [vmem:[%s5925 + $0x10] sm:$0xff]
        %v5929 = vld [vmem:[%s5925 + $0x18] sm:$0xff]
        %v5930 = vld [vmem:[%s5925 + $0x20] sm:$0xff]
        %v5931 = vld [vmem:[%s5925 + $0x28] sm:$0xff]
        %v5932 = vld [vmem:[%s5925 + $0x30] sm:$0xff]
        %v5933 = vld [vmem:[%s5925 + $0x38] sm:$0xff]
        %v5934 = vld [vmem:[%s5925 + $0x40] sm:$0xff]
        %v5935 = vld [vmem:[%s5925 + $0x48] sm:$0xff]
        %v5936 = vld [vmem:[%s5925 + $0x50] sm:$0xff]
        %v5937 = vld [vmem:[%s5925 + $0x58] sm:$0xff]
        %v5938 = vld [vmem:[%s5925 + $0x60] sm:$0xff]
        %v5939 = vld [vmem:[%s5925 + $0x68] sm:$0xff]
        %v5940 = vld [vmem:[%s5925 + $0x70] sm:$0xff]
        %v5941 = vld [vmem:[%s5925 + $0x78] sm:$0xff]
        %v5943 = vsel %vm1084, %v5927, 0
        %v5946 = vsel %vm1084, %v5929, 0
        %v5949 = vsel %vm1084, %v5931, 0
        %v5952 = vsel %vm1084, %v5933, 0
        %v5955 = vsel %vm1084, %v5935, 0
        %v5958 = vsel %vm1084, %v5937, 0
        %v5961 = vsel %vm1084, %v5939, 0
        %v5964 = vsel %vm1084, %v5941, 0
        %5966 = vmatpush.msra.mxu0 %v1065
        %5967 = vmatpush.msra.mxu0 %v1064
        %5968 = vmatpush.msra.mxu0 %v1063
        %5969 = vmatpush.msra.mxu0 %v1062
        %5970 = vmatpush.msra.mxu0 %v1061
        %5971 = vmatpush.msra.mxu0 %v1060
        %5972 = vmatpush.msra.mxu0 %v1059
        %5973 = vmatpush.msra.mxu0 %v1058
        %5974 = vmatpush.msra.mxu0 %v1057
        %5975 = vmatpush.msra.mxu0 %v1056
        %5976 = vmatpush.msra.mxu0 %v1055
        %5977 = vmatpush.msra.mxu0 %v1054
        %5978 = vmatpush.msra.mxu0 %v1053
        %5979 = vmatpush.msra.mxu0 %v1052
        %5980 = vmatpush.msra.mxu0 %v1051
        %5981 = vmatpush.msra.mxu0 %v1050
        %5982 = vmatmul.f32.gmra.mxu0 %v5926
        %v5983 = vpop.f32.mrf.mxu0
        %v5984 = vadd.f32 0.0, %v5983
        %5985 = vmatmul.f32.gmra.mxu0 %v5928
        %v5986 = vpop.f32.mrf.mxu0
        %v5987 = vadd.f32 0.0, %v5986
        %5988 = vmatmul.f32.gmra.mxu0 %v5930
        %v5989 = vpop.f32.mrf.mxu0
        %v5990 = vadd.f32 0.0, %v5989
        %5991 = vmatmul.f32.gmra.mxu0 %v5932
        %v5992 = vpop.f32.mrf.mxu0
        %v5993 = vadd.f32 0.0, %v5992
        %5994 = vmatmul.f32.gmra.mxu0 %v5934
        %v5995 = vpop.f32.mrf.mxu0
        %v5996 = vadd.f32 0.0, %v5995
        %5997 = vmatmul.f32.gmra.mxu0 %v5936
        %v5998 = vpop.f32.mrf.mxu0
        %v5999 = vadd.f32 0.0, %v5998
        %6000 = vmatmul.f32.gmra.mxu0 %v5938
        %v6001 = vpop.f32.mrf.mxu0
        %v6002 = vadd.f32 0.0, %v6001
        %6003 = vmatmul.f32.gmra.mxu0 %v5940
        %v6004 = vpop.f32.mrf.mxu0
        %v6005 = vadd.f32 0.0, %v6004
        %6006 = vdwg.mxu0
        %6007 = vmatpush.msra.mxu0 0.0
        %6008 = vmatpush.msra.mxu0 0.0
        %6009 = vmatpush.msra.mxu0 0.0
        %6010 = vmatpush.msra.mxu0 0.0
        %6011 = vmatpush.msra.mxu0 0.0
        %6012 = vmatpush.msra.mxu0 0.0
        %6013 = vmatpush.msra.mxu0 0.0
        %6014 = vmatpush.msra.mxu0 0.0
        %6015 = vmatpush.msra.mxu0 0.0
        %6016 = vmatpush.msra.mxu0 0.0
        %6017 = vmatpush.msra.mxu0 0.0
        %6018 = vmatpush.msra.mxu0 0.0
        %6019 = vmatpush.msra.mxu0 0.0
        %6020 = vmatpush.msra.mxu0 0.0
        %6021 = vmatpush.msra.mxu0 %v1067
        %6022 = vmatpush.msra.mxu0 %v1066
        %6023 = vmatmul.f32.gmra.mxu0 %v5943
        %v6024 = vpop.f32.mrf.mxu0
        %v6025 = vadd.f32 %v5984, %v6024
        %6026 = vmatmul.f32.gmra.mxu0 %v5946
        %v6027 = vpop.f32.mrf.mxu0
        %v6028 = vadd.f32 %v5987, %v6027
        %6029 = vmatmul.f32.gmra.mxu0 %v5949
        %v6030 = vpop.f32.mrf.mxu0
        %v6031 = vadd.f32 %v5990, %v6030
        %6032 = vmatmul.f32.gmra.mxu0 %v5952
        %v6033 = vpop.f32.mrf.mxu0
        %v6034 = vadd.f32 %v5993, %v6033
        %6035 = vmatmul.f32.gmra.mxu0 %v5955
        %v6036 = vpop.f32.mrf.mxu0
        %v6037 = vadd.f32 %v5996, %v6036
        %6038 = vmatmul.f32.gmra.mxu0 %v5958
        %v6039 = vpop.f32.mrf.mxu0
        %v6040 = vadd.f32 %v5999, %v6039
        %6041 = vmatmul.f32.gmra.mxu0 %v5961
        %v6042 = vpop.f32.mrf.mxu0
        %v6043 = vadd.f32 %v6002, %v6042
        %6044 = vmatmul.f32.gmra.mxu0 %v5964
        %v6045 = vpop.f32.mrf.mxu0
        %v6046 = vadd.f32 %v6005, %v6045
        %6047 = vdwg.mxu0
        %s6048 = scalar_lea.vmem %s4, 576
        %v6049 = vld [vmem:[%s6048] sm:$0xff]
        %v6050 = vld [vmem:[%s6048 + $0x8] sm:$0xff]
        %v6051 = vld [vmem:[%s6048 + $0x10] sm:$0xf]
        %v6053 = vsel %vm1321, %v6025, 0
        %v6056 = vsel %vm1321, %v6028, 0
        %v6059 = vsel %vm1321, %v6031, 0
        %v6062 = vsel %vm1321, %v6034, 0
        %v6065 = vsel %vm1321, %v6037, 0
        %v6068 = vsel %vm1321, %v6040, 0
        %v6071 = vsel %vm1321, %v6043, 0
        %v6074 = vsel %vm1321, %v6046, 0
        %v6077 = vsel %vm1346, %v6051, 0
        %6079 = vmatpush.msra.mxu0 0.0
        %6080 = vmatpush.msra.mxu0 0.0
        %6081 = vmatpush.msra.mxu0 0.0
        %6082 = vmatpush.msra.mxu0 0.0
        %6083 = vmatpush.msra.mxu0 0.0
        %6084 = vmatpush.msra.mxu0 0.0
        %6085 = vmatpush.msra.mxu0 0.0
        %6086 = vmatpush.msra.mxu0 0.0
        %6087 = vmatpush.msra.mxu0 0.0
        %6088 = vmatpush.msra.mxu0 0.0
        %6089 = vmatpush.msra.mxu0 0.0
        %6090 = vmatpush.msra.mxu0 0.0
        %6091 = vmatpush.msra.mxu0 0.0
        %6092 = vmatpush.msra.mxu0 %v6077
        %6093 = vmatpush.msra.mxu0 %v6050
        %6094 = vmatpush.msra.mxu0 %v6049
        %6095 = vmatmul.f32.gmra.mxu0 %v6053
        %v6096 = vpop.f32.mrf.mxu0
        %v6097 = vadd.f32 0.0, %v6096
        %6098 = vmatmul.f32.gmra.mxu0 %v6056
        %v6099 = vpop.f32.mrf.mxu0
        %v6100 = vadd.f32 0.0, %v6099
        %6101 = vmatmul.f32.gmra.mxu0 %v6059
        %v6102 = vpop.f32.mrf.mxu0
        %v6103 = vadd.f32 0.0, %v6102
        %6104 = vmatmul.f32.gmra.mxu0 %v6062
        %v6105 = vpop.f32.mrf.mxu0
        %v6106 = vadd.f32 0.0, %v6105
        %6107 = vmatmul.f32.gmra.mxu0 %v6065
        %v6108 = vpop.f32.mrf.mxu0
        %v6109 = vadd.f32 0.0, %v6108
        %6110 = vmatmul.f32.gmra.mxu0 %v6068
        %v6111 = vpop.f32.mrf.mxu0
        %v6112 = vadd.f32 0.0, %v6111
        %6113 = vmatmul.f32.gmra.mxu0 %v6071
        %v6114 = vpop.f32.mrf.mxu0
        %v6115 = vadd.f32 0.0, %v6114
        %6116 = vmatmul.f32.gmra.mxu0 %v6074
        %v6117 = vpop.f32.mrf.mxu0
        %v6118 = vadd.f32 0.0, %v6117
        %6119 = vdwg.mxu0
        %v6120 = vadd.f32 %v5917, %v6097
        %v6121 = vadd.f32 %v5918, %v6100
        %v6122 = vadd.f32 %v5919, %v6103
        %v6123 = vadd.f32 %v5920, %v6106
        %v6124 = vadd.f32 %v5921, %v6109
        %v6125 = vadd.f32 %v5922, %v6112
        %v6126 = vadd.f32 %v5923, %v6115
        %v6127 = vadd.f32 %v5924, %v6118
        %v6128 = vld [vmem:[%s5] sm:$0x1]
        %v6130 = vperm.slane %v6128, 0
        %v6132 = vadd.f32 %v6120, %v6130
        %v6133 = vadd.f32 %v6121, %v6130
        %v6134 = vadd.f32 %v6122, %v6130
        %v6135 = vadd.f32 %v6123, %v6130
        %v6136 = vadd.f32 %v6124, %v6130
        %v6137 = vadd.f32 %v6125, %v6130
        %v6138 = vadd.f32 %v6126, %v6130
        %v6139 = vadd.f32 %v6127, %v6130
        %v6140 = vmax.f32 %v6132, 0.0
        %v6141 = vmax.f32 %v6133, 0.0
        %v6142 = vmax.f32 %v6134, 0.0
        %v6143 = vmax.f32 %v6135, 0.0
        %v6144 = vmax.f32 %v6136, 0.0
        %v6145 = vmax.f32 %v6137, 0.0
        %v6146 = vmax.f32 %v6138, 0.0
        %v6147 = vmax.f32 %v6139, 0.0
        %v6148 = vmax.f32 %v6140, %v6142
        %v6149 = vmax.f32 %v6141, %v6143
        %v6150 = vmax.f32 %v6144, %v6146
        %v6151 = vmax.f32 %v6145, %v6147
        %v6152 = vmax.f32 %v6148, %v6150
        %v6153 = vmax.f32 %v6149, %v6151
        %v6154 = vld [vmem:[%s7] sm:$0xf]
        %v6155 = vld [vmem:[%s6] sm:$0xff]
        %v6156 = vld [vmem:[%s6 + $0x8] sm:$0xff]
        %v6157 = vld [vmem:[%s6 + $0x10] sm:$0xff]
        %v6158 = vld [vmem:[%s6 + $0x18] sm:$0xff]
        %v6159 = vld [vmem:[%s6 + $0x20] sm:$0xff]
        %v6160 = vld [vmem:[%s6 + $0x28] sm:$0xff]
        %v6161 = vld [vmem:[%s6 + $0x30] sm:$0xff]
        %v6162 = vld [vmem:[%s6 + $0x38] sm:$0xff]
        %v6163 = vld [vmem:[%s6 + $0x40] sm:$0xff]
        %v6164 = vld [vmem:[%s6 + $0x48] sm:$0xff]
        %v6165 = vld [vmem:[%s6 + $0x50] sm:$0xff]
        %v6166 = vld [vmem:[%s6 + $0x58] sm:$0xff]
        %v6167 = vld [vmem:[%s6 + $0x60] sm:$0xff]
        %v6168 = vld [vmem:[%s6 + $0x68] sm:$0xff]
        %v6169 = vld [vmem:[%s6 + $0x70] sm:$0xff]
        %v6170 = vld [vmem:[%s6 + $0x78] sm:$0xff]
        %v6171 = vld [vmem:[%s6 + $0x80] sm:$0xff]
        %v6172 = vld [vmem:[%s6 + $0x88] sm:$0xff]
        %v6173 = vld [vmem:[%s6 + $0x90] sm:$0xff]
        %v6174 = vld [vmem:[%s6 + $0x98] sm:$0xff]
        %v6175 = vld [vmem:[%s6 + $0xa0] sm:$0xff]
        %v6176 = vld [vmem:[%s6 + $0xa8] sm:$0xff]
        %v6177 = vld [vmem:[%s6 + $0xb0] sm:$0xff]
        %v6178 = vld [vmem:[%s6 + $0xb8] sm:$0xff]
        %v6179 = vld [vmem:[%s6 + $0xc0] sm:$0x3]
        %v6180 = vld [vmem:[%s6 + $0xc8] sm:$0x3]
        %v6181 = vld [vmem:[%s6 + $0xd0] sm:$0x3]
        %v6182 = vld [vmem:[%s6 + $0xd8] sm:$0x3]
        %vm6183 = vcmask 408576
        %v6185 = vsel %vm6183, %v6152, 0
        %vm6187 = vcmask 1041408
        %v6189 = vsel %vm6187, %v6179, 0
        %v6192 = vsel %vm6187, %v6180, 0
        %v6195 = vsel %vm6187, %v6181, 0
        %v6198 = vsel %vm6187, %v6182, 0
        %6200 = vmatpush.msra.mxu0 0.0
        %6201 = vmatpush.msra.mxu0 0.0
        %6202 = vmatpush.msra.mxu0 0.0
        %6203 = vmatpush.msra.mxu0 0.0
        %6204 = vmatpush.msra.mxu0 0.0
        %6205 = vmatpush.msra.mxu0 0.0
        %6206 = vmatpush.msra.mxu0 0.0
        %6207 = vmatpush.msra.mxu0 0.0
        %6208 = vmatpush.msra.mxu0 0.0
        %6209 = vmatpush.msra.mxu0 %v6189
        %6210 = vmatpush.msra.mxu0 %v6175
        %6211 = vmatpush.msra.mxu0 %v6171
        %6212 = vmatpush.msra.mxu0 %v6167
        %6213 = vmatpush.msra.mxu0 %v6163
        %6214 = vmatpush.msra.mxu0 %v6159
        %6215 = vmatpush.msra.mxu0 %v6155
        %6216 = vmatmul.f32.gmra.mxu0 %v6185
        %v6217 = vpop.f32.mrf.mxu0
        %v6218 = vadd.f32 0.0, %v6217
        %6219 = vdwg.mxu0
        %6220 = vmatpush.msra.mxu0 0.0
        %6221 = vmatpush.msra.mxu0 0.0
        %6222 = vmatpush.msra.mxu0 0.0
        %6223 = vmatpush.msra.mxu0 0.0
        %6224 = vmatpush.msra.mxu0 0.0
        %6225 = vmatpush.msra.mxu0 0.0
        %6226 = vmatpush.msra.mxu0 0.0
        %6227 = vmatpush.msra.mxu0 0.0
        %6228 = vmatpush.msra.mxu0 0.0
        %6229 = vmatpush.msra.mxu0 %v6192
        %6230 = vmatpush.msra.mxu0 %v6176
        %6231 = vmatpush.msra.mxu0 %v6172
        %6232 = vmatpush.msra.mxu0 %v6168
        %6233 = vmatpush.msra.mxu0 %v6164
        %6234 = vmatpush.msra.mxu0 %v6160
        %6235 = vmatpush.msra.mxu0 %v6156
        %6236 = vmatmul.f32.gmra.mxu0 %v6185
        %v6237 = vpop.f32.mrf.mxu0
        %v6238 = vadd.f32 0.0, %v6237
        %6239 = vdwg.mxu0
        %6240 = vmatpush.msra.mxu0 0.0
        %6241 = vmatpush.msra.mxu0 0.0
        %6242 = vmatpush.msra.mxu0 0.0
        %6243 = vmatpush.msra.mxu0 0.0
        %6244 = vmatpush.msra.mxu0 0.0
        %6245 = vmatpush.msra.mxu0 0.0
        %6246 = vmatpush.msra.mxu0 0.0
        %6247 = vmatpush.msra.mxu0 0.0
        %6248 = vmatpush.msra.mxu0 0.0
        %6249 = vmatpush.msra.mxu0 %v6195
        %6250 = vmatpush.msra.mxu0 %v6177
        %6251 = vmatpush.msra.mxu0 %v6173
        %6252 = vmatpush.msra.mxu0 %v6169
        %6253 = vmatpush.msra.mxu0 %v6165
        %6254 = vmatpush.msra.mxu0 %v6161
        %6255 = vmatpush.msra.mxu0 %v6157
        %6256 = vmatmul.f32.gmra.mxu0 %v6185
        %v6257 = vpop.f32.mrf.mxu0
        %v6258 = vadd.f32 0.0, %v6257
        %6259 = vdwg.mxu0
        %6260 = vmatpush.msra.mxu0 0.0
        %6261 = vmatpush.msra.mxu0 0.0
        %6262 = vmatpush.msra.mxu0 0.0
        %6263 = vmatpush.msra.mxu0 0.0
        %6264 = vmatpush.msra.mxu0 0.0
        %6265 = vmatpush.msra.mxu0 0.0
        %6266 = vmatpush.msra.mxu0 0.0
        %6267 = vmatpush.msra.mxu0 0.0
        %6268 = vmatpush.msra.mxu0 0.0
        %6269 = vmatpush.msra.mxu0 %v6198
        %6270 = vmatpush.msra.mxu0 %v6178
        %6271 = vmatpush.msra.mxu0 %v6174
        %6272 = vmatpush.msra.mxu0 %v6170
        %6273 = vmatpush.msra.mxu0 %v6166
        %6274 = vmatpush.msra.mxu0 %v6162
        %6275 = vmatpush.msra.mxu0 %v6158
        %6276 = vmatmul.f32.gmra.mxu0 %v6185
        %v6277 = vpop.f32.mrf.mxu0
        %v6278 = vadd.f32 0.0, %v6277
        %6279 = vdwg.mxu0
        %v6284 = vrot.slane %v6238, 7
        %v6285 = vrot.slane %v6258, 6
        %v6286 = vrot.slane %v6278, 5
        %v6287 = vsel %vm438, %v6218, %v6284
        %vm6288 = vcmask 1042434
        %v6289 = vsel %vm6288, %v6285, %v6286
        %v6290 = vsel %vm6187, %v6287, %v6289
        %v6292 = vadd.f32 %v6154, %v6290
        %s6293 = scalar_lea.vmem %s6, 224
        %v6294 = vld [vmem:[%s6293] sm:$0xff]
        %v6295 = vld [vmem:[%s6293 + $0x8] sm:$0xff]
        %v6296 = vld [vmem:[%s6293 + $0x10] sm:$0xff]
        %v6297 = vld [vmem:[%s6293 + $0x18] sm:$0xff]
        %v6298 = vld [vmem:[%s6293 + $0x20] sm:$0xff]
        %v6299 = vld [vmem:[%s6293 + $0x28] sm:$0xff]
        %v6300 = vld [vmem:[%s6293 + $0x30] sm:$0xff]
        %v6301 = vld [vmem:[%s6293 + $0x38] sm:$0xff]
        %v6302 = vld [vmem:[%s6293 + $0x40] sm:$0xff]
        %v6303 = vld [vmem:[%s6293 + $0x48] sm:$0xff]
        %v6304 = vld [vmem:[%s6293 + $0x50] sm:$0xff]
        %v6305 = vld [vmem:[%s6293 + $0x58] sm:$0xff]
        %v6306 = vld [vmem:[%s6293 + $0x60] sm:$0xff]
        %v6307 = vld [vmem:[%s6293 + $0x68] sm:$0xff]
        %v6308 = vld [vmem:[%s6293 + $0x70] sm:$0xff]
        %v6309 = vld [vmem:[%s6293 + $0x78] sm:$0xff]
        %v6310 = vld [vmem:[%s6293 + $0x80] sm:$0xff]
        %v6311 = vld [vmem:[%s6293 + $0x88] sm:$0xff]
        %v6312 = vld [vmem:[%s6293 + $0x90] sm:$0xff]
        %v6313 = vld [vmem:[%s6293 + $0x98] sm:$0xff]
        %v6314 = vld [vmem:[%s6293 + $0xa0] sm:$0xff]
        %v6315 = vld [vmem:[%s6293 + $0xa8] sm:$0xff]
        %v6316 = vld [vmem:[%s6293 + $0xb0] sm:$0xff]
        %v6317 = vld [vmem:[%s6293 + $0xb8] sm:$0xff]
        %v6318 = vld [vmem:[%s6293 + $0xc0] sm:$0x3]
        %v6319 = vld [vmem:[%s6293 + $0xc8] sm:$0x3]
        %v6320 = vld [vmem:[%s6293 + $0xd0] sm:$0x3]
        %v6321 = vld [vmem:[%s6293 + $0xd8] sm:$0x3]
        %v6322 = vrot.slane %v6152, 1
        %v6323 = vsel %vm6183, %v6322, 0
        %v6326 = vsel %vm6187, %v6318, 0
        %v6329 = vsel %vm6187, %v6319, 0
        %v6332 = vsel %vm6187, %v6320, 0
        %v6335 = vsel %vm6187, %v6321, 0
        %6337 = vmatpush.msra.mxu0 0.0
        %6338 = vmatpush.msra.mxu0 0.0
        %6339 = vmatpush.msra.mxu0 0.0
        %6340 = vmatpush.msra.mxu0 0.0
        %6341 = vmatpush.msra.mxu0 0.0
        %6342 = vmatpush.msra.mxu0 0.0
        %6343 = vmatpush.msra.mxu0 0.0
        %6344 = vmatpush.msra.mxu0 0.0
        %6345 = vmatpush.msra.mxu0 0.0
        %6346 = vmatpush.msra.mxu0 %v6326
        %6347 = vmatpush.msra.mxu0 %v6314
        %6348 = vmatpush.msra.mxu0 %v6310
        %6349 = vmatpush.msra.mxu0 %v6306
        %6350 = vmatpush.msra.mxu0 %v6302
        %6351 = vmatpush.msra.mxu0 %v6298
        %6352 = vmatpush.msra.mxu0 %v6294
        %6353 = vmatmul.f32.gmra.mxu0 %v6323
        %v6354 = vpop.f32.mrf.mxu0
        %v6355 = vadd.f32 0.0, %v6354
        %6356 = vdwg.mxu0
        %6357 = vmatpush.msra.mxu0 0.0
        %6358 = vmatpush.msra.mxu0 0.0
        %6359 = vmatpush.msra.mxu0 0.0
        %6360 = vmatpush.msra.mxu0 0.0
        %6361 = vmatpush.msra.mxu0 0.0
        %6362 = vmatpush.msra.mxu0 0.0
        %6363 = vmatpush.msra.mxu0 0.0
        %6364 = vmatpush.msra.mxu0 0.0
        %6365 = vmatpush.msra.mxu0 0.0
        %6366 = vmatpush.msra.mxu0 %v6329
        %6367 = vmatpush.msra.mxu0 %v6315
        %6368 = vmatpush.msra.mxu0 %v6311
        %6369 = vmatpush.msra.mxu0 %v6307
        %6370 = vmatpush.msra.mxu0 %v6303
        %6371 = vmatpush.msra.mxu0 %v6299
        %6372 = vmatpush.msra.mxu0 %v6295
        %6373 = vmatmul.f32.gmra.mxu0 %v6323
        %v6374 = vpop.f32.mrf.mxu0
        %v6375 = vadd.f32 0.0, %v6374
        %6376 = vdwg.mxu0
        %6377 = vmatpush.msra.mxu0 0.0
        %6378 = vmatpush.msra.mxu0 0.0
        %6379 = vmatpush.msra.mxu0 0.0
        %6380 = vmatpush.msra.mxu0 0.0
        %6381 = vmatpush.msra.mxu0 0.0
        %6382 = vmatpush.msra.mxu0 0.0
        %6383 = vmatpush.msra.mxu0 0.0
        %6384 = vmatpush.msra.mxu0 0.0
        %6385 = vmatpush.msra.mxu0 0.0
        %6386 = vmatpush.msra.mxu0 %v6332
        %6387 = vmatpush.msra.mxu0 %v6316
        %6388 = vmatpush.msra.mxu0 %v6312
        %6389 = vmatpush.msra.mxu0 %v6308
        %6390 = vmatpush.msra.mxu0 %v6304
        %6391 = vmatpush.msra.mxu0 %v6300
        %6392 = vmatpush.msra.mxu0 %v6296
        %6393 = vmatmul.f32.gmra.mxu0 %v6323
        %v6394 = vpop.f32.mrf.mxu0
        %v6395 = vadd.f32 0.0, %v6394
        %6396 = vdwg.mxu0
        %6397 = vmatpush.msra.mxu0 0.0
        %6398 = vmatpush.msra.mxu0 0.0
        %6399 = vmatpush.msra.mxu0 0.0
        %6400 = vmatpush.msra.mxu0 0.0
        %6401 = vmatpush.msra.mxu0 0.0
        %6402 = vmatpush.msra.mxu0 0.0
        %6403 = vmatpush.msra.mxu0 0.0
        %6404 = vmatpush.msra.mxu0 0.0
        %6405 = vmatpush.msra.mxu0 0.0
        %6406 = vmatpush.msra.mxu0 %v6335
        %6407 = vmatpush.msra.mxu0 %v6317
        %6408 = vmatpush.msra.mxu0 %v6313
        %6409 = vmatpush.msra.mxu0 %v6309
        %6410 = vmatpush.msra.mxu0 %v6305
        %6411 = vmatpush.msra.mxu0 %v6301
        %6412 = vmatpush.msra.mxu0 %v6297
        %6413 = vmatmul.f32.gmra.mxu0 %v6323
        %v6414 = vpop.f32.mrf.mxu0
        %v6415 = vadd.f32 0.0, %v6414
        %6416 = vdwg.mxu0
        %v6421 = vrot.slane %v6375, 7
        %v6422 = vrot.slane %v6395, 6
        %v6423 = vrot.slane %v6415, 5
        %v6424 = vsel %vm438, %v6355, %v6421
        %v6425 = vsel %vm6288, %v6422, %v6423
        %v6426 = vsel %vm6187, %v6424, %v6425
        %v6428 = vadd.f32 %v6292, %v6426
        %s6429 = scalar_lea.vmem %s6, 448
        %v6430 = vld [vmem:[%s6429] sm:$0xff]
        %v6431 = vld [vmem:[%s6429 + $0x8] sm:$0xff]
        %v6432 = vld [vmem:[%s6429 + $0x10] sm:$0xff]
        %v6433 = vld [vmem:[%s6429 + $0x18] sm:$0xff]
        %v6434 = vld [vmem:[%s6429 + $0x20] sm:$0xff]
        %v6435 = vld [vmem:[%s6429 + $0x28] sm:$0xff]
        %v6436 = vld [vmem:[%s6429 + $0x30] sm:$0xff]
        %v6437 = vld [vmem:[%s6429 + $0x38] sm:$0xff]
        %v6438 = vld [vmem:[%s6429 + $0x40] sm:$0xff]
        %v6439 = vld [vmem:[%s6429 + $0x48] sm:$0xff]
        %v6440 = vld [vmem:[%s6429 + $0x50] sm:$0xff]
        %v6441 = vld [vmem:[%s6429 + $0x58] sm:$0xff]
        %v6442 = vld [vmem:[%s6429 + $0x60] sm:$0xff]
        %v6443 = vld [vmem:[%s6429 + $0x68] sm:$0xff]
        %v6444 = vld [vmem:[%s6429 + $0x70] sm:$0xff]
        %v6445 = vld [vmem:[%s6429 + $0x78] sm:$0xff]
        %v6446 = vld [vmem:[%s6429 + $0x80] sm:$0xff]
        %v6447 = vld [vmem:[%s6429 + $0x88] sm:$0xff]
        %v6448 = vld [vmem:[%s6429 + $0x90] sm:$0xff]
        %v6449 = vld [vmem:[%s6429 + $0x98] sm:$0xff]
        %v6450 = vld [vmem:[%s6429 + $0xa0] sm:$0xff]
        %v6451 = vld [vmem:[%s6429 + $0xa8] sm:$0xff]
        %v6452 = vld [vmem:[%s6429 + $0xb0] sm:$0xff]
        %v6453 = vld [vmem:[%s6429 + $0xb8] sm:$0xff]
        %v6454 = vld [vmem:[%s6429 + $0xc0] sm:$0x3]
        %v6455 = vld [vmem:[%s6429 + $0xc8] sm:$0x3]
        %v6456 = vld [vmem:[%s6429 + $0xd0] sm:$0x3]
        %v6457 = vld [vmem:[%s6429 + $0xd8] sm:$0x3]
        %v6458 = vrot.slane %v6152, 2
        %v6459 = vsel %vm6183, %v6458, 0
        %v6462 = vsel %vm6187, %v6454, 0
        %v6465 = vsel %vm6187, %v6455, 0
        %v6468 = vsel %vm6187, %v6456, 0
        %v6471 = vsel %vm6187, %v6457, 0
        %6473 = vmatpush.msra.mxu0 0.0
        %6474 = vmatpush.msra.mxu0 0.0
        %6475 = vmatpush.msra.mxu0 0.0
        %6476 = vmatpush.msra.mxu0 0.0
        %6477 = vmatpush.msra.mxu0 0.0
        %6478 = vmatpush.msra.mxu0 0.0
        %6479 = vmatpush.msra.mxu0 0.0
        %6480 = vmatpush.msra.mxu0 0.0
        %6481 = vmatpush.msra.mxu0 0.0
        %6482 = vmatpush.msra.mxu0 %v6462
        %6483 = vmatpush.msra.mxu0 %v6450
        %6484 = vmatpush.msra.mxu0 %v6446
        %6485 = vmatpush.msra.mxu0 %v6442
        %6486 = vmatpush.msra.mxu0 %v6438
        %6487 = vmatpush.msra.mxu0 %v6434
        %6488 = vmatpush.msra.mxu0 %v6430
        %6489 = vmatmul.f32.gmra.mxu0 %v6459
        %v6490 = vpop.f32.mrf.mxu0
        %v6491 = vadd.f32 0.0, %v6490
        %6492 = vdwg.mxu0
        %6493 = vmatpush.msra.mxu0 0.0
        %6494 = vmatpush.msra.mxu0 0.0
        %6495 = vmatpush.msra.mxu0 0.0
        %6496 = vmatpush.msra.mxu0 0.0
        %6497 = vmatpush.msra.mxu0 0.0
        %6498 = vmatpush.msra.mxu0 0.0
        %6499 = vmatpush.msra.mxu0 0.0
        %6500 = vmatpush.msra.mxu0 0.0
        %6501 = vmatpush.msra.mxu0 0.0
        %6502 = vmatpush.msra.mxu0 %v6465
        %6503 = vmatpush.msra.mxu0 %v6451
        %6504 = vmatpush.msra.mxu0 %v6447
        %6505 = vmatpush.msra.mxu0 %v6443
        %6506 = vmatpush.msra.mxu0 %v6439
        %6507 = vmatpush.msra.mxu0 %v6435
        %6508 = vmatpush.msra.mxu0 %v6431
        %6509 = vmatmul.f32.gmra.mxu0 %v6459
        %v6510 = vpop.f32.mrf.mxu0
        %v6511 = vadd.f32 0.0, %v6510
        %6512 = vdwg.mxu0
        %6513 = vmatpush.msra.mxu0 0.0
        %6514 = vmatpush.msra.mxu0 0.0
        %6515 = vmatpush.msra.mxu0 0.0
        %6516 = vmatpush.msra.mxu0 0.0
        %6517 = vmatpush.msra.mxu0 0.0
        %6518 = vmatpush.msra.mxu0 0.0
        %6519 = vmatpush.msra.mxu0 0.0
        %6520 = vmatpush.msra.mxu0 0.0
        %6521 = vmatpush.msra.mxu0 0.0
        %6522 = vmatpush.msra.mxu0 %v6468
        %6523 = vmatpush.msra.mxu0 %v6452
        %6524 = vmatpush.msra.mxu0 %v6448
        %6525 = vmatpush.msra.mxu0 %v6444
        %6526 = vmatpush.msra.mxu0 %v6440
        %6527 = vmatpush.msra.mxu0 %v6436
        %6528 = vmatpush.msra.mxu0 %v6432
        %6529 = vmatmul.f32.gmra.mxu0 %v6459
        %v6530 = vpop.f32.mrf.mxu0
        %v6531 = vadd.f32 0.0, %v6530
        %6532 = vdwg.mxu0
        %6533 = vmatpush.msra.mxu0 0.0
        %6534 = vmatpush.msra.mxu0 0.0
        %6535 = vmatpush.msra.mxu0 0.0
        %6536 = vmatpush.msra.mxu0 0.0
        %6537 = vmatpush.msra.mxu0 0.0
        %6538 = vmatpush.msra.mxu0 0.0
        %6539 = vmatpush.msra.mxu0 0.0
        %6540 = vmatpush.msra.mxu0 0.0
        %6541 = vmatpush.msra.mxu0 0.0
        %6542 = vmatpush.msra.mxu0 %v6471
        %6543 = vmatpush.msra.mxu0 %v6453
        %6544 = vmatpush.msra.mxu0 %v6449
        %6545 = vmatpush.msra.mxu0 %v6445
        %6546 = vmatpush.msra.mxu0 %v6441
        %6547 = vmatpush.msra.mxu0 %v6437
        %6548 = vmatpush.msra.mxu0 %v6433
        %6549 = vmatmul.f32.gmra.mxu0 %v6459
        %v6550 = vpop.f32.mrf.mxu0
        %v6551 = vadd.f32 0.0, %v6550
        %6552 = vdwg.mxu0
        %v6557 = vrot.slane %v6511, 7
        %v6558 = vrot.slane %v6531, 6
        %v6559 = vrot.slane %v6551, 5
        %v6560 = vsel %vm438, %v6491, %v6557
        %v6561 = vsel %vm6288, %v6558, %v6559
        %v6562 = vsel %vm6187, %v6560, %v6561
        %v6564 = vadd.f32 %v6428, %v6562
        %s6565 = scalar_lea.vmem %s6, 672
        %v6566 = vld [vmem:[%s6565] sm:$0xff]
        %v6567 = vld [vmem:[%s6565 + $0x8] sm:$0xff]
        %v6568 = vld [vmem:[%s6565 + $0x10] sm:$0xff]
        %v6569 = vld [vmem:[%s6565 + $0x18] sm:$0xff]
        %v6570 = vld [vmem:[%s6565 + $0x20] sm:$0xff]
        %v6571 = vld [vmem:[%s6565 + $0x28] sm:$0xff]
        %v6572 = vld [vmem:[%s6565 + $0x30] sm:$0xff]
        %v6573 = vld [vmem:[%s6565 + $0x38] sm:$0xff]
        %v6574 = vld [vmem:[%s6565 + $0x40] sm:$0xff]
        %v6575 = vld [vmem:[%s6565 + $0x48] sm:$0xff]
        %v6576 = vld [vmem:[%s6565 + $0x50] sm:$0xff]
        %v6577 = vld [vmem:[%s6565 + $0x58] sm:$0xff]
        %v6578 = vld [vmem:[%s6565 + $0x60] sm:$0xff]
        %v6579 = vld [vmem:[%s6565 + $0x68] sm:$0xff]
        %v6580 = vld [vmem:[%s6565 + $0x70] sm:$0xff]
        %v6581 = vld [vmem:[%s6565 + $0x78] sm:$0xff]
        %v6582 = vld [vmem:[%s6565 + $0x80] sm:$0xff]
        %v6583 = vld [vmem:[%s6565 + $0x88] sm:$0xff]
        %v6584 = vld [vmem:[%s6565 + $0x90] sm:$0xff]
        %v6585 = vld [vmem:[%s6565 + $0x98] sm:$0xff]
        %v6586 = vld [vmem:[%s6565 + $0xa0] sm:$0xff]
        %v6587 = vld [vmem:[%s6565 + $0xa8] sm:$0xff]
        %v6588 = vld [vmem:[%s6565 + $0xb0] sm:$0xff]
        %v6589 = vld [vmem:[%s6565 + $0xb8] sm:$0xff]
        %v6590 = vld [vmem:[%s6565 + $0xc0] sm:$0x3]
        %v6591 = vld [vmem:[%s6565 + $0xc8] sm:$0x3]
        %v6592 = vld [vmem:[%s6565 + $0xd0] sm:$0x3]
        %v6593 = vld [vmem:[%s6565 + $0xd8] sm:$0x3]
        %v6594 = vrot.slane %v6152, 3
        %v6595 = vsel %vm6183, %v6594, 0
        %v6598 = vsel %vm6187, %v6590, 0
        %v6601 = vsel %vm6187, %v6591, 0
        %v6604 = vsel %vm6187, %v6592, 0
        %v6607 = vsel %vm6187, %v6593, 0
        %6609 = vmatpush.msra.mxu0 0.0
        %6610 = vmatpush.msra.mxu0 0.0
        %6611 = vmatpush.msra.mxu0 0.0
        %6612 = vmatpush.msra.mxu0 0.0
        %6613 = vmatpush.msra.mxu0 0.0
        %6614 = vmatpush.msra.mxu0 0.0
        %6615 = vmatpush.msra.mxu0 0.0
        %6616 = vmatpush.msra.mxu0 0.0
        %6617 = vmatpush.msra.mxu0 0.0
        %6618 = vmatpush.msra.mxu0 %v6598
        %6619 = vmatpush.msra.mxu0 %v6586
        %6620 = vmatpush.msra.mxu0 %v6582
        %6621 = vmatpush.msra.mxu0 %v6578
        %6622 = vmatpush.msra.mxu0 %v6574
        %6623 = vmatpush.msra.mxu0 %v6570
        %6624 = vmatpush.msra.mxu0 %v6566
        %6625 = vmatmul.f32.gmra.mxu0 %v6595
        %v6626 = vpop.f32.mrf.mxu0
        %v6627 = vadd.f32 0.0, %v6626
        %6628 = vdwg.mxu0
        %6629 = vmatpush.msra.mxu0 0.0
        %6630 = vmatpush.msra.mxu0 0.0
        %6631 = vmatpush.msra.mxu0 0.0
        %6632 = vmatpush.msra.mxu0 0.0
        %6633 = vmatpush.msra.mxu0 0.0
        %6634 = vmatpush.msra.mxu0 0.0
        %6635 = vmatpush.msra.mxu0 0.0
        %6636 = vmatpush.msra.mxu0 0.0
        %6637 = vmatpush.msra.mxu0 0.0
        %6638 = vmatpush.msra.mxu0 %v6601
        %6639 = vmatpush.msra.mxu0 %v6587
        %6640 = vmatpush.msra.mxu0 %v6583
        %6641 = vmatpush.msra.mxu0 %v6579
        %6642 = vmatpush.msra.mxu0 %v6575
        %6643 = vmatpush.msra.mxu0 %v6571
        %6644 = vmatpush.msra.mxu0 %v6567
        %6645 = vmatmul.f32.gmra.mxu0 %v6595
        %v6646 = vpop.f32.mrf.mxu0
        %v6647 = vadd.f32 0.0, %v6646
        %6648 = vdwg.mxu0
        %6649 = vmatpush.msra.mxu0 0.0
        %6650 = vmatpush.msra.mxu0 0.0
        %6651 = vmatpush.msra.mxu0 0.0
        %6652 = vmatpush.msra.mxu0 0.0
        %6653 = vmatpush.msra.mxu0 0.0
        %6654 = vmatpush.msra.mxu0 0.0
        %6655 = vmatpush.msra.mxu0 0.0
        %6656 = vmatpush.msra.mxu0 0.0
        %6657 = vmatpush.msra.mxu0 0.0
        %6658 = vmatpush.msra.mxu0 %v6604
        %6659 = vmatpush.msra.mxu0 %v6588
        %6660 = vmatpush.msra.mxu0 %v6584
        %6661 = vmatpush.msra.mxu0 %v6580
        %6662 = vmatpush.msra.mxu0 %v6576
        %6663 = vmatpush.msra.mxu0 %v6572
        %6664 = vmatpush.msra.mxu0 %v6568
        %6665 = vmatmul.f32.gmra.mxu0 %v6595
        %v6666 = vpop.f32.mrf.mxu0
        %v6667 = vadd.f32 0.0, %v6666
        %6668 = vdwg.mxu0
        %6669 = vmatpush.msra.mxu0 0.0
        %6670 = vmatpush.msra.mxu0 0.0
        %6671 = vmatpush.msra.mxu0 0.0
        %6672 = vmatpush.msra.mxu0 0.0
        %6673 = vmatpush.msra.mxu0 0.0
        %6674 = vmatpush.msra.mxu0 0.0
        %6675 = vmatpush.msra.mxu0 0.0
        %6676 = vmatpush.msra.mxu0 0.0
        %6677 = vmatpush.msra.mxu0 0.0
        %6678 = vmatpush.msra.mxu0 %v6607
        %6679 = vmatpush.msra.mxu0 %v6589
        %6680 = vmatpush.msra.mxu0 %v6585
        %6681 = vmatpush.msra.mxu0 %v6581
        %6682 = vmatpush.msra.mxu0 %v6577
        %6683 = vmatpush.msra.mxu0 %v6573
        %6684 = vmatpush.msra.mxu0 %v6569
        %6685 = vmatmul.f32.gmra.mxu0 %v6595
        %v6686 = vpop.f32.mrf.mxu0
        %v6687 = vadd.f32 0.0, %v6686
        %6688 = vdwg.mxu0
        %v6693 = vrot.slane %v6647, 7
        %v6694 = vrot.slane %v6667, 6
        %v6695 = vrot.slane %v6687, 5
        %v6696 = vsel %vm438, %v6627, %v6693
        %v6697 = vsel %vm6288, %v6694, %v6695
        %v6698 = vsel %vm6187, %v6696, %v6697
        %v6700 = vadd.f32 %v6564, %v6698
        %s6701 = scalar_lea.vmem %s6, 896
        %v6702 = vld [vmem:[%s6701] sm:$0xff]
        %v6703 = vld [vmem:[%s6701 + $0x8] sm:$0xff]
        %v6704 = vld [vmem:[%s6701 + $0x10] sm:$0xff]
        %v6705 = vld [vmem:[%s6701 + $0x18] sm:$0xff]
        %v6706 = vld [vmem:[%s6701 + $0x20] sm:$0xff]
        %v6707 = vld [vmem:[%s6701 + $0x28] sm:$0xff]
        %v6708 = vld [vmem:[%s6701 + $0x30] sm:$0xff]
        %v6709 = vld [vmem:[%s6701 + $0x38] sm:$0xff]
        %v6710 = vld [vmem:[%s6701 + $0x40] sm:$0xff]
        %v6711 = vld [vmem:[%s6701 + $0x48] sm:$0xff]
        %v6712 = vld [vmem:[%s6701 + $0x50] sm:$0xff]
        %v6713 = vld [vmem:[%s6701 + $0x58] sm:$0xff]
        %v6714 = vld [vmem:[%s6701 + $0x60] sm:$0xff]
        %v6715 = vld [vmem:[%s6701 + $0x68] sm:$0xff]
        %v6716 = vld [vmem:[%s6701 + $0x70] sm:$0xff]
        %v6717 = vld [vmem:[%s6701 + $0x78] sm:$0xff]
        %v6718 = vld [vmem:[%s6701 + $0x80] sm:$0xff]
        %v6719 = vld [vmem:[%s6701 + $0x88] sm:$0xff]
        %v6720 = vld [vmem:[%s6701 + $0x90] sm:$0xff]
        %v6721 = vld [vmem:[%s6701 + $0x98] sm:$0xff]
        %v6722 = vld [vmem:[%s6701 + $0xa0] sm:$0xff]
        %v6723 = vld [vmem:[%s6701 + $0xa8] sm:$0xff]
        %v6724 = vld [vmem:[%s6701 + $0xb0] sm:$0xff]
        %v6725 = vld [vmem:[%s6701 + $0xb8] sm:$0xff]
        %v6726 = vld [vmem:[%s6701 + $0xc0] sm:$0x3]
        %v6727 = vld [vmem:[%s6701 + $0xc8] sm:$0x3]
        %v6728 = vld [vmem:[%s6701 + $0xd0] sm:$0x3]
        %v6729 = vld [vmem:[%s6701 + $0xd8] sm:$0x3]
        %v6730 = vrot.slane %v6152, 4
        %v6731 = vsel %vm6183, %v6730, 0
        %v6734 = vsel %vm6187, %v6726, 0
        %v6737 = vsel %vm6187, %v6727, 0
        %v6740 = vsel %vm6187, %v6728, 0
        %v6743 = vsel %vm6187, %v6729, 0
        %6745 = vmatpush.msra.mxu0 0.0
        %6746 = vmatpush.msra.mxu0 0.0
        %6747 = vmatpush.msra.mxu0 0.0
        %6748 = vmatpush.msra.mxu0 0.0
        %6749 = vmatpush.msra.mxu0 0.0
        %6750 = vmatpush.msra.mxu0 0.0
        %6751 = vmatpush.msra.mxu0 0.0
        %6752 = vmatpush.msra.mxu0 0.0
        %6753 = vmatpush.msra.mxu0 0.0
        %6754 = vmatpush.msra.mxu0 %v6734
        %6755 = vmatpush.msra.mxu0 %v6722
        %6756 = vmatpush.msra.mxu0 %v6718
        %6757 = vmatpush.msra.mxu0 %v6714
        %6758 = vmatpush.msra.mxu0 %v6710
        %6759 = vmatpush.msra.mxu0 %v6706
        %6760 = vmatpush.msra.mxu0 %v6702
        %6761 = vmatmul.f32.gmra.mxu0 %v6731
        %v6762 = vpop.f32.mrf.mxu0
        %v6763 = vadd.f32 0.0, %v6762
        %6764 = vdwg.mxu0
        %6765 = vmatpush.msra.mxu0 0.0
        %6766 = vmatpush.msra.mxu0 0.0
        %6767 = vmatpush.msra.mxu0 0.0
        %6768 = vmatpush.msra.mxu0 0.0
        %6769 = vmatpush.msra.mxu0 0.0
        %6770 = vmatpush.msra.mxu0 0.0
        %6771 = vmatpush.msra.mxu0 0.0
        %6772 = vmatpush.msra.mxu0 0.0
        %6773 = vmatpush.msra.mxu0 0.0
        %6774 = vmatpush.msra.mxu0 %v6737
        %6775 = vmatpush.msra.mxu0 %v6723
        %6776 = vmatpush.msra.mxu0 %v6719
        %6777 = vmatpush.msra.mxu0 %v6715
        %6778 = vmatpush.msra.mxu0 %v6711
        %6779 = vmatpush.msra.mxu0 %v6707
        %6780 = vmatpush.msra.mxu0 %v6703
        %6781 = vmatmul.f32.gmra.mxu0 %v6731
        %v6782 = vpop.f32.mrf.mxu0
        %v6783 = vadd.f32 0.0, %v6782
        %6784 = vdwg.mxu0
        %6785 = vmatpush.msra.mxu0 0.0
        %6786 = vmatpush.msra.mxu0 0.0
        %6787 = vmatpush.msra.mxu0 0.0
        %6788 = vmatpush.msra.mxu0 0.0
        %6789 = vmatpush.msra.mxu0 0.0
        %6790 = vmatpush.msra.mxu0 0.0
        %6791 = vmatpush.msra.mxu0 0.0
        %6792 = vmatpush.msra.mxu0 0.0
        %6793 = vmatpush.msra.mxu0 0.0
        %6794 = vmatpush.msra.mxu0 %v6740
        %6795 = vmatpush.msra.mxu0 %v6724
        %6796 = vmatpush.msra.mxu0 %v6720
        %6797 = vmatpush.msra.mxu0 %v6716
        %6798 = vmatpush.msra.mxu0 %v6712
        %6799 = vmatpush.msra.mxu0 %v6708
        %6800 = vmatpush.msra.mxu0 %v6704
        %6801 = vmatmul.f32.gmra.mxu0 %v6731
        %v6802 = vpop.f32.mrf.mxu0
        %v6803 = vadd.f32 0.0, %v6802
        %6804 = vdwg.mxu0
        %6805 = vmatpush.msra.mxu0 0.0
        %6806 = vmatpush.msra.mxu0 0.0
        %6807 = vmatpush.msra.mxu0 0.0
        %6808 = vmatpush.msra.mxu0 0.0
        %6809 = vmatpush.msra.mxu0 0.0
        %6810 = vmatpush.msra.mxu0 0.0
        %6811 = vmatpush.msra.mxu0 0.0
        %6812 = vmatpush.msra.mxu0 0.0
        %6813 = vmatpush.msra.mxu0 0.0
        %6814 = vmatpush.msra.mxu0 %v6743
        %6815 = vmatpush.msra.mxu0 %v6725
        %6816 = vmatpush.msra.mxu0 %v6721
        %6817 = vmatpush.msra.mxu0 %v6717
        %6818 = vmatpush.msra.mxu0 %v6713
        %6819 = vmatpush.msra.mxu0 %v6709
        %6820 = vmatpush.msra.mxu0 %v6705
        %6821 = vmatmul.f32.gmra.mxu0 %v6731
        %v6822 = vpop.f32.mrf.mxu0
        %v6823 = vadd.f32 0.0, %v6822
        %6824 = vdwg.mxu0
        %v6829 = vrot.slane %v6783, 7
        %v6830 = vrot.slane %v6803, 6
        %v6831 = vrot.slane %v6823, 5
        %v6832 = vsel %vm438, %v6763, %v6829
        %v6833 = vsel %vm6288, %v6830, %v6831
        %v6834 = vsel %vm6187, %v6832, %v6833
        %v6836 = vadd.f32 %v6700, %v6834
        %s6837 = scalar_lea.vmem %s6, 1120
        %v6838 = vld [vmem:[%s6837] sm:$0xff]
        %v6839 = vld [vmem:[%s6837 + $0x8] sm:$0xff]
        %v6840 = vld [vmem:[%s6837 + $0x10] sm:$0xff]
        %v6841 = vld [vmem:[%s6837 + $0x18] sm:$0xff]
        %v6842 = vld [vmem:[%s6837 + $0x20] sm:$0xff]
        %v6843 = vld [vmem:[%s6837 + $0x28] sm:$0xff]
        %v6844 = vld [vmem:[%s6837 + $0x30] sm:$0xff]
        %v6845 = vld [vmem:[%s6837 + $0x38] sm:$0xff]
        %v6846 = vld [vmem:[%s6837 + $0x40] sm:$0xff]
        %v6847 = vld [vmem:[%s6837 + $0x48] sm:$0xff]
        %v6848 = vld [vmem:[%s6837 + $0x50] sm:$0xff]
        %v6849 = vld [vmem:[%s6837 + $0x58] sm:$0xff]
        %v6850 = vld [vmem:[%s6837 + $0x60] sm:$0xff]
        %v6851 = vld [vmem:[%s6837 + $0x68] sm:$0xff]
        %v6852 = vld [vmem:[%s6837 + $0x70] sm:$0xff]
        %v6853 = vld [vmem:[%s6837 + $0x78] sm:$0xff]
        %v6854 = vld [vmem:[%s6837 + $0x80] sm:$0xff]
        %v6855 = vld [vmem:[%s6837 + $0x88] sm:$0xff]
        %v6856 = vld [vmem:[%s6837 + $0x90] sm:$0xff]
        %v6857 = vld [vmem:[%s6837 + $0x98] sm:$0xff]
        %v6858 = vld [vmem:[%s6837 + $0xa0] sm:$0xff]
        %v6859 = vld [vmem:[%s6837 + $0xa8] sm:$0xff]
        %v6860 = vld [vmem:[%s6837 + $0xb0] sm:$0xff]
        %v6861 = vld [vmem:[%s6837 + $0xb8] sm:$0xff]
        %v6862 = vld [vmem:[%s6837 + $0xc0] sm:$0x3]
        %v6863 = vld [vmem:[%s6837 + $0xc8] sm:$0x3]
        %v6864 = vld [vmem:[%s6837 + $0xd0] sm:$0x3]
        %v6865 = vld [vmem:[%s6837 + $0xd8] sm:$0x3]
        %v6866 = vrot.slane %v6152, 5
        %v6867 = vsel %vm6183, %v6866, 0
        %v6870 = vsel %vm6187, %v6862, 0
        %v6873 = vsel %vm6187, %v6863, 0
        %v6876 = vsel %vm6187, %v6864, 0
        %v6879 = vsel %vm6187, %v6865, 0
        %6881 = vmatpush.msra.mxu0 0.0
        %6882 = vmatpush.msra.mxu0 0.0
        %6883 = vmatpush.msra.mxu0 0.0
        %6884 = vmatpush.msra.mxu0 0.0
        %6885 = vmatpush.msra.mxu0 0.0
        %6886 = vmatpush.msra.mxu0 0.0
        %6887 = vmatpush.msra.mxu0 0.0
        %6888 = vmatpush.msra.mxu0 0.0
        %6889 = vmatpush.msra.mxu0 0.0
        %6890 = vmatpush.msra.mxu0 %v6870
        %6891 = vmatpush.msra.mxu0 %v6858
        %6892 = vmatpush.msra.mxu0 %v6854
        %6893 = vmatpush.msra.mxu0 %v6850
        %6894 = vmatpush.msra.mxu0 %v6846
        %6895 = vmatpush.msra.mxu0 %v6842
        %6896 = vmatpush.msra.mxu0 %v6838
        %6897 = vmatmul.f32.gmra.mxu0 %v6867
        %v6898 = vpop.f32.mrf.mxu0
        %v6899 = vadd.f32 0.0, %v6898
        %6900 = vdwg.mxu0
        %6901 = vmatpush.msra.mxu0 0.0
        %6902 = vmatpush.msra.mxu0 0.0
        %6903 = vmatpush.msra.mxu0 0.0
        %6904 = vmatpush.msra.mxu0 0.0
        %6905 = vmatpush.msra.mxu0 0.0
        %6906 = vmatpush.msra.mxu0 0.0
        %6907 = vmatpush.msra.mxu0 0.0
        %6908 = vmatpush.msra.mxu0 0.0
        %6909 = vmatpush.msra.mxu0 0.0
        %6910 = vmatpush.msra.mxu0 %v6873
        %6911 = vmatpush.msra.mxu0 %v6859
        %6912 = vmatpush.msra.mxu0 %v6855
        %6913 = vmatpush.msra.mxu0 %v6851
        %6914 = vmatpush.msra.mxu0 %v6847
        %6915 = vmatpush.msra.mxu0 %v6843
        %6916 = vmatpush.msra.mxu0 %v6839
        %6917 = vmatmul.f32.gmra.mxu0 %v6867
        %v6918 = vpop.f32.mrf.mxu0
        %v6919 = vadd.f32 0.0, %v6918
        %6920 = vdwg.mxu0
        %6921 = vmatpush.msra.mxu0 0.0
        %6922 = vmatpush.msra.mxu0 0.0
        %6923 = vmatpush.msra.mxu0 0.0
        %6924 = vmatpush.msra.mxu0 0.0
        %6925 = vmatpush.msra.mxu0 0.0
        %6926 = vmatpush.msra.mxu0 0.0
        %6927 = vmatpush.msra.mxu0 0.0
        %6928 = vmatpush.msra.mxu0 0.0
        %6929 = vmatpush.msra.mxu0 0.0
        %6930 = vmatpush.msra.mxu0 %v6876
        %6931 = vmatpush.msra.mxu0 %v6860
        %6932 = vmatpush.msra.mxu0 %v6856
        %6933 = vmatpush.msra.mxu0 %v6852
        %6934 = vmatpush.msra.mxu0 %v6848
        %6935 = vmatpush.msra.mxu0 %v6844
        %6936 = vmatpush.msra.mxu0 %v6840
        %6937 = vmatmul.f32.gmra.mxu0 %v6867
        %v6938 = vpop.f32.mrf.mxu0
        %v6939 = vadd.f32 0.0, %v6938
        %6940 = vdwg.mxu0
        %6941 = vmatpush.msra.mxu0 0.0
        %6942 = vmatpush.msra.mxu0 0.0
        %6943 = vmatpush.msra.mxu0 0.0
        %6944 = vmatpush.msra.mxu0 0.0
        %6945 = vmatpush.msra.mxu0 0.0
        %6946 = vmatpush.msra.mxu0 0.0
        %6947 = vmatpush.msra.mxu0 0.0
        %6948 = vmatpush.msra.mxu0 0.0
        %6949 = vmatpush.msra.mxu0 0.0
        %6950 = vmatpush.msra.mxu0 %v6879
        %6951 = vmatpush.msra.mxu0 %v6861
        %6952 = vmatpush.msra.mxu0 %v6857
        %6953 = vmatpush.msra.mxu0 %v6853
        %6954 = vmatpush.msra.mxu0 %v6849
        %6955 = vmatpush.msra.mxu0 %v6845
        %6956 = vmatpush.msra.mxu0 %v6841
        %6957 = vmatmul.f32.gmra.mxu0 %v6867
        %v6958 = vpop.f32.mrf.mxu0
        %v6959 = vadd.f32 0.0, %v6958
        %6960 = vdwg.mxu0
        %v6965 = vrot.slane %v6919, 7
        %v6966 = vrot.slane %v6939, 6
        %v6967 = vrot.slane %v6959, 5
        %v6968 = vsel %vm438, %v6899, %v6965
        %v6969 = vsel %vm6288, %v6966, %v6967
        %v6970 = vsel %vm6187, %v6968, %v6969
        %v6972 = vadd.f32 %v6836, %v6970
        %s6973 = scalar_lea.vmem %s6, 1344
        %v6974 = vld [vmem:[%s6973] sm:$0xff]
        %v6975 = vld [vmem:[%s6973 + $0x8] sm:$0xff]
        %v6976 = vld [vmem:[%s6973 + $0x10] sm:$0xff]
        %v6977 = vld [vmem:[%s6973 + $0x18] sm:$0xff]
        %v6978 = vld [vmem:[%s6973 + $0x20] sm:$0xff]
        %v6979 = vld [vmem:[%s6973 + $0x28] sm:$0xff]
        %v6980 = vld [vmem:[%s6973 + $0x30] sm:$0xff]
        %v6981 = vld [vmem:[%s6973 + $0x38] sm:$0xff]
        %v6982 = vld [vmem:[%s6973 + $0x40] sm:$0xff]
        %v6983 = vld [vmem:[%s6973 + $0x48] sm:$0xff]
        %v6984 = vld [vmem:[%s6973 + $0x50] sm:$0xff]
        %v6985 = vld [vmem:[%s6973 + $0x58] sm:$0xff]
        %v6986 = vld [vmem:[%s6973 + $0x60] sm:$0xff]
        %v6987 = vld [vmem:[%s6973 + $0x68] sm:$0xff]
        %v6988 = vld [vmem:[%s6973 + $0x70] sm:$0xff]
        %v6989 = vld [vmem:[%s6973 + $0x78] sm:$0xff]
        %v6990 = vld [vmem:[%s6973 + $0x80] sm:$0xff]
        %v6991 = vld [vmem:[%s6973 + $0x88] sm:$0xff]
        %v6992 = vld [vmem:[%s6973 + $0x90] sm:$0xff]
        %v6993 = vld [vmem:[%s6973 + $0x98] sm:$0xff]
        %v6994 = vld [vmem:[%s6973 + $0xa0] sm:$0xff]
        %v6995 = vld [vmem:[%s6973 + $0xa8] sm:$0xff]
        %v6996 = vld [vmem:[%s6973 + $0xb0] sm:$0xff]
        %v6997 = vld [vmem:[%s6973 + $0xb8] sm:$0xff]
        %v6998 = vld [vmem:[%s6973 + $0xc0] sm:$0x3]
        %v6999 = vld [vmem:[%s6973 + $0xc8] sm:$0x3]
        %v7000 = vld [vmem:[%s6973 + $0xd0] sm:$0x3]
        %v7001 = vld [vmem:[%s6973 + $0xd8] sm:$0x3]
        %v7002 = vrot.slane %v6152, 6
        %v7003 = vsel %vm6183, %v7002, 0
        %v7006 = vsel %vm6187, %v6998, 0
        %v7009 = vsel %vm6187, %v6999, 0
        %v7012 = vsel %vm6187, %v7000, 0
        %v7015 = vsel %vm6187, %v7001, 0
        %7017 = vmatpush.msra.mxu0 0.0
        %7018 = vmatpush.msra.mxu0 0.0
        %7019 = vmatpush.msra.mxu0 0.0
        %7020 = vmatpush.msra.mxu0 0.0
        %7021 = vmatpush.msra.mxu0 0.0
        %7022 = vmatpush.msra.mxu0 0.0
        %7023 = vmatpush.msra.mxu0 0.0
        %7024 = vmatpush.msra.mxu0 0.0
        %7025 = vmatpush.msra.mxu0 0.0
        %7026 = vmatpush.msra.mxu0 %v7006
        %7027 = vmatpush.msra.mxu0 %v6994
        %7028 = vmatpush.msra.mxu0 %v6990
        %7029 = vmatpush.msra.mxu0 %v6986
        %7030 = vmatpush.msra.mxu0 %v6982
        %7031 = vmatpush.msra.mxu0 %v6978
        %7032 = vmatpush.msra.mxu0 %v6974
        %7033 = vmatmul.f32.gmra.mxu0 %v7003
        %v7034 = vpop.f32.mrf.mxu0
        %v7035 = vadd.f32 0.0, %v7034
        %7036 = vdwg.mxu0
        %7037 = vmatpush.msra.mxu0 0.0
        %7038 = vmatpush.msra.mxu0 0.0
        %7039 = vmatpush.msra.mxu0 0.0
        %7040 = vmatpush.msra.mxu0 0.0
        %7041 = vmatpush.msra.mxu0 0.0
        %7042 = vmatpush.msra.mxu0 0.0
        %7043 = vmatpush.msra.mxu0 0.0
        %7044 = vmatpush.msra.mxu0 0.0
        %7045 = vmatpush.msra.mxu0 0.0
        %7046 = vmatpush.msra.mxu0 %v7009
        %7047 = vmatpush.msra.mxu0 %v6995
        %7048 = vmatpush.msra.mxu0 %v6991
        %7049 = vmatpush.msra.mxu0 %v6987
        %7050 = vmatpush.msra.mxu0 %v6983
        %7051 = vmatpush.msra.mxu0 %v6979
        %7052 = vmatpush.msra.mxu0 %v6975
        %7053 = vmatmul.f32.gmra.mxu0 %v7003
        %v7054 = vpop.f32.mrf.mxu0
        %v7055 = vadd.f32 0.0, %v7054
        %7056 = vdwg.mxu0
        %7057 = vmatpush.msra.mxu0 0.0
        %7058 = vmatpush.msra.mxu0 0.0
        %7059 = vmatpush.msra.mxu0 0.0
        %7060 = vmatpush.msra.mxu0 0.0
        %7061 = vmatpush.msra.mxu0 0.0
        %7062 = vmatpush.msra.mxu0 0.0
        %7063 = vmatpush.msra.mxu0 0.0
        %7064 = vmatpush.msra.mxu0 0.0
        %7065 = vmatpush.msra.mxu0 0.0
        %7066 = vmatpush.msra.mxu0 %v7012
        %7067 = vmatpush.msra.mxu0 %v6996
        %7068 = vmatpush.msra.mxu0 %v6992
        %7069 = vmatpush.msra.mxu0 %v6988
        %7070 = vmatpush.msra.mxu0 %v6984
        %7071 = vmatpush.msra.mxu0 %v6980
        %7072 = vmatpush.msra.mxu0 %v6976
        %7073 = vmatmul.f32.gmra.mxu0 %v7003
        %v7074 = vpop.f32.mrf.mxu0
        %v7075 = vadd.f32 0.0, %v7074
        %7076 = vdwg.mxu0
        %7077 = vmatpush.msra.mxu0 0.0
        %7078 = vmatpush.msra.mxu0 0.0
        %7079 = vmatpush.msra.mxu0 0.0
        %7080 = vmatpush.msra.mxu0 0.0
        %7081 = vmatpush.msra.mxu0 0.0
        %7082 = vmatpush.msra.mxu0 0.0
        %7083 = vmatpush.msra.mxu0 0.0
        %7084 = vmatpush.msra.mxu0 0.0
        %7085 = vmatpush.msra.mxu0 0.0
        %7086 = vmatpush.msra.mxu0 %v7015
        %7087 = vmatpush.msra.mxu0 %v6997
        %7088 = vmatpush.msra.mxu0 %v6993
        %7089 = vmatpush.msra.mxu0 %v6989
        %7090 = vmatpush.msra.mxu0 %v6985
        %7091 = vmatpush.msra.mxu0 %v6981
        %7092 = vmatpush.msra.mxu0 %v6977
        %7093 = vmatmul.f32.gmra.mxu0 %v7003
        %v7094 = vpop.f32.mrf.mxu0
        %v7095 = vadd.f32 0.0, %v7094
        %7096 = vdwg.mxu0
        %v7101 = vrot.slane %v7055, 7
        %v7102 = vrot.slane %v7075, 6
        %v7103 = vrot.slane %v7095, 5
        %v7104 = vsel %vm438, %v7035, %v7101
        %v7105 = vsel %vm6288, %v7102, %v7103
        %v7106 = vsel %vm6187, %v7104, %v7105
        %v7108 = vadd.f32 %v6972, %v7106
        %s7109 = scalar_lea.vmem %s6, 1568
        %v7110 = vld [vmem:[%s7109] sm:$0xff]
        %v7111 = vld [vmem:[%s7109 + $0x8] sm:$0xff]
        %v7112 = vld [vmem:[%s7109 + $0x10] sm:$0xff]
        %v7113 = vld [vmem:[%s7109 + $0x18] sm:$0xff]
        %v7114 = vld [vmem:[%s7109 + $0x20] sm:$0xff]
        %v7115 = vld [vmem:[%s7109 + $0x28] sm:$0xff]
        %v7116 = vld [vmem:[%s7109 + $0x30] sm:$0xff]
        %v7117 = vld [vmem:[%s7109 + $0x38] sm:$0xff]
        %v7118 = vld [vmem:[%s7109 + $0x40] sm:$0xff]
        %v7119 = vld [vmem:[%s7109 + $0x48] sm:$0xff]
        %v7120 = vld [vmem:[%s7109 + $0x50] sm:$0xff]
        %v7121 = vld [vmem:[%s7109 + $0x58] sm:$0xff]
        %v7122 = vld [vmem:[%s7109 + $0x60] sm:$0xff]
        %v7123 = vld [vmem:[%s7109 + $0x68] sm:$0xff]
        %v7124 = vld [vmem:[%s7109 + $0x70] sm:$0xff]
        %v7125 = vld [vmem:[%s7109 + $0x78] sm:$0xff]
        %v7126 = vld [vmem:[%s7109 + $0x80] sm:$0xff]
        %v7127 = vld [vmem:[%s7109 + $0x88] sm:$0xff]
        %v7128 = vld [vmem:[%s7109 + $0x90] sm:$0xff]
        %v7129 = vld [vmem:[%s7109 + $0x98] sm:$0xff]
        %v7130 = vld [vmem:[%s7109 + $0xa0] sm:$0xff]
        %v7131 = vld [vmem:[%s7109 + $0xa8] sm:$0xff]
        %v7132 = vld [vmem:[%s7109 + $0xb0] sm:$0xff]
        %v7133 = vld [vmem:[%s7109 + $0xb8] sm:$0xff]
        %v7134 = vld [vmem:[%s7109 + $0xc0] sm:$0x3]
        %v7135 = vld [vmem:[%s7109 + $0xc8] sm:$0x3]
        %v7136 = vld [vmem:[%s7109 + $0xd0] sm:$0x3]
        %v7137 = vld [vmem:[%s7109 + $0xd8] sm:$0x3]
        %v7138 = vrot.slane %v6152, 7
        %v7139 = vsel %vm6183, %v7138, 0
        %v7142 = vsel %vm6187, %v7134, 0
        %v7145 = vsel %vm6187, %v7135, 0
        %v7148 = vsel %vm6187, %v7136, 0
        %v7151 = vsel %vm6187, %v7137, 0
        %7153 = vmatpush.msra.mxu0 0.0
        %7154 = vmatpush.msra.mxu0 0.0
        %7155 = vmatpush.msra.mxu0 0.0
        %7156 = vmatpush.msra.mxu0 0.0
        %7157 = vmatpush.msra.mxu0 0.0
        %7158 = vmatpush.msra.mxu0 0.0
        %7159 = vmatpush.msra.mxu0 0.0
        %7160 = vmatpush.msra.mxu0 0.0
        %7161 = vmatpush.msra.mxu0 0.0
        %7162 = vmatpush.msra.mxu0 %v7142
        %7163 = vmatpush.msra.mxu0 %v7130
        %7164 = vmatpush.msra.mxu0 %v7126
        %7165 = vmatpush.msra.mxu0 %v7122
        %7166 = vmatpush.msra.mxu0 %v7118
        %7167 = vmatpush.msra.mxu0 %v7114
        %7168 = vmatpush.msra.mxu0 %v7110
        %7169 = vmatmul.f32.gmra.mxu0 %v7139
        %v7170 = vpop.f32.mrf.mxu0
        %v7171 = vadd.f32 0.0, %v7170
        %7172 = vdwg.mxu0
        %7173 = vmatpush.msra.mxu0 0.0
        %7174 = vmatpush.msra.mxu0 0.0
        %7175 = vmatpush.msra.mxu0 0.0
        %7176 = vmatpush.msra.mxu0 0.0
        %7177 = vmatpush.msra.mxu0 0.0
        %7178 = vmatpush.msra.mxu0 0.0
        %7179 = vmatpush.msra.mxu0 0.0
        %7180 = vmatpush.msra.mxu0 0.0
        %7181 = vmatpush.msra.mxu0 0.0
        %7182 = vmatpush.msra.mxu0 %v7145
        %7183 = vmatpush.msra.mxu0 %v7131
        %7184 = vmatpush.msra.mxu0 %v7127
        %7185 = vmatpush.msra.mxu0 %v7123
        %7186 = vmatpush.msra.mxu0 %v7119
        %7187 = vmatpush.msra.mxu0 %v7115
        %7188 = vmatpush.msra.mxu0 %v7111
        %7189 = vmatmul.f32.gmra.mxu0 %v7139
        %v7190 = vpop.f32.mrf.mxu0
        %v7191 = vadd.f32 0.0, %v7190
        %7192 = vdwg.mxu0
        %7193 = vmatpush.msra.mxu0 0.0
        %7194 = vmatpush.msra.mxu0 0.0
        %7195 = vmatpush.msra.mxu0 0.0
        %7196 = vmatpush.msra.mxu0 0.0
        %7197 = vmatpush.msra.mxu0 0.0
        %7198 = vmatpush.msra.mxu0 0.0
        %7199 = vmatpush.msra.mxu0 0.0
        %7200 = vmatpush.msra.mxu0 0.0
        %7201 = vmatpush.msra.mxu0 0.0
        %7202 = vmatpush.msra.mxu0 %v7148
        %7203 = vmatpush.msra.mxu0 %v7132
        %7204 = vmatpush.msra.mxu0 %v7128
        %7205 = vmatpush.msra.mxu0 %v7124
        %7206 = vmatpush.msra.mxu0 %v7120
        %7207 = vmatpush.msra.mxu0 %v7116
        %7208 = vmatpush.msra.mxu0 %v7112
        %7209 = vmatmul.f32.gmra.mxu0 %v7139
        %v7210 = vpop.f32.mrf.mxu0
        %v7211 = vadd.f32 0.0, %v7210
        %7212 = vdwg.mxu0
        %7213 = vmatpush.msra.mxu0 0.0
        %7214 = vmatpush.msra.mxu0 0.0
        %7215 = vmatpush.msra.mxu0 0.0
        %7216 = vmatpush.msra.mxu0 0.0
        %7217 = vmatpush.msra.mxu0 0.0
        %7218 = vmatpush.msra.mxu0 0.0
        %7219 = vmatpush.msra.mxu0 0.0
        %7220 = vmatpush.msra.mxu0 0.0
        %7221 = vmatpush.msra.mxu0 0.0
        %7222 = vmatpush.msra.mxu0 %v7151
        %7223 = vmatpush.msra.mxu0 %v7133
        %7224 = vmatpush.msra.mxu0 %v7129
        %7225 = vmatpush.msra.mxu0 %v7125
        %7226 = vmatpush.msra.mxu0 %v7121
        %7227 = vmatpush.msra.mxu0 %v7117
        %7228 = vmatpush.msra.mxu0 %v7113
        %7229 = vmatmul.f32.gmra.mxu0 %v7139
        %v7230 = vpop.f32.mrf.mxu0
        %v7231 = vadd.f32 0.0, %v7230
        %7232 = vdwg.mxu0
        %v7237 = vrot.slane %v7191, 7
        %v7238 = vrot.slane %v7211, 6
        %v7239 = vrot.slane %v7231, 5
        %v7240 = vsel %vm438, %v7171, %v7237
        %v7241 = vsel %vm6288, %v7238, %v7239
        %v7242 = vsel %vm6187, %v7240, %v7241
        %v7244 = vadd.f32 %v7108, %v7242
        %s7245 = scalar_lea.vmem %s6, 1792
        %v7246 = vld [vmem:[%s7245] sm:$0xff]
        %v7247 = vld [vmem:[%s7245 + $0x8] sm:$0xff]
        %v7248 = vld [vmem:[%s7245 + $0x10] sm:$0xff]
        %v7249 = vld [vmem:[%s7245 + $0x18] sm:$0xff]
        %v7250 = vld [vmem:[%s7245 + $0x20] sm:$0xff]
        %v7251 = vld [vmem:[%s7245 + $0x28] sm:$0xff]
        %v7252 = vld [vmem:[%s7245 + $0x30] sm:$0xff]
        %v7253 = vld [vmem:[%s7245 + $0x38] sm:$0xff]
        %v7254 = vld [vmem:[%s7245 + $0x40] sm:$0xff]
        %v7255 = vld [vmem:[%s7245 + $0x48] sm:$0xff]
        %v7256 = vld [vmem:[%s7245 + $0x50] sm:$0xff]
        %v7257 = vld [vmem:[%s7245 + $0x58] sm:$0xff]
        %v7258 = vld [vmem:[%s7245 + $0x60] sm:$0xff]
        %v7259 = vld [vmem:[%s7245 + $0x68] sm:$0xff]
        %v7260 = vld [vmem:[%s7245 + $0x70] sm:$0xff]
        %v7261 = vld [vmem:[%s7245 + $0x78] sm:$0xff]
        %v7262 = vld [vmem:[%s7245 + $0x80] sm:$0xff]
        %v7263 = vld [vmem:[%s7245 + $0x88] sm:$0xff]
        %v7264 = vld [vmem:[%s7245 + $0x90] sm:$0xff]
        %v7265 = vld [vmem:[%s7245 + $0x98] sm:$0xff]
        %v7266 = vld [vmem:[%s7245 + $0xa0] sm:$0xff]
        %v7267 = vld [vmem:[%s7245 + $0xa8] sm:$0xff]
        %v7268 = vld [vmem:[%s7245 + $0xb0] sm:$0xff]
        %v7269 = vld [vmem:[%s7245 + $0xb8] sm:$0xff]
        %v7270 = vld [vmem:[%s7245 + $0xc0] sm:$0x3]
        %v7271 = vld [vmem:[%s7245 + $0xc8] sm:$0x3]
        %v7272 = vld [vmem:[%s7245 + $0xd0] sm:$0x3]
        %v7273 = vld [vmem:[%s7245 + $0xd8] sm:$0x3]
        %v7275 = vsel %vm6183, %v6153, 0
        %v7278 = vsel %vm6187, %v7270, 0
        %v7281 = vsel %vm6187, %v7271, 0
        %v7284 = vsel %vm6187, %v7272, 0
        %v7287 = vsel %vm6187, %v7273, 0
        %7289 = vmatpush.msra.mxu0 0.0
        %7290 = vmatpush.msra.mxu0 0.0
        %7291 = vmatpush.msra.mxu0 0.0
        %7292 = vmatpush.msra.mxu0 0.0
        %7293 = vmatpush.msra.mxu0 0.0
        %7294 = vmatpush.msra.mxu0 0.0
        %7295 = vmatpush.msra.mxu0 0.0
        %7296 = vmatpush.msra.mxu0 0.0
        %7297 = vmatpush.msra.mxu0 0.0
        %7298 = vmatpush.msra.mxu0 %v7278
        %7299 = vmatpush.msra.mxu0 %v7266
        %7300 = vmatpush.msra.mxu0 %v7262
        %7301 = vmatpush.msra.mxu0 %v7258
        %7302 = vmatpush.msra.mxu0 %v7254
        %7303 = vmatpush.msra.mxu0 %v7250
        %7304 = vmatpush.msra.mxu0 %v7246
        %7305 = vmatmul.f32.gmra.mxu0 %v7275
        %v7306 = vpop.f32.mrf.mxu0
        %v7307 = vadd.f32 0.0, %v7306
        %7308 = vdwg.mxu0
        %7309 = vmatpush.msra.mxu0 0.0
        %7310 = vmatpush.msra.mxu0 0.0
        %7311 = vmatpush.msra.mxu0 0.0
        %7312 = vmatpush.msra.mxu0 0.0
        %7313 = vmatpush.msra.mxu0 0.0
        %7314 = vmatpush.msra.mxu0 0.0
        %7315 = vmatpush.msra.mxu0 0.0
        %7316 = vmatpush.msra.mxu0 0.0
        %7317 = vmatpush.msra.mxu0 0.0
        %7318 = vmatpush.msra.mxu0 %v7281
        %7319 = vmatpush.msra.mxu0 %v7267
        %7320 = vmatpush.msra.mxu0 %v7263
        %7321 = vmatpush.msra.mxu0 %v7259
        %7322 = vmatpush.msra.mxu0 %v7255
        %7323 = vmatpush.msra.mxu0 %v7251
        %7324 = vmatpush.msra.mxu0 %v7247
        %7325 = vmatmul.f32.gmra.mxu0 %v7275
        %v7326 = vpop.f32.mrf.mxu0
        %v7327 = vadd.f32 0.0, %v7326
        %7328 = vdwg.mxu0
        %7329 = vmatpush.msra.mxu0 0.0
        %7330 = vmatpush.msra.mxu0 0.0
        %7331 = vmatpush.msra.mxu0 0.0
        %7332 = vmatpush.msra.mxu0 0.0
        %7333 = vmatpush.msra.mxu0 0.0
        %7334 = vmatpush.msra.mxu0 0.0
        %7335 = vmatpush.msra.mxu0 0.0
        %7336 = vmatpush.msra.mxu0 0.0
        %7337 = vmatpush.msra.mxu0 0.0
        %7338 = vmatpush.msra.mxu0 %v7284
        %7339 = vmatpush.msra.mxu0 %v7268
        %7340 = vmatpush.msra.mxu0 %v7264
        %7341 = vmatpush.msra.mxu0 %v7260
        %7342 = vmatpush.msra.mxu0 %v7256
        %7343 = vmatpush.msra.mxu0 %v7252
        %7344 = vmatpush.msra.mxu0 %v7248
        %7345 = vmatmul.f32.gmra.mxu0 %v7275
        %v7346 = vpop.f32.mrf.mxu0
        %v7347 = vadd.f32 0.0, %v7346
        %7348 = vdwg.mxu0
        %7349 = vmatpush.msra.mxu0 0.0
        %7350 = vmatpush.msra.mxu0 0.0
        %7351 = vmatpush.msra.mxu0 0.0
        %7352 = vmatpush.msra.mxu0 0.0
        %7353 = vmatpush.msra.mxu0 0.0
        %7354 = vmatpush.msra.mxu0 0.0
        %7355 = vmatpush.msra.mxu0 0.0
        %7356 = vmatpush.msra.mxu0 0.0
        %7357 = vmatpush.msra.mxu0 0.0
        %7358 = vmatpush.msra.mxu0 %v7287
        %7359 = vmatpush.msra.mxu0 %v7269
        %7360 = vmatpush.msra.mxu0 %v7265
        %7361 = vmatpush.msra.mxu0 %v7261
        %7362 = vmatpush.msra.mxu0 %v7257
        %7363 = vmatpush.msra.mxu0 %v7253
        %7364 = vmatpush.msra.mxu0 %v7249
        %7365 = vmatmul.f32.gmra.mxu0 %v7275
        %v7366 = vpop.f32.mrf.mxu0
        %v7367 = vadd.f32 0.0, %v7366
        %7368 = vdwg.mxu0
        %v7373 = vrot.slane %v7327, 7
        %v7374 = vrot.slane %v7347, 6
        %v7375 = vrot.slane %v7367, 5
        %v7376 = vsel %vm438, %v7307, %v7373
        %v7377 = vsel %vm6288, %v7374, %v7375
        %v7378 = vsel %vm6187, %v7376, %v7377
        %v7380 = vadd.f32 %v7244, %v7378
        %s7381 = scalar_lea.vmem %s6, 2016
        %v7382 = vld [vmem:[%s7381] sm:$0xff]
        %v7383 = vld [vmem:[%s7381 + $0x8] sm:$0xff]
        %v7384 = vld [vmem:[%s7381 + $0x10] sm:$0xff]
        %v7385 = vld [vmem:[%s7381 + $0x18] sm:$0xff]
        %v7386 = vld [vmem:[%s7381 + $0x20] sm:$0xff]
        %v7387 = vld [vmem:[%s7381 + $0x28] sm:$0xff]
        %v7388 = vld [vmem:[%s7381 + $0x30] sm:$0xff]
        %v7389 = vld [vmem:[%s7381 + $0x38] sm:$0xff]
        %v7390 = vld [vmem:[%s7381 + $0x40] sm:$0xff]
        %v7391 = vld [vmem:[%s7381 + $0x48] sm:$0xff]
        %v7392 = vld [vmem:[%s7381 + $0x50] sm:$0xff]
        %v7393 = vld [vmem:[%s7381 + $0x58] sm:$0xff]
        %v7394 = vld [vmem:[%s7381 + $0x60] sm:$0xff]
        %v7395 = vld [vmem:[%s7381 + $0x68] sm:$0xff]
        %v7396 = vld [vmem:[%s7381 + $0x70] sm:$0xff]
        %v7397 = vld [vmem:[%s7381 + $0x78] sm:$0xff]
        %v7398 = vld [vmem:[%s7381 + $0x80] sm:$0xff]
        %v7399 = vld [vmem:[%s7381 + $0x88] sm:$0xff]
        %v7400 = vld [vmem:[%s7381 + $0x90] sm:$0xff]
        %v7401 = vld [vmem:[%s7381 + $0x98] sm:$0xff]
        %v7402 = vld [vmem:[%s7381 + $0xa0] sm:$0xff]
        %v7403 = vld [vmem:[%s7381 + $0xa8] sm:$0xff]
        %v7404 = vld [vmem:[%s7381 + $0xb0] sm:$0xff]
        %v7405 = vld [vmem:[%s7381 + $0xb8] sm:$0xff]
        %v7406 = vld [vmem:[%s7381 + $0xc0] sm:$0x3]
        %v7407 = vld [vmem:[%s7381 + $0xc8] sm:$0x3]
        %v7408 = vld [vmem:[%s7381 + $0xd0] sm:$0x3]
        %v7409 = vld [vmem:[%s7381 + $0xd8] sm:$0x3]
        %v7410 = vrot.slane %v6153, 1
        %v7411 = vsel %vm6183, %v7410, 0
        %v7414 = vsel %vm6187, %v7406, 0
        %v7417 = vsel %vm6187, %v7407, 0
        %v7420 = vsel %vm6187, %v7408, 0
        %v7423 = vsel %vm6187, %v7409, 0
        %7425 = vmatpush.msra.mxu0 0.0
        %7426 = vmatpush.msra.mxu0 0.0
        %7427 = vmatpush.msra.mxu0 0.0
        %7428 = vmatpush.msra.mxu0 0.0
        %7429 = vmatpush.msra.mxu0 0.0
        %7430 = vmatpush.msra.mxu0 0.0
        %7431 = vmatpush.msra.mxu0 0.0
        %7432 = vmatpush.msra.mxu0 0.0
        %7433 = vmatpush.msra.mxu0 0.0
        %7434 = vmatpush.msra.mxu0 %v7414
        %7435 = vmatpush.msra.mxu0 %v7402
        %7436 = vmatpush.msra.mxu0 %v7398
        %7437 = vmatpush.msra.mxu0 %v7394
        %7438 = vmatpush.msra.mxu0 %v7390
        %7439 = vmatpush.msra.mxu0 %v7386
        %7440 = vmatpush.msra.mxu0 %v7382
        %7441 = vmatmul.f32.gmra.mxu0 %v7411
        %v7442 = vpop.f32.mrf.mxu0
        %v7443 = vadd.f32 0.0, %v7442
        %7444 = vdwg.mxu0
        %7445 = vmatpush.msra.mxu0 0.0
        %7446 = vmatpush.msra.mxu0 0.0
        %7447 = vmatpush.msra.mxu0 0.0
        %7448 = vmatpush.msra.mxu0 0.0
        %7449 = vmatpush.msra.mxu0 0.0
        %7450 = vmatpush.msra.mxu0 0.0
        %7451 = vmatpush.msra.mxu0 0.0
        %7452 = vmatpush.msra.mxu0 0.0
        %7453 = vmatpush.msra.mxu0 0.0
        %7454 = vmatpush.msra.mxu0 %v7417
        %7455 = vmatpush.msra.mxu0 %v7403
        %7456 = vmatpush.msra.mxu0 %v7399
        %7457 = vmatpush.msra.mxu0 %v7395
        %7458 = vmatpush.msra.mxu0 %v7391
        %7459 = vmatpush.msra.mxu0 %v7387
        %7460 = vmatpush.msra.mxu0 %v7383
        %7461 = vmatmul.f32.gmra.mxu0 %v7411
        %v7462 = vpop.f32.mrf.mxu0
        %v7463 = vadd.f32 0.0, %v7462
        %7464 = vdwg.mxu0
        %7465 = vmatpush.msra.mxu0 0.0
        %7466 = vmatpush.msra.mxu0 0.0
        %7467 = vmatpush.msra.mxu0 0.0
        %7468 = vmatpush.msra.mxu0 0.0
        %7469 = vmatpush.msra.mxu0 0.0
        %7470 = vmatpush.msra.mxu0 0.0
        %7471 = vmatpush.msra.mxu0 0.0
        %7472 = vmatpush.msra.mxu0 0.0
        %7473 = vmatpush.msra.mxu0 0.0
        %7474 = vmatpush.msra.mxu0 %v7420
        %7475 = vmatpush.msra.mxu0 %v7404
        %7476 = vmatpush.msra.mxu0 %v7400
        %7477 = vmatpush.msra.mxu0 %v7396
        %7478 = vmatpush.msra.mxu0 %v7392
        %7479 = vmatpush.msra.mxu0 %v7388
        %7480 = vmatpush.msra.mxu0 %v7384
        %7481 = vmatmul.f32.gmra.mxu0 %v7411
        %v7482 = vpop.f32.mrf.mxu0
        %v7483 = vadd.f32 0.0, %v7482
        %7484 = vdwg.mxu0
        %7485 = vmatpush.msra.mxu0 0.0
        %7486 = vmatpush.msra.mxu0 0.0
        %7487 = vmatpush.msra.mxu0 0.0
        %7488 = vmatpush.msra.mxu0 0.0
        %7489 = vmatpush.msra.mxu0 0.0
        %7490 = vmatpush.msra.mxu0 0.0
        %7491 = vmatpush.msra.mxu0 0.0
        %7492 = vmatpush.msra.mxu0 0.0
        %7493 = vmatpush.msra.mxu0 0.0
        %7494 = vmatpush.msra.mxu0 %v7423
        %7495 = vmatpush.msra.mxu0 %v7405
        %7496 = vmatpush.msra.mxu0 %v7401
        %7497 = vmatpush.msra.mxu0 %v7397
        %7498 = vmatpush.msra.mxu0 %v7393
        %7499 = vmatpush.msra.mxu0 %v7389
        %7500 = vmatpush.msra.mxu0 %v7385
        %7501 = vmatmul.f32.gmra.mxu0 %v7411
        %v7502 = vpop.f32.mrf.mxu0
        %v7503 = vadd.f32 0.0, %v7502
        %7504 = vdwg.mxu0
        %v7509 = vrot.slane %v7463, 7
        %v7510 = vrot.slane %v7483, 6
        %v7511 = vrot.slane %v7503, 5
        %v7512 = vsel %vm438, %v7443, %v7509
        %v7513 = vsel %vm6288, %v7510, %v7511
        %v7514 = vsel %vm6187, %v7512, %v7513
        %v7516 = vadd.f32 %v7380, %v7514
        %s7517 = scalar_lea.vmem %s6, 2240
        %v7518 = vld [vmem:[%s7517] sm:$0xff]
        %v7519 = vld [vmem:[%s7517 + $0x8] sm:$0xff]
        %v7520 = vld [vmem:[%s7517 + $0x10] sm:$0xff]
        %v7521 = vld [vmem:[%s7517 + $0x18] sm:$0xff]
        %v7522 = vld [vmem:[%s7517 + $0x20] sm:$0xff]
        %v7523 = vld [vmem:[%s7517 + $0x28] sm:$0xff]
        %v7524 = vld [vmem:[%s7517 + $0x30] sm:$0xff]
        %v7525 = vld [vmem:[%s7517 + $0x38] sm:$0xff]
        %v7526 = vld [vmem:[%s7517 + $0x40] sm:$0xff]
        %v7527 = vld [vmem:[%s7517 + $0x48] sm:$0xff]
        %v7528 = vld [vmem:[%s7517 + $0x50] sm:$0xff]
        %v7529 = vld [vmem:[%s7517 + $0x58] sm:$0xff]
        %v7530 = vld [vmem:[%s7517 + $0x60] sm:$0xff]
        %v7531 = vld [vmem:[%s7517 + $0x68] sm:$0xff]
        %v7532 = vld [vmem:[%s7517 + $0x70] sm:$0xff]
        %v7533 = vld [vmem:[%s7517 + $0x78] sm:$0xff]
        %v7534 = vld [vmem:[%s7517 + $0x80] sm:$0xff]
        %v7535 = vld [vmem:[%s7517 + $0x88] sm:$0xff]
        %v7536 = vld [vmem:[%s7517 + $0x90] sm:$0xff]
        %v7537 = vld [vmem:[%s7517 + $0x98] sm:$0xff]
        %v7538 = vld [vmem:[%s7517 + $0xa0] sm:$0xff]
        %v7539 = vld [vmem:[%s7517 + $0xa8] sm:$0xff]
        %v7540 = vld [vmem:[%s7517 + $0xb0] sm:$0xff]
        %v7541 = vld [vmem:[%s7517 + $0xb8] sm:$0xff]
        %v7542 = vld [vmem:[%s7517 + $0xc0] sm:$0x3]
        %v7543 = vld [vmem:[%s7517 + $0xc8] sm:$0x3]
        %v7544 = vld [vmem:[%s7517 + $0xd0] sm:$0x3]
        %v7545 = vld [vmem:[%s7517 + $0xd8] sm:$0x3]
        %v7546 = vrot.slane %v6153, 2
        %v7547 = vsel %vm6183, %v7546, 0
        %v7550 = vsel %vm6187, %v7542, 0
        %v7553 = vsel %vm6187, %v7543, 0
        %v7556 = vsel %vm6187, %v7544, 0
        %v7559 = vsel %vm6187, %v7545, 0
        %7561 = vmatpush.msra.mxu0 0.0
        %7562 = vmatpush.msra.mxu0 0.0
        %7563 = vmatpush.msra.mxu0 0.0
        %7564 = vmatpush.msra.mxu0 0.0
        %7565 = vmatpush.msra.mxu0 0.0
        %7566 = vmatpush.msra.mxu0 0.0
        %7567 = vmatpush.msra.mxu0 0.0
        %7568 = vmatpush.msra.mxu0 0.0
        %7569 = vmatpush.msra.mxu0 0.0
        %7570 = vmatpush.msra.mxu0 %v7550
        %7571 = vmatpush.msra.mxu0 %v7538
        %7572 = vmatpush.msra.mxu0 %v7534
        %7573 = vmatpush.msra.mxu0 %v7530
        %7574 = vmatpush.msra.mxu0 %v7526
        %7575 = vmatpush.msra.mxu0 %v7522
        %7576 = vmatpush.msra.mxu0 %v7518
        %7577 = vmatmul.f32.gmra.mxu0 %v7547
        %v7578 = vpop.f32.mrf.mxu0
        %v7579 = vadd.f32 0.0, %v7578
        %7580 = vdwg.mxu0
        %7581 = vmatpush.msra.mxu0 0.0
        %7582 = vmatpush.msra.mxu0 0.0
        %7583 = vmatpush.msra.mxu0 0.0
        %7584 = vmatpush.msra.mxu0 0.0
        %7585 = vmatpush.msra.mxu0 0.0
        %7586 = vmatpush.msra.mxu0 0.0
        %7587 = vmatpush.msra.mxu0 0.0
        %7588 = vmatpush.msra.mxu0 0.0
        %7589 = vmatpush.msra.mxu0 0.0
        %7590 = vmatpush.msra.mxu0 %v7553
        %7591 = vmatpush.msra.mxu0 %v7539
        %7592 = vmatpush.msra.mxu0 %v7535
        %7593 = vmatpush.msra.mxu0 %v7531
        %7594 = vmatpush.msra.mxu0 %v7527
        %7595 = vmatpush.msra.mxu0 %v7523
        %7596 = vmatpush.msra.mxu0 %v7519
        %7597 = vmatmul.f32.gmra.mxu0 %v7547
        %v7598 = vpop.f32.mrf.mxu0
        %v7599 = vadd.f32 0.0, %v7598
        %7600 = vdwg.mxu0
        %7601 = vmatpush.msra.mxu0 0.0
        %7602 = vmatpush.msra.mxu0 0.0
        %7603 = vmatpush.msra.mxu0 0.0
        %7604 = vmatpush.msra.mxu0 0.0
        %7605 = vmatpush.msra.mxu0 0.0
        %7606 = vmatpush.msra.mxu0 0.0
        %7607 = vmatpush.msra.mxu0 0.0
        %7608 = vmatpush.msra.mxu0 0.0
        %7609 = vmatpush.msra.mxu0 0.0
        %7610 = vmatpush.msra.mxu0 %v7556
        %7611 = vmatpush.msra.mxu0 %v7540
        %7612 = vmatpush.msra.mxu0 %v7536
        %7613 = vmatpush.msra.mxu0 %v7532
        %7614 = vmatpush.msra.mxu0 %v7528
        %7615 = vmatpush.msra.mxu0 %v7524
        %7616 = vmatpush.msra.mxu0 %v7520
        %7617 = vmatmul.f32.gmra.mxu0 %v7547
        %v7618 = vpop.f32.mrf.mxu0
        %v7619 = vadd.f32 0.0, %v7618
        %7620 = vdwg.mxu0
        %7621 = vmatpush.msra.mxu0 0.0
        %7622 = vmatpush.msra.mxu0 0.0
        %7623 = vmatpush.msra.mxu0 0.0
        %7624 = vmatpush.msra.mxu0 0.0
        %7625 = vmatpush.msra.mxu0 0.0
        %7626 = vmatpush.msra.mxu0 0.0
        %7627 = vmatpush.msra.mxu0 0.0
        %7628 = vmatpush.msra.mxu0 0.0
        %7629 = vmatpush.msra.mxu0 0.0
        %7630 = vmatpush.msra.mxu0 %v7559
        %7631 = vmatpush.msra.mxu0 %v7541
        %7632 = vmatpush.msra.mxu0 %v7537
        %7633 = vmatpush.msra.mxu0 %v7533
        %7634 = vmatpush.msra.mxu0 %v7529
        %7635 = vmatpush.msra.mxu0 %v7525
        %7636 = vmatpush.msra.mxu0 %v7521
        %7637 = vmatmul.f32.gmra.mxu0 %v7547
        %v7638 = vpop.f32.mrf.mxu0
        %v7639 = vadd.f32 0.0, %v7638
        %7640 = vdwg.mxu0
        %v7645 = vrot.slane %v7599, 7
        %v7646 = vrot.slane %v7619, 6
        %v7647 = vrot.slane %v7639, 5
        %v7648 = vsel %vm438, %v7579, %v7645
        %v7649 = vsel %vm6288, %v7646, %v7647
        %v7650 = vsel %vm6187, %v7648, %v7649
        %v7652 = vadd.f32 %v7516, %v7650
        %s7653 = scalar_lea.vmem %s6, 2464
        %v7654 = vld [vmem:[%s7653] sm:$0xff]
        %v7655 = vld [vmem:[%s7653 + $0x8] sm:$0xff]
        %v7656 = vld [vmem:[%s7653 + $0x10] sm:$0xff]
        %v7657 = vld [vmem:[%s7653 + $0x18] sm:$0xff]
        %v7658 = vld [vmem:[%s7653 + $0x20] sm:$0xff]
        %v7659 = vld [vmem:[%s7653 + $0x28] sm:$0xff]
        %v7660 = vld [vmem:[%s7653 + $0x30] sm:$0xff]
        %v7661 = vld [vmem:[%s7653 + $0x38] sm:$0xff]
        %v7662 = vld [vmem:[%s7653 + $0x40] sm:$0xff]
        %v7663 = vld [vmem:[%s7653 + $0x48] sm:$0xff]
        %v7664 = vld [vmem:[%s7653 + $0x50] sm:$0xff]
        %v7665 = vld [vmem:[%s7653 + $0x58] sm:$0xff]
        %v7666 = vld [vmem:[%s7653 + $0x60] sm:$0xff]
        %v7667 = vld [vmem:[%s7653 + $0x68] sm:$0xff]
        %v7668 = vld [vmem:[%s7653 + $0x70] sm:$0xff]
        %v7669 = vld [vmem:[%s7653 + $0x78] sm:$0xff]
        %v7670 = vld [vmem:[%s7653 + $0x80] sm:$0xff]
        %v7671 = vld [vmem:[%s7653 + $0x88] sm:$0xff]
        %v7672 = vld [vmem:[%s7653 + $0x90] sm:$0xff]
        %v7673 = vld [vmem:[%s7653 + $0x98] sm:$0xff]
        %v7674 = vld [vmem:[%s7653 + $0xa0] sm:$0xff]
        %v7675 = vld [vmem:[%s7653 + $0xa8] sm:$0xff]
        %v7676 = vld [vmem:[%s7653 + $0xb0] sm:$0xff]
        %v7677 = vld [vmem:[%s7653 + $0xb8] sm:$0xff]
        %v7678 = vld [vmem:[%s7653 + $0xc0] sm:$0x3]
        %v7679 = vld [vmem:[%s7653 + $0xc8] sm:$0x3]
        %v7680 = vld [vmem:[%s7653 + $0xd0] sm:$0x3]
        %v7681 = vld [vmem:[%s7653 + $0xd8] sm:$0x3]
        %v7682 = vrot.slane %v6153, 3
        %v7683 = vsel %vm6183, %v7682, 0
        %v7686 = vsel %vm6187, %v7678, 0
        %v7689 = vsel %vm6187, %v7679, 0
        %v7692 = vsel %vm6187, %v7680, 0
        %v7695 = vsel %vm6187, %v7681, 0
        %7697 = vmatpush.msra.mxu0 0.0
        %7698 = vmatpush.msra.mxu0 0.0
        %7699 = vmatpush.msra.mxu0 0.0
        %7700 = vmatpush.msra.mxu0 0.0
        %7701 = vmatpush.msra.mxu0 0.0
        %7702 = vmatpush.msra.mxu0 0.0
        %7703 = vmatpush.msra.mxu0 0.0
        %7704 = vmatpush.msra.mxu0 0.0
        %7705 = vmatpush.msra.mxu0 0.0
        %7706 = vmatpush.msra.mxu0 %v7686
        %7707 = vmatpush.msra.mxu0 %v7674
        %7708 = vmatpush.msra.mxu0 %v7670
        %7709 = vmatpush.msra.mxu0 %v7666
        %7710 = vmatpush.msra.mxu0 %v7662
        %7711 = vmatpush.msra.mxu0 %v7658
        %7712 = vmatpush.msra.mxu0 %v7654
        %7713 = vmatmul.f32.gmra.mxu0 %v7683
        %v7714 = vpop.f32.mrf.mxu0
        %v7715 = vadd.f32 0.0, %v7714
        %7716 = vdwg.mxu0
        %7717 = vmatpush.msra.mxu0 0.0
        %7718 = vmatpush.msra.mxu0 0.0
        %7719 = vmatpush.msra.mxu0 0.0
        %7720 = vmatpush.msra.mxu0 0.0
        %7721 = vmatpush.msra.mxu0 0.0
        %7722 = vmatpush.msra.mxu0 0.0
        %7723 = vmatpush.msra.mxu0 0.0
        %7724 = vmatpush.msra.mxu0 0.0
        %7725 = vmatpush.msra.mxu0 0.0
        %7726 = vmatpush.msra.mxu0 %v7689
        %7727 = vmatpush.msra.mxu0 %v7675
        %7728 = vmatpush.msra.mxu0 %v7671
        %7729 = vmatpush.msra.mxu0 %v7667
        %7730 = vmatpush.msra.mxu0 %v7663
        %7731 = vmatpush.msra.mxu0 %v7659
        %7732 = vmatpush.msra.mxu0 %v7655
        %7733 = vmatmul.f32.gmra.mxu0 %v7683
        %v7734 = vpop.f32.mrf.mxu0
        %v7735 = vadd.f32 0.0, %v7734
        %7736 = vdwg.mxu0
        %7737 = vmatpush.msra.mxu0 0.0
        %7738 = vmatpush.msra.mxu0 0.0
        %7739 = vmatpush.msra.mxu0 0.0
        %7740 = vmatpush.msra.mxu0 0.0
        %7741 = vmatpush.msra.mxu0 0.0
        %7742 = vmatpush.msra.mxu0 0.0
        %7743 = vmatpush.msra.mxu0 0.0
        %7744 = vmatpush.msra.mxu0 0.0
        %7745 = vmatpush.msra.mxu0 0.0
        %7746 = vmatpush.msra.mxu0 %v7692
        %7747 = vmatpush.msra.mxu0 %v7676
        %7748 = vmatpush.msra.mxu0 %v7672
        %7749 = vmatpush.msra.mxu0 %v7668
        %7750 = vmatpush.msra.mxu0 %v7664
        %7751 = vmatpush.msra.mxu0 %v7660
        %7752 = vmatpush.msra.mxu0 %v7656
        %7753 = vmatmul.f32.gmra.mxu0 %v7683
        %v7754 = vpop.f32.mrf.mxu0
        %v7755 = vadd.f32 0.0, %v7754
        %7756 = vdwg.mxu0
        %7757 = vmatpush.msra.mxu0 0.0
        %7758 = vmatpush.msra.mxu0 0.0
        %7759 = vmatpush.msra.mxu0 0.0
        %7760 = vmatpush.msra.mxu0 0.0
        %7761 = vmatpush.msra.mxu0 0.0
        %7762 = vmatpush.msra.mxu0 0.0
        %7763 = vmatpush.msra.mxu0 0.0
        %7764 = vmatpush.msra.mxu0 0.0
        %7765 = vmatpush.msra.mxu0 0.0
        %7766 = vmatpush.msra.mxu0 %v7695
        %7767 = vmatpush.msra.mxu0 %v7677
        %7768 = vmatpush.msra.mxu0 %v7673
        %7769 = vmatpush.msra.mxu0 %v7669
        %7770 = vmatpush.msra.mxu0 %v7665
        %7771 = vmatpush.msra.mxu0 %v7661
        %7772 = vmatpush.msra.mxu0 %v7657
        %7773 = vmatmul.f32.gmra.mxu0 %v7683
        %v7774 = vpop.f32.mrf.mxu0
        %v7775 = vadd.f32 0.0, %v7774
        %7776 = vdwg.mxu0
        %v7781 = vrot.slane %v7735, 7
        %v7782 = vrot.slane %v7755, 6
        %v7783 = vrot.slane %v7775, 5
        %v7784 = vsel %vm438, %v7715, %v7781
        %v7785 = vsel %vm6288, %v7782, %v7783
        %v7786 = vsel %vm6187, %v7784, %v7785
        %v7788 = vadd.f32 %v7652, %v7786
        %s7789 = scalar_lea.vmem %s6, 2688
        %v7790 = vld [vmem:[%s7789] sm:$0xff]
        %v7791 = vld [vmem:[%s7789 + $0x8] sm:$0xff]
        %v7792 = vld [vmem:[%s7789 + $0x10] sm:$0xff]
        %v7793 = vld [vmem:[%s7789 + $0x18] sm:$0xff]
        %v7794 = vld [vmem:[%s7789 + $0x20] sm:$0xff]
        %v7795 = vld [vmem:[%s7789 + $0x28] sm:$0xff]
        %v7796 = vld [vmem:[%s7789 + $0x30] sm:$0xff]
        %v7797 = vld [vmem:[%s7789 + $0x38] sm:$0xff]
        %v7798 = vld [vmem:[%s7789 + $0x40] sm:$0xff]
        %v7799 = vld [vmem:[%s7789 + $0x48] sm:$0xff]
        %v7800 = vld [vmem:[%s7789 + $0x50] sm:$0xff]
        %v7801 = vld [vmem:[%s7789 + $0x58] sm:$0xff]
        %v7802 = vld [vmem:[%s7789 + $0x60] sm:$0xff]
        %v7803 = vld [vmem:[%s7789 + $0x68] sm:$0xff]
        %v7804 = vld [vmem:[%s7789 + $0x70] sm:$0xff]
        %v7805 = vld [vmem:[%s7789 + $0x78] sm:$0xff]
        %v7806 = vld [vmem:[%s7789 + $0x80] sm:$0xff]
        %v7807 = vld [vmem:[%s7789 + $0x88] sm:$0xff]
        %v7808 = vld [vmem:[%s7789 + $0x90] sm:$0xff]
        %v7809 = vld [vmem:[%s7789 + $0x98] sm:$0xff]
        %v7810 = vld [vmem:[%s7789 + $0xa0] sm:$0xff]
        %v7811 = vld [vmem:[%s7789 + $0xa8] sm:$0xff]
        %v7812 = vld [vmem:[%s7789 + $0xb0] sm:$0xff]
        %v7813 = vld [vmem:[%s7789 + $0xb8] sm:$0xff]
        %v7814 = vld [vmem:[%s7789 + $0xc0] sm:$0x3]
        %v7815 = vld [vmem:[%s7789 + $0xc8] sm:$0x3]
        %v7816 = vld [vmem:[%s7789 + $0xd0] sm:$0x3]
        %v7817 = vld [vmem:[%s7789 + $0xd8] sm:$0x3]
        %v7818 = vrot.slane %v6153, 4
        %v7819 = vsel %vm6183, %v7818, 0
        %v7822 = vsel %vm6187, %v7814, 0
        %v7825 = vsel %vm6187, %v7815, 0
        %v7828 = vsel %vm6187, %v7816, 0
        %v7831 = vsel %vm6187, %v7817, 0
        %7833 = vmatpush.msra.mxu0 0.0
        %7834 = vmatpush.msra.mxu0 0.0
        %7835 = vmatpush.msra.mxu0 0.0
        %7836 = vmatpush.msra.mxu0 0.0
        %7837 = vmatpush.msra.mxu0 0.0
        %7838 = vmatpush.msra.mxu0 0.0
        %7839 = vmatpush.msra.mxu0 0.0
        %7840 = vmatpush.msra.mxu0 0.0
        %7841 = vmatpush.msra.mxu0 0.0
        %7842 = vmatpush.msra.mxu0 %v7822
        %7843 = vmatpush.msra.mxu0 %v7810
        %7844 = vmatpush.msra.mxu0 %v7806
        %7845 = vmatpush.msra.mxu0 %v7802
        %7846 = vmatpush.msra.mxu0 %v7798
        %7847 = vmatpush.msra.mxu0 %v7794
        %7848 = vmatpush.msra.mxu0 %v7790
        %7849 = vmatmul.f32.gmra.mxu0 %v7819
        %v7850 = vpop.f32.mrf.mxu0
        %v7851 = vadd.f32 0.0, %v7850
        %7852 = vdwg.mxu0
        %7853 = vmatpush.msra.mxu0 0.0
        %7854 = vmatpush.msra.mxu0 0.0
        %7855 = vmatpush.msra.mxu0 0.0
        %7856 = vmatpush.msra.mxu0 0.0
        %7857 = vmatpush.msra.mxu0 0.0
        %7858 = vmatpush.msra.mxu0 0.0
        %7859 = vmatpush.msra.mxu0 0.0
        %7860 = vmatpush.msra.mxu0 0.0
        %7861 = vmatpush.msra.mxu0 0.0
        %7862 = vmatpush.msra.mxu0 %v7825
        %7863 = vmatpush.msra.mxu0 %v7811
        %7864 = vmatpush.msra.mxu0 %v7807
        %7865 = vmatpush.msra.mxu0 %v7803
        %7866 = vmatpush.msra.mxu0 %v7799
        %7867 = vmatpush.msra.mxu0 %v7795
        %7868 = vmatpush.msra.mxu0 %v7791
        %7869 = vmatmul.f32.gmra.mxu0 %v7819
        %v7870 = vpop.f32.mrf.mxu0
        %v7871 = vadd.f32 0.0, %v7870
        %7872 = vdwg.mxu0
        %7873 = vmatpush.msra.mxu0 0.0
        %7874 = vmatpush.msra.mxu0 0.0
        %7875 = vmatpush.msra.mxu0 0.0
        %7876 = vmatpush.msra.mxu0 0.0
        %7877 = vmatpush.msra.mxu0 0.0
        %7878 = vmatpush.msra.mxu0 0.0
        %7879 = vmatpush.msra.mxu0 0.0
        %7880 = vmatpush.msra.mxu0 0.0
        %7881 = vmatpush.msra.mxu0 0.0
        %7882 = vmatpush.msra.mxu0 %v7828
        %7883 = vmatpush.msra.mxu0 %v7812
        %7884 = vmatpush.msra.mxu0 %v7808
        %7885 = vmatpush.msra.mxu0 %v7804
        %7886 = vmatpush.msra.mxu0 %v7800
        %7887 = vmatpush.msra.mxu0 %v7796
        %7888 = vmatpush.msra.mxu0 %v7792
        %7889 = vmatmul.f32.gmra.mxu0 %v7819
        %v7890 = vpop.f32.mrf.mxu0
        %v7891 = vadd.f32 0.0, %v7890
        %7892 = vdwg.mxu0
        %7893 = vmatpush.msra.mxu0 0.0
        %7894 = vmatpush.msra.mxu0 0.0
        %7895 = vmatpush.msra.mxu0 0.0
        %7896 = vmatpush.msra.mxu0 0.0
        %7897 = vmatpush.msra.mxu0 0.0
        %7898 = vmatpush.msra.mxu0 0.0
        %7899 = vmatpush.msra.mxu0 0.0
        %7900 = vmatpush.msra.mxu0 0.0
        %7901 = vmatpush.msra.mxu0 0.0
        %7902 = vmatpush.msra.mxu0 %v7831
        %7903 = vmatpush.msra.mxu0 %v7813
        %7904 = vmatpush.msra.mxu0 %v7809
        %7905 = vmatpush.msra.mxu0 %v7805
        %7906 = vmatpush.msra.mxu0 %v7801
        %7907 = vmatpush.msra.mxu0 %v7797
        %7908 = vmatpush.msra.mxu0 %v7793
        %7909 = vmatmul.f32.gmra.mxu0 %v7819
        %v7910 = vpop.f32.mrf.mxu0
        %v7911 = vadd.f32 0.0, %v7910
        %7912 = vdwg.mxu0
        %v7917 = vrot.slane %v7871, 7
        %v7918 = vrot.slane %v7891, 6
        %v7919 = vrot.slane %v7911, 5
        %v7920 = vsel %vm438, %v7851, %v7917
        %v7921 = vsel %vm6288, %v7918, %v7919
        %v7922 = vsel %vm6187, %v7920, %v7921
        %v7924 = vadd.f32 %v7788, %v7922
        %s7925 = scalar_lea.vmem %s6, 2912
        %v7926 = vld [vmem:[%s7925] sm:$0xff]
        %v7927 = vld [vmem:[%s7925 + $0x8] sm:$0xff]
        %v7928 = vld [vmem:[%s7925 + $0x10] sm:$0xff]
        %v7929 = vld [vmem:[%s7925 + $0x18] sm:$0xff]
        %v7930 = vld [vmem:[%s7925 + $0x20] sm:$0xff]
        %v7931 = vld [vmem:[%s7925 + $0x28] sm:$0xff]
        %v7932 = vld [vmem:[%s7925 + $0x30] sm:$0xff]
        %v7933 = vld [vmem:[%s7925 + $0x38] sm:$0xff]
        %v7934 = vld [vmem:[%s7925 + $0x40] sm:$0xff]
        %v7935 = vld [vmem:[%s7925 + $0x48] sm:$0xff]
        %v7936 = vld [vmem:[%s7925 + $0x50] sm:$0xff]
        %v7937 = vld [vmem:[%s7925 + $0x58] sm:$0xff]
        %v7938 = vld [vmem:[%s7925 + $0x60] sm:$0xff]
        %v7939 = vld [vmem:[%s7925 + $0x68] sm:$0xff]
        %v7940 = vld [vmem:[%s7925 + $0x70] sm:$0xff]
        %v7941 = vld [vmem:[%s7925 + $0x78] sm:$0xff]
        %v7942 = vld [vmem:[%s7925 + $0x80] sm:$0xff]
        %v7943 = vld [vmem:[%s7925 + $0x88] sm:$0xff]
        %v7944 = vld [vmem:[%s7925 + $0x90] sm:$0xff]
        %v7945 = vld [vmem:[%s7925 + $0x98] sm:$0xff]
        %v7946 = vld [vmem:[%s7925 + $0xa0] sm:$0xff]
        %v7947 = vld [vmem:[%s7925 + $0xa8] sm:$0xff]
        %v7948 = vld [vmem:[%s7925 + $0xb0] sm:$0xff]
        %v7949 = vld [vmem:[%s7925 + $0xb8] sm:$0xff]
        %v7950 = vld [vmem:[%s7925 + $0xc0] sm:$0x3]
        %v7951 = vld [vmem:[%s7925 + $0xc8] sm:$0x3]
        %v7952 = vld [vmem:[%s7925 + $0xd0] sm:$0x3]
        %v7953 = vld [vmem:[%s7925 + $0xd8] sm:$0x3]
        %v7954 = vrot.slane %v6153, 5
        %v7955 = vsel %vm6183, %v7954, 0
        %v7958 = vsel %vm6187, %v7950, 0
        %v7961 = vsel %vm6187, %v7951, 0
        %v7964 = vsel %vm6187, %v7952, 0
        %v7967 = vsel %vm6187, %v7953, 0
        %7969 = vmatpush.msra.mxu0 0.0
        %7970 = vmatpush.msra.mxu0 0.0
        %7971 = vmatpush.msra.mxu0 0.0
        %7972 = vmatpush.msra.mxu0 0.0
        %7973 = vmatpush.msra.mxu0 0.0
        %7974 = vmatpush.msra.mxu0 0.0
        %7975 = vmatpush.msra.mxu0 0.0
        %7976 = vmatpush.msra.mxu0 0.0
        %7977 = vmatpush.msra.mxu0 0.0
        %7978 = vmatpush.msra.mxu0 %v7958
        %7979 = vmatpush.msra.mxu0 %v7946
        %7980 = vmatpush.msra.mxu0 %v7942
        %7981 = vmatpush.msra.mxu0 %v7938
        %7982 = vmatpush.msra.mxu0 %v7934
        %7983 = vmatpush.msra.mxu0 %v7930
        %7984 = vmatpush.msra.mxu0 %v7926
        %7985 = vmatmul.f32.gmra.mxu0 %v7955
        %v7986 = vpop.f32.mrf.mxu0
        %v7987 = vadd.f32 0.0, %v7986
        %7988 = vdwg.mxu0
        %7989 = vmatpush.msra.mxu0 0.0
        %7990 = vmatpush.msra.mxu0 0.0
        %7991 = vmatpush.msra.mxu0 0.0
        %7992 = vmatpush.msra.mxu0 0.0
        %7993 = vmatpush.msra.mxu0 0.0
        %7994 = vmatpush.msra.mxu0 0.0
        %7995 = vmatpush.msra.mxu0 0.0
        %7996 = vmatpush.msra.mxu0 0.0
        %7997 = vmatpush.msra.mxu0 0.0
        %7998 = vmatpush.msra.mxu0 %v7961
        %7999 = vmatpush.msra.mxu0 %v7947
        %8000 = vmatpush.msra.mxu0 %v7943
        %8001 = vmatpush.msra.mxu0 %v7939
        %8002 = vmatpush.msra.mxu0 %v7935
        %8003 = vmatpush.msra.mxu0 %v7931
        %8004 = vmatpush.msra.mxu0 %v7927
        %8005 = vmatmul.f32.gmra.mxu0 %v7955
        %v8006 = vpop.f32.mrf.mxu0
        %v8007 = vadd.f32 0.0, %v8006
        %8008 = vdwg.mxu0
        %8009 = vmatpush.msra.mxu0 0.0
        %8010 = vmatpush.msra.mxu0 0.0
        %8011 = vmatpush.msra.mxu0 0.0
        %8012 = vmatpush.msra.mxu0 0.0
        %8013 = vmatpush.msra.mxu0 0.0
        %8014 = vmatpush.msra.mxu0 0.0
        %8015 = vmatpush.msra.mxu0 0.0
        %8016 = vmatpush.msra.mxu0 0.0
        %8017 = vmatpush.msra.mxu0 0.0
        %8018 = vmatpush.msra.mxu0 %v7964
        %8019 = vmatpush.msra.mxu0 %v7948
        %8020 = vmatpush.msra.mxu0 %v7944
        %8021 = vmatpush.msra.mxu0 %v7940
        %8022 = vmatpush.msra.mxu0 %v7936
        %8023 = vmatpush.msra.mxu0 %v7932
        %8024 = vmatpush.msra.mxu0 %v7928
        %8025 = vmatmul.f32.gmra.mxu0 %v7955
        %v8026 = vpop.f32.mrf.mxu0
        %v8027 = vadd.f32 0.0, %v8026
        %8028 = vdwg.mxu0
        %8029 = vmatpush.msra.mxu0 0.0
        %8030 = vmatpush.msra.mxu0 0.0
        %8031 = vmatpush.msra.mxu0 0.0
        %8032 = vmatpush.msra.mxu0 0.0
        %8033 = vmatpush.msra.mxu0 0.0
        %8034 = vmatpush.msra.mxu0 0.0
        %8035 = vmatpush.msra.mxu0 0.0
        %8036 = vmatpush.msra.mxu0 0.0
        %8037 = vmatpush.msra.mxu0 0.0
        %8038 = vmatpush.msra.mxu0 %v7967
        %8039 = vmatpush.msra.mxu0 %v7949
        %8040 = vmatpush.msra.mxu0 %v7945
        %8041 = vmatpush.msra.mxu0 %v7941
        %8042 = vmatpush.msra.mxu0 %v7937
        %8043 = vmatpush.msra.mxu0 %v7933
        %8044 = vmatpush.msra.mxu0 %v7929
        %8045 = vmatmul.f32.gmra.mxu0 %v7955
        %v8046 = vpop.f32.mrf.mxu0
        %v8047 = vadd.f32 0.0, %v8046
        %8048 = vdwg.mxu0
        %v8053 = vrot.slane %v8007, 7
        %v8054 = vrot.slane %v8027, 6
        %v8055 = vrot.slane %v8047, 5
        %v8056 = vsel %vm438, %v7987, %v8053
        %v8057 = vsel %vm6288, %v8054, %v8055
        %v8058 = vsel %vm6187, %v8056, %v8057
        %v8060 = vadd.f32 %v7924, %v8058
        %s8061 = scalar_lea.vmem %s6, 3136
        %v8062 = vld [vmem:[%s8061] sm:$0xff]
        %v8063 = vld [vmem:[%s8061 + $0x8] sm:$0xff]
        %v8064 = vld [vmem:[%s8061 + $0x10] sm:$0xff]
        %v8065 = vld [vmem:[%s8061 + $0x18] sm:$0xff]
        %v8066 = vld [vmem:[%s8061 + $0x20] sm:$0xff]
        %v8067 = vld [vmem:[%s8061 + $0x28] sm:$0xff]
        %v8068 = vld [vmem:[%s8061 + $0x30] sm:$0xff]
        %v8069 = vld [vmem:[%s8061 + $0x38] sm:$0xff]
        %v8070 = vld [vmem:[%s8061 + $0x40] sm:$0xff]
        %v8071 = vld [vmem:[%s8061 + $0x48] sm:$0xff]
        %v8072 = vld [vmem:[%s8061 + $0x50] sm:$0xff]
        %v8073 = vld [vmem:[%s8061 + $0x58] sm:$0xff]
        %v8074 = vld [vmem:[%s8061 + $0x60] sm:$0xff]
        %v8075 = vld [vmem:[%s8061 + $0x68] sm:$0xff]
        %v8076 = vld [vmem:[%s8061 + $0x70] sm:$0xff]
        %v8077 = vld [vmem:[%s8061 + $0x78] sm:$0xff]
        %v8078 = vld [vmem:[%s8061 + $0x80] sm:$0xff]
        %v8079 = vld [vmem:[%s8061 + $0x88] sm:$0xff]
        %v8080 = vld [vmem:[%s8061 + $0x90] sm:$0xff]
        %v8081 = vld [vmem:[%s8061 + $0x98] sm:$0xff]
        %v8082 = vld [vmem:[%s8061 + $0xa0] sm:$0xff]
        %v8083 = vld [vmem:[%s8061 + $0xa8] sm:$0xff]
        %v8084 = vld [vmem:[%s8061 + $0xb0] sm:$0xff]
        %v8085 = vld [vmem:[%s8061 + $0xb8] sm:$0xff]
        %v8086 = vld [vmem:[%s8061 + $0xc0] sm:$0x3]
        %v8087 = vld [vmem:[%s8061 + $0xc8] sm:$0x3]
        %v8088 = vld [vmem:[%s8061 + $0xd0] sm:$0x3]
        %v8089 = vld [vmem:[%s8061 + $0xd8] sm:$0x3]
        %v8090 = vrot.slane %v6153, 6
        %v8091 = vsel %vm6183, %v8090, 0
        %v8094 = vsel %vm6187, %v8086, 0
        %v8097 = vsel %vm6187, %v8087, 0
        %v8100 = vsel %vm6187, %v8088, 0
        %v8103 = vsel %vm6187, %v8089, 0
        %8105 = vmatpush.msra.mxu0 0.0
        %8106 = vmatpush.msra.mxu0 0.0
        %8107 = vmatpush.msra.mxu0 0.0
        %8108 = vmatpush.msra.mxu0 0.0
        %8109 = vmatpush.msra.mxu0 0.0
        %8110 = vmatpush.msra.mxu0 0.0
        %8111 = vmatpush.msra.mxu0 0.0
        %8112 = vmatpush.msra.mxu0 0.0
        %8113 = vmatpush.msra.mxu0 0.0
        %8114 = vmatpush.msra.mxu0 %v8094
        %8115 = vmatpush.msra.mxu0 %v8082
        %8116 = vmatpush.msra.mxu0 %v8078
        %8117 = vmatpush.msra.mxu0 %v8074
        %8118 = vmatpush.msra.mxu0 %v8070
        %8119 = vmatpush.msra.mxu0 %v8066
        %8120 = vmatpush.msra.mxu0 %v8062
        %8121 = vmatmul.f32.gmra.mxu0 %v8091
        %v8122 = vpop.f32.mrf.mxu0
        %v8123 = vadd.f32 0.0, %v8122
        %8124 = vdwg.mxu0
        %8125 = vmatpush.msra.mxu0 0.0
        %8126 = vmatpush.msra.mxu0 0.0
        %8127 = vmatpush.msra.mxu0 0.0
        %8128 = vmatpush.msra.mxu0 0.0
        %8129 = vmatpush.msra.mxu0 0.0
        %8130 = vmatpush.msra.mxu0 0.0
        %8131 = vmatpush.msra.mxu0 0.0
        %8132 = vmatpush.msra.mxu0 0.0
        %8133 = vmatpush.msra.mxu0 0.0
        %8134 = vmatpush.msra.mxu0 %v8097
        %8135 = vmatpush.msra.mxu0 %v8083
        %8136 = vmatpush.msra.mxu0 %v8079
        %8137 = vmatpush.msra.mxu0 %v8075
        %8138 = vmatpush.msra.mxu0 %v8071
        %8139 = vmatpush.msra.mxu0 %v8067
        %8140 = vmatpush.msra.mxu0 %v8063
        %8141 = vmatmul.f32.gmra.mxu0 %v8091
        %v8142 = vpop.f32.mrf.mxu0
        %v8143 = vadd.f32 0.0, %v8142
        %8144 = vdwg.mxu0
        %8145 = vmatpush.msra.mxu0 0.0
        %8146 = vmatpush.msra.mxu0 0.0
        %8147 = vmatpush.msra.mxu0 0.0
        %8148 = vmatpush.msra.mxu0 0.0
        %8149 = vmatpush.msra.mxu0 0.0
        %8150 = vmatpush.msra.mxu0 0.0
        %8151 = vmatpush.msra.mxu0 0.0
        %8152 = vmatpush.msra.mxu0 0.0
        %8153 = vmatpush.msra.mxu0 0.0
        %8154 = vmatpush.msra.mxu0 %v8100
        %8155 = vmatpush.msra.mxu0 %v8084
        %8156 = vmatpush.msra.mxu0 %v8080
        %8157 = vmatpush.msra.mxu0 %v8076
        %8158 = vmatpush.msra.mxu0 %v8072
        %8159 = vmatpush.msra.mxu0 %v8068
        %8160 = vmatpush.msra.mxu0 %v8064
        %8161 = vmatmul.f32.gmra.mxu0 %v8091
        %v8162 = vpop.f32.mrf.mxu0
        %v8163 = vadd.f32 0.0, %v8162
        %8164 = vdwg.mxu0
        %8165 = vmatpush.msra.mxu0 0.0
        %8166 = vmatpush.msra.mxu0 0.0
        %8167 = vmatpush.msra.mxu0 0.0
        %8168 = vmatpush.msra.mxu0 0.0
        %8169 = vmatpush.msra.mxu0 0.0
        %8170 = vmatpush.msra.mxu0 0.0
        %8171 = vmatpush.msra.mxu0 0.0
        %8172 = vmatpush.msra.mxu0 0.0
        %8173 = vmatpush.msra.mxu0 0.0
        %8174 = vmatpush.msra.mxu0 %v8103
        %8175 = vmatpush.msra.mxu0 %v8085
        %8176 = vmatpush.msra.mxu0 %v8081
        %8177 = vmatpush.msra.mxu0 %v8077
        %8178 = vmatpush.msra.mxu0 %v8073
        %8179 = vmatpush.msra.mxu0 %v8069
        %8180 = vmatpush.msra.mxu0 %v8065
        %8181 = vmatmul.f32.gmra.mxu0 %v8091
        %v8182 = vpop.f32.mrf.mxu0
        %v8183 = vadd.f32 0.0, %v8182
        %8184 = vdwg.mxu0
        %v8189 = vrot.slane %v8143, 7
        %v8190 = vrot.slane %v8163, 6
        %v8191 = vrot.slane %v8183, 5
        %v8192 = vsel %vm438, %v8123, %v8189
        %v8193 = vsel %vm6288, %v8190, %v8191
        %v8194 = vsel %vm6187, %v8192, %v8193
        %v8196 = vadd.f32 %v8060, %v8194
        %s8197 = scalar_lea.vmem %s6, 3360
        %v8198 = vld [vmem:[%s8197] sm:$0xff]
        %v8199 = vld [vmem:[%s8197 + $0x8] sm:$0xff]
        %v8200 = vld [vmem:[%s8197 + $0x10] sm:$0xff]
        %v8201 = vld [vmem:[%s8197 + $0x18] sm:$0xff]
        %v8202 = vld [vmem:[%s8197 + $0x20] sm:$0xff]
        %v8203 = vld [vmem:[%s8197 + $0x28] sm:$0xff]
        %v8204 = vld [vmem:[%s8197 + $0x30] sm:$0xff]
        %v8205 = vld [vmem:[%s8197 + $0x38] sm:$0xff]
        %v8206 = vld [vmem:[%s8197 + $0x40] sm:$0xff]
        %v8207 = vld [vmem:[%s8197 + $0x48] sm:$0xff]
        %v8208 = vld [vmem:[%s8197 + $0x50] sm:$0xff]
        %v8209 = vld [vmem:[%s8197 + $0x58] sm:$0xff]
        %v8210 = vld [vmem:[%s8197 + $0x60] sm:$0xff]
        %v8211 = vld [vmem:[%s8197 + $0x68] sm:$0xff]
        %v8212 = vld [vmem:[%s8197 + $0x70] sm:$0xff]
        %v8213 = vld [vmem:[%s8197 + $0x78] sm:$0xff]
        %v8214 = vld [vmem:[%s8197 + $0x80] sm:$0xff]
        %v8215 = vld [vmem:[%s8197 + $0x88] sm:$0xff]
        %v8216 = vld [vmem:[%s8197 + $0x90] sm:$0xff]
        %v8217 = vld [vmem:[%s8197 + $0x98] sm:$0xff]
        %v8218 = vld [vmem:[%s8197 + $0xa0] sm:$0xff]
        %v8219 = vld [vmem:[%s8197 + $0xa8] sm:$0xff]
        %v8220 = vld [vmem:[%s8197 + $0xb0] sm:$0xff]
        %v8221 = vld [vmem:[%s8197 + $0xb8] sm:$0xff]
        %v8222 = vld [vmem:[%s8197 + $0xc0] sm:$0x3]
        %v8223 = vld [vmem:[%s8197 + $0xc8] sm:$0x3]
        %v8224 = vld [vmem:[%s8197 + $0xd0] sm:$0x3]
        %v8225 = vld [vmem:[%s8197 + $0xd8] sm:$0x3]
        %v8226 = vrot.slane %v6153, 7
        %v8227 = vsel %vm6183, %v8226, 0
        %v8230 = vsel %vm6187, %v8222, 0
        %v8233 = vsel %vm6187, %v8223, 0
        %v8236 = vsel %vm6187, %v8224, 0
        %v8239 = vsel %vm6187, %v8225, 0
        %8241 = vmatpush.msra.mxu0 0.0
        %8242 = vmatpush.msra.mxu0 0.0
        %8243 = vmatpush.msra.mxu0 0.0
        %8244 = vmatpush.msra.mxu0 0.0
        %8245 = vmatpush.msra.mxu0 0.0
        %8246 = vmatpush.msra.mxu0 0.0
        %8247 = vmatpush.msra.mxu0 0.0
        %8248 = vmatpush.msra.mxu0 0.0
        %8249 = vmatpush.msra.mxu0 0.0
        %8250 = vmatpush.msra.mxu0 %v8230
        %8251 = vmatpush.msra.mxu0 %v8218
        %8252 = vmatpush.msra.mxu0 %v8214
        %8253 = vmatpush.msra.mxu0 %v8210
        %8254 = vmatpush.msra.mxu0 %v8206
        %8255 = vmatpush.msra.mxu0 %v8202
        %8256 = vmatpush.msra.mxu0 %v8198
        %8257 = vmatmul.f32.gmra.mxu0 %v8227
        %v8258 = vpop.f32.mrf.mxu0
        %v8259 = vadd.f32 0.0, %v8258
        %8260 = vdwg.mxu0
        %8261 = vmatpush.msra.mxu0 0.0
        %8262 = vmatpush.msra.mxu0 0.0
        %8263 = vmatpush.msra.mxu0 0.0
        %8264 = vmatpush.msra.mxu0 0.0
        %8265 = vmatpush.msra.mxu0 0.0
        %8266 = vmatpush.msra.mxu0 0.0
        %8267 = vmatpush.msra.mxu0 0.0
        %8268 = vmatpush.msra.mxu0 0.0
        %8269 = vmatpush.msra.mxu0 0.0
        %8270 = vmatpush.msra.mxu0 %v8233
        %8271 = vmatpush.msra.mxu0 %v8219
        %8272 = vmatpush.msra.mxu0 %v8215
        %8273 = vmatpush.msra.mxu0 %v8211
        %8274 = vmatpush.msra.mxu0 %v8207
        %8275 = vmatpush.msra.mxu0 %v8203
        %8276 = vmatpush.msra.mxu0 %v8199
        %8277 = vmatmul.f32.gmra.mxu0 %v8227
        %v8278 = vpop.f32.mrf.mxu0
        %v8279 = vadd.f32 0.0, %v8278
        %8280 = vdwg.mxu0
        %8281 = vmatpush.msra.mxu0 0.0
        %8282 = vmatpush.msra.mxu0 0.0
        %8283 = vmatpush.msra.mxu0 0.0
        %8284 = vmatpush.msra.mxu0 0.0
        %8285 = vmatpush.msra.mxu0 0.0
        %8286 = vmatpush.msra.mxu0 0.0
        %8287 = vmatpush.msra.mxu0 0.0
        %8288 = vmatpush.msra.mxu0 0.0
        %8289 = vmatpush.msra.mxu0 0.0
        %8290 = vmatpush.msra.mxu0 %v8236
        %8291 = vmatpush.msra.mxu0 %v8220
        %8292 = vmatpush.msra.mxu0 %v8216
        %8293 = vmatpush.msra.mxu0 %v8212
        %8294 = vmatpush.msra.mxu0 %v8208
        %8295 = vmatpush.msra.mxu0 %v8204
        %8296 = vmatpush.msra.mxu0 %v8200
        %8297 = vmatmul.f32.gmra.mxu0 %v8227
        %v8298 = vpop.f32.mrf.mxu0
        %v8299 = vadd.f32 0.0, %v8298
        %8300 = vdwg.mxu0
        %8301 = vmatpush.msra.mxu0 0.0
        %8302 = vmatpush.msra.mxu0 0.0
        %8303 = vmatpush.msra.mxu0 0.0
        %8304 = vmatpush.msra.mxu0 0.0
        %8305 = vmatpush.msra.mxu0 0.0
        %8306 = vmatpush.msra.mxu0 0.0
        %8307 = vmatpush.msra.mxu0 0.0
        %8308 = vmatpush.msra.mxu0 0.0
        %8309 = vmatpush.msra.mxu0 0.0
        %8310 = vmatpush.msra.mxu0 %v8239
        %8311 = vmatpush.msra.mxu0 %v8221
        %8312 = vmatpush.msra.mxu0 %v8217
        %8313 = vmatpush.msra.mxu0 %v8213
        %8314 = vmatpush.msra.mxu0 %v8209
        %8315 = vmatpush.msra.mxu0 %v8205
        %8316 = vmatpush.msra.mxu0 %v8201
        %8317 = vmatmul.f32.gmra.mxu0 %v8227
        %v8318 = vpop.f32.mrf.mxu0
        %v8319 = vadd.f32 0.0, %v8318
        %8320 = vdwg.mxu0
        %v8325 = vrot.slane %v8279, 7
        %v8326 = vrot.slane %v8299, 6
        %v8327 = vrot.slane %v8319, 5
        %v8328 = vsel %vm438, %v8259, %v8325
        %v8329 = vsel %vm6288, %v8326, %v8327
        %v8330 = vsel %vm6187, %v8328, %v8329
        %v8332 = vadd.f32 %v8196, %v8330
        %v8333 = vmax.f32 %v8332, 0.0
        %v8334 = vld [vmem:[%s9] sm:$0x1]
        %v8335 = vld [vmem:[%s8] sm:$0xff]
        %v8336 = vld [vmem:[%s8 + $0x8] sm:$0xff]
        %v8337 = vld [vmem:[%s8 + $0x10] sm:$0xff]
        %v8338 = vld [vmem:[%s8 + $0x18] sm:$0xff]
        %v8339 = vld [vmem:[%s8 + $0x20] sm:$0xff]
        %v8340 = vld [vmem:[%s8 + $0x28] sm:$0xff]
        %v8341 = vld [vmem:[%s8 + $0x30] sm:$0xff]
        %v8342 = vld [vmem:[%s8 + $0x38] sm:$0xff]
        %v8343 = vld [vmem:[%s8 + $0x40] sm:$0xff]
        %v8344 = vld [vmem:[%s8 + $0x48] sm:$0xff]
        %v8345 = vld [vmem:[%s8 + $0x50] sm:$0xff]
        %v8346 = vld [vmem:[%s8 + $0x58] sm:$0xff]
        %v8347 = vld [vmem:[%s8 + $0x60] sm:$0xff]
        %v8348 = vld [vmem:[%s8 + $0x68] sm:$0xff]
        %v8349 = vld [vmem:[%s8 + $0x70] sm:$0xff]
        %v8350 = vld [vmem:[%s8 + $0x78] sm:$0xff]
        %8351 = vmatpush.msra.mxu0 %v8350
        %8352 = vmatpush.msra.mxu0 %v8349
        %8353 = vmatpush.msra.mxu0 %v8348
        %8354 = vmatpush.msra.mxu0 %v8347
        %8355 = vmatpush.msra.mxu0 %v8346
        %8356 = vmatpush.msra.mxu0 %v8345
        %8357 = vmatpush.msra.mxu0 %v8344
        %8358 = vmatpush.msra.mxu0 %v8343
        %8359 = vmatpush.msra.mxu0 %v8342
        %8360 = vmatpush.msra.mxu0 %v8341
        %8361 = vmatpush.msra.mxu0 %v8340
        %8362 = vmatpush.msra.mxu0 %v8339
        %8363 = vmatpush.msra.mxu0 %v8338
        %8364 = vmatpush.msra.mxu0 %v8337
        %8365 = vmatpush.msra.mxu0 %v8336
        %8366 = vmatpush.msra.mxu0 %v8335
        %8367 = vmatmul.f32.gmra.mxu0 %v8333
        %v8368 = vpop.f32.mrf.mxu0
        %v8369 = vadd.f32 0.0, %v8368
        %8370 = vdwg.mxu0
        %v8371 = vadd.f32 %v8334, %v8369
        %v8372 = vld [vmem:[%s8 + $0x80] sm:$0xff]
        %v8373 = vld [vmem:[%s8 + $0x88] sm:$0xff]
        %v8374 = vld [vmem:[%s8 + $0x90] sm:$0xff]
        %v8375 = vld [vmem:[%s8 + $0x98] sm:$0xff]
        %v8376 = vld [vmem:[%s8 + $0xa0] sm:$0xff]
        %v8377 = vld [vmem:[%s8 + $0xa8] sm:$0xff]
        %v8378 = vld [vmem:[%s8 + $0xb0] sm:$0xff]
        %v8379 = vld [vmem:[%s8 + $0xb8] sm:$0xff]
        %v8380 = vld [vmem:[%s8 + $0xc0] sm:$0xff]
        %v8381 = vld [vmem:[%s8 + $0xc8] sm:$0xff]
        %v8382 = vld [vmem:[%s8 + $0xd0] sm:$0xff]
        %v8383 = vld [vmem:[%s8 + $0xd8] sm:$0xff]
        %v8384 = vld [vmem:[%s8 + $0xe0] sm:$0xff]
        %v8385 = vld [vmem:[%s8 + $0xe8] sm:$0xff]
        %v8386 = vld [vmem:[%s8 + $0xf0] sm:$0xff]
        %v8387 = vld [vmem:[%s8 + $0xf8] sm:$0xff]
        %v8389 = vperm.slane %v8333, 1
        %8391 = vmatpush.msra.mxu0 %v8387
        %8392 = vmatpush.msra.mxu0 %v8386
        %8393 = vmatpush.msra.mxu0 %v8385
        %8394 = vmatpush.msra.mxu0 %v8384
        %8395 = vmatpush.msra.mxu0 %v8383
        %8396 = vmatpush.msra.mxu0 %v8382
        %8397 = vmatpush.msra.mxu0 %v8381
        %8398 = vmatpush.msra.mxu0 %v8380
        %8399 = vmatpush.msra.mxu0 %v8379
        %8400 = vmatpush.msra.mxu0 %v8378
        %8401 = vmatpush.msra.mxu0 %v8377
        %8402 = vmatpush.msra.mxu0 %v8376
        %8403 = vmatpush.msra.mxu0 %v8375
        %8404 = vmatpush.msra.mxu0 %v8374
        %8405 = vmatpush.msra.mxu0 %v8373
        %8406 = vmatpush.msra.mxu0 %v8372
        %8407 = vmatmul.f32.gmra.mxu0 %v8389
        %v8408 = vpop.f32.mrf.mxu0
        %v8409 = vadd.f32 0.0, %v8408
        %8410 = vdwg.mxu0
        %v8411 = vadd.f32 %v8371, %v8409
        %v8412 = vld [vmem:[%s8 + $0x100] sm:$0xff]
        %v8413 = vld [vmem:[%s8 + $0x108] sm:$0xff]
        %v8414 = vld [vmem:[%s8 + $0x110] sm:$0xff]
        %v8415 = vld [vmem:[%s8 + $0x118] sm:$0xff]
        %v8416 = vld [vmem:[%s8 + $0x120] sm:$0xff]
        %v8417 = vld [vmem:[%s8 + $0x128] sm:$0xff]
        %v8418 = vld [vmem:[%s8 + $0x130] sm:$0xff]
        %v8419 = vld [vmem:[%s8 + $0x138] sm:$0xff]
        %v8420 = vld [vmem:[%s8 + $0x140] sm:$0xff]
        %v8421 = vld [vmem:[%s8 + $0x148] sm:$0xff]
        %v8422 = vld [vmem:[%s8 + $0x150] sm:$0xff]
        %v8423 = vld [vmem:[%s8 + $0x158] sm:$0xff]
        %v8424 = vld [vmem:[%s8 + $0x160] sm:$0xff]
        %v8425 = vld [vmem:[%s8 + $0x168] sm:$0xff]
        %v8426 = vld [vmem:[%s8 + $0x170] sm:$0xff]
        %v8427 = vld [vmem:[%s8 + $0x178] sm:$0xff]
        %v8428 = vperm.slane %v8333, 2
        %8430 = vmatpush.msra.mxu0 %v8427
        %8431 = vmatpush.msra.mxu0 %v8426
        %8432 = vmatpush.msra.mxu0 %v8425
        %8433 = vmatpush.msra.mxu0 %v8424
        %8434 = vmatpush.msra.mxu0 %v8423
        %8435 = vmatpush.msra.mxu0 %v8422
        %8436 = vmatpush.msra.mxu0 %v8421
        %8437 = vmatpush.msra.mxu0 %v8420
        %8438 = vmatpush.msra.mxu0 %v8419
        %8439 = vmatpush.msra.mxu0 %v8418
        %8440 = vmatpush.msra.mxu0 %v8417
        %8441 = vmatpush.msra.mxu0 %v8416
        %8442 = vmatpush.msra.mxu0 %v8415
        %8443 = vmatpush.msra.mxu0 %v8414
        %8444 = vmatpush.msra.mxu0 %v8413
        %8445 = vmatpush.msra.mxu0 %v8412
        %8446 = vmatmul.f32.gmra.mxu0 %v8428
        %v8447 = vpop.f32.mrf.mxu0
        %v8448 = vadd.f32 0.0, %v8447
        %8449 = vdwg.mxu0
        %v8450 = vadd.f32 %v8411, %v8448
        %v8451 = vld [vmem:[%s8 + $0x180] sm:$0xff]
        %v8452 = vld [vmem:[%s8 + $0x188] sm:$0xff]
        %v8453 = vld [vmem:[%s8 + $0x190] sm:$0xff]
        %v8454 = vld [vmem:[%s8 + $0x198] sm:$0xff]
        %v8455 = vld [vmem:[%s8 + $0x1a0] sm:$0xff]
        %v8456 = vld [vmem:[%s8 + $0x1a8] sm:$0xff]
        %v8457 = vld [vmem:[%s8 + $0x1b0] sm:$0xff]
        %v8458 = vld [vmem:[%s8 + $0x1b8] sm:$0xff]
        %v8459 = vld [vmem:[%s8 + $0x1c0] sm:$0xff]
        %v8460 = vld [vmem:[%s8 + $0x1c8] sm:$0xff]
        %v8461 = vld [vmem:[%s8 + $0x1d0] sm:$0xff]
        %v8462 = vld [vmem:[%s8 + $0x1d8] sm:$0xff]
        %v8463 = vld [vmem:[%s8 + $0x1e0] sm:$0xff]
        %v8464 = vld [vmem:[%s8 + $0x1e8] sm:$0xff]
        %v8465 = vld [vmem:[%s8 + $0x1f0] sm:$0xff]
        %v8466 = vld [vmem:[%s8 + $0x1f8] sm:$0xff]
        %v8467 = vperm.slane %v8333, 3
        %8469 = vmatpush.msra.mxu0 %v8466
        %8470 = vmatpush.msra.mxu0 %v8465
        %8471 = vmatpush.msra.mxu0 %v8464
        %8472 = vmatpush.msra.mxu0 %v8463
        %8473 = vmatpush.msra.mxu0 %v8462
        %8474 = vmatpush.msra.mxu0 %v8461
        %8475 = vmatpush.msra.mxu0 %v8460
        %8476 = vmatpush.msra.mxu0 %v8459
        %8477 = vmatpush.msra.mxu0 %v8458
        %8478 = vmatpush.msra.mxu0 %v8457
        %8479 = vmatpush.msra.mxu0 %v8456
        %8480 = vmatpush.msra.mxu0 %v8455
        %8481 = vmatpush.msra.mxu0 %v8454
        %8482 = vmatpush.msra.mxu0 %v8453
        %8483 = vmatpush.msra.mxu0 %v8452
        %8484 = vmatpush.msra.mxu0 %v8451
        %8485 = vmatmul.f32.gmra.mxu0 %v8467
        %v8486 = vpop.f32.mrf.mxu0
        %v8487 = vadd.f32 0.0, %v8486
        %8488 = vdwg.mxu0
        %v8489 = vadd.f32 %v8450, %v8487
        %v8490 = vsel %vm438, %v8489, -inf
        %8491 = vmax.xlane.f32.xlu0 %v8490
        %v8492 = vpop.xlane.xlu0 %8491
        %v8493 = vsub.f32 %v8489, %v8492
        %v8494 = vmul.f32 %v8493, 1.442695
        %v8495 = vpow.pop %v8494
        %v8496 = vsel %vm438, %v8495, 0.0
        %8497 = vadd.xlane.f32.xlu0 %v8496
        %v8498 = vpop.xlane.xlu0 %8497
        %v8499 = vrcp.pop %v8498
        %v8500 = vmul.f32 %v8495, %v8499
        %8501 = vst [vmem:[%s351] sm:$0x1] %v8500
        %s8502 = sand.u32 %s247, 1
        %s8503 = scalar_lea.sflag [#allocation3], %s8502
        %s8504 = sand.u32 %s247, 1
        %s8505 = scalar_lea.vmem [#allocation2], %s8504
        // Predicated region
        $region61: #{lenet_forward.1} parent=59 // pred_check
          %p8506 = pneg %p257
        $region62: #{lenet_forward.1} parent=59 // pred_check_branch
          %8508 = sbr.rel (%p8506) target = $region64
        $region63: #{lenet_forward.1} parent=59 // pred_region
          %8510 = vsyncadd %s8503, 0
          %s8511 = scalar_lea.hbm %s10, %s24
          %s8513 = sshll.u32 %s8505, 4
          %s8514 = int_to_ptr.vmem [resolvable:$true] %s8513
          %s8515 = sshll.u32 %s8511, 4
          %s8516 = int_to_ptr.hbm [resolvable:$true] %s8515
          %8518 = dma.vmem_to_hbm [thread:$0]  %s8514, 16, %s8516, %s8503
        $region64: #{lenet_forward.1} parent=59 // pred_fallthru
          _
      $region60: #{lenet_forward.1} parent=5 // pred_fallthru
        _
      %p8519 = scmp.le.s32.totalorder 2, %s19
      // Predicated region
      $region65: #{lenet_forward.1} parent=5 // pred_check
        %p8520 = pneg %p8519
      $region66: #{lenet_forward.1} parent=5 // pred_check_branch
        %8522 = sbr.rel (%p8520) target = $region68
      $region67: #{lenet_forward.1} parent=5 // pred_region
        %s8523 = ssub.s32 %s19, 2
        // Predicated region
        $region69: #{lenet_forward.1} parent=67 // pred_check
          %p8524 = pneg %p263
        $region70: #{lenet_forward.1} parent=67 // pred_check_branch
          %8526 = sbr.rel (%p8524) target = $region72
        $region71: #{lenet_forward.1} parent=67 // pred_region
          %s8527 = sand.u32 %s248, 1
          %s8528 = scalar_lea.sflag [#allocation3], %s8527
          %s8529 = sand.u32 %s248, 1
          %s8530 = scalar_lea.vmem [#allocation2], %s8529
          %8532 = dma.done %s8528, 16
        $region72: #{lenet_forward.1} parent=67 // pred_fallthru
          _
      $region68: #{lenet_forward.1} parent=5 // pred_fallthru
        _
    $region6: #{lenet_forward.1} parent=1 // loop_footer
      %s23 = sadd.s32 1, %s19
    $region7: #{lenet_forward.1} parent=1 // loop_footer_branch
      %18 = sbr.rel target = $region3
    $region8: #{lenet_forward.1} parent=1 // loop_exit
      _
    %8533 = vsyncpa [#allocation3], 1
    %s8534 = scalar_lea.sflag [#allocation3], 1
    %8535 = vsyncpa %s8534, 1

</llo_original>
